<compile_context>
chip_gen: v5e
topology: v5e:2x2
jax: 0.10.0
libtpu: 0.0.40
codegen_flags: <defaults>
</compile_context>

<pallas_src>
import functools

import jax
import jax.numpy as jnp
import numpy as np
from jax import lax
from jax.experimental import pallas as pl
from jax.experimental.pallas import tpu as pltpu

EPS = 1e-5
N_GROUPS = 8
LANE = 128

# (stride, pool) per conv block, matching MNIST_CNN.forward
BLOCK_CFG = ((1, False), (2, False), (1, False), (1, True))


def _round_up(x, m):
    return ((x + m - 1) // m) * m


def _pick_b_tile(n, cap=16):
    """Samples per grid step: the whole batch in one fat step (grid is a
    sequential loop on a TensorCore), capped by a comfortable VMEM budget."""
    b = max(min(n, cap), 1)
    while n % b:
        b -= 1
    return b


# ---------------------------------------------------------------------------
# Shared in-kernel helper: bias + ReLU + GroupNorm statistics (batched)
# ---------------------------------------------------------------------------
def _bias_relu_gn(y, aff, g, b_tile):
    """y: (b, P, C) f32 conv output. aff: (3, C) = [bias; gamma; beta].
    g: (C, C) group-averaging matrix.  Returns (relu'd y, channel sums,
    per-sample scale, per-sample shift)."""
    bias = aff[0:1, :]
    gamma = aff[1:2, :]
    beta = aff[2:3, :]
    y = jnp.maximum(y + bias, 0.0)                                   # (b,P,C)
    cs = jnp.sum(y, axis=1)                                          # (b,C)
    cq = jnp.sum(y * y, axis=1)                                      # (b,C)
    mean = jnp.dot(cs, g, preferred_element_type=jnp.float32)        # group mean
    ex2 = jnp.dot(cq, g, preferred_element_type=jnp.float32)         # group E[x^2]
    var = jnp.maximum(ex2 - mean * mean, 0.0)                        # clamp >= 0
    scale = lax.rsqrt(var + EPS) * gamma                             # (b,C)
    shift = beta - mean * scale                                      # (b,C)
    return y, cs, scale, shift


def _conv3x3_taps(xp_ref, w_ref, b_tile, hw, c):
    """3x3 stride-1 pad-1 conv from the padded activation scratch via 9
    accumulated tap matmuls.  xp_ref: (b, hw+2, hw+2, c) f32 VMEM scratch with
    the activation in its interior and zeros on the border."""
    m = b_tile * hw * hw
    acc = jnp.zeros((m, c), jnp.float32)
    t = 0
    for kh in range(3):
        for kw in range(3):
            tap = xp_ref[:, kh:kh + hw, kw:kw + hw, :]               # (b,hw,hw,c) f32
            tap = tap.astype(jnp.bfloat16).reshape(m, c)
            acc = acc + jnp.dot(tap, w_ref[t],
                                preferred_element_type=jnp.float32)
            t += 1
    return acc.reshape(b_tile, hw * hw, c)


# ---------------------------------------------------------------------------
# Kernel 1: conv1 (im2col matmul) + bias + ReLU + GroupNorm(8, 64)
# ---------------------------------------------------------------------------
def block1_kernel(patches_ref, w_ref, aff_ref, g_ref, out_ref, *, b_tile):
    p = patches_ref.shape[1]
    kp = patches_ref.shape[2]
    c = w_ref.shape[1]
    pm = patches_ref[...].reshape(b_tile * p, kp)                    # bf16
    y = jnp.dot(pm, w_ref[...], preferred_element_type=jnp.float32)
    y = y.reshape(b_tile, p, c)
    y, _, scale, shift = _bias_relu_gn(y, aff_ref[...], g_ref[...], b_tile)
    out_ref[...] = (y * scale[:, None, :] + shift[:, None, :]).astype(out_ref.dtype)


def run_block1(patches, prep):
    n, p, kp = patches.shape
    b_tile = _pick_b_tile(n)
    cost = pl.CostEstimate(
        flops=int(2 * n * p * kp * LANE + 4 * n * LANE * LANE + 10 * n * p * LANE),
        transcendentals=int(n * LANE),
        bytes_accessed=int(patches.size * 2 + prep["w1m"].size * 2
                           + prep["aff1"].size * 4 + prep["g1"].size * 4
                           + n * p * LANE * 2))
    return pl.pallas_call(
        functools.partial(block1_kernel, b_tile=b_tile),
        out_shape=jax.ShapeDtypeStruct((n, p, LANE), jnp.bfloat16),
        grid=(n // b_tile,),
        in_specs=[
            pl.BlockSpec((b_tile, p, kp), lambda i: (i, 0, 0)),      # patches
            pl.BlockSpec((kp, LANE), lambda i: (0, 0)),              # bf16 weight
            pl.BlockSpec((3, LANE), lambda i: (0, 0)),               # [bias;gamma;beta]
            pl.BlockSpec((LANE, LANE), lambda i: (0, 0)),            # group-avg matrix
        ],
        out_specs=pl.BlockSpec((b_tile, p, LANE), lambda i: (i, 0, 0)),
        compiler_params=pltpu.CompilerParams(dimension_semantics=("parallel",)),
        cost_estimate=cost,
    )(patches, prep["w1m"], prep["aff1"], prep["g1"])


# ---------------------------------------------------------------------------
# Kernel 2: conv2(+GN) -> conv3(+GN) -> conv4(+GN) -> folded avg-pool
# ---------------------------------------------------------------------------
def blocks234_kernel(patches_ref, w2_ref, w3_ref, w4_ref, aff_ref, g_ref,
                     out_ref, xp_ref, *, b_tile, hw):
    p = hw * hw
    c = LANE
    g = g_ref[...]

    # Zero the padded-activation scratch once; its border stays zero because we
    # only ever overwrite the interior below.
    xp_ref[...] = jnp.zeros(xp_ref.shape, xp_ref.dtype)

    # ---- block 2: stride-2 conv2 from prebuilt im2col patches ----
    kp = patches_ref.shape[2]
    pm = patches_ref[...].reshape(b_tile * p, kp)                    # bf16
    y = jnp.dot(pm, w2_ref[...], preferred_element_type=jnp.float32)
    y = y.reshape(b_tile, p, c)
    y, _, scale, shift = _bias_relu_gn(y, aff_ref[0], g, b_tile)
    a = y * scale[:, None, :] + shift[:, None, :]                    # (b,p,c) f32

    # ---- block 3: conv3 via 9 in-kernel tap matmuls ----
    xp_ref[:, 1:hw + 1, 1:hw + 1, :] = a.reshape(b_tile, hw, hw, c)
    y = _conv3x3_taps(xp_ref, w3_ref, b_tile, hw, c)
    y, _, scale, shift = _bias_relu_gn(y, aff_ref[1], g, b_tile)
    a = y * scale[:, None, :] + shift[:, None, :]

    # ---- block 4: conv4 + GN + algebraically folded adaptive avg-pool ----
    xp_ref[:, 1:hw + 1, 1:hw + 1, :] = a.reshape(b_tile, hw, hw, c)
    y = _conv3x3_taps(xp_ref, w4_ref, b_tile, hw, c)
    _, cs, scale, shift = _bias_relu_gn(y, aff_ref[2], g, b_tile)
    out_ref[0] = cs * (scale * (1.0 / float(p))) + shift             # (b,c) f32


def run_blocks234(patches, prep, hw):
    n, p, kp = patches.shape
    b_tile = _pick_b_tile(n)
    n_tiles = n // b_tile
    cost = pl.CostEstimate(
        flops=int(2 * n * p * kp * LANE                              # conv2
                  + 2 * 9 * 2 * n * p * LANE * LANE                  # conv3 + conv4
                  + 3 * 4 * n * LANE * LANE                          # group stats
                  + 3 * 10 * n * p * LANE),
        transcendentals=int(3 * n * LANE),
        bytes_accessed=int(patches.size * 2 + prep["w2m"].size * 2
                           + prep["w3t"].size * 2 + prep["w4t"].size * 2
                           + prep["aff234"].size * 4 + prep["g234"].size * 4
                           + n * LANE * 4))
    return pl.pallas_call(
        functools.partial(blocks234_kernel, b_tile=b_tile, hw=hw),
        out_shape=jax.ShapeDtypeStruct((n_tiles, b_tile, LANE), jnp.float32),
        grid=(n_tiles,),
        in_specs=[
            pl.BlockSpec((b_tile, p, kp), lambda i: (i, 0, 0)),      # conv2 patches
            pl.BlockSpec((kp, LANE), lambda i: (0, 0)),              # conv2 weight
            pl.BlockSpec((9, LANE, LANE), lambda i: (0, 0, 0)),      # conv3 tap weights
            pl.BlockSpec((9, LANE, LANE), lambda i: (0, 0, 0)),      # conv4 tap weights
            pl.BlockSpec((3, 3, LANE), lambda i: (0, 0, 0)),         # affines blocks 2-4
            pl.BlockSpec((LANE, LANE), lambda i: (0, 0)),            # group-avg matrix
        ],
        out_specs=pl.BlockSpec((1, b_tile, LANE), lambda i: (i, 0, 0)),
        scratch_shapes=[pltpu.VMEM((b_tile, hw + 2, hw + 2, LANE), jnp.float32)],
        compiler_params=pltpu.CompilerParams(dimension_semantics=("parallel",)),
        cost_estimate=cost,
    )(patches, prep["w2m"], prep["w3t"], prep["w4t"], prep["aff234"], prep["g234"])


# ---------------------------------------------------------------------------
# XLA glue: im2col (bf16) and parameter preparation
# ---------------------------------------------------------------------------
def _im2col(x_nhwc, stride, k_pad):
    """3x3, padding=1 im2col on a bf16 activation.
    Returns (N, Hout*Wout, k_pad) bf16 patches, Hout, Wout."""
    x_nhwc = x_nhwc.astype(jnp.bfloat16)
    n, h, w, c = x_nhwc.shape
    xp = jnp.pad(x_nhwc, ((0, 0), (1, 1), (1, 1), (0, 0)))
    hout = (h + 2 - 3) // stride + 1
    wout = (w + 2 - 3) // stride + 1
    taps = [xp[:, kh:kh + hout * stride:stride, kw:kw + wout * stride:stride, :]
            for kh in range(3) for kw in range(3)]
    patches = jnp.concatenate(taps, axis=-1).reshape(n, hout * wout, 9 * c)
    if k_pad > 9 * c:
        patches = jnp.pad(patches, ((0, 0), (0, 0), (0, k_pad - 9 * c)))
    return patches, hout, wout


def group_avg_matrix(c_real, c_pad, n_spatial):
    """G[j, c] = 1/(group_size * H*W) iff j and c are REAL channels of the same
    GroupNorm group; padded channels belong to no group."""
    cg = c_real // N_GROUPS
    ch = np.arange(c_pad)
    valid = ch < c_real
    gid = np.where(valid, ch // cg, -1)
    same = (gid[:, None] == gid[None, :]) & valid[:, None] & valid[None, :]
    return jnp.asarray(same.astype(np.float32) / float(cg * n_spatial))


def prepare_params(params, input_shape):
    c_in, h, w = input_shape
    h2 = (h + 2 - 3) // 2 + 1
    w2 = (w + 2 - 3) // 2 + 1
    c1, c2, c3, c4 = params      # each (w_hwio, bias, gamma, beta)

    # block 1: im2col weight, K = 9*c_in padded to 128, Cout 64 padded to 128
    k1 = 9 * c_in
    k1p = _round_up(k1, LANE)
    w1m = jnp.pad(c1[0].reshape(k1, 64),
                  ((0, k1p - k1), (0, LANE - 64))).astype(jnp.bfloat16)
    aff1 = jnp.stack([jnp.pad(c1[1], (0, LANE - 64)),
                      jnp.pad(c1[2], (0, LANE - 64)),
                      jnp.pad(c1[3], (0, LANE - 64))]).astype(jnp.float32)
    g1 = group_avg_matrix(64, LANE, h * w)

    # block 2: stride-2 conv from XLA im2col over the REAL 64 conv1 channels
    k2 = 9 * 64
    k2p = _round_up(k2, LANE)                                        # 640
    w2m = jnp.pad(c2[0].reshape(k2, LANE),
                  ((0, k2p - k2), (0, 0))).astype(jnp.bfloat16)

    # blocks 3/4: per-tap weights for in-kernel accumulation
    w3t = c3[0].reshape(9, LANE, LANE).astype(jnp.bfloat16)
    w4t = c4[0].reshape(9, LANE, LANE).astype(jnp.bfloat16)

    aff234 = jnp.stack([jnp.stack([c[1], c[2], c[3]]) for c in (c2, c3, c4)]
                       ).astype(jnp.float32)                          # (3, 3, 128)
    g234 = group_avg_matrix(LANE, LANE, h2 * w2)
    return dict(k1p=k1p, w1m=w1m, aff1=aff1, g1=g1,
                k2p=k2p, w2m=w2m, w3t=w3t, w4t=w4t, aff234=aff234, g234=g234)


def init_params(key, c_in):
    """Deterministic synthetic params in the true MNIST_CNN layer shapes (HWIO)."""
    specs = [(c_in, 64), (64, 128), (128, 128), (128, 128)]
    params = []
    for i, (ci, co) in enumerate(specs):
        kw_, kb_, kg_, kbe_ = jax.random.split(jax.random.fold_in(key, i), 4)
        bound = 1.0 / np.sqrt(9 * ci)
        w = jax.random.uniform(kw_, (3, 3, ci, co), jnp.float32, -bound, bound)
        b = jax.random.uniform(kb_, (co,), jnp.float32, -bound, bound)
        gamma = 1.0 + 0.1 * jax.random.normal(kg_, (co,), jnp.float32)
        beta = 0.1 * jax.random.normal(kbe_, (co,), jnp.float32)
        params.append((w, b, gamma, beta))
    return params


def mnist_cnn_forward(x_nchw, prep):
    # PyTorch input is NCHW; transpose once to NHWC for the TPU pipeline.
    x = jnp.transpose(x_nchw, (0, 2, 3, 1)).astype(jnp.bfloat16)
    n = x.shape[0]
    p1, h1, w1 = _im2col(x, 1, prep["k1p"])
    a1 = run_block1(p1, prep)                                        # (n, h1*w1, 128) bf16
    a1 = a1.reshape(n, h1, w1, LANE)[..., :64]                       # real conv1 channels
    p2, h2, w2 = _im2col(a1, 2, prep["k2p"])                         # (n, h2*w2, 640)
    out = run_blocks234(p2, prep, hw=h2)                             # (tiles, b_tile, 128)
    return out.reshape(n, LANE)


# ---------------------------------------------------------------------------
# Pure-JAX reference (same bf16 quantization of matmul operands, f32 math)
# ---------------------------------------------------------------------------
def ref_block(x, w_hwio, bias, gamma, beta, *, stride, pool=False):
    xq = x.astype(jnp.bfloat16).astype(jnp.float32)          # mimic MXU bf16 inputs
    wq = w_hwio.astype(jnp.bfloat16).astype(jnp.float32)
    y = lax.conv_general_dilated(
        xq, wq, window_strides=(stride, stride), padding=((1, 1), (1, 1)),
        dimension_numbers=("NHWC", "HWIO", "NHWC"),
        precision=lax.Precision.HIGHEST)
    y = jnp.maximum(y + bias, 0.0)
    n, h, w, c = y.shape
    cg = c // N_GROUPS
    yg = y.reshape(n, h * w, N_GROUPS, cg)
    mean = jnp.mean(yg, axis=(1, 3), keepdims=True)
    var = jnp.mean((yg - mean) ** 2, axis=(1, 3), keepdims=True)
    yn = ((yg - mean) * lax.rsqrt(var + EPS)).reshape(n, h, w, c)
    yn = yn * gamma + beta
    if pool:
        return jnp.mean(yn, axis=(1, 2))
    return yn


def mnist_cnn_reference(x_nchw, params):
    x = jnp.transpose(x_nchw, (0, 2, 3, 1)).astype(jnp.float32)
    for (w, b, g, be), (stride, pool) in zip(params, BLOCK_CFG):
        x = ref_block(x, w, b, g, be, stride=stride, pool=pool)
    return x


if __name__ == "__main__":
    key = jax.random.PRNGKey(0)
    k_x, k_p = jax.random.split(key)

    # small input consistent with MNIST_CNN(input_shape=(4, 16, 16)), batch=2, NCHW
    input_shape = (4, 16, 16)
    x = jax.random.normal(k_x, (2,) + input_shape, dtype=jnp.float32)
    params = init_params(k_p, c_in=input_shape[0])
    prepared = prepare_params(params, input_shape)

    fwd = jax.jit(lambda xs: mnist_cnn_forward(xs, prepared))
    feats = jax.block_until_ready(fwd(x))                            # (2, 128)
    ref = jax.block_until_ready(mnist_cnn_reference(x, params))

    assert feats.shape == (2, 128)
    # Both paths quantize matmul operands to bf16 and accumulate/normalize in f32.
    np.testing.assert_allclose(np.asarray(feats), np.asarray(ref),
                               rtol=1e-2, atol=1e-2)
    print("KERNEL_OK")
</pallas_src>

<mosaic_0001>
module attributes {stable_mosaic.version = 11 : i64} {
  func.func @block1_kernel(%arg0: i32, %arg1: memref<2x256x128xbf16, #tpu.memory_space<vmem>>, %arg2: memref<128x128xbf16, #tpu.memory_space<vmem>>, %arg3: memref<3x128xf32, #tpu.memory_space<vmem>>, %arg4: memref<128x128xf32, #tpu.memory_space<vmem>>, %arg5: memref<2x256x128xbf16, #tpu.memory_space<vmem>>) attributes {dimension_semantics = [#tpu.dimension_semantics<parallel>], iteration_bounds = array<i64: 1>, scalar_prefetch = 0 : i64, scratch_operands = 0 : i64, tpu.core_type = #tpu.core_type<tc>, window_params = [{transform_indices = @transform_0, window_bounds = array<i64: 2, 256, 128>}, {pipeline_mode = #tpu.pipeline_mode<synchronous>, transform_indices = @transform_1, window_bounds = array<i64: 128, 128>}, {pipeline_mode = #tpu.pipeline_mode<synchronous>, transform_indices = @transform_2, window_bounds = array<i64: 3, 128>}, {pipeline_mode = #tpu.pipeline_mode<synchronous>, transform_indices = @transform_3, window_bounds = array<i64: 128, 128>}, {transform_indices = @transform_4, window_bounds = array<i64: 2, 256, 128>}]} {
    %c0 = arith.constant 0 : index
    %c0_0 = arith.constant 0 : index
    %c0_1 = arith.constant 0 : index
    %0 = vector.load %arg1[%c0, %c0_0, %c0_1] : memref<2x256x128xbf16, #tpu.memory_space<vmem>>, vector<2x256x128xbf16>
    %1 = vector.shape_cast %0 : vector<2x256x128xbf16> to vector<512x128xbf16>
    %c0_2 = arith.constant 0 : index
    %c0_3 = arith.constant 0 : index
    %2 = vector.load %arg2[%c0_2, %c0_3] : memref<128x128xbf16, #tpu.memory_space<vmem>>, vector<128x128xbf16>
    %cst = arith.constant dense<0.000000e+00> : vector<512x128xf32>
    %3 = tpu.matmul %1, %2, %cst {dimension_numbers = #tpu.dot_dimension_numbers<[1], [0], [0], [1], [0, 0, 1, 1], [], []>} : vector<512x128xbf16>, vector<128x128xbf16>, vector<512x128xf32> -> vector<512x128xf32>
    %4 = vector.shape_cast %3 : vector<512x128xf32> to vector<2x256x128xf32>
    %c0_4 = arith.constant 0 : index
    %c0_5 = arith.constant 0 : index
    %5 = vector.load %arg3[%c0_4, %c0_5] : memref<3x128xf32, #tpu.memory_space<vmem>>, vector<3x128xf32>
    %c0_6 = arith.constant 0 : index
    %c0_7 = arith.constant 0 : index
    %6 = vector.load %arg4[%c0_6, %c0_7] : memref<128x128xf32, #tpu.memory_space<vmem>>, vector<128x128xf32>
    %7 = vector.extract_strided_slice %5 {offsets = [0, 0], sizes = [1, 128], strides = [1, 1]} : vector<3x128xf32> to vector<1x128xf32>
    %8 = vector.extract_strided_slice %5 {offsets = [1, 0], sizes = [1, 128], strides = [1, 1]} : vector<3x128xf32> to vector<1x128xf32>
    %9 = vector.extract_strided_slice %5 {offsets = [2, 0], sizes = [1, 128], strides = [1, 1]} : vector<3x128xf32> to vector<1x128xf32>
    %10 = vector.shape_cast %7 : vector<1x128xf32> to vector<1x1x128xf32>
    %11 = vector.broadcast %10 : vector<1x1x128xf32> to vector<2x256x128xf32>
    %12 = arith.addf %4, %11 : vector<2x256x128xf32>
    %cst_8 = arith.constant 0.000000e+00 : f32
    %13 = vector.broadcast %cst_8 : f32 to vector<2x256x128xf32>
    %14 = arith.maximumf %12, %13 : vector<2x256x128xf32>
    %cst_9 = arith.constant dense<0.000000e+00> : vector<2x128xf32>
    %15 = vector.multi_reduction <add>, %14, %cst_9 [1] : vector<2x256x128xf32> to vector<2x128xf32>
    %16 = arith.mulf %14, %14 : vector<2x256x128xf32>
    %cst_10 = arith.constant dense<0.000000e+00> : vector<2x128xf32>
    %17 = vector.multi_reduction <add>, %16, %cst_10 [1] : vector<2x256x128xf32> to vector<2x128xf32>
    %cst_11 = arith.constant dense<0.000000e+00> : vector<2x128xf32>
    %18 = tpu.matmul %15, %6, %cst_11 {dimension_numbers = #tpu.dot_dimension_numbers<[1], [0], [0], [1], [0, 0, 1, 1], [], []>} : vector<2x128xf32>, vector<128x128xf32>, vector<2x128xf32> -> vector<2x128xf32>
    %cst_12 = arith.constant dense<0.000000e+00> : vector<2x128xf32>
    %19 = tpu.matmul %17, %6, %cst_12 {dimension_numbers = #tpu.dot_dimension_numbers<[1], [0], [0], [1], [0, 0, 1, 1], [], []>} : vector<2x128xf32>, vector<128x128xf32>, vector<2x128xf32> -> vector<2x128xf32>
    %20 = arith.mulf %18, %18 : vector<2x128xf32>
    %21 = arith.subf %19, %20 : vector<2x128xf32>
    %cst_13 = arith.constant 0.000000e+00 : f32
    %22 = vector.broadcast %cst_13 : f32 to vector<2x128xf32>
    %23 = arith.maximumf %21, %22 : vector<2x128xf32>
    %cst_14 = arith.constant 9.99999974E-6 : f32
    %24 = vector.broadcast %cst_14 : f32 to vector<2x128xf32>
    %25 = arith.addf %23, %24 : vector<2x128xf32>
    %26 = math.rsqrt %25 : vector<2x128xf32>
    %27 = vector.broadcast %8 : vector<1x128xf32> to vector<2x128xf32>
    %28 = arith.mulf %26, %27 : vector<2x128xf32>
    %29 = arith.mulf %18, %28 : vector<2x128xf32>
    %30 = vector.broadcast %9 : vector<1x128xf32> to vector<2x128xf32>
    %31 = arith.subf %30, %29 : vector<2x128xf32>
    %32 = vector.shape_cast %28 : vector<2x128xf32> to vector<2x1x128xf32>
    %33 = vector.broadcast %32 : vector<2x1x128xf32> to vector<2x256x128xf32>
    %34 = arith.mulf %14, %33 : vector<2x256x128xf32>
    %35 = vector.shape_cast %31 : vector<2x128xf32> to vector<2x1x128xf32>
    %36 = vector.broadcast %35 : vector<2x1x128xf32> to vector<2x256x128xf32>
    %37 = arith.addf %34, %36 : vector<2x256x128xf32>
    %38 = arith.truncf %37 : vector<2x256x128xf32> to vector<2x256x128xbf16>
    %c0_15 = arith.constant 0 : index
    %c0_16 = arith.constant 0 : index
    %c0_17 = arith.constant 0 : index
    %39 = vector.load %arg5[%c0_15, %c0_16, %c0_17] : memref<2x256x128xbf16, #tpu.memory_space<vmem>>, vector<2x256x128xbf16>
    tpu.vector_store %arg5[%c0_15, %c0_16, %c0_17], %38 {strides = array<i32>} : memref<2x256x128xbf16, #tpu.memory_space<vmem>>, vector<2x256x128xbf16>,
    return
  }
  func.func @transform_0(%arg0: i32) -> (i32, i32, i32) {
    %c0_i32 = arith.constant 0 : i32
    %c0_i32_0 = arith.constant 0 : i32
    %c0_i32_1 = arith.constant 0 : i32
    return %arg0, %c0_i32, %c0_i32_0 : i32, i32, i32
  }
  func.func @transform_1(%arg0: i32) -> (i32, i32) {
    %c0_i32 = arith.constant 0 : i32
    %c0_i32_0 = arith.constant 0 : i32
    %c0_i32_1 = arith.constant 0 : i32
    return %c0_i32, %c0_i32_0 : i32, i32
  }
  func.func @transform_2(%arg0: i32) -> (i32, i32) {
    %c0_i32 = arith.constant 0 : i32
    %c0_i32_0 = arith.constant 0 : i32
    %c0_i32_1 = arith.constant 0 : i32
    return %c0_i32, %c0_i32_0 : i32, i32
  }
  func.func @transform_3(%arg0: i32) -> (i32, i32) {
    %c0_i32 = arith.constant 0 : i32
    %c0_i32_0 = arith.constant 0 : i32
    %c0_i32_1 = arith.constant 0 : i32
    return %c0_i32, %c0_i32_0 : i32, i32
  }
  func.func @transform_4(%arg0: i32) -> (i32, i32, i32) {
    %c0_i32 = arith.constant 0 : i32
    %c0_i32_0 = arith.constant 0 : i32
    %c0_i32_1 = arith.constant 0 : i32
    return %arg0, %c0_i32, %c0_i32_0 : i32, i32, i32
  }
}

module attributes {stable_mosaic.version = 11 : i64} {
  func.func @blocks234_kernel(%arg0: i32, %arg1: memref<2x64x640xbf16, #tpu.memory_space<vmem>>, %arg2: memref<640x128xbf16, #tpu.memory_space<vmem>>, %arg3: memref<9x128x128xbf16, #tpu.memory_space<vmem>>, %arg4: memref<9x128x128xbf16, #tpu.memory_space<vmem>>, %arg5: memref<3x3x128xf32, #tpu.memory_space<vmem>>, %arg6: memref<128x128xf32, #tpu.memory_space<vmem>>, %arg7: memref<1x2x128xf32, #tpu.memory_space<vmem>>, %arg8: memref<2x10x10x128xf32, #tpu.memory_space<vmem>>) attributes {dimension_semantics = [#tpu.dimension_semantics<parallel>], iteration_bounds = array<i64: 1>, scalar_prefetch = 0 : i64, scratch_operands = 1 : i64, tpu.core_type = #tpu.core_type<tc>, window_params = [{transform_indices = @transform_0, window_bounds = array<i64: 2, 64, 640>}, {pipeline_mode = #tpu.pipeline_mode<synchronous>, transform_indices = @transform_1, window_bounds = array<i64: 640, 128>}, {pipeline_mode = #tpu.pipeline_mode<synchronous>, transform_indices = @transform_2, window_bounds = array<i64: 9, 128, 128>}, {pipeline_mode = #tpu.pipeline_mode<synchronous>, transform_indices = @transform_3, window_bounds = array<i64: 9, 128, 128>}, {pipeline_mode = #tpu.pipeline_mode<synchronous>, transform_indices = @transform_4, window_bounds = array<i64: 3, 3, 128>}, {pipeline_mode = #tpu.pipeline_mode<synchronous>, transform_indices = @transform_5, window_bounds = array<i64: 128, 128>}, {transform_indices = @transform_6, window_bounds = array<i64: 1, 2, 128>}]} {
    %c0 = arith.constant 0 : index
    %c0_0 = arith.constant 0 : index
    %0 = vector.load %arg6[%c0, %c0_0] : memref<128x128xf32, #tpu.memory_space<vmem>>, vector<128x128xf32>
    %cst = arith.constant 0.000000e+00 : f32
    %1 = vector.broadcast %cst : f32 to vector<2x10x10x128xf32>
    %c0_1 = arith.constant 0 : index
    %c0_2 = arith.constant 0 : index
    %c0_3 = arith.constant 0 : index
    %c0_4 = arith.constant 0 : index
    %2 = vector.load %arg8[%c0_1, %c0_2, %c0_3, %c0_4] : memref<2x10x10x128xf32, #tpu.memory_space<vmem>>, vector<2x10x10x128xf32>
    tpu.vector_store %arg8[%c0_1, %c0_2, %c0_3, %c0_4], %1 {strides = array<i32>} : memref<2x10x10x128xf32, #tpu.memory_space<vmem>>, vector<2x10x10x128xf32>,
    %c0_5 = arith.constant 0 : index
    %c0_6 = arith.constant 0 : index
    %c0_7 = arith.constant 0 : index
    %3 = vector.load %arg1[%c0_5, %c0_6, %c0_7] : memref<2x64x640xbf16, #tpu.memory_space<vmem>>, vector<2x64x640xbf16>
    %4 = vector.shape_cast %3 : vector<2x64x640xbf16> to vector<128x640xbf16>
    %c0_8 = arith.constant 0 : index
    %c0_9 = arith.constant 0 : index
    %5 = vector.load %arg2[%c0_8, %c0_9] : memref<640x128xbf16, #tpu.memory_space<vmem>>, vector<640x128xbf16>
    %cst_10 = arith.constant dense<0.000000e+00> : vector<128x128xf32>
    %6 = tpu.matmul %4, %5, %cst_10 {dimension_numbers = #tpu.dot_dimension_numbers<[1], [0], [0], [1], [0, 0, 1, 1], [], []>} : vector<128x640xbf16>, vector<640x128xbf16>, vector<128x128xf32> -> vector<128x128xf32>
    %7 = vector.shape_cast %6 : vector<128x128xf32> to vector<2x64x128xf32>
    %c0_11 = arith.constant 0 : index
    %c0_12 = arith.constant 0 : index
    %c0_13 = arith.constant 0 : index
    %8 = vector.load %arg5[%c0_11, %c0_12, %c0_13] : memref<3x3x128xf32, #tpu.memory_space<vmem>>, vector<1x3x128xf32>
    %9 = vector.shape_cast %8 : vector<1x3x128xf32> to vector<3x128xf32>
    %10 = vector.extract_strided_slice %9 {offsets = [0, 0], sizes = [1, 128], strides = [1, 1]} : vector<3x128xf32> to vector<1x128xf32>
    %11 = vector.extract_strided_slice %9 {offsets = [1, 0], sizes = [1, 128], strides = [1, 1]} : vector<3x128xf32> to vector<1x128xf32>
    %12 = vector.extract_strided_slice %9 {offsets = [2, 0], sizes = [1, 128], strides = [1, 1]} : vector<3x128xf32> to vector<1x128xf32>
    %13 = vector.shape_cast %10 : vector<1x128xf32> to vector<1x1x128xf32>
    %14 = vector.broadcast %13 : vector<1x1x128xf32> to vector<2x64x128xf32>
    %15 = arith.addf %7, %14 : vector<2x64x128xf32>
    %cst_14 = arith.constant 0.000000e+00 : f32
    %16 = vector.broadcast %cst_14 : f32 to vector<2x64x128xf32>
    %17 = arith.maximumf %15, %16 : vector<2x64x128xf32>
    %cst_15 = arith.constant dense<0.000000e+00> : vector<2x128xf32>
    %18 = vector.multi_reduction <add>, %17, %cst_15 [1] : vector<2x64x128xf32> to vector<2x128xf32>
    %19 = arith.mulf %17, %17 : vector<2x64x128xf32>
    %cst_16 = arith.constant dense<0.000000e+00> : vector<2x128xf32>
    %20 = vector.multi_reduction <add>, %19, %cst_16 [1] : vector<2x64x128xf32> to vector<2x128xf32>
    %cst_17 = arith.constant dense<0.000000e+00> : vector<2x128xf32>
    %21 = tpu.matmul %18, %0, %cst_17 {dimension_numbers = #tpu.dot_dimension_numbers<[1], [0], [0], [1], [0, 0, 1, 1], [], []>} : vector<2x128xf32>, vector<128x128xf32>, vector<2x128xf32> -> vector<2x128xf32>
    %cst_18 = arith.constant dense<0.000000e+00> : vector<2x128xf32>
    %22 = tpu.matmul %20, %0, %cst_18 {dimension_numbers = #tpu.dot_dimension_numbers<[1], [0], [0], [1], [0, 0, 1, 1], [], []>} : vector<2x128xf32>, vector<128x128xf32>, vector<2x128xf32> -> vector<2x128xf32>
    %23 = arith.mulf %21, %21 : vector<2x128xf32>
    %24 = arith.subf %22, %23 : vector<2x128xf32>
    %cst_19 = arith.constant 0.000000e+00 : f32
    %25 = vector.broadcast %cst_19 : f32 to vector<2x128xf32>
    %26 = arith.maximumf %24, %25 : vector<2x128xf32>
    %cst_20 = arith.constant 9.99999974E-6 : f32
    %27 = vector.broadcast %cst_20 : f32 to vector<2x128xf32>
    %28 = arith.addf %26, %27 : vector<2x128xf32>
    %29 = math.rsqrt %28 : vector<2x128xf32>
    %30 = vector.broadcast %11 : vector<1x128xf32> to vector<2x128xf32>
    %31 = arith.mulf %29, %30 : vector<2x128xf32>
    %32 = arith.mulf %21, %31 : vector<2x128xf32>
    %33 = vector.broadcast %12 : vector<1x128xf32> to vector<2x128xf32>
    %34 = arith.subf %33, %32 : vector<2x128xf32>
    %35 = vector.shape_cast %31 : vector<2x128xf32> to vector<2x1x128xf32>
    %36 = vector.broadcast %35 : vector<2x1x128xf32> to vector<2x64x128xf32>
    %37 = arith.mulf %17, %36 : vector<2x64x128xf32>
    %38 = vector.shape_cast %34 : vector<2x128xf32> to vector<2x1x128xf32>
    %39 = vector.broadcast %38 : vector<2x1x128xf32> to vector<2x64x128xf32>
    %40 = arith.addf %37, %39 : vector<2x64x128xf32>
    %41 = vector.shape_cast %40 : vector<2x64x128xf32> to vector<2x8x8x128xf32>
    %c0_21 = arith.constant 0 : index
    %c1 = arith.constant 1 : index
    %c1_22 = arith.constant 1 : index
    %c0_23 = arith.constant 0 : index
    %42 = vector.load %arg8[%c0_21, %c1, %c1_22, %c0_23] : memref<2x10x10x128xf32, #tpu.memory_space<vmem>>, vector<2x8x8x128xf32>
    tpu.vector_store %arg8[%c0_21, %c1, %c1_22, %c0_23], %41 {strides = array<i32>} : memref<2x10x10x128xf32, #tpu.memory_space<vmem>>, vector<2x8x8x128xf32>,
    %cst_24 = arith.constant 0.000000e+00 : f32
    %43 = vector.broadcast %cst_24 : f32 to vector<128x128xf32>
    %c0_25 = arith.constant 0 : index
    %c0_26 = arith.constant 0 : index
    %c0_27 = arith.constant 0 : index
    %c0_28 = arith.constant 0 : index
    %44 = vector.load %arg8[%c0_25, %c0_26, %c0_27, %c0_28] : memref<2x10x10x128xf32, #tpu.memory_space<vmem>>, vector<2x8x8x128xf32>
    %45 = arith.truncf %44 : vector<2x8x8x128xf32> to vector<2x8x8x128xbf16>
    %46 = vector.shape_cast %45 : vector<2x8x8x128xbf16> to vector<128x128xbf16>
    %c0_29 = arith.constant 0 : index
    %c0_30 = arith.constant 0 : index
    %c0_31 = arith.constant 0 : index
    %47 = vector.load %arg3[%c0_29, %c0_30, %c0_31] : memref<9x128x128xbf16, #tpu.memory_space<vmem>>, vector<1x128x128xbf16>
    %48 = vector.shape_cast %47 : vector<1x128x128xbf16> to vector<128x128xbf16>
    %cst_32 = arith.constant dense<0.000000e+00> : vector<128x128xf32>
    %49 = tpu.matmul %46, %48, %cst_32 {dimension_numbers = #tpu.dot_dimension_numbers<[1], [0], [0], [1], [0, 0, 1, 1], [], []>} : vector<128x128xbf16>, vector<128x128xbf16>, vector<128x128xf32> -> vector<128x128xf32>
    %50 = arith.addf %43, %49 : vector<128x128xf32>
    %c0_33 = arith.constant 0 : index
    %c0_34 = arith.constant 0 : index
    %c1_35 = arith.constant 1 : index
    %c0_36 = arith.constant 0 : index
    %51 = vector.load %arg8[%c0_33, %c0_34, %c1_35, %c0_36] : memref<2x10x10x128xf32, #tpu.memory_space<vmem>>, vector<2x8x8x128xf32>
    %52 = arith.truncf %51 : vector<2x8x8x128xf32> to vector<2x8x8x128xbf16>
    %53 = vector.shape_cast %52 : vector<2x8x8x128xbf16> to vector<128x128xbf16>
    %c1_37 = arith.constant 1 : index
    %c0_38 = arith.constant 0 : index
    %c0_39 = arith.constant 0 : index
    %54 = vector.load %arg3[%c1_37, %c0_38, %c0_39] : memref<9x128x128xbf16, #tpu.memory_space<vmem>>, vector<1x128x128xbf16>
    %55 = vector.shape_cast %54 : vector<1x128x128xbf16> to vector<128x128xbf16>
    %cst_40 = arith.constant dense<0.000000e+00> : vector<128x128xf32>
    %56 = tpu.matmul %53, %55, %cst_40 {dimension_numbers = #tpu.dot_dimension_numbers<[1], [0], [0], [1], [0, 0, 1, 1], [], []>} : vector<128x128xbf16>, vector<128x128xbf16>, vector<128x128xf32> -> vector<128x128xf32>
    %57 = arith.addf %50, %56 : vector<128x128xf32>
    %c0_41 = arith.constant 0 : index
    %c0_42 = arith.constant 0 : index
    %c2 = arith.constant 2 : index
    %c0_43 = arith.constant 0 : index
    %58 = vector.load %arg8[%c0_41, %c0_42, %c2, %c0_43] : memref<2x10x10x128xf32, #tpu.memory_space<vmem>>, vector<2x8x8x128xf32>
    %59 = arith.truncf %58 : vector<2x8x8x128xf32> to vector<2x8x8x128xbf16>
    %60 = vector.shape_cast %59 : vector<2x8x8x128xbf16> to vector<128x128xbf16>
    %c2_44 = arith.constant 2 : index
    %c0_45 = arith.constant 0 : index
    %c0_46 = arith.constant 0 : index
    %61 = vector.load %arg3[%c2_44, %c0_45, %c0_46] : memref<9x128x128xbf16, #tpu.memory_space<vmem>>, vector<1x128x128xbf16>
    %62 = vector.shape_cast %61 : vector<1x128x128xbf16> to vector<128x128xbf16>
    %cst_47 = arith.constant dense<0.000000e+00> : vector<128x128xf32>
    %63 = tpu.matmul %60, %62, %cst_47 {dimension_numbers = #tpu.dot_dimension_numbers<[1], [0], [0], [1], [0, 0, 1, 1], [], []>} : vector<128x128xbf16>, vector<128x128xbf16>, vector<128x128xf32> -> vector<128x128xf32>
    %64 = arith.addf %57, %63 : vector<128x128xf32>
    %c0_48 = arith.constant 0 : index
    %c1_49 = arith.constant 1 : index
    %c0_50 = arith.constant 0 : index
    %c0_51 = arith.constant 0 : index
    %65 = vector.load %arg8[%c0_48, %c1_49, %c0_50, %c0_51] : memref<2x10x10x128xf32, #tpu.memory_space<vmem>>, vector<2x8x8x128xf32>
    %66 = arith.truncf %65 : vector<2x8x8x128xf32> to vector<2x8x8x128xbf16>
    %67 = vector.shape_cast %66 : vector<2x8x8x128xbf16> to vector<128x128xbf16>
    %c3 = arith.constant 3 : index
    %c0_52 = arith.constant 0 : index
    %c0_53 = arith.constant 0 : index
    %68 = vector.load %arg3[%c3, %c0_52, %c0_53] : memref<9x128x128xbf16, #tpu.memory_space<vmem>>, vector<1x128x128xbf16>
    %69 = vector.shape_cast %68 : vector<1x128x128xbf16> to vector<128x128xbf16>
    %cst_54 = arith.constant dense<0.000000e+00> : vector<128x128xf32>
    %70 = tpu.matmul %67, %69, %cst_54 {dimension_numbers = #tpu.dot_dimension_numbers<[1], [0], [0], [1], [0, 0, 1, 1], [], []>} : vector<128x128xbf16>, vector<128x128xbf16>, vector<128x128xf32> -> vector<128x128xf32>
    %71 = arith.addf %64, %70 : vector<128x128xf32>
    %c0_55 = arith.constant 0 : index
    %c1_56 = arith.constant 1 : index
    %c1_57 = arith.constant 1 : index
    %c0_58 = arith.constant 0 : index
    %72 = vector.load %arg8[%c0_55, %c1_56, %c1_57, %c0_58] : memref<2x10x10x128xf32, #tpu.memory_space<vmem>>, vector<2x8x8x128xf32>
    %73 = arith.truncf %72 : vector<2x8x8x128xf32> to vector<2x8x8x128xbf16>
    %74 = vector.shape_cast %73 : vector<2x8x8x128xbf16> to vector<128x128xbf16>
    %c4 = arith.constant 4 : index
    %c0_59 = arith.constant 0 : index
    %c0_60 = arith.constant 0 : index
    %75 = vector.load %arg3[%c4, %c0_59, %c0_60] : memref<9x128x128xbf16, #tpu.memory_space<vmem>>, vector<1x128x128xbf16>
    %76 = vector.shape_cast %75 : vector<1x128x128xbf16> to vector<128x128xbf16>
    %cst_61 = arith.constant dense<0.000000e+00> : vector<128x128xf32>
    %77 = tpu.matmul %74, %76, %cst_61 {dimension_numbers = #tpu.dot_dimension_numbers<[1], [0], [0], [1], [0, 0, 1, 1], [], []>} : vector<128x128xbf16>, vector<128x128xbf16>, vector<128x128xf32> -> vector<128x128xf32>
    %78 = arith.addf %71, %77 : vector<128x128xf32>
    %c0_62 = arith.constant 0 : index
    %c1_63 = arith.constant 1 : index
    %c2_64 = arith.constant 2 : index
    %c0_65 = arith.constant 0 : index
    %79 = vector.load %arg8[%c0_62, %c1_63, %c2_64, %c0_65] : memref<2x10x10x128xf32, #tpu.memory_space<vmem>>, vector<2x8x8x128xf32>
    %80 = arith.truncf %79 : vector<2x8x8x128xf32> to vector<2x8x8x128xbf16>
    %81 = vector.shape_cast %80 : vector<2x8x8x128xbf16> to vector<128x128xbf16>
    %c5 = arith.constant 5 : index
    %c0_66 = arith.constant 0 : index
    %c0_67 = arith.constant 0 : index
    %82 = vector.load %arg3[%c5, %c0_66, %c0_67] : memref<9x128x128xbf16, #tpu.memory_space<vmem>>, vector<1x128x128xbf16>
    %83 = vector.shape_cast %82 : vector<1x128x128xbf16> to vector<128x128xbf16>
    %cst_68 = arith.constant dense<0.000000e+00> : vector<128x128xf32>
    %84 = tpu.matmul %81, %83, %cst_68 {dimension_numbers = #tpu.dot_dimension_numbers<[1], [0], [0], [1], [0, 0, 1, 1], [], []>} : vector<128x128xbf16>, vector<128x128xbf16>, vector<128x128xf32> -> vector<128x128xf32>
    %85 = arith.addf %78, %84 : vector<128x128xf32>
    %c0_69 = arith.constant 0 : index
    %c2_70 = arith.constant 2 : index
    %c0_71 = arith.constant 0 : index
    %c0_72 = arith.constant 0 : index
    %86 = vector.load %arg8[%c0_69, %c2_70, %c0_71, %c0_72] : memref<2x10x10x128xf32, #tpu.memory_space<vmem>>, vector<2x8x8x128xf32>
    %87 = arith.truncf %86 : vector<2x8x8x128xf32> to vector<2x8x8x128xbf16>
    %88 = vector.shape_cast %87 : vector<2x8x8x128xbf16> to vector<128x128xbf16>
    %c6 = arith.constant 6 : index
    %c0_73 = arith.constant 0 : index
    %c0_74 = arith.constant 0 : index
    %89 = vector.load %arg3[%c6, %c0_73, %c0_74] : memref<9x128x128xbf16, #tpu.memory_space<vmem>>, vector<1x128x128xbf16>
    %90 = vector.shape_cast %89 : vector<1x128x128xbf16> to vector<128x128xbf16>
    %cst_75 = arith.constant dense<0.000000e+00> : vector<128x128xf32>
    %91 = tpu.matmul %88, %90, %cst_75 {dimension_numbers = #tpu.dot_dimension_numbers<[1], [0], [0], [1], [0, 0, 1, 1], [], []>} : vector<128x128xbf16>, vector<128x128xbf16>, vector<128x128xf32> -> vector<128x128xf32>
    %92 = arith.addf %85, %91 : vector<128x128xf32>
    %c0_76 = arith.constant 0 : index
    %c2_77 = arith.constant 2 : index
    %c1_78 = arith.constant 1 : index
    %c0_79 = arith.constant 0 : index
    %93 = vector.load %arg8[%c0_76, %c2_77, %c1_78, %c0_79] : memref<2x10x10x128xf32, #tpu.memory_space<vmem>>, vector<2x8x8x128xf32>
    %94 = arith.truncf %93 : vector<2x8x8x128xf32> to vector<2x8x8x128xbf16>
    %95 = vector.shape_cast %94 : vector<2x8x8x128xbf16> to vector<128x128xbf16>
    %c7 = arith.constant 7 : index
    %c0_80 = arith.constant 0 : index
    %c0_81 = arith.constant 0 : index
    %96 = vector.load %arg3[%c7, %c0_80, %c0_81] : memref<9x128x128xbf16, #tpu.memory_space<vmem>>, vector<1x128x128xbf16>
    %97 = vector.shape_cast %96 : vector<1x128x128xbf16> to vector<128x128xbf16>
    %cst_82 = arith.constant dense<0.000000e+00> : vector<128x128xf32>
    %98 = tpu.matmul %95, %97, %cst_82 {dimension_numbers = #tpu.dot_dimension_numbers<[1], [0], [0], [1], [0, 0, 1, 1], [], []>} : vector<128x128xbf16>, vector<128x128xbf16>, vector<128x128xf32> -> vector<128x128xf32>
    %99 = arith.addf %92, %98 : vector<128x128xf32>
    %c0_83 = arith.constant 0 : index
    %c2_84 = arith.constant 2 : index
    %c2_85 = arith.constant 2 : index
    %c0_86 = arith.constant 0 : index
    %100 = vector.load %arg8[%c0_83, %c2_84, %c2_85, %c0_86] : memref<2x10x10x128xf32, #tpu.memory_space<vmem>>, vector<2x8x8x128xf32>
    %101 = arith.truncf %100 : vector<2x8x8x128xf32> to vector<2x8x8x128xbf16>
    %102 = vector.shape_cast %101 : vector<2x8x8x128xbf16> to vector<128x128xbf16>
    %c8 = arith.constant 8 : index
    %c0_87 = arith.constant 0 : index
    %c0_88 = arith.constant 0 : index
    %103 = vector.load %arg3[%c8, %c0_87, %c0_88] : memref<9x128x128xbf16, #tpu.memory_space<vmem>>, vector<1x128x128xbf16>
    %104 = vector.shape_cast %103 : vector<1x128x128xbf16> to vector<128x128xbf16>
    %cst_89 = arith.constant dense<0.000000e+00> : vector<128x128xf32>
    %105 = tpu.matmul %102, %104, %cst_89 {dimension_numbers = #tpu.dot_dimension_numbers<[1], [0], [0], [1], [0, 0, 1, 1], [], []>} : vector<128x128xbf16>, vector<128x128xbf16>, vector<128x128xf32> -> vector<128x128xf32>
    %106 = arith.addf %99, %105 : vector<128x128xf32>
    %107 = vector.shape_cast %106 : vector<128x128xf32> to vector<2x64x128xf32>
    %c1_90 = arith.constant 1 : index
    %c0_91 = arith.constant 0 : index
    %c0_92 = arith.constant 0 : index
    %108 = vector.load %arg5[%c1_90, %c0_91, %c0_92] : memref<3x3x128xf32, #tpu.memory_space<vmem>>, vector<1x3x128xf32>
    %109 = vector.shape_cast %108 : vector<1x3x128xf32> to vector<3x128xf32>
    %110 = vector.extract_strided_slice %109 {offsets = [0, 0], sizes = [1, 128], strides = [1, 1]} : vector<3x128xf32> to vector<1x128xf32>
    %111 = vector.extract_strided_slice %109 {offsets = [1, 0], sizes = [1, 128], strides = [1, 1]} : vector<3x128xf32> to vector<1x128xf32>
    %112 = vector.extract_strided_slice %109 {offsets = [2, 0], sizes = [1, 128], strides = [1, 1]} : vector<3x128xf32> to vector<1x128xf32>
    %113 = vector.shape_cast %110 : vector<1x128xf32> to vector<1x1x128xf32>
    %114 = vector.broadcast %113 : vector<1x1x128xf32> to vector<2x64x128xf32>
    %115 = arith.addf %107, %114 : vector<2x64x128xf32>
    %cst_93 = arith.constant 0.000000e+00 : f32
    %116 = vector.broadcast %cst_93 : f32 to vector<2x64x128xf32>
    %117 = arith.maximumf %115, %116 : vector<2x64x128xf32>
    %cst_94 = arith.constant dense<0.000000e+00> : vector<2x128xf32>
    %118 = vector.multi_reduction <add>, %117, %cst_94 [1] : vector<2x64x128xf32> to vector<2x128xf32>
    %119 = arith.mulf %117, %117 : vector<2x64x128xf32>
    %cst_95 = arith.constant dense<0.000000e+00> : vector<2x128xf32>
    %120 = vector.multi_reduction <add>, %119, %cst_95 [1] : vector<2x64x128xf32> to vector<2x128xf32>
    %cst_96 = arith.constant dense<0.000000e+00> : vector<2x128xf32>
    %121 = tpu.matmul %118, %0, %cst_96 {dimension_numbers = #tpu.dot_dimension_numbers<[1], [0], [0], [1], [0, 0, 1, 1], [], []>} : vector<2x128xf32>, vector<128x128xf32>, vector<2x128xf32> -> vector<2x128xf32>
    %cst_97 = arith.constant dense<0.000000e+00> : vector<2x128xf32>
    %122 = tpu.matmul %120, %0, %cst_97 {dimension_numbers = #tpu.dot_dimension_numbers<[1], [0], [0], [1], [0, 0, 1, 1], [], []>} : vector<2x128xf32>, vector<128x128xf32>, vector<2x128xf32> -> vector<2x128xf32>
    %123 = arith.mulf %121, %121 : vector<2x128xf32>
    %124 = arith.subf %122, %123 : vector<2x128xf32>
    %cst_98 = arith.constant 0.000000e+00 : f32
    %125 = vector.broadcast %cst_98 : f32 to vector<2x128xf32>
    %126 = arith.maximumf %124, %125 : vector<2x128xf32>
    %cst_99 = arith.constant 9.99999974E-6 : f32
    %127 = vector.broadcast %cst_99 : f32 to vector<2x128xf32>
    %128 = arith.addf %126, %127 : vector<2x128xf32>
    %129 = math.rsqrt %128 : vector<2x128xf32>
    %130 = vector.broadcast %111 : vector<1x128xf32> to vector<2x128xf32>
    %131 = arith.mulf %129, %130 : vector<2x128xf32>
    %132 = arith.mulf %121, %131 : vector<2x128xf32>
    %133 = vector.broadcast %112 : vector<1x128xf32> to vector<2x128xf32>
    %134 = arith.subf %133, %132 : vector<2x128xf32>
    %135 = vector.shape_cast %131 : vector<2x128xf32> to vector<2x1x128xf32>
    %136 = vector.broadcast %135 : vector<2x1x128xf32> to vector<2x64x128xf32>
    %137 = arith.mulf %117, %136 : vector<2x64x128xf32>
    %138 = vector.shape_cast %134 : vector<2x128xf32> to vector<2x1x128xf32>
    %139 = vector.broadcast %138 : vector<2x1x128xf32> to vector<2x64x128xf32>
    %140 = arith.addf %137, %139 : vector<2x64x128xf32>
    %141 = vector.shape_cast %140 : vector<2x64x128xf32> to vector<2x8x8x128xf32>
    %c0_100 = arith.constant 0 : index
    %c1_101 = arith.constant 1 : index
    %c1_102 = arith.constant 1 : index
    %c0_103 = arith.constant 0 : index
    %142 = vector.load %arg8[%c0_100, %c1_101, %c1_102, %c0_103] : memref<2x10x10x128xf32, #tpu.memory_space<vmem>>, vector<2x8x8x128xf32>
    tpu.vector_store %arg8[%c0_100, %c1_101, %c1_102, %c0_103], %141 {strides = array<i32>} : memref<2x10x10x128xf32, #tpu.memory_space<vmem>>, vector<2x8x8x128xf32>,
    %cst_104 = arith.constant 0.000000e+00 : f32
    %143 = vector.broadcast %cst_104 : f32 to vector<128x128xf32>
    %c0_105 = arith.constant 0 : index
    %c0_106 = arith.constant 0 : index
    %c0_107 = arith.constant 0 : index
    %c0_108 = arith.constant 0 : index
    %144 = vector.load %arg8[%c0_105, %c0_106, %c0_107, %c0_108] : memref<2x10x10x128xf32, #tpu.memory_space<vmem>>, vector<2x8x8x128xf32>
    %145 = arith.truncf %144 : vector<2x8x8x128xf32> to vector<2x8x8x128xbf16>
    %146 = vector.shape_cast %145 : vector<2x8x8x128xbf16> to vector<128x128xbf16>
    %c0_109 = arith.constant 0 : index
    %c0_110 = arith.constant 0 : index
    %c0_111 = arith.constant 0 : index
    %147 = vector.load %arg4[%c0_109, %c0_110, %c0_111] : memref<9x128x128xbf16, #tpu.memory_space<vmem>>, vector<1x128x128xbf16>
    %148 = vector.shape_cast %147 : vector<1x128x128xbf16> to vector<128x128xbf16>
    %cst_112 = arith.constant dense<0.000000e+00> : vector<128x128xf32>
    %149 = tpu.matmul %146, %148, %cst_112 {dimension_numbers = #tpu.dot_dimension_numbers<[1], [0], [0], [1], [0, 0, 1, 1], [], []>} : vector<128x128xbf16>, vector<128x128xbf16>, vector<128x128xf32> -> vector<128x128xf32>
    %150 = arith.addf %143, %149 : vector<128x128xf32>
    %c0_113 = arith.constant 0 : index
    %c0_114 = arith.constant 0 : index
    %c1_115 = arith.constant 1 : index
    %c0_116 = arith.constant 0 : index
    %151 = vector.load %arg8[%c0_113, %c0_114, %c1_115, %c0_116] : memref<2x10x10x128xf32, #tpu.memory_space<vmem>>, vector<2x8x8x128xf32>
    %152 = arith.truncf %151 : vector<2x8x8x128xf32> to vector<2x8x8x128xbf16>
    %153 = vector.shape_cast %152 : vector<2x8x8x128xbf16> to vector<128x128xbf16>
    %c1_117 = arith.constant 1 : index
    %c0_118 = arith.constant 0 : index
    %c0_119 = arith.constant 0 : index
    %154 = vector.load %arg4[%c1_117, %c0_118, %c0_119] : memref<9x128x128xbf16, #tpu.memory_space<vmem>>, vector<1x128x128xbf16>
    %155 = vector.shape_cast %154 : vector<1x128x128xbf16> to vector<128x128xbf16>
    %cst_120 = arith.constant dense<0.000000e+00> : vector<128x128xf32>
    %156 = tpu.matmul %153, %155, %cst_120 {dimension_numbers = #tpu.dot_dimension_numbers<[1], [0], [0], [1], [0, 0, 1, 1], [], []>} : vector<128x128xbf16>, vector<128x128xbf16>, vector<128x128xf32> -> vector<128x128xf32>
    %157 = arith.addf %150, %156 : vector<128x128xf32>
    %c0_121 = arith.constant 0 : index
    %c0_122 = arith.constant 0 : index
    %c2_123 = arith.constant 2 : index
    %c0_124 = arith.constant 0 : index
    %158 = vector.load %arg8[%c0_121, %c0_122, %c2_123, %c0_124] : memref<2x10x10x128xf32, #tpu.memory_space<vmem>>, vector<2x8x8x128xf32>
    %159 = arith.truncf %158 : vector<2x8x8x128xf32> to vector<2x8x8x128xbf16>
    %160 = vector.shape_cast %159 : vector<2x8x8x128xbf16> to vector<128x128xbf16>
    %c2_125 = arith.constant 2 : index
    %c0_126 = arith.constant 0 : index
    %c0_127 = arith.constant 0 : index
    %161 = vector.load %arg4[%c2_125, %c0_126, %c0_127] : memref<9x128x128xbf16, #tpu.memory_space<vmem>>, vector<1x128x128xbf16>
    %162 = vector.shape_cast %161 : vector<1x128x128xbf16> to vector<128x128xbf16>
    %cst_128 = arith.constant dense<0.000000e+00> : vector<128x128xf32>
    %163 = tpu.matmul %160, %162, %cst_128 {dimension_numbers = #tpu.dot_dimension_numbers<[1], [0], [0], [1], [0, 0, 1, 1], [], []>} : vector<128x128xbf16>, vector<128x128xbf16>, vector<128x128xf32> -> vector<128x128xf32>
    %164 = arith.addf %157, %163 : vector<128x128xf32>
    %c0_129 = arith.constant 0 : index
    %c1_130 = arith.constant 1 : index
    %c0_131 = arith.constant 0 : index
    %c0_132 = arith.constant 0 : index
    %165 = vector.load %arg8[%c0_129, %c1_130, %c0_131, %c0_132] : memref<2x10x10x128xf32, #tpu.memory_space<vmem>>, vector<2x8x8x128xf32>
    %166 = arith.truncf %165 : vector<2x8x8x128xf32> to vector<2x8x8x128xbf16>
    %167 = vector.shape_cast %166 : vector<2x8x8x128xbf16> to vector<128x128xbf16>
    %c3_133 = arith.constant 3 : index
    %c0_134 = arith.constant 0 : index
    %c0_135 = arith.constant 0 : index
    %168 = vector.load %arg4[%c3_133, %c0_134, %c0_135] : memref<9x128x128xbf16, #tpu.memory_space<vmem>>, vector<1x128x128xbf16>
    %169 = vector.shape_cast %168 : vector<1x128x128xbf16> to vector<128x128xbf16>
    %cst_136 = arith.constant dense<0.000000e+00> : vector<128x128xf32>
    %170 = tpu.matmul %167, %169, %cst_136 {dimension_numbers = #tpu.dot_dimension_numbers<[1], [0], [0], [1], [0, 0, 1, 1], [], []>} : vector<128x128xbf16>, vector<128x128xbf16>, vector<128x128xf32> -> vector<128x128xf32>
    %171 = arith.addf %164, %170 : vector<128x128xf32>
    %c0_137 = arith.constant 0 : index
    %c1_138 = arith.constant 1 : index
    %c1_139 = arith.constant 1 : index
    %c0_140 = arith.constant 0 : index
    %172 = vector.load %arg8[%c0_137, %c1_138, %c1_139, %c0_140] : memref<2x10x10x128xf32, #tpu.memory_space<vmem>>, vector<2x8x8x128xf32>
    %173 = arith.truncf %172 : vector<2x8x8x128xf32> to vector<2x8x8x128xbf16>
    %174 = vector.shape_cast %173 : vector<2x8x8x128xbf16> to vector<128x128xbf16>
    %c4_141 = arith.constant 4 : index
    %c0_142 = arith.constant 0 : index
    %c0_143 = arith.constant 0 : index
    %175 = vector.load %arg4[%c4_141, %c0_142, %c0_143] : memref<9x128x128xbf16, #tpu.memory_space<vmem>>, vector<1x128x128xbf16>
    %176 = vector.shape_cast %175 : vector<1x128x128xbf16> to vector<128x128xbf16>
    %cst_144 = arith.constant dense<0.000000e+00> : vector<128x128xf32>
    %177 = tpu.matmul %174, %176, %cst_144 {dimension_numbers = #tpu.dot_dimension_numbers<[1], [0], [0], [1], [0, 0, 1, 1], [], []>} : vector<128x128xbf16>, vector<128x128xbf16>, vector<128x128xf32> -> vector<128x128xf32>
    %178 = arith.addf %171, %177 : vector<128x128xf32>
    %c0_145 = arith.constant 0 : index
    %c1_146 = arith.constant 1 : index
    %c2_147 = arith.constant 2 : index
    %c0_148 = arith.constant 0 : index
    %179 = vector.load %arg8[%c0_145, %c1_146, %c2_147, %c0_148] : memref<2x10x10x128xf32, #tpu.memory_space<vmem>>, vector<2x8x8x128xf32>
    %180 = arith.truncf %179 : vector<2x8x8x128xf32> to vector<2x8x8x128xbf16>
    %181 = vector.shape_cast %180 : vector<2x8x8x128xbf16> to vector<128x128xbf16>
    %c5_149 = arith.constant 5 : index
    %c0_150 = arith.constant 0 : index
    %c0_151 = arith.constant 0 : index
    %182 = vector.load %arg4[%c5_149, %c0_150, %c0_151] : memref<9x128x128xbf16, #tpu.memory_space<vmem>>, vector<1x128x128xbf16>
    %183 = vector.shape_cast %182 : vector<1x128x128xbf16> to vector<128x128xbf16>
    %cst_152 = arith.constant dense<0.000000e+00> : vector<128x128xf32>
    %184 = tpu.matmul %181, %183, %cst_152 {dimension_numbers = #tpu.dot_dimension_numbers<[1], [0], [0], [1], [0, 0, 1, 1], [], []>} : vector<128x128xbf16>, vector<128x128xbf16>, vector<128x128xf32> -> vector<128x128xf32>
    %185 = arith.addf %178, %184 : vector<128x128xf32>
    %c0_153 = arith.constant 0 : index
    %c2_154 = arith.constant 2 : index
    %c0_155 = arith.constant 0 : index
    %c0_156 = arith.constant 0 : index
    %186 = vector.load %arg8[%c0_153, %c2_154, %c0_155, %c0_156] : memref<2x10x10x128xf32, #tpu.memory_space<vmem>>, vector<2x8x8x128xf32>
    %187 = arith.truncf %186 : vector<2x8x8x128xf32> to vector<2x8x8x128xbf16>
    %188 = vector.shape_cast %187 : vector<2x8x8x128xbf16> to vector<128x128xbf16>
    %c6_157 = arith.constant 6 : index
    %c0_158 = arith.constant 0 : index
    %c0_159 = arith.constant 0 : index
    %189 = vector.load %arg4[%c6_157, %c0_158, %c0_159] : memref<9x128x128xbf16, #tpu.memory_space<vmem>>, vector<1x128x128xbf16>
    %190 = vector.shape_cast %189 : vector<1x128x128xbf16> to vector<128x128xbf16>
    %cst_160 = arith.constant dense<0.000000e+00> : vector<128x128xf32>
    %191 = tpu.matmul %188, %190, %cst_160 {dimension_numbers = #tpu.dot_dimension_numbers<[1], [0], [0], [1], [0, 0, 1, 1], [], []>} : vector<128x128xbf16>, vector<128x128xbf16>, vector<128x128xf32> -> vector<128x128xf32>
    %192 = arith.addf %185, %191 : vector<128x128xf32>
    %c0_161 = arith.constant 0 : index
    %c2_162 = arith.constant 2 : index
    %c1_163 = arith.constant 1 : index
    %c0_164 = arith.constant 0 : index
    %193 = vector.load %arg8[%c0_161, %c2_162, %c1_163, %c0_164] : memref<2x10x10x128xf32, #tpu.memory_space<vmem>>, vector<2x8x8x128xf32>
    %194 = arith.truncf %193 : vector<2x8x8x128xf32> to vector<2x8x8x128xbf16>
    %195 = vector.shape_cast %194 : vector<2x8x8x128xbf16> to vector<128x128xbf16>
    %c7_165 = arith.constant 7 : index
    %c0_166 = arith.constant 0 : index
    %c0_167 = arith.constant 0 : index
    %196 = vector.load %arg4[%c7_165, %c0_166, %c0_167] : memref<9x128x128xbf16, #tpu.memory_space<vmem>>, vector<1x128x128xbf16>
    %197 = vector.shape_cast %196 : vector<1x128x128xbf16> to vector<128x128xbf16>
    %cst_168 = arith.constant dense<0.000000e+00> : vector<128x128xf32>
    %198 = tpu.matmul %195, %197, %cst_168 {dimension_numbers = #tpu.dot_dimension_numbers<[1], [0], [0], [1], [0, 0, 1, 1], [], []>} : vector<128x128xbf16>, vector<128x128xbf16>, vector<128x128xf32> -> vector<128x128xf32>
    %199 = arith.addf %192, %198 : vector<128x128xf32>
    %c0_169 = arith.constant 0 : index
    %c2_170 = arith.constant 2 : index
    %c2_171 = arith.constant 2 : index
    %c0_172 = arith.constant 0 : index
    %200 = vector.load %arg8[%c0_169, %c2_170, %c2_171, %c0_172] : memref<2x10x10x128xf32, #tpu.memory_space<vmem>>, vector<2x8x8x128xf32>
    %201 = arith.truncf %200 : vector<2x8x8x128xf32> to vector<2x8x8x128xbf16>
    %202 = vector.shape_cast %201 : vector<2x8x8x128xbf16> to vector<128x128xbf16>
    %c8_173 = arith.constant 8 : index
    %c0_174 = arith.constant 0 : index
    %c0_175 = arith.constant 0 : index
    %203 = vector.load %arg4[%c8_173, %c0_174, %c0_175] : memref<9x128x128xbf16, #tpu.memory_space<vmem>>, vector<1x128x128xbf16>
    %204 = vector.shape_cast %203 : vector<1x128x128xbf16> to vector<128x128xbf16>
    %cst_176 = arith.constant dense<0.000000e+00> : vector<128x128xf32>
    %205 = tpu.matmul %202, %204, %cst_176 {dimension_numbers = #tpu.dot_dimension_numbers<[1], [0], [0], [1], [0, 0, 1, 1], [], []>} : vector<128x128xbf16>, vector<128x128xbf16>, vector<128x128xf32> -> vector<128x128xf32>
    %206 = arith.addf %199, %205 : vector<128x128xf32>
    %207 = vector.shape_cast %206 : vector<128x128xf32> to vector<2x64x128xf32>
    %c2_177 = arith.constant 2 : index
    %c0_178 = arith.constant 0 : index
    %c0_179 = arith.constant 0 : index
    %208 = vector.load %arg5[%c2_177, %c0_178, %c0_179] : memref<3x3x128xf32, #tpu.memory_space<vmem>>, vector<1x3x128xf32>
    %209 = vector.shape_cast %208 : vector<1x3x128xf32> to vector<3x128xf32>
    %210 = vector.extract_strided_slice %209 {offsets = [0, 0], sizes = [1, 128], strides = [1, 1]} : vector<3x128xf32> to vector<1x128xf32>
    %211 = vector.extract_strided_slice %209 {offsets = [1, 0], sizes = [1, 128], strides = [1, 1]} : vector<3x128xf32> to vector<1x128xf32>
    %212 = vector.extract_strided_slice %209 {offsets = [2, 0], sizes = [1, 128], strides = [1, 1]} : vector<3x128xf32> to vector<1x128xf32>
    %213 = vector.shape_cast %210 : vector<1x128xf32> to vector<1x1x128xf32>
    %214 = vector.broadcast %213 : vector<1x1x128xf32> to vector<2x64x128xf32>
    %215 = arith.addf %207, %214 : vector<2x64x128xf32>
    %cst_180 = arith.constant 0.000000e+00 : f32
    %216 = vector.broadcast %cst_180 : f32 to vector<2x64x128xf32>
    %217 = arith.maximumf %215, %216 : vector<2x64x128xf32>
    %cst_181 = arith.constant dense<0.000000e+00> : vector<2x128xf32>
    %218 = vector.multi_reduction <add>, %217, %cst_181 [1] : vector<2x64x128xf32> to vector<2x128xf32>
    %219 = arith.mulf %217, %217 : vector<2x64x128xf32>
    %cst_182 = arith.constant dense<0.000000e+00> : vector<2x128xf32>
    %220 = vector.multi_reduction <add>, %219, %cst_182 [1] : vector<2x64x128xf32> to vector<2x128xf32>
    %cst_183 = arith.constant dense<0.000000e+00> : vector<2x128xf32>
    %221 = tpu.matmul %218, %0, %cst_183 {dimension_numbers = #tpu.dot_dimension_numbers<[1], [0], [0], [1], [0, 0, 1, 1], [], []>} : vector<2x128xf32>, vector<128x128xf32>, vector<2x128xf32> -> vector<2x128xf32>
    %cst_184 = arith.constant dense<0.000000e+00> : vector<2x128xf32>
    %222 = tpu.matmul %220, %0, %cst_184 {dimension_numbers = #tpu.dot_dimension_numbers<[1], [0], [0], [1], [0, 0, 1, 1], [], []>} : vector<2x128xf32>, vector<128x128xf32>, vector<2x128xf32> -> vector<2x128xf32>
    %223 = arith.mulf %221, %221 : vector<2x128xf32>
    %224 = arith.subf %222, %223 : vector<2x128xf32>
    %cst_185 = arith.constant 0.000000e+00 : f32
    %225 = vector.broadcast %cst_185 : f32 to vector<2x128xf32>
    %226 = arith.maximumf %224, %225 : vector<2x128xf32>
    %cst_186 = arith.constant 9.99999974E-6 : f32
    %227 = vector.broadcast %cst_186 : f32 to vector<2x128xf32>
    %228 = arith.addf %226, %227 : vector<2x128xf32>
    %229 = math.rsqrt %228 : vector<2x128xf32>
    %230 = vector.broadcast %211 : vector<1x128xf32> to vector<2x128xf32>
    %231 = arith.mulf %229, %230 : vector<2x128xf32>
    %232 = arith.mulf %221, %231 : vector<2x128xf32>
    %233 = vector.broadcast %212 : vector<1x128xf32> to vector<2x128xf32>
    %234 = arith.subf %233, %232 : vector<2x128xf32>
    %cst_187 = arith.constant 1.562500e-02 : f32
    %235 = vector.broadcast %cst_187 : f32 to vector<2x128xf32>
    %236 = arith.mulf %231, %235 : vector<2x128xf32>
    %237 = arith.mulf %218, %236 : vector<2x128xf32>
    %238 = arith.addf %237, %234 : vector<2x128xf32>
    %c0_188 = arith.constant 0 : index
    %c0_189 = arith.constant 0 : index
    %c0_190 = arith.constant 0 : index
    %239 = vector.load %arg7[%c0_188, %c0_189, %c0_190] : memref<1x2x128xf32, #tpu.memory_space<vmem>>, vector<1x2x128xf32>
    %240 = vector.shape_cast %239 : vector<1x2x128xf32> to vector<2x128xf32>
    %241 = vector.shape_cast %238 : vector<2x128xf32> to vector<1x2x128xf32>
    tpu.vector_store %arg7[%c0_188, %c0_189, %c0_190], %241 {strides = array<i32>} : memref<1x2x128xf32, #tpu.memory_space<vmem>>, vector<1x2x128xf32>,
    return
  }
  func.func @transform_0(%arg0: i32) -> (i32, i32, i32) {
    %c0_i32 = arith.constant 0 : i32
    %c0_i32_0 = arith.constant 0 : i32
    %c0_i32_1 = arith.constant 0 : i32
    return %arg0, %c0_i32, %c0_i32_0 : i32, i32, i32
  }
  func.func @transform_1(%arg0: i32) -> (i32, i32) {
    %c0_i32 = arith.constant 0 : i32
    %c0_i32_0 = arith.constant 0 : i32
    %c0_i32_1 = arith.constant 0 : i32
    return %c0_i32, %c0_i32_0 : i32, i32
  }
  func.func @transform_2(%arg0: i32) -> (i32, i32, i32) {
    %c0_i32 = arith.constant 0 : i32
    %c0_i32_0 = arith.constant 0 : i32
    %c0_i32_1 = arith.constant 0 : i32
    %c0_i32_2 = arith.constant 0 : i32
    return %c0_i32, %c0_i32_0, %c0_i32_1 : i32, i32, i32
  }
  func.func @transform_3(%arg0: i32) -> (i32, i32, i32) {
    %c0_i32 = arith.constant 0 : i32
    %c0_i32_0 = arith.constant 0 : i32
    %c0_i32_1 = arith.constant 0 : i32
    %c0_i32_2 = arith.constant 0 : i32
    return %c0_i32, %c0_i32_0, %c0_i32_1 : i32, i32, i32
  }
  func.func @transform_4(%arg0: i32) -> (i32, i32, i32) {
    %c0_i32 = arith.constant 0 : i32
    %c0_i32_0 = arith.constant 0 : i32
    %c0_i32_1 = arith.constant 0 : i32
    %c0_i32_2 = arith.constant 0 : i32
    return %c0_i32, %c0_i32_0, %c0_i32_1 : i32, i32, i32
  }
  func.func @transform_5(%arg0: i32) -> (i32, i32) {
    %c0_i32 = arith.constant 0 : i32
    %c0_i32_0 = arith.constant 0 : i32
    %c0_i32_1 = arith.constant 0 : i32
    return %c0_i32, %c0_i32_0 : i32, i32
  }
  func.func @transform_6(%arg0: i32) -> (i32, i32, i32) {
    %c0_i32 = arith.constant 0 : i32
    %c0_i32_0 = arith.constant 0 : i32
    %c0_i32_1 = arith.constant 0 : i32
    return %arg0, %c0_i32, %c0_i32_0 : i32, i32, i32
  }
}

</mosaic_0001>

<llo_original>
// kernel: _lambda_.2
$region0: #{_lambda_.2}
  #allocation0 [shape = 'u32[]', space=smem, size = 0x4, offset = 0x4, fixed_abs, tag = 'smem constant byte address 0x4 - core index']
  #allocation1 [shape = 'u32[72,128]{1,0:T(1,128)}', space=vmem, size = 0x9000, scoped, tag = 'internal scratch']
  %s0 = inlined_call_operand.vmem [shape: bf16[2,256,128], index: 0, kind: input, shape index: {}]
  %s1 = inlined_call_operand.vmem [shape: bf16[128,128], index: 1, kind: input, shape index: {}]
  %s2 = inlined_call_operand.vmem [shape: f32[3,128], index: 2, kind: input, shape index: {}]
  %s3 = inlined_call_operand.vmem [shape: f32[128,128], index: 3, kind: input, shape index: {}]
  %s4 = inlined_call_operand.vmem [shape: bf16[2,256,128], index: 4, kind: output, shape index: {}]
  %s5 = sld [smem:[#allocation0]]
  $region26: #{_lambda_.2} parent=0
    _
  %s7 = ssub.s32 1, %s5
  %s8 = scalar_select 0, %s7, %s5
  // Predicated region
  $region2: #{_lambda_.2} parent=0 // pred_check
    _
  $region3: #{_lambda_.2} parent=0 // pred_check_branch
    %10 = sbr.rel (0) target = $region5
  $region4: #{_lambda_.2} parent=0 // pred_region
    _
  $region5: #{_lambda_.2} parent=0 // pred_fallthru
    _
  // Predicated region
  $region6: #{_lambda_.2} parent=0 // pred_check
    _
  $region7: #{_lambda_.2} parent=0 // pred_check_branch
    %12 = sbr.rel (0) target = $region9
  $region8: #{_lambda_.2} parent=0 // pred_region
    _
  $region9: #{_lambda_.2} parent=0 // pred_fallthru
    _
  // Predicated region
  $region10: #{_lambda_.2} parent=0 // pred_check
    _
  $region11: #{_lambda_.2} parent=0 // pred_check_branch
    %14 = sbr.rel (0) target = $region13
  $region12: #{_lambda_.2} parent=0 // pred_region
    _
  $region13: #{_lambda_.2} parent=0 // pred_fallthru
    _
  // Predicated region
  $region14: #{_lambda_.2} parent=0 // pred_check
    _
  $region15: #{_lambda_.2} parent=0 // pred_check_branch
    %16 = sbr.rel (0) target = $region17
  $region16: #{_lambda_.2} parent=0 // pred_region
    _
  $region17: #{_lambda_.2} parent=0 // pred_fallthru
    _
  %v17 = vld [vmem:[%s0] sm:$0xf]
  %v18 = vld [vmem:[%s0 + $0x4] sm:$0xf]
  %v19 = vld [vmem:[%s0 + $0x8] sm:$0xf]
  %v20 = vld [vmem:[%s0 + $0xc] sm:$0xf]
  %v21 = vld [vmem:[%s0 + $0x10] sm:$0xf]
  %v22 = vld [vmem:[%s0 + $0x14] sm:$0xf]
  %v23 = vld [vmem:[%s0 + $0x18] sm:$0xf]
  %v24 = vld [vmem:[%s0 + $0x1c] sm:$0xf]
  %v25 = vld [vmem:[%s0 + $0x20] sm:$0xf]
  %v26 = vld [vmem:[%s0 + $0x24] sm:$0xf]
  %v27 = vld [vmem:[%s0 + $0x28] sm:$0xf]
  %v28 = vld [vmem:[%s0 + $0x2c] sm:$0xf]
  %v29 = vld [vmem:[%s0 + $0x30] sm:$0xf]
  %v30 = vld [vmem:[%s0 + $0x34] sm:$0xf]
  %v31 = vld [vmem:[%s0 + $0x38] sm:$0xf]
  %v32 = vld [vmem:[%s0 + $0x3c] sm:$0xf]
  %v33 = vld [vmem:[%s0 + $0x40] sm:$0xf]
  %v34 = vld [vmem:[%s0 + $0x44] sm:$0xf]
  %v35 = vld [vmem:[%s0 + $0x48] sm:$0xf]
  %v36 = vld [vmem:[%s0 + $0x4c] sm:$0xf]
  %v37 = vld [vmem:[%s0 + $0x50] sm:$0xf]
  %v38 = vld [vmem:[%s0 + $0x54] sm:$0xf]
  %v39 = vld [vmem:[%s0 + $0x58] sm:$0xf]
  %v40 = vld [vmem:[%s0 + $0x5c] sm:$0xf]
  %v41 = vld [vmem:[%s0 + $0x60] sm:$0xf]
  %v42 = vld [vmem:[%s0 + $0x64] sm:$0xf]
  %v43 = vld [vmem:[%s0 + $0x68] sm:$0xf]
  %v44 = vld [vmem:[%s0 + $0x6c] sm:$0xf]
  %v45 = vld [vmem:[%s0 + $0x70] sm:$0xf]
  %v46 = vld [vmem:[%s0 + $0x74] sm:$0xf]
  %v47 = vld [vmem:[%s0 + $0x78] sm:$0xf]
  %v48 = vld [vmem:[%s0 + $0x7c] sm:$0xf]
  %v49 = vld [vmem:[%s0 + $0x80] sm:$0xf]
  %v50 = vld [vmem:[%s0 + $0x84] sm:$0xf]
  %v51 = vld [vmem:[%s0 + $0x88] sm:$0xf]
  %v52 = vld [vmem:[%s0 + $0x8c] sm:$0xf]
  %v53 = vld [vmem:[%s0 + $0x90] sm:$0xf]
  %v54 = vld [vmem:[%s0 + $0x94] sm:$0xf]
  %v55 = vld [vmem:[%s0 + $0x98] sm:$0xf]
  %v56 = vld [vmem:[%s0 + $0x9c] sm:$0xf]
  %v57 = vld [vmem:[%s0 + $0xa0] sm:$0xf]
  %v58 = vld [vmem:[%s0 + $0xa4] sm:$0xf]
  %v59 = vld [vmem:[%s0 + $0xa8] sm:$0xf]
  %v60 = vld [vmem:[%s0 + $0xac] sm:$0xf]
  %v61 = vld [vmem:[%s0 + $0xb0] sm:$0xf]
  %v62 = vld [vmem:[%s0 + $0xb4] sm:$0xf]
  %v63 = vld [vmem:[%s0 + $0xb8] sm:$0xf]
  %v64 = vld [vmem:[%s0 + $0xbc] sm:$0xf]
  %v65 = vld [vmem:[%s0 + $0xc0] sm:$0xf]
  %v66 = vld [vmem:[%s0 + $0xc4] sm:$0xf]
  %v67 = vld [vmem:[%s0 + $0xc8] sm:$0xf]
  %v68 = vld [vmem:[%s0 + $0xcc] sm:$0xf]
  %v69 = vld [vmem:[%s0 + $0xd0] sm:$0xf]
  %v70 = vld [vmem:[%s0 + $0xd4] sm:$0xf]
  %v71 = vld [vmem:[%s0 + $0xd8] sm:$0xf]
  %v72 = vld [vmem:[%s0 + $0xdc] sm:$0xf]
  %v73 = vld [vmem:[%s0 + $0xe0] sm:$0xf]
  %v74 = vld [vmem:[%s0 + $0xe4] sm:$0xf]
  %v75 = vld [vmem:[%s0 + $0xe8] sm:$0xf]
  %v76 = vld [vmem:[%s0 + $0xec] sm:$0xf]
  %v77 = vld [vmem:[%s0 + $0xf0] sm:$0xf]
  %v78 = vld [vmem:[%s0 + $0xf4] sm:$0xf]
  %v79 = vld [vmem:[%s0 + $0xf8] sm:$0xf]
  %v80 = vld [vmem:[%s0 + $0xfc] sm:$0xf]
  %v81 = vld [vmem:[%s1] sm:$0xf]
  %v82 = vld [vmem:[%s1 + $0x4] sm:$0xf]
  %v83 = vld [vmem:[%s1 + $0x8] sm:$0xf]
  %v84 = vld [vmem:[%s1 + $0xc] sm:$0xf]
  %v85 = vld [vmem:[%s1 + $0x10] sm:$0xf]
  %v86 = vld [vmem:[%s1 + $0x14] sm:$0xf]
  %v87 = vld [vmem:[%s1 + $0x18] sm:$0xf]
  %v88 = vld [vmem:[%s1 + $0x1c] sm:$0xf]
  %v89 = vld [vmem:[%s1 + $0x20] sm:$0xf]
  %v90 = vld [vmem:[%s1 + $0x24] sm:$0xf]
  %v91 = vld [vmem:[%s1 + $0x28] sm:$0xf]
  %v92 = vld [vmem:[%s1 + $0x2c] sm:$0xf]
  %v93 = vld [vmem:[%s1 + $0x30] sm:$0xf]
  %v94 = vld [vmem:[%s1 + $0x34] sm:$0xf]
  %v95 = vld [vmem:[%s1 + $0x38] sm:$0xf]
  %v96 = vld [vmem:[%s1 + $0x3c] sm:$0xf]
  %v161 = vunpack.c.l.b16 %v17
  %v162 = vunpack.c.l.b16 %v18
  %v163 = vunpack.c.l.b16 %v19
  %v164 = vunpack.c.l.b16 %v20
  %v165 = vunpack.c.l.b16 %v21
  %v166 = vunpack.c.l.b16 %v22
  %v167 = vunpack.c.l.b16 %v23
  %v168 = vunpack.c.l.b16 %v24
  %v169 = vunpack.c.l.b16 %v25
  %v170 = vunpack.c.l.b16 %v26
  %v171 = vunpack.c.l.b16 %v27
  %v172 = vunpack.c.l.b16 %v28
  %v173 = vunpack.c.l.b16 %v29
  %v174 = vunpack.c.l.b16 %v30
  %v175 = vunpack.c.l.b16 %v31
  %v176 = vunpack.c.l.b16 %v32
  %v177 = vunpack.c.l.b16 %v33
  %v178 = vunpack.c.l.b16 %v34
  %v179 = vunpack.c.l.b16 %v35
  %v180 = vunpack.c.l.b16 %v36
  %v181 = vunpack.c.l.b16 %v37
  %v182 = vunpack.c.l.b16 %v38
  %v183 = vunpack.c.l.b16 %v39
  %v184 = vunpack.c.l.b16 %v40
  %v185 = vunpack.c.l.b16 %v41
  %v186 = vunpack.c.l.b16 %v42
  %v187 = vunpack.c.l.b16 %v43
  %v188 = vunpack.c.l.b16 %v44
  %v189 = vunpack.c.l.b16 %v45
  %v190 = vunpack.c.l.b16 %v46
  %v191 = vunpack.c.l.b16 %v47
  %v192 = vunpack.c.l.b16 %v48
  %v193 = vunpack.c.l.b16 %v49
  %v194 = vunpack.c.l.b16 %v50
  %v195 = vunpack.c.l.b16 %v51
  %v196 = vunpack.c.l.b16 %v52
  %v197 = vunpack.c.l.b16 %v53
  %v198 = vunpack.c.l.b16 %v54
  %v199 = vunpack.c.l.b16 %v55
  %v200 = vunpack.c.l.b16 %v56
  %v201 = vunpack.c.l.b16 %v57
  %v202 = vunpack.c.l.b16 %v58
  %v203 = vunpack.c.l.b16 %v59
  %v204 = vunpack.c.l.b16 %v60
  %v205 = vunpack.c.l.b16 %v61
  %v206 = vunpack.c.l.b16 %v62
  %v207 = vunpack.c.l.b16 %v63
  %v208 = vunpack.c.l.b16 %v64
  %v209 = vunpack.c.l.b16 %v65
  %v210 = vunpack.c.l.b16 %v66
  %v211 = vunpack.c.l.b16 %v67
  %v212 = vunpack.c.l.b16 %v68
  %v213 = vunpack.c.l.b16 %v69
  %v214 = vunpack.c.l.b16 %v70
  %v215 = vunpack.c.l.b16 %v71
  %v216 = vunpack.c.l.b16 %v72
  %v217 = vunpack.c.l.b16 %v73
  %v218 = vunpack.c.l.b16 %v74
  %v219 = vunpack.c.l.b16 %v75
  %v220 = vunpack.c.l.b16 %v76
  %v221 = vunpack.c.l.b16 %v77
  %v222 = vunpack.c.l.b16 %v78
  %v223 = vunpack.c.l.b16 %v79
  %v224 = vunpack.c.l.b16 %v80
  %v225 = vpack.c.b16 %v162, %v161
  %v226 = vpack.c.b16 %v164, %v163
  %v227 = vpack.c.b16 %v166, %v165
  %v228 = vpack.c.b16 %v168, %v167
  %v229 = vpack.c.b16 %v170, %v169
  %v230 = vpack.c.b16 %v172, %v171
  %v231 = vpack.c.b16 %v174, %v173
  %v232 = vpack.c.b16 %v176, %v175
  %v233 = vpack.c.b16 %v178, %v177
  %v234 = vpack.c.b16 %v180, %v179
  %v235 = vpack.c.b16 %v182, %v181
  %v236 = vpack.c.b16 %v184, %v183
  %v237 = vpack.c.b16 %v186, %v185
  %v238 = vpack.c.b16 %v188, %v187
  %v239 = vpack.c.b16 %v190, %v189
  %v240 = vpack.c.b16 %v192, %v191
  %v241 = vpack.c.b16 %v194, %v193
  %v242 = vpack.c.b16 %v196, %v195
  %v243 = vpack.c.b16 %v198, %v197
  %v244 = vpack.c.b16 %v200, %v199
  %v245 = vpack.c.b16 %v202, %v201
  %v246 = vpack.c.b16 %v204, %v203
  %v247 = vpack.c.b16 %v206, %v205
  %v248 = vpack.c.b16 %v208, %v207
  %v249 = vpack.c.b16 %v210, %v209
  %v250 = vpack.c.b16 %v212, %v211
  %v251 = vpack.c.b16 %v214, %v213
  %v252 = vpack.c.b16 %v216, %v215
  %v253 = vpack.c.b16 %v218, %v217
  %v254 = vpack.c.b16 %v220, %v219
  %v255 = vpack.c.b16 %v222, %v221
  %v256 = vpack.c.b16 %v224, %v223
  %v305 = vunpack.c.l.b16 %v81
  %v306 = vunpack.c.l.b16 %v82
  %v307 = vunpack.c.l.b16 %v83
  %v308 = vunpack.c.l.b16 %v84
  %v309 = vunpack.c.l.b16 %v85
  %v310 = vunpack.c.l.b16 %v86
  %v311 = vunpack.c.l.b16 %v87
  %v312 = vunpack.c.l.b16 %v88
  %v313 = vunpack.c.l.b16 %v89
  %v314 = vunpack.c.l.b16 %v90
  %v315 = vunpack.c.l.b16 %v91
  %v316 = vunpack.c.l.b16 %v92
  %v317 = vunpack.c.l.b16 %v93
  %v318 = vunpack.c.l.b16 %v94
  %v319 = vunpack.c.l.b16 %v95
  %v320 = vunpack.c.l.b16 %v96
  %v321 = vpack.c.b16 %v306, %v305
  %v322 = vpack.c.b16 %v308, %v307
  %v323 = vpack.c.b16 %v310, %v309
  %v324 = vpack.c.b16 %v312, %v311
  %v325 = vpack.c.b16 %v314, %v313
  %v326 = vpack.c.b16 %v316, %v315
  %v327 = vpack.c.b16 %v318, %v317
  %v328 = vpack.c.b16 %v320, %v319
  %337 = vmatpush.bf16.msra.mxu0 %v328
  %338 = vmatpush.bf16.msra.mxu0 %v327
  %339 = vmatpush.bf16.msra.mxu0 %v326
  %340 = vmatpush.bf16.msra.mxu0 %v325
  %341 = vmatpush.bf16.msra.mxu0 %v324
  %342 = vmatpush.bf16.msra.mxu0 %v323
  %343 = vmatpush.bf16.msra.mxu0 %v322
  %344 = vmatpush.bf16.msra.mxu0 %v321
  %345 = vmatmul.bf16.gmra.mxu0 %v225
  %v346 = vpop.f32.mrf.mxu0
  %v347 = vadd.f32 0.0, %v346
  %v348 = vpop.f32.mrf.mxu0
  %v349 = vadd.f32 0.0, %v348
  %350 = vmatmul.bf16.gmra.mxu0 %v226
  %v351 = vpop.f32.mrf.mxu0
  %v352 = vadd.f32 0.0, %v351
  %v353 = vpop.f32.mrf.mxu0
  %v354 = vadd.f32 0.0, %v353
  %355 = vmatmul.bf16.gmra.mxu0 %v227
  %v356 = vpop.f32.mrf.mxu0
  %v357 = vadd.f32 0.0, %v356
  %v358 = vpop.f32.mrf.mxu0
  %v359 = vadd.f32 0.0, %v358
  %360 = vmatmul.bf16.gmra.mxu0 %v228
  %v361 = vpop.f32.mrf.mxu0
  %v362 = vadd.f32 0.0, %v361
  %v363 = vpop.f32.mrf.mxu0
  %v364 = vadd.f32 0.0, %v363
  %365 = vmatmul.bf16.gmra.mxu0 %v229
  %v366 = vpop.f32.mrf.mxu0
  %v367 = vadd.f32 0.0, %v366
  %v368 = vpop.f32.mrf.mxu0
  %v369 = vadd.f32 0.0, %v368
  %370 = vmatmul.bf16.gmra.mxu0 %v230
  %v371 = vpop.f32.mrf.mxu0
  %v372 = vadd.f32 0.0, %v371
  %v373 = vpop.f32.mrf.mxu0
  %v374 = vadd.f32 0.0, %v373
  %375 = vmatmul.bf16.gmra.mxu0 %v231
  %v376 = vpop.f32.mrf.mxu0
  %v377 = vadd.f32 0.0, %v376
  %v378 = vpop.f32.mrf.mxu0
  %v379 = vadd.f32 0.0, %v378
  %380 = vmatmul.bf16.gmra.mxu0 %v232
  %v381 = vpop.f32.mrf.mxu0
  %v382 = vadd.f32 0.0, %v381
  %v383 = vpop.f32.mrf.mxu0
  %v384 = vadd.f32 0.0, %v383
  %385 = vmatmul.bf16.gmra.mxu0 %v233
  %v386 = vpop.f32.mrf.mxu0
  %v387 = vadd.f32 0.0, %v386
  %v388 = vpop.f32.mrf.mxu0
  %v389 = vadd.f32 0.0, %v388
  %390 = vmatmul.bf16.gmra.mxu0 %v234
  %v391 = vpop.f32.mrf.mxu0
  %v392 = vadd.f32 0.0, %v391
  %v393 = vpop.f32.mrf.mxu0
  %v394 = vadd.f32 0.0, %v393
  %395 = vmatmul.bf16.gmra.mxu0 %v235
  %v396 = vpop.f32.mrf.mxu0
  %v397 = vadd.f32 0.0, %v396
  %v398 = vpop.f32.mrf.mxu0
  %v399 = vadd.f32 0.0, %v398
  %400 = vmatmul.bf16.gmra.mxu0 %v236
  %v401 = vpop.f32.mrf.mxu0
  %v402 = vadd.f32 0.0, %v401
  %v403 = vpop.f32.mrf.mxu0
  %v404 = vadd.f32 0.0, %v403
  %405 = vmatmul.bf16.gmra.mxu0 %v237
  %v406 = vpop.f32.mrf.mxu0
  %v407 = vadd.f32 0.0, %v406
  %v408 = vpop.f32.mrf.mxu0
  %v409 = vadd.f32 0.0, %v408
  %410 = vmatmul.bf16.gmra.mxu0 %v238
  %v411 = vpop.f32.mrf.mxu0
  %v412 = vadd.f32 0.0, %v411
  %v413 = vpop.f32.mrf.mxu0
  %v414 = vadd.f32 0.0, %v413
  %415 = vmatmul.bf16.gmra.mxu0 %v239
  %v416 = vpop.f32.mrf.mxu0
  %v417 = vadd.f32 0.0, %v416
  %v418 = vpop.f32.mrf.mxu0
  %v419 = vadd.f32 0.0, %v418
  %420 = vmatmul.bf16.gmra.mxu0 %v240
  %v421 = vpop.f32.mrf.mxu0
  %v422 = vadd.f32 0.0, %v421
  %v423 = vpop.f32.mrf.mxu0
  %v424 = vadd.f32 0.0, %v423
  %425 = vmatmul.bf16.gmra.mxu0 %v241
  %v426 = vpop.f32.mrf.mxu0
  %v427 = vadd.f32 0.0, %v426
  %v428 = vpop.f32.mrf.mxu0
  %v429 = vadd.f32 0.0, %v428
  %430 = vmatmul.bf16.gmra.mxu0 %v242
  %v431 = vpop.f32.mrf.mxu0
  %v432 = vadd.f32 0.0, %v431
  %v433 = vpop.f32.mrf.mxu0
  %v434 = vadd.f32 0.0, %v433
  %435 = vmatmul.bf16.gmra.mxu0 %v243
  %v436 = vpop.f32.mrf.mxu0
  %v437 = vadd.f32 0.0, %v436
  %v438 = vpop.f32.mrf.mxu0
  %v439 = vadd.f32 0.0, %v438
  %440 = vmatmul.bf16.gmra.mxu0 %v244
  %v441 = vpop.f32.mrf.mxu0
  %v442 = vadd.f32 0.0, %v441
  %v443 = vpop.f32.mrf.mxu0
  %v444 = vadd.f32 0.0, %v443
  %445 = vmatmul.bf16.gmra.mxu0 %v245
  %v446 = vpop.f32.mrf.mxu0
  %v447 = vadd.f32 0.0, %v446
  %v448 = vpop.f32.mrf.mxu0
  %v449 = vadd.f32 0.0, %v448
  %450 = vmatmul.bf16.gmra.mxu0 %v246
  %v451 = vpop.f32.mrf.mxu0
  %v452 = vadd.f32 0.0, %v451
  %v453 = vpop.f32.mrf.mxu0
  %v454 = vadd.f32 0.0, %v453
  %455 = vmatmul.bf16.gmra.mxu0 %v247
  %v456 = vpop.f32.mrf.mxu0
  %v457 = vadd.f32 0.0, %v456
  %v458 = vpop.f32.mrf.mxu0
  %v459 = vadd.f32 0.0, %v458
  %460 = vmatmul.bf16.gmra.mxu0 %v248
  %v461 = vpop.f32.mrf.mxu0
  %v462 = vadd.f32 0.0, %v461
  %v463 = vpop.f32.mrf.mxu0
  %v464 = vadd.f32 0.0, %v463
  %465 = vmatmul.bf16.gmra.mxu0 %v249
  %v466 = vpop.f32.mrf.mxu0
  %v467 = vadd.f32 0.0, %v466
  %v468 = vpop.f32.mrf.mxu0
  %v469 = vadd.f32 0.0, %v468
  %470 = vmatmul.bf16.gmra.mxu0 %v250
  %v471 = vpop.f32.mrf.mxu0
  %v472 = vadd.f32 0.0, %v471
  %v473 = vpop.f32.mrf.mxu0
  %v474 = vadd.f32 0.0, %v473
  %475 = vmatmul.bf16.gmra.mxu0 %v251
  %v476 = vpop.f32.mrf.mxu0
  %v477 = vadd.f32 0.0, %v476
  %v478 = vpop.f32.mrf.mxu0
  %v479 = vadd.f32 0.0, %v478
  %480 = vmatmul.bf16.gmra.mxu0 %v252
  %v481 = vpop.f32.mrf.mxu0
  %v482 = vadd.f32 0.0, %v481
  %v483 = vpop.f32.mrf.mxu0
  %v484 = vadd.f32 0.0, %v483
  %485 = vmatmul.bf16.gmra.mxu0 %v253
  %v486 = vpop.f32.mrf.mxu0
  %v487 = vadd.f32 0.0, %v486
  %v488 = vpop.f32.mrf.mxu0
  %v489 = vadd.f32 0.0, %v488
  %490 = vmatmul.bf16.gmra.mxu0 %v254
  %v491 = vpop.f32.mrf.mxu0
  %v492 = vadd.f32 0.0, %v491
  %v493 = vpop.f32.mrf.mxu0
  %v494 = vadd.f32 0.0, %v493
  %495 = vmatmul.bf16.gmra.mxu0 %v255
  %v496 = vpop.f32.mrf.mxu0
  %v497 = vadd.f32 0.0, %v496
  %v498 = vpop.f32.mrf.mxu0
  %v499 = vadd.f32 0.0, %v498
  %500 = vmatmul.bf16.gmra.mxu0 %v256
  %v501 = vpop.f32.mrf.mxu0
  %v502 = vadd.f32 0.0, %v501
  %v503 = vpop.f32.mrf.mxu0
  %v504 = vadd.f32 0.0, %v503
  %505 = vdwg.mxu0
  %v506 = vld [vmem:[%s2] sm:$0x7]
  %v507 = vld [vmem:[%s3] sm:$0xff]
  %v508 = vld [vmem:[%s3 + $0x8] sm:$0xff]
  %v509 = vld [vmem:[%s3 + $0x10] sm:$0xff]
  %v510 = vld [vmem:[%s3 + $0x18] sm:$0xff]
  %v511 = vld [vmem:[%s3 + $0x20] sm:$0xff]
  %v512 = vld [vmem:[%s3 + $0x28] sm:$0xff]
  %v513 = vld [vmem:[%s3 + $0x30] sm:$0xff]
  %v514 = vld [vmem:[%s3 + $0x38] sm:$0xff]
  %v515 = vld [vmem:[%s3 + $0x40] sm:$0xff]
  %v516 = vld [vmem:[%s3 + $0x48] sm:$0xff]
  %v517 = vld [vmem:[%s3 + $0x50] sm:$0xff]
  %v518 = vld [vmem:[%s3 + $0x58] sm:$0xff]
  %v519 = vld [vmem:[%s3 + $0x60] sm:$0xff]
  %v520 = vld [vmem:[%s3 + $0x68] sm:$0xff]
  %v521 = vld [vmem:[%s3 + $0x70] sm:$0xff]
  %v522 = vld [vmem:[%s3 + $0x78] sm:$0xff]
  %v523 = vperm.slane %v506, 0
  %v524 = vadd.f32 %v347, %v523
  %v525 = vadd.f32 %v349, %v523
  %v526 = vadd.f32 %v352, %v523
  %v527 = vadd.f32 %v354, %v523
  %v528 = vadd.f32 %v357, %v523
  %v529 = vadd.f32 %v359, %v523
  %v530 = vadd.f32 %v362, %v523
  %v531 = vadd.f32 %v364, %v523
  %v532 = vadd.f32 %v367, %v523
  %v533 = vadd.f32 %v369, %v523
  %v534 = vadd.f32 %v372, %v523
  %v535 = vadd.f32 %v374, %v523
  %v536 = vadd.f32 %v377, %v523
  %v537 = vadd.f32 %v379, %v523
  %v538 = vadd.f32 %v382, %v523
  %v539 = vadd.f32 %v384, %v523
  %v540 = vadd.f32 %v387, %v523
  %v541 = vadd.f32 %v389, %v523
  %v542 = vadd.f32 %v392, %v523
  %v543 = vadd.f32 %v394, %v523
  %v544 = vadd.f32 %v397, %v523
  %v545 = vadd.f32 %v399, %v523
  %v546 = vadd.f32 %v402, %v523
  %v547 = vadd.f32 %v404, %v523
  %v548 = vadd.f32 %v407, %v523
  %v549 = vadd.f32 %v409, %v523
  %v550 = vadd.f32 %v412, %v523
  %v551 = vadd.f32 %v414, %v523
  %v552 = vadd.f32 %v417, %v523
  %v553 = vadd.f32 %v419, %v523
  %v554 = vadd.f32 %v422, %v523
  %v555 = vadd.f32 %v424, %v523
  %v556 = vadd.f32 %v427, %v523
  %v557 = vadd.f32 %v429, %v523
  %v558 = vadd.f32 %v432, %v523
  %v559 = vadd.f32 %v434, %v523
  %v560 = vadd.f32 %v437, %v523
  %v561 = vadd.f32 %v439, %v523
  %v562 = vadd.f32 %v442, %v523
  %v563 = vadd.f32 %v444, %v523
  %v564 = vadd.f32 %v447, %v523
  %v565 = vadd.f32 %v449, %v523
  %v566 = vadd.f32 %v452, %v523
  %v567 = vadd.f32 %v454, %v523
  %v568 = vadd.f32 %v457, %v523
  %v569 = vadd.f32 %v459, %v523
  %v570 = vadd.f32 %v462, %v523
  %v571 = vadd.f32 %v464, %v523
  %v572 = vadd.f32 %v467, %v523
  %v573 = vadd.f32 %v469, %v523
  %v574 = vadd.f32 %v472, %v523
  %v575 = vadd.f32 %v474, %v523
  %v576 = vadd.f32 %v477, %v523
  %v577 = vadd.f32 %v479, %v523
  %v578 = vadd.f32 %v482, %v523
  %v579 = vadd.f32 %v484, %v523
  %v580 = vadd.f32 %v487, %v523
  %v581 = vadd.f32 %v489, %v523
  %v582 = vadd.f32 %v492, %v523
  %v583 = vadd.f32 %v494, %v523
  %v584 = vadd.f32 %v497, %v523
  %v585 = vadd.f32 %v499, %v523
  %v586 = vadd.f32 %v502, %v523
  %v587 = vadd.f32 %v504, %v523
  %v588 = vmax.f32 %v524, 0.0
  %v589 = vmax.f32 %v525, 0.0
  %v590 = vmax.f32 %v526, 0.0
  %v591 = vmax.f32 %v527, 0.0
  %v592 = vmax.f32 %v528, 0.0
  %v593 = vmax.f32 %v529, 0.0
  %v594 = vmax.f32 %v530, 0.0
  %v595 = vmax.f32 %v531, 0.0
  %v596 = vmax.f32 %v532, 0.0
  %v597 = vmax.f32 %v533, 0.0
  %v598 = vmax.f32 %v534, 0.0
  %v599 = vmax.f32 %v535, 0.0
  %v600 = vmax.f32 %v536, 0.0
  %v601 = vmax.f32 %v537, 0.0
  %v602 = vmax.f32 %v538, 0.0
  %v603 = vmax.f32 %v539, 0.0
  %v604 = vmax.f32 %v540, 0.0
  %v605 = vmax.f32 %v541, 0.0
  %v606 = vmax.f32 %v542, 0.0
  %v607 = vmax.f32 %v543, 0.0
  %v608 = vmax.f32 %v544, 0.0
  %v609 = vmax.f32 %v545, 0.0
  %v610 = vmax.f32 %v546, 0.0
  %v611 = vmax.f32 %v547, 0.0
  %v612 = vmax.f32 %v548, 0.0
  %v613 = vmax.f32 %v549, 0.0
  %v614 = vmax.f32 %v550, 0.0
  %v615 = vmax.f32 %v551, 0.0
  %v616 = vmax.f32 %v552, 0.0
  %v617 = vmax.f32 %v553, 0.0
  %v618 = vmax.f32 %v554, 0.0
  %v619 = vmax.f32 %v555, 0.0
  %v620 = vmax.f32 %v556, 0.0
  %v621 = vmax.f32 %v557, 0.0
  %v622 = vmax.f32 %v558, 0.0
  %v623 = vmax.f32 %v559, 0.0
  %v624 = vmax.f32 %v560, 0.0
  %v625 = vmax.f32 %v561, 0.0
  %v626 = vmax.f32 %v562, 0.0
  %v627 = vmax.f32 %v563, 0.0
  %v628 = vmax.f32 %v564, 0.0
  %v629 = vmax.f32 %v565, 0.0
  %v630 = vmax.f32 %v566, 0.0
  %v631 = vmax.f32 %v567, 0.0
  %v632 = vmax.f32 %v568, 0.0
  %v633 = vmax.f32 %v569, 0.0
  %v634 = vmax.f32 %v570, 0.0
  %v635 = vmax.f32 %v571, 0.0
  %v636 = vmax.f32 %v572, 0.0
  %v637 = vmax.f32 %v573, 0.0
  %v638 = vmax.f32 %v574, 0.0
  %v639 = vmax.f32 %v575, 0.0
  %v640 = vmax.f32 %v576, 0.0
  %v641 = vmax.f32 %v577, 0.0
  %v642 = vmax.f32 %v578, 0.0
  %v643 = vmax.f32 %v579, 0.0
  %v644 = vmax.f32 %v580, 0.0
  %v645 = vmax.f32 %v581, 0.0
  %v646 = vmax.f32 %v582, 0.0
  %v647 = vmax.f32 %v583, 0.0
  %v648 = vmax.f32 %v584, 0.0
  %v649 = vmax.f32 %v585, 0.0
  %v650 = vmax.f32 %v586, 0.0
  %v651 = vmax.f32 %v587, 0.0
  %v652 = vadd.f32 %v588, %v589
  %v653 = vadd.f32 %v652, %v590
  %v654 = vadd.f32 %v653, %v591
  %v655 = vadd.f32 %v654, %v592
  %v656 = vadd.f32 %v655, %v593
  %v657 = vadd.f32 %v656, %v594
  %v658 = vadd.f32 %v657, %v595
  %v659 = vadd.f32 %v658, %v596
  %v660 = vadd.f32 %v659, %v597
  %v661 = vadd.f32 %v660, %v598
  %v662 = vadd.f32 %v661, %v599
  %v663 = vadd.f32 %v662, %v600
  %v664 = vadd.f32 %v663, %v601
  %v665 = vadd.f32 %v664, %v602
  %v666 = vadd.f32 %v665, %v603
  %v667 = vadd.f32 %v666, %v604
  %v668 = vadd.f32 %v667, %v605
  %v669 = vadd.f32 %v668, %v606
  %v670 = vadd.f32 %v669, %v607
  %v671 = vadd.f32 %v670, %v608
  %v672 = vadd.f32 %v671, %v609
  %v673 = vadd.f32 %v672, %v610
  %v674 = vadd.f32 %v673, %v611
  %v675 = vadd.f32 %v674, %v612
  %v676 = vadd.f32 %v675, %v613
  %v677 = vadd.f32 %v676, %v614
  %v678 = vadd.f32 %v677, %v615
  %v679 = vadd.f32 %v678, %v616
  %v680 = vadd.f32 %v679, %v617
  %v681 = vadd.f32 %v680, %v618
  %v682 = vadd.f32 %v681, %v619
  %v683 = vrot.slane %v682, 4
  %v684 = vadd.f32 %v682, %v683
  %v685 = vrot.slane %v684, 2
  %v686 = vadd.f32 %v684, %v685
  %v687 = vrot.slane %v686, 1
  %v688 = vadd.f32 %v686, %v687
  %v689 = vadd.f32 %v620, %v621
  %v690 = vadd.f32 %v689, %v622
  %v691 = vadd.f32 %v690, %v623
  %v692 = vadd.f32 %v691, %v624
  %v693 = vadd.f32 %v692, %v625
  %v694 = vadd.f32 %v693, %v626
  %v695 = vadd.f32 %v694, %v627
  %v696 = vadd.f32 %v695, %v628
  %v697 = vadd.f32 %v696, %v629
  %v698 = vadd.f32 %v697, %v630
  %v699 = vadd.f32 %v698, %v631
  %v700 = vadd.f32 %v699, %v632
  %v701 = vadd.f32 %v700, %v633
  %v702 = vadd.f32 %v701, %v634
  %v703 = vadd.f32 %v702, %v635
  %v704 = vadd.f32 %v703, %v636
  %v705 = vadd.f32 %v704, %v637
  %v706 = vadd.f32 %v705, %v638
  %v707 = vadd.f32 %v706, %v639
  %v708 = vadd.f32 %v707, %v640
  %v709 = vadd.f32 %v708, %v641
  %v710 = vadd.f32 %v709, %v642
  %v711 = vadd.f32 %v710, %v643
  %v712 = vadd.f32 %v711, %v644
  %v713 = vadd.f32 %v712, %v645
  %v714 = vadd.f32 %v713, %v646
  %v715 = vadd.f32 %v714, %v647
  %v716 = vadd.f32 %v715, %v648
  %v717 = vadd.f32 %v716, %v649
  %v718 = vadd.f32 %v717, %v650
  %v719 = vadd.f32 %v718, %v651
  %v720 = vrot.slane %v719, 4
  %v721 = vadd.f32 %v719, %v720
  %v722 = vrot.slane %v721, 2
  %v723 = vadd.f32 %v721, %v722
  %v724 = vrot.slane %v723, 1
  %v725 = vadd.f32 %v723, %v724
  %v726 = vmul.f32 %v588, %v588
  %v727 = vmul.f32 %v589, %v589
  %v728 = vmul.f32 %v590, %v590
  %v729 = vmul.f32 %v591, %v591
  %v730 = vmul.f32 %v592, %v592
  %v731 = vmul.f32 %v593, %v593
  %v732 = vmul.f32 %v594, %v594
  %v733 = vmul.f32 %v595, %v595
  %v734 = vmul.f32 %v596, %v596
  %v735 = vmul.f32 %v597, %v597
  %v736 = vmul.f32 %v598, %v598
  %v737 = vmul.f32 %v599, %v599
  %v738 = vmul.f32 %v600, %v600
  %v739 = vmul.f32 %v601, %v601
  %v740 = vmul.f32 %v602, %v602
  %v741 = vmul.f32 %v603, %v603
  %v742 = vmul.f32 %v604, %v604
  %v743 = vmul.f32 %v605, %v605
  %v744 = vmul.f32 %v606, %v606
  %v745 = vmul.f32 %v607, %v607
  %v746 = vmul.f32 %v608, %v608
  %v747 = vmul.f32 %v609, %v609
  %v748 = vmul.f32 %v610, %v610
  %v749 = vmul.f32 %v611, %v611
  %v750 = vmul.f32 %v612, %v612
  %v751 = vmul.f32 %v613, %v613
  %v752 = vmul.f32 %v614, %v614
  %v753 = vmul.f32 %v615, %v615
  %v754 = vmul.f32 %v616, %v616
  %v755 = vmul.f32 %v617, %v617
  %v756 = vmul.f32 %v618, %v618
  %v757 = vmul.f32 %v619, %v619
  %v758 = vmul.f32 %v620, %v620
  %v759 = vmul.f32 %v621, %v621
  %v760 = vmul.f32 %v622, %v622
  %v761 = vmul.f32 %v623, %v623
  %v762 = vmul.f32 %v624, %v624
  %v763 = vmul.f32 %v625, %v625
  %v764 = vmul.f32 %v626, %v626
  %v765 = vmul.f32 %v627, %v627
  %v766 = vmul.f32 %v628, %v628
  %v767 = vmul.f32 %v629, %v629
  %v768 = vmul.f32 %v630, %v630
  %v769 = vmul.f32 %v631, %v631
  %v770 = vmul.f32 %v632, %v632
  %v771 = vmul.f32 %v633, %v633
  %v772 = vmul.f32 %v634, %v634
  %v773 = vmul.f32 %v635, %v635
  %v774 = vmul.f32 %v636, %v636
  %v775 = vmul.f32 %v637, %v637
  %v776 = vmul.f32 %v638, %v638
  %v777 = vmul.f32 %v639, %v639
  %v778 = vmul.f32 %v640, %v640
  %v779 = vmul.f32 %v641, %v641
  %v780 = vmul.f32 %v642, %v642
  %v781 = vmul.f32 %v643, %v643
  %v782 = vmul.f32 %v644, %v644
  %v783 = vmul.f32 %v645, %v645
  %v784 = vmul.f32 %v646, %v646
  %v785 = vmul.f32 %v647, %v647
  %v786 = vmul.f32 %v648, %v648
  %v787 = vmul.f32 %v649, %v649
  %v788 = vmul.f32 %v650, %v650
  %v789 = vmul.f32 %v651, %v651
  %v790 = vadd.f32 %v726, %v727
  %v791 = vadd.f32 %v790, %v728
  %v792 = vadd.f32 %v791, %v729
  %v793 = vadd.f32 %v792, %v730
  %v794 = vadd.f32 %v793, %v731
  %v795 = vadd.f32 %v794, %v732
  %v796 = vadd.f32 %v795, %v733
  %v797 = vadd.f32 %v796, %v734
  %v798 = vadd.f32 %v797, %v735
  %v799 = vadd.f32 %v798, %v736
  %v800 = vadd.f32 %v799, %v737
  %v801 = vadd.f32 %v800, %v738
  %v802 = vadd.f32 %v801, %v739
  %v803 = vadd.f32 %v802, %v740
  %v804 = vadd.f32 %v803, %v741
  %v805 = vadd.f32 %v804, %v742
  %v806 = vadd.f32 %v805, %v743
  %v807 = vadd.f32 %v806, %v744
  %v808 = vadd.f32 %v807, %v745
  %v809 = vadd.f32 %v808, %v746
  %v810 = vadd.f32 %v809, %v747
  %v811 = vadd.f32 %v810, %v748
  %v812 = vadd.f32 %v811, %v749
  %v813 = vadd.f32 %v812, %v750
  %v814 = vadd.f32 %v813, %v751
  %v815 = vadd.f32 %v814, %v752
  %v816 = vadd.f32 %v815, %v753
  %v817 = vadd.f32 %v816, %v754
  %v818 = vadd.f32 %v817, %v755
  %v819 = vadd.f32 %v818, %v756
  %v820 = vadd.f32 %v819, %v757
  %v821 = vrot.slane %v820, 4
  %v822 = vadd.f32 %v820, %v821
  %v823 = vrot.slane %v822, 2
  %v824 = vadd.f32 %v822, %v823
  %v825 = vrot.slane %v824, 1
  %v826 = vadd.f32 %v824, %v825
  %v827 = vadd.f32 %v758, %v759
  %v828 = vadd.f32 %v827, %v760
  %v829 = vadd.f32 %v828, %v761
  %v830 = vadd.f32 %v829, %v762
  %v831 = vadd.f32 %v830, %v763
  %v832 = vadd.f32 %v831, %v764
  %v833 = vadd.f32 %v832, %v765
  %v834 = vadd.f32 %v833, %v766
  %v835 = vadd.f32 %v834, %v767
  %v836 = vadd.f32 %v835, %v768
  %v837 = vadd.f32 %v836, %v769
  %v838 = vadd.f32 %v837, %v770
  %v839 = vadd.f32 %v838, %v771
  %v840 = vadd.f32 %v839, %v772
  %v841 = vadd.f32 %v840, %v773
  %v842 = vadd.f32 %v841, %v774
  %v843 = vadd.f32 %v842, %v775
  %v844 = vadd.f32 %v843, %v776
  %v845 = vadd.f32 %v844, %v777
  %v846 = vadd.f32 %v845, %v778
  %v847 = vadd.f32 %v846, %v779
  %v848 = vadd.f32 %v847, %v780
  %v849 = vadd.f32 %v848, %v781
  %v850 = vadd.f32 %v849, %v782
  %v851 = vadd.f32 %v850, %v783
  %v852 = vadd.f32 %v851, %v784
  %v853 = vadd.f32 %v852, %v785
  %v854 = vadd.f32 %v853, %v786
  %v855 = vadd.f32 %v854, %v787
  %v856 = vadd.f32 %v855, %v788
  %v857 = vadd.f32 %v856, %v789
  %v858 = vrot.slane %v857, 4
  %v859 = vadd.f32 %v857, %v858
  %v860 = vrot.slane %v859, 2
  %v861 = vadd.f32 %v859, %v860
  %v862 = vrot.slane %v861, 1
  %v863 = vadd.f32 %v861, %v862
  %vm866 = vcmask 1041409
  %v867 = vsel %vm866, %v725, %v688
  %869 = vmatpush.msra.mxu0 %v522
  %870 = vmatpush.msra.mxu0 %v521
  %871 = vmatpush.msra.mxu0 %v520
  %872 = vmatpush.msra.mxu0 %v519
  %873 = vmatpush.msra.mxu0 %v518
  %874 = vmatpush.msra.mxu0 %v517
  %875 = vmatpush.msra.mxu0 %v516
  %876 = vmatpush.msra.mxu0 %v515
  %877 = vmatpush.msra.mxu0 %v514
  %878 = vmatpush.msra.mxu0 %v513
  %879 = vmatpush.msra.mxu0 %v512
  %880 = vmatpush.msra.mxu0 %v511
  %881 = vmatpush.msra.mxu0 %v510
  %882 = vmatpush.msra.mxu0 %v509
  %883 = vmatpush.msra.mxu0 %v508
  %884 = vmatpush.msra.mxu0 %v507
  %885 = vmatmul.f32.gmra.mxu0 %v867
  %v886 = vpop.f32.mrf.mxu0
  %v887 = vadd.f32 0.0, %v886
  %888 = vdwg.mxu0
  %v891 = vsel %vm866, %v863, %v826
  %893 = vmatpush.msra.mxu0 %v522
  %894 = vmatpush.msra.mxu0 %v521
  %895 = vmatpush.msra.mxu0 %v520
  %896 = vmatpush.msra.mxu0 %v519
  %897 = vmatpush.msra.mxu0 %v518
  %898 = vmatpush.msra.mxu0 %v517
  %899 = vmatpush.msra.mxu0 %v516
  %900 = vmatpush.msra.mxu0 %v515
  %901 = vmatpush.msra.mxu0 %v514
  %902 = vmatpush.msra.mxu0 %v513
  %903 = vmatpush.msra.mxu0 %v512
  %904 = vmatpush.msra.mxu0 %v511
  %905 = vmatpush.msra.mxu0 %v510
  %906 = vmatpush.msra.mxu0 %v509
  %907 = vmatpush.msra.mxu0 %v508
  %908 = vmatpush.msra.mxu0 %v507
  %909 = vmatmul.f32.gmra.mxu0 %v891
  %v910 = vpop.f32.mrf.mxu0
  %v911 = vadd.f32 0.0, %v910
  %912 = vdwg.mxu0
  %v913 = vmul.f32 %v887, %v887
  %v914 = vsub.f32 %v911, %v913
  %v915 = vmax.f32 %v914, 0.0
  %v916 = vadd.f32 %v915, 1e-05
  %v917 = vrsqrt.pop %v916
  %v918 = vmul.f32 %v917, %v916
  %v919 = vmul.f32 %v918, %v917
  %v920 = vmul.f32 0.5, %v919
  %v921 = vsub.f32 1.5, %v920
  %v922 = vmul.f32 %v917, %v921
  %vm923 = vweird.f32 %v916
  %vm924 = vweird.f32 %v917
  %vm925 = vmor %vm923, %vm924
  %v926 = vsel %vm925, %v917, %v922
  %v927 = vperm.slane %v506, 1
  %v928 = vmul.f32 %v926, %v927
  %v929 = vmul.f32 %v887, %v928
  %v930 = vperm.slane %v506, 2
  %v931 = vsub.f32 %v930, %v929
  %v933 = vrot.slane %v928, 1
  %v934 = vperm.slane %v928, 0
  %v935 = vperm.slane %v933, 0
  %v938 = vmul.f32 %v588, %v934
  %v939 = vmul.f32 %v589, %v934
  %v940 = vmul.f32 %v590, %v934
  %v941 = vmul.f32 %v591, %v934
  %v942 = vmul.f32 %v592, %v934
  %v943 = vmul.f32 %v593, %v934
  %v944 = vmul.f32 %v594, %v934
  %v945 = vmul.f32 %v595, %v934
  %v946 = vmul.f32 %v596, %v934
  %v947 = vmul.f32 %v597, %v934
  %v948 = vmul.f32 %v598, %v934
  %v949 = vmul.f32 %v599, %v934
  %v950 = vmul.f32 %v600, %v934
  %v951 = vmul.f32 %v601, %v934
  %v952 = vmul.f32 %v602, %v934
  %v953 = vmul.f32 %v603, %v934
  %v954 = vmul.f32 %v604, %v934
  %v955 = vmul.f32 %v605, %v934
  %v956 = vmul.f32 %v606, %v934
  %v957 = vmul.f32 %v607, %v934
  %v958 = vmul.f32 %v608, %v934
  %v959 = vmul.f32 %v609, %v934
  %v960 = vmul.f32 %v610, %v934
  %v961 = vmul.f32 %v611, %v934
  %v962 = vmul.f32 %v612, %v934
  %v963 = vmul.f32 %v613, %v934
  %v964 = vmul.f32 %v614, %v934
  %v965 = vmul.f32 %v615, %v934
  %v966 = vmul.f32 %v616, %v934
  %v967 = vmul.f32 %v617, %v934
  %v968 = vmul.f32 %v618, %v934
  %v969 = vmul.f32 %v619, %v934
  %v970 = vmul.f32 %v620, %v935
  %v971 = vmul.f32 %v621, %v935
  %v972 = vmul.f32 %v622, %v935
  %v973 = vmul.f32 %v623, %v935
  %v974 = vmul.f32 %v624, %v935
  %v975 = vmul.f32 %v625, %v935
  %v976 = vmul.f32 %v626, %v935
  %v977 = vmul.f32 %v627, %v935
  %v978 = vmul.f32 %v628, %v935
  %v979 = vmul.f32 %v629, %v935
  %v980 = vmul.f32 %v630, %v935
  %v981 = vmul.f32 %v631, %v935
  %v982 = vmul.f32 %v632, %v935
  %v983 = vmul.f32 %v633, %v935
  %v984 = vmul.f32 %v634, %v935
  %v985 = vmul.f32 %v635, %v935
  %v986 = vmul.f32 %v636, %v935
  %v987 = vmul.f32 %v637, %v935
  %v988 = vmul.f32 %v638, %v935
  %v989 = vmul.f32 %v639, %v935
  %v990 = vmul.f32 %v640, %v935
  %v991 = vmul.f32 %v641, %v935
  %v992 = vmul.f32 %v642, %v935
  %v993 = vmul.f32 %v643, %v935
  %v994 = vmul.f32 %v644, %v935
  %v995 = vmul.f32 %v645, %v935
  %v996 = vmul.f32 %v646, %v935
  %v997 = vmul.f32 %v647, %v935
  %v998 = vmul.f32 %v648, %v935
  %v999 = vmul.f32 %v649, %v935
  %v1000 = vmul.f32 %v650, %v935
  %v1001 = vmul.f32 %v651, %v935
  %v1003 = vrot.slane %v931, 1
  %v1004 = vperm.slane %v931, 0
  %v1005 = vperm.slane %v1003, 0
  %v1008 = vadd.f32 %v938, %v1004
  %v1009 = vadd.f32 %v939, %v1004
  %v1010 = vadd.f32 %v940, %v1004
  %v1011 = vadd.f32 %v941, %v1004
  %v1012 = vadd.f32 %v942, %v1004
  %v1013 = vadd.f32 %v943, %v1004
  %v1014 = vadd.f32 %v944, %v1004
  %v1015 = vadd.f32 %v945, %v1004
  %v1016 = vadd.f32 %v946, %v1004
  %v1017 = vadd.f32 %v947, %v1004
  %v1018 = vadd.f32 %v948, %v1004
  %v1019 = vadd.f32 %v949, %v1004
  %v1020 = vadd.f32 %v950, %v1004
  %v1021 = vadd.f32 %v951, %v1004
  %v1022 = vadd.f32 %v952, %v1004
  %v1023 = vadd.f32 %v953, %v1004
  %v1024 = vadd.f32 %v954, %v1004
  %v1025 = vadd.f32 %v955, %v1004
  %v1026 = vadd.f32 %v956, %v1004
  %v1027 = vadd.f32 %v957, %v1004
  %v1028 = vadd.f32 %v958, %v1004
  %v1029 = vadd.f32 %v959, %v1004
  %v1030 = vadd.f32 %v960, %v1004
  %v1031 = vadd.f32 %v961, %v1004
  %v1032 = vadd.f32 %v962, %v1004
  %v1033 = vadd.f32 %v963, %v1004
  %v1034 = vadd.f32 %v964, %v1004
  %v1035 = vadd.f32 %v965, %v1004
  %v1036 = vadd.f32 %v966, %v1004
  %v1037 = vadd.f32 %v967, %v1004
  %v1038 = vadd.f32 %v968, %v1004
  %v1039 = vadd.f32 %v969, %v1004
  %v1040 = vadd.f32 %v970, %v1005
  %v1041 = vadd.f32 %v971, %v1005
  %v1042 = vadd.f32 %v972, %v1005
  %v1043 = vadd.f32 %v973, %v1005
  %v1044 = vadd.f32 %v974, %v1005
  %v1045 = vadd.f32 %v975, %v1005
  %v1046 = vadd.f32 %v976, %v1005
  %v1047 = vadd.f32 %v977, %v1005
  %v1048 = vadd.f32 %v978, %v1005
  %v1049 = vadd.f32 %v979, %v1005
  %v1050 = vadd.f32 %v980, %v1005
  %v1051 = vadd.f32 %v981, %v1005
  %v1052 = vadd.f32 %v982, %v1005
  %v1053 = vadd.f32 %v983, %v1005
  %v1054 = vadd.f32 %v984, %v1005
  %v1055 = vadd.f32 %v985, %v1005
  %v1056 = vadd.f32 %v986, %v1005
  %v1057 = vadd.f32 %v987, %v1005
  %v1058 = vadd.f32 %v988, %v1005
  %v1059 = vadd.f32 %v989, %v1005
  %v1060 = vadd.f32 %v990, %v1005
  %v1061 = vadd.f32 %v991, %v1005
  %v1062 = vadd.f32 %v992, %v1005
  %v1063 = vadd.f32 %v993, %v1005
  %v1064 = vadd.f32 %v994, %v1005
  %v1065 = vadd.f32 %v995, %v1005
  %v1066 = vadd.f32 %v996, %v1005
  %v1067 = vadd.f32 %v997, %v1005
  %v1068 = vadd.f32 %v998, %v1005
  %v1069 = vadd.f32 %v999, %v1005
  %v1070 = vadd.f32 %v1000, %v1005
  %v1071 = vadd.f32 %v1001, %v1005
  %v1072 = vpack.c.bf16 %v1008, %v1008
  %v1073 = vpack.c.bf16 %v1009, %v1009
  %v1074 = vpack.c.bf16 %v1010, %v1010
  %v1075 = vpack.c.bf16 %v1011, %v1011
  %v1076 = vpack.c.bf16 %v1012, %v1012
  %v1077 = vpack.c.bf16 %v1013, %v1013
  %v1078 = vpack.c.bf16 %v1014, %v1014
  %v1079 = vpack.c.bf16 %v1015, %v1015
  %v1080 = vpack.c.bf16 %v1016, %v1016
  %v1081 = vpack.c.bf16 %v1017, %v1017
  %v1082 = vpack.c.bf16 %v1018, %v1018
  %v1083 = vpack.c.bf16 %v1019, %v1019
  %v1084 = vpack.c.bf16 %v1020, %v1020
  %v1085 = vpack.c.bf16 %v1021, %v1021
  %v1086 = vpack.c.bf16 %v1022, %v1022
  %v1087 = vpack.c.bf16 %v1023, %v1023
  %v1088 = vpack.c.bf16 %v1024, %v1024
  %v1089 = vpack.c.bf16 %v1025, %v1025
  %v1090 = vpack.c.bf16 %v1026, %v1026
  %v1091 = vpack.c.bf16 %v1027, %v1027
  %v1092 = vpack.c.bf16 %v1028, %v1028
  %v1093 = vpack.c.bf16 %v1029, %v1029
  %v1094 = vpack.c.bf16 %v1030, %v1030
  %v1095 = vpack.c.bf16 %v1031, %v1031
  %v1096 = vpack.c.bf16 %v1032, %v1032
  %v1097 = vpack.c.bf16 %v1033, %v1033
  %v1098 = vpack.c.bf16 %v1034, %v1034
  %v1099 = vpack.c.bf16 %v1035, %v1035
  %v1100 = vpack.c.bf16 %v1036, %v1036
  %v1101 = vpack.c.bf16 %v1037, %v1037
  %v1102 = vpack.c.bf16 %v1038, %v1038
  %v1103 = vpack.c.bf16 %v1039, %v1039
  %v1104 = vpack.c.bf16 %v1040, %v1040
  %v1105 = vpack.c.bf16 %v1041, %v1041
  %v1106 = vpack.c.bf16 %v1042, %v1042
  %v1107 = vpack.c.bf16 %v1043, %v1043
  %v1108 = vpack.c.bf16 %v1044, %v1044
  %v1109 = vpack.c.bf16 %v1045, %v1045
  %v1110 = vpack.c.bf16 %v1046, %v1046
  %v1111 = vpack.c.bf16 %v1047, %v1047
  %v1112 = vpack.c.bf16 %v1048, %v1048
  %v1113 = vpack.c.bf16 %v1049, %v1049
  %v1114 = vpack.c.bf16 %v1050, %v1050
  %v1115 = vpack.c.bf16 %v1051, %v1051
  %v1116 = vpack.c.bf16 %v1052, %v1052
  %v1117 = vpack.c.bf16 %v1053, %v1053
  %v1118 = vpack.c.bf16 %v1054, %v1054
  %v1119 = vpack.c.bf16 %v1055, %v1055
  %v1120 = vpack.c.bf16 %v1056, %v1056
  %v1121 = vpack.c.bf16 %v1057, %v1057
  %v1122 = vpack.c.bf16 %v1058, %v1058
  %v1123 = vpack.c.bf16 %v1059, %v1059
  %v1124 = vpack.c.bf16 %v1060, %v1060
  %v1125 = vpack.c.bf16 %v1061, %v1061
  %v1126 = vpack.c.bf16 %v1062, %v1062
  %v1127 = vpack.c.bf16 %v1063, %v1063
  %v1128 = vpack.c.bf16 %v1064, %v1064
  %v1129 = vpack.c.bf16 %v1065, %v1065
  %v1130 = vpack.c.bf16 %v1066, %v1066
  %v1131 = vpack.c.bf16 %v1067, %v1067
  %v1132 = vpack.c.bf16 %v1068, %v1068
  %v1133 = vpack.c.bf16 %v1069, %v1069
  %v1134 = vpack.c.bf16 %v1070, %v1070
  %v1135 = vpack.c.bf16 %v1071, %v1071
  %1136 = vst [vmem:[%s4] sm:$0xf] %v1072
  %1137 = vst [vmem:[%s4 + $0x4] sm:$0xf] %v1073
  %1138 = vst [vmem:[%s4 + $0x8] sm:$0xf] %v1074
  %1139 = vst [vmem:[%s4 + $0xc] sm:$0xf] %v1075
  %1140 = vst [vmem:[%s4 + $0x10] sm:$0xf] %v1076
  %1141 = vst [vmem:[%s4 + $0x14] sm:$0xf] %v1077
  %1142 = vst [vmem:[%s4 + $0x18] sm:$0xf] %v1078
  %1143 = vst [vmem:[%s4 + $0x1c] sm:$0xf] %v1079
  %1144 = vst [vmem:[%s4 + $0x20] sm:$0xf] %v1080
  %1145 = vst [vmem:[%s4 + $0x24] sm:$0xf] %v1081
  %1146 = vst [vmem:[%s4 + $0x28] sm:$0xf] %v1082
  %1147 = vst [vmem:[%s4 + $0x2c] sm:$0xf] %v1083
  %1148 = vst [vmem:[%s4 + $0x30] sm:$0xf] %v1084
  %1149 = vst [vmem:[%s4 + $0x34] sm:$0xf] %v1085
  %1150 = vst [vmem:[%s4 + $0x38] sm:$0xf] %v1086
  %1151 = vst [vmem:[%s4 + $0x3c] sm:$0xf] %v1087
  %1152 = vst [vmem:[%s4 + $0x40] sm:$0xf] %v1088
  %1153 = vst [vmem:[%s4 + $0x44] sm:$0xf] %v1089
  %1154 = vst [vmem:[%s4 + $0x48] sm:$0xf] %v1090
  %1155 = vst [vmem:[%s4 + $0x4c] sm:$0xf] %v1091
  %1156 = vst [vmem:[%s4 + $0x50] sm:$0xf] %v1092
  %1157 = vst [vmem:[%s4 + $0x54] sm:$0xf] %v1093
  %1158 = vst [vmem:[%s4 + $0x58] sm:$0xf] %v1094
  %1159 = vst [vmem:[%s4 + $0x5c] sm:$0xf] %v1095
  %1160 = vst [vmem:[%s4 + $0x60] sm:$0xf] %v1096
  %1161 = vst [vmem:[%s4 + $0x64] sm:$0xf] %v1097
  %1162 = vst [vmem:[%s4 + $0x68] sm:$0xf] %v1098
  %1163 = vst [vmem:[%s4 + $0x6c] sm:$0xf] %v1099
  %1164 = vst [vmem:[%s4 + $0x70] sm:$0xf] %v1100
  %1165 = vst [vmem:[%s4 + $0x74] sm:$0xf] %v1101
  %1166 = vst [vmem:[%s4 + $0x78] sm:$0xf] %v1102
  %1167 = vst [vmem:[%s4 + $0x7c] sm:$0xf] %v1103
  %1168 = vst [vmem:[%s4 + $0x80] sm:$0xf] %v1104
  %1169 = vst [vmem:[%s4 + $0x84] sm:$0xf] %v1105
  %1170 = vst [vmem:[%s4 + $0x88] sm:$0xf] %v1106
  %1171 = vst [vmem:[%s4 + $0x8c] sm:$0xf] %v1107
  %1172 = vst [vmem:[%s4 + $0x90] sm:$0xf] %v1108
  %1173 = vst [vmem:[%s4 + $0x94] sm:$0xf] %v1109
  %1174 = vst [vmem:[%s4 + $0x98] sm:$0xf] %v1110
  %1175 = vst [vmem:[%s4 + $0x9c] sm:$0xf] %v1111
  %1176 = vst [vmem:[%s4 + $0xa0] sm:$0xf] %v1112
  %1177 = vst [vmem:[%s4 + $0xa4] sm:$0xf] %v1113
  %1178 = vst [vmem:[%s4 + $0xa8] sm:$0xf] %v1114
  %1179 = vst [vmem:[%s4 + $0xac] sm:$0xf] %v1115
  %1180 = vst [vmem:[%s4 + $0xb0] sm:$0xf] %v1116
  %1181 = vst [vmem:[%s4 + $0xb4] sm:$0xf] %v1117
  %1182 = vst [vmem:[%s4 + $0xb8] sm:$0xf] %v1118
  %1183 = vst [vmem:[%s4 + $0xbc] sm:$0xf] %v1119
  %1184 = vst [vmem:[%s4 + $0xc0] sm:$0xf] %v1120
  %1185 = vst [vmem:[%s4 + $0xc4] sm:$0xf] %v1121
  %1186 = vst [vmem:[%s4 + $0xc8] sm:$0xf] %v1122
  %1187 = vst [vmem:[%s4 + $0xcc] sm:$0xf] %v1123
  %1188 = vst [vmem:[%s4 + $0xd0] sm:$0xf] %v1124
  %1189 = vst [vmem:[%s4 + $0xd4] sm:$0xf] %v1125
  %1190 = vst [vmem:[%s4 + $0xd8] sm:$0xf] %v1126
  %1191 = vst [vmem:[%s4 + $0xdc] sm:$0xf] %v1127
  %1192 = vst [vmem:[%s4 + $0xe0] sm:$0xf] %v1128
  %1193 = vst [vmem:[%s4 + $0xe4] sm:$0xf] %v1129
  %1194 = vst [vmem:[%s4 + $0xe8] sm:$0xf] %v1130
  %1195 = vst [vmem:[%s4 + $0xec] sm:$0xf] %v1131
  %1196 = vst [vmem:[%s4 + $0xf0] sm:$0xf] %v1132
  %1197 = vst [vmem:[%s4 + $0xf4] sm:$0xf] %v1133
  %1198 = vst [vmem:[%s4 + $0xf8] sm:$0xf] %v1134
  %1199 = vst [vmem:[%s4 + $0xfc] sm:$0xf] %v1135
  // Predicated region
  $region18: #{_lambda_.2} parent=0 // pred_check
    _
  $region19: #{_lambda_.2} parent=0 // pred_check_branch
    %1201 = sbr.rel (0) target = $region21
  $region20: #{_lambda_.2} parent=0 // pred_region
    _
  $region21: #{_lambda_.2} parent=0 // pred_fallthru
    _
  // Predicated region
  $region22: #{_lambda_.2} parent=0 // pred_check
    _
  $region23: #{_lambda_.2} parent=0 // pred_check_branch
    %1203 = sbr.rel (0) target = $region25
  $region24: #{_lambda_.2} parent=0 // pred_region
    _
  $region25: #{_lambda_.2} parent=0 // pred_fallthru
    _

// kernel: _lambda_.3
$region0: #{_lambda_.3}
  #allocation0 [shape = 'u32[]', space=smem, size = 0x4, offset = 0x4, fixed_abs, tag = 'smem constant byte address 0x4 - core index']
  #allocation1 [shape = 'u32[72,128]{1,0:T(1,128)}', space=vmem, size = 0x9000, scoped, tag = 'internal scratch']
  #allocation2 [shape = 'f32[2,10,10,128]{3,2,1,0:T(8,128)}', space=vmem, size = 0x28000, scoped, tag = 'scratch operand']
  %s0 = inlined_call_operand.vmem [shape: bf16[2,64,640], index: 0, kind: input, shape index: {}]
  %s1 = inlined_call_operand.vmem [shape: bf16[640,128], index: 1, kind: input, shape index: {}]
  %s2 = inlined_call_operand.vmem [shape: bf16[9,128,128], index: 2, kind: input, shape index: {}]
  %s3 = inlined_call_operand.vmem [shape: bf16[9,128,128], index: 3, kind: input, shape index: {}]
  %s4 = inlined_call_operand.vmem [shape: f32[3,3,128], index: 4, kind: input, shape index: {}]
  %s5 = inlined_call_operand.vmem [shape: f32[128,128], index: 5, kind: input, shape index: {}]
  %s6 = inlined_call_operand.hbm [shape: f32[1,2,128], index: 6, kind: output, shape index: {}]
  %s7 = sld [smem:[#allocation0]]
  $region34: #{_lambda_.3} parent=0
    _
  %s9 = ssub.s32 1, %s7
  %s10 = scalar_select 0, %s9, %s7
  $region1: #{_lambda_.3} parent=0
    #allocation3 [shape = 'u8[1024]{0}', space=vmem, size = 0x400, scoped, tag = 'output window, operand 0, single buffered']
    #allocation4 [shape = 's32[1]{0}', space=sflag, size = 0x4, scoped, tag = 'scoped memory for _lambda_.3']
    %11 = vsyncpa [#allocation4], 0
    // Predicated region
    $region2: #{_lambda_.3} parent=1 // pred_check
      _
    $region3: #{_lambda_.3} parent=1 // pred_check_branch
      %13 = sbr.rel (0) target = $region5
    $region4: #{_lambda_.3} parent=1 // pred_region
      _
    $region5: #{_lambda_.3} parent=1 // pred_fallthru
      _
    // Predicated region
    $region6: #{_lambda_.3} parent=1 // pred_check
      _
    $region7: #{_lambda_.3} parent=1 // pred_check_branch
      %15 = sbr.rel (0) target = $region9
    $region8: #{_lambda_.3} parent=1 // pred_region
      _
    $region9: #{_lambda_.3} parent=1 // pred_fallthru
      _
    // Predicated region
    $region10: #{_lambda_.3} parent=1 // pred_check
      _
    $region11: #{_lambda_.3} parent=1 // pred_check_branch
      %17 = sbr.rel (0) target = $region13
    $region12: #{_lambda_.3} parent=1 // pred_region
      _
    $region13: #{_lambda_.3} parent=1 // pred_fallthru
      _
    // Predicated region
    $region14: #{_lambda_.3} parent=1 // pred_check
      _
    $region15: #{_lambda_.3} parent=1 // pred_check_branch
      %19 = sbr.rel (0) target = $region17
    $region16: #{_lambda_.3} parent=1 // pred_region
      _
    $region17: #{_lambda_.3} parent=1 // pred_fallthru
      _
    // Predicated region
    $region18: #{_lambda_.3} parent=1 // pred_check
      _
    $region19: #{_lambda_.3} parent=1 // pred_check_branch
      %21 = sbr.rel (0) target = $region21
    $region20: #{_lambda_.3} parent=1 // pred_region
      _
    $region21: #{_lambda_.3} parent=1 // pred_fallthru
      _
    // Predicated region
    $region22: #{_lambda_.3} parent=1 // pred_check
      _
    $region23: #{_lambda_.3} parent=1 // pred_check_branch
      %23 = sbr.rel (0) target = $region25
    $region24: #{_lambda_.3} parent=1 // pred_region
      _
    $region25: #{_lambda_.3} parent=1 // pred_fallthru
      _
    %v24 = vld [vmem:[%s5] sm:$0xff]
    %v25 = vld [vmem:[%s5 + $0x8] sm:$0xff]
    %v26 = vld [vmem:[%s5 + $0x10] sm:$0xff]
    %v27 = vld [vmem:[%s5 + $0x18] sm:$0xff]
    %v28 = vld [vmem:[%s5 + $0x20] sm:$0xff]
    %v29 = vld [vmem:[%s5 + $0x28] sm:$0xff]
    %v30 = vld [vmem:[%s5 + $0x30] sm:$0xff]
    %v31 = vld [vmem:[%s5 + $0x38] sm:$0xff]
    %v32 = vld [vmem:[%s5 + $0x40] sm:$0xff]
    %v33 = vld [vmem:[%s5 + $0x48] sm:$0xff]
    %v34 = vld [vmem:[%s5 + $0x50] sm:$0xff]
    %v35 = vld [vmem:[%s5 + $0x58] sm:$0xff]
    %v36 = vld [vmem:[%s5 + $0x60] sm:$0xff]
    %v37 = vld [vmem:[%s5 + $0x68] sm:$0xff]
    %v38 = vld [vmem:[%s5 + $0x70] sm:$0xff]
    %v39 = vld [vmem:[%s5 + $0x78] sm:$0xff]
    %40 = vst [vmem:[#allocation2] sm:$0xff] 0.0
    %41 = vst [vmem:[#allocation2 + $0x8] sm:$0x3] 0.0
    %42 = vst [vmem:[#allocation2 + $0x10] sm:$0xff] 0.0
    %43 = vst [vmem:[#allocation2 + $0x18] sm:$0x3] 0.0
    %44 = vst [vmem:[#allocation2 + $0x20] sm:$0xff] 0.0
    %45 = vst [vmem:[#allocation2 + $0x28] sm:$0x3] 0.0
    %46 = vst [vmem:[#allocation2 + $0x30] sm:$0xff] 0.0
    %47 = vst [vmem:[#allocation2 + $0x38] sm:$0x3] 0.0
    %48 = vst [vmem:[#allocation2 + $0x40] sm:$0xff] 0.0
    %49 = vst [vmem:[#allocation2 + $0x48] sm:$0x3] 0.0
    %50 = vst [vmem:[#allocation2 + $0x50] sm:$0xff] 0.0
    %51 = vst [vmem:[#allocation2 + $0x58] sm:$0x3] 0.0
    %52 = vst [vmem:[#allocation2 + $0x60] sm:$0xff] 0.0
    %53 = vst [vmem:[#allocation2 + $0x68] sm:$0x3] 0.0
    %54 = vst [vmem:[#allocation2 + $0x70] sm:$0xff] 0.0
    %55 = vst [vmem:[#allocation2 + $0x78] sm:$0x3] 0.0
    %56 = vst [vmem:[#allocation2 + $0x80] sm:$0xff] 0.0
    %57 = vst [vmem:[#allocation2 + $0x88] sm:$0x3] 0.0
    %58 = vst [vmem:[#allocation2 + $0x90] sm:$0xff] 0.0
    %59 = vst [vmem:[#allocation2 + $0x98] sm:$0x3] 0.0
    %60 = vst [vmem:[#allocation2 + $0xa0] sm:$0xff] 0.0
    %61 = vst [vmem:[#allocation2 + $0xa8] sm:$0x3] 0.0
    %62 = vst [vmem:[#allocation2 + $0xb0] sm:$0xff] 0.0
    %63 = vst [vmem:[#allocation2 + $0xb8] sm:$0x3] 0.0
    %64 = vst [vmem:[#allocation2 + $0xc0] sm:$0xff] 0.0
    %65 = vst [vmem:[#allocation2 + $0xc8] sm:$0x3] 0.0
    %66 = vst [vmem:[#allocation2 + $0xd0] sm:$0xff] 0.0
    %67 = vst [vmem:[#allocation2 + $0xd8] sm:$0x3] 0.0
    %68 = vst [vmem:[#allocation2 + $0xe0] sm:$0xff] 0.0
    %69 = vst [vmem:[#allocation2 + $0xe8] sm:$0x3] 0.0
    %70 = vst [vmem:[#allocation2 + $0xf0] sm:$0xff] 0.0
    %71 = vst [vmem:[#allocation2 + $0xf8] sm:$0x3] 0.0
    %72 = vst [vmem:[#allocation2 + $0x100] sm:$0xff] 0.0
    %73 = vst [vmem:[#allocation2 + $0x108] sm:$0x3] 0.0
    %74 = vst [vmem:[#allocation2 + $0x110] sm:$0xff] 0.0
    %75 = vst [vmem:[#allocation2 + $0x118] sm:$0x3] 0.0
    %76 = vst [vmem:[#allocation2 + $0x120] sm:$0xff] 0.0
    %77 = vst [vmem:[#allocation2 + $0x128] sm:$0x3] 0.0
    %78 = vst [vmem:[#allocation2 + $0x130] sm:$0xff] 0.0
    %79 = vst [vmem:[#allocation2 + $0x138] sm:$0x3] 0.0
    %v80 = vld [vmem:[%s0] sm:$0xff]
    %v81 = vld [vmem:[%s0 + $0x8] sm:$0xff]
    %v82 = vld [vmem:[%s0 + $0x10] sm:$0xf]
    %v83 = vld [vmem:[%s0 + $0x14] sm:$0xff]
    %v84 = vld [vmem:[%s0 + $0x1c] sm:$0xff]
    %v85 = vld [vmem:[%s0 + $0x24] sm:$0xf]
    %v86 = vld [vmem:[%s0 + $0x28] sm:$0xff]
    %v87 = vld [vmem:[%s0 + $0x30] sm:$0xff]
    %v88 = vld [vmem:[%s0 + $0x38] sm:$0xf]
    %v89 = vld [vmem:[%s0 + $0x3c] sm:$0xff]
    %v90 = vld [vmem:[%s0 + $0x44] sm:$0xff]
    %v91 = vld [vmem:[%s0 + $0x4c] sm:$0xf]
    %v92 = vld [vmem:[%s0 + $0x50] sm:$0xff]
    %v93 = vld [vmem:[%s0 + $0x58] sm:$0xff]
    %v94 = vld [vmem:[%s0 + $0x60] sm:$0xf]
    %v95 = vld [vmem:[%s0 + $0x64] sm:$0xff]
    %v96 = vld [vmem:[%s0 + $0x6c] sm:$0xff]
    %v97 = vld [vmem:[%s0 + $0x74] sm:$0xf]
    %v98 = vld [vmem:[%s0 + $0x78] sm:$0xff]
    %v99 = vld [vmem:[%s0 + $0x80] sm:$0xff]
    %v100 = vld [vmem:[%s0 + $0x88] sm:$0xf]
    %v101 = vld [vmem:[%s0 + $0x8c] sm:$0xff]
    %v102 = vld [vmem:[%s0 + $0x94] sm:$0xff]
    %v103 = vld [vmem:[%s0 + $0x9c] sm:$0xf]
    %v104 = vld [vmem:[%s0 + $0xa0] sm:$0xff]
    %v105 = vld [vmem:[%s0 + $0xa8] sm:$0xff]
    %v106 = vld [vmem:[%s0 + $0xb0] sm:$0xf]
    %v107 = vld [vmem:[%s0 + $0xb4] sm:$0xff]
    %v108 = vld [vmem:[%s0 + $0xbc] sm:$0xff]
    %v109 = vld [vmem:[%s0 + $0xc4] sm:$0xf]
    %v110 = vld [vmem:[%s0 + $0xc8] sm:$0xff]
    %v111 = vld [vmem:[%s0 + $0xd0] sm:$0xff]
    %v112 = vld [vmem:[%s0 + $0xd8] sm:$0xf]
    %v113 = vld [vmem:[%s0 + $0xdc] sm:$0xff]
    %v114 = vld [vmem:[%s0 + $0xe4] sm:$0xff]
    %v115 = vld [vmem:[%s0 + $0xec] sm:$0xf]
    %v116 = vld [vmem:[%s0 + $0xf0] sm:$0xff]
    %v117 = vld [vmem:[%s0 + $0xf8] sm:$0xff]
    %v118 = vld [vmem:[%s0 + $0x100] sm:$0xf]
    %v119 = vld [vmem:[%s0 + $0x104] sm:$0xff]
    %v120 = vld [vmem:[%s0 + $0x10c] sm:$0xff]
    %v121 = vld [vmem:[%s0 + $0x114] sm:$0xf]
    %v122 = vld [vmem:[%s0 + $0x118] sm:$0xff]
    %v123 = vld [vmem:[%s0 + $0x120] sm:$0xff]
    %v124 = vld [vmem:[%s0 + $0x128] sm:$0xf]
    %v125 = vld [vmem:[%s0 + $0x12c] sm:$0xff]
    %v126 = vld [vmem:[%s0 + $0x134] sm:$0xff]
    %v127 = vld [vmem:[%s0 + $0x13c] sm:$0xf]
    %v128 = vld [vmem:[%s1] sm:$0xf]
    %v129 = vld [vmem:[%s1 + $0x4] sm:$0xf]
    %v130 = vld [vmem:[%s1 + $0x8] sm:$0xf]
    %v131 = vld [vmem:[%s1 + $0xc] sm:$0xf]
    %v132 = vld [vmem:[%s1 + $0x10] sm:$0xf]
    %v133 = vld [vmem:[%s1 + $0x14] sm:$0xf]
    %v134 = vld [vmem:[%s1 + $0x18] sm:$0xf]
    %v135 = vld [vmem:[%s1 + $0x1c] sm:$0xf]
    %v136 = vld [vmem:[%s1 + $0x20] sm:$0xf]
    %v137 = vld [vmem:[%s1 + $0x24] sm:$0xf]
    %v138 = vld [vmem:[%s1 + $0x28] sm:$0xf]
    %v139 = vld [vmem:[%s1 + $0x2c] sm:$0xf]
    %v140 = vld [vmem:[%s1 + $0x30] sm:$0xf]
    %v141 = vld [vmem:[%s1 + $0x34] sm:$0xf]
    %v142 = vld [vmem:[%s1 + $0x38] sm:$0xf]
    %v143 = vld [vmem:[%s1 + $0x3c] sm:$0xf]
    %v144 = vld [vmem:[%s1 + $0x40] sm:$0xf]
    %v145 = vld [vmem:[%s1 + $0x44] sm:$0xf]
    %v146 = vld [vmem:[%s1 + $0x48] sm:$0xf]
    %v147 = vld [vmem:[%s1 + $0x4c] sm:$0xf]
    %v148 = vld [vmem:[%s1 + $0x50] sm:$0xf]
    %v149 = vld [vmem:[%s1 + $0x54] sm:$0xf]
    %v150 = vld [vmem:[%s1 + $0x58] sm:$0xf]
    %v151 = vld [vmem:[%s1 + $0x5c] sm:$0xf]
    %v152 = vld [vmem:[%s1 + $0x60] sm:$0xf]
    %v153 = vld [vmem:[%s1 + $0x64] sm:$0xf]
    %v154 = vld [vmem:[%s1 + $0x68] sm:$0xf]
    %v155 = vld [vmem:[%s1 + $0x6c] sm:$0xf]
    %v156 = vld [vmem:[%s1 + $0x70] sm:$0xf]
    %v157 = vld [vmem:[%s1 + $0x74] sm:$0xf]
    %v158 = vld [vmem:[%s1 + $0x78] sm:$0xf]
    %v159 = vld [vmem:[%s1 + $0x7c] sm:$0xf]
    %v160 = vld [vmem:[%s1 + $0x80] sm:$0xf]
    %v161 = vld [vmem:[%s1 + $0x84] sm:$0xf]
    %v162 = vld [vmem:[%s1 + $0x88] sm:$0xf]
    %v163 = vld [vmem:[%s1 + $0x8c] sm:$0xf]
    %v164 = vld [vmem:[%s1 + $0x90] sm:$0xf]
    %v165 = vld [vmem:[%s1 + $0x94] sm:$0xf]
    %v166 = vld [vmem:[%s1 + $0x98] sm:$0xf]
    %v167 = vld [vmem:[%s1 + $0x9c] sm:$0xf]
    %v168 = vld [vmem:[%s1 + $0xa0] sm:$0xf]
    %v169 = vld [vmem:[%s1 + $0xa4] sm:$0xf]
    %v170 = vld [vmem:[%s1 + $0xa8] sm:$0xf]
    %v171 = vld [vmem:[%s1 + $0xac] sm:$0xf]
    %v172 = vld [vmem:[%s1 + $0xb0] sm:$0xf]
    %v173 = vld [vmem:[%s1 + $0xb4] sm:$0xf]
    %v174 = vld [vmem:[%s1 + $0xb8] sm:$0xf]
    %v175 = vld [vmem:[%s1 + $0xbc] sm:$0xf]
    %v176 = vld [vmem:[%s1 + $0xc0] sm:$0xf]
    %v177 = vld [vmem:[%s1 + $0xc4] sm:$0xf]
    %v178 = vld [vmem:[%s1 + $0xc8] sm:$0xf]
    %v179 = vld [vmem:[%s1 + $0xcc] sm:$0xf]
    %v180 = vld [vmem:[%s1 + $0xd0] sm:$0xf]
    %v181 = vld [vmem:[%s1 + $0xd4] sm:$0xf]
    %v182 = vld [vmem:[%s1 + $0xd8] sm:$0xf]
    %v183 = vld [vmem:[%s1 + $0xdc] sm:$0xf]
    %v184 = vld [vmem:[%s1 + $0xe0] sm:$0xf]
    %v185 = vld [vmem:[%s1 + $0xe4] sm:$0xf]
    %v186 = vld [vmem:[%s1 + $0xe8] sm:$0xf]
    %v187 = vld [vmem:[%s1 + $0xec] sm:$0xf]
    %v188 = vld [vmem:[%s1 + $0xf0] sm:$0xf]
    %v189 = vld [vmem:[%s1 + $0xf4] sm:$0xf]
    %v190 = vld [vmem:[%s1 + $0xf8] sm:$0xf]
    %v191 = vld [vmem:[%s1 + $0xfc] sm:$0xf]
    %v192 = vld [vmem:[%s1 + $0x100] sm:$0xf]
    %v193 = vld [vmem:[%s1 + $0x104] sm:$0xf]
    %v194 = vld [vmem:[%s1 + $0x108] sm:$0xf]
    %v195 = vld [vmem:[%s1 + $0x10c] sm:$0xf]
    %v196 = vld [vmem:[%s1 + $0x110] sm:$0xf]
    %v197 = vld [vmem:[%s1 + $0x114] sm:$0xf]
    %v198 = vld [vmem:[%s1 + $0x118] sm:$0xf]
    %v199 = vld [vmem:[%s1 + $0x11c] sm:$0xf]
    %v200 = vld [vmem:[%s1 + $0x120] sm:$0xf]
    %v201 = vld [vmem:[%s1 + $0x124] sm:$0xf]
    %v202 = vld [vmem:[%s1 + $0x128] sm:$0xf]
    %v203 = vld [vmem:[%s1 + $0x12c] sm:$0xf]
    %v204 = vld [vmem:[%s1 + $0x130] sm:$0xf]
    %v205 = vld [vmem:[%s1 + $0x134] sm:$0xf]
    %v206 = vld [vmem:[%s1 + $0x138] sm:$0xf]
    %v207 = vld [vmem:[%s1 + $0x13c] sm:$0xf]
    %v256 = vunpack.c.l.b16 %v80
    %v257 = vunpack.c.h.b16 %v80
    %v258 = vunpack.c.l.b16 %v81
    %v259 = vunpack.c.h.b16 %v81
    %v260 = vunpack.c.l.b16 %v82
    %v261 = vunpack.c.l.b16 %v83
    %v262 = vunpack.c.h.b16 %v83
    %v263 = vunpack.c.l.b16 %v84
    %v264 = vunpack.c.h.b16 %v84
    %v265 = vunpack.c.l.b16 %v85
    %v266 = vunpack.c.l.b16 %v86
    %v267 = vunpack.c.h.b16 %v86
    %v268 = vunpack.c.l.b16 %v87
    %v269 = vunpack.c.h.b16 %v87
    %v270 = vunpack.c.l.b16 %v88
    %v271 = vunpack.c.l.b16 %v89
    %v272 = vunpack.c.h.b16 %v89
    %v273 = vunpack.c.l.b16 %v90
    %v274 = vunpack.c.h.b16 %v90
    %v275 = vunpack.c.l.b16 %v91
    %v276 = vunpack.c.l.b16 %v92
    %v277 = vunpack.c.h.b16 %v92
    %v278 = vunpack.c.l.b16 %v93
    %v279 = vunpack.c.h.b16 %v93
    %v280 = vunpack.c.l.b16 %v94
    %v281 = vunpack.c.l.b16 %v95
    %v282 = vunpack.c.h.b16 %v95
    %v283 = vunpack.c.l.b16 %v96
    %v284 = vunpack.c.h.b16 %v96
    %v285 = vunpack.c.l.b16 %v97
    %v286 = vunpack.c.l.b16 %v98
    %v287 = vunpack.c.h.b16 %v98
    %v288 = vunpack.c.l.b16 %v99
    %v289 = vunpack.c.h.b16 %v99
    %v290 = vunpack.c.l.b16 %v100
    %v291 = vunpack.c.l.b16 %v101
    %v292 = vunpack.c.h.b16 %v101
    %v293 = vunpack.c.l.b16 %v102
    %v294 = vunpack.c.h.b16 %v102
    %v295 = vunpack.c.l.b16 %v103
    %v296 = vunpack.c.l.b16 %v104
    %v297 = vunpack.c.h.b16 %v104
    %v298 = vunpack.c.l.b16 %v105
    %v299 = vunpack.c.h.b16 %v105
    %v300 = vunpack.c.l.b16 %v106
    %v301 = vunpack.c.l.b16 %v107
    %v302 = vunpack.c.h.b16 %v107
    %v303 = vunpack.c.l.b16 %v108
    %v304 = vunpack.c.h.b16 %v108
    %v305 = vunpack.c.l.b16 %v109
    %v306 = vunpack.c.l.b16 %v110
    %v307 = vunpack.c.h.b16 %v110
    %v308 = vunpack.c.l.b16 %v111
    %v309 = vunpack.c.h.b16 %v111
    %v310 = vunpack.c.l.b16 %v112
    %v311 = vunpack.c.l.b16 %v113
    %v312 = vunpack.c.h.b16 %v113
    %v313 = vunpack.c.l.b16 %v114
    %v314 = vunpack.c.h.b16 %v114
    %v315 = vunpack.c.l.b16 %v115
    %v316 = vunpack.c.l.b16 %v116
    %v317 = vunpack.c.h.b16 %v116
    %v318 = vunpack.c.l.b16 %v117
    %v319 = vunpack.c.h.b16 %v117
    %v320 = vunpack.c.l.b16 %v118
    %v321 = vunpack.c.l.b16 %v119
    %v322 = vunpack.c.h.b16 %v119
    %v323 = vunpack.c.l.b16 %v120
    %v324 = vunpack.c.h.b16 %v120
    %v325 = vunpack.c.l.b16 %v121
    %v326 = vunpack.c.l.b16 %v122
    %v327 = vunpack.c.h.b16 %v122
    %v328 = vunpack.c.l.b16 %v123
    %v329 = vunpack.c.h.b16 %v123
    %v330 = vunpack.c.l.b16 %v124
    %v331 = vunpack.c.l.b16 %v125
    %v332 = vunpack.c.h.b16 %v125
    %v333 = vunpack.c.l.b16 %v126
    %v334 = vunpack.c.h.b16 %v126
    %v335 = vunpack.c.l.b16 %v127
    %v336 = vpack.c.b16 %v261, %v256
    %v337 = vpack.c.b16 %v262, %v257
    %v338 = vpack.c.b16 %v263, %v258
    %v339 = vpack.c.b16 %v264, %v259
    %v340 = vpack.c.b16 %v265, %v260
    %v341 = vpack.c.b16 %v271, %v266
    %v342 = vpack.c.b16 %v272, %v267
    %v343 = vpack.c.b16 %v273, %v268
    %v344 = vpack.c.b16 %v274, %v269
    %v345 = vpack.c.b16 %v275, %v270
    %v346 = vpack.c.b16 %v281, %v276
    %v347 = vpack.c.b16 %v282, %v277
    %v348 = vpack.c.b16 %v283, %v278
    %v349 = vpack.c.b16 %v284, %v279
    %v350 = vpack.c.b16 %v285, %v280
    %v351 = vpack.c.b16 %v291, %v286
    %v352 = vpack.c.b16 %v292, %v287
    %v353 = vpack.c.b16 %v293, %v288
    %v354 = vpack.c.b16 %v294, %v289
    %v355 = vpack.c.b16 %v295, %v290
    %v356 = vpack.c.b16 %v301, %v296
    %v357 = vpack.c.b16 %v302, %v297
    %v358 = vpack.c.b16 %v303, %v298
    %v359 = vpack.c.b16 %v304, %v299
    %v360 = vpack.c.b16 %v305, %v300
    %v361 = vpack.c.b16 %v311, %v306
    %v362 = vpack.c.b16 %v312, %v307
    %v363 = vpack.c.b16 %v313, %v308
    %v364 = vpack.c.b16 %v314, %v309
    %v365 = vpack.c.b16 %v315, %v310
    %v366 = vpack.c.b16 %v321, %v316
    %v367 = vpack.c.b16 %v322, %v317
    %v368 = vpack.c.b16 %v323, %v318
    %v369 = vpack.c.b16 %v324, %v319
    %v370 = vpack.c.b16 %v325, %v320
    %v371 = vpack.c.b16 %v331, %v326
    %v372 = vpack.c.b16 %v332, %v327
    %v373 = vpack.c.b16 %v333, %v328
    %v374 = vpack.c.b16 %v334, %v329
    %v375 = vpack.c.b16 %v335, %v330
    %v496 = vunpack.c.l.b16 %v128
    %v497 = vunpack.c.l.b16 %v129
    %v498 = vunpack.c.l.b16 %v130
    %v499 = vunpack.c.l.b16 %v131
    %v500 = vunpack.c.l.b16 %v132
    %v501 = vunpack.c.l.b16 %v133
    %v502 = vunpack.c.l.b16 %v134
    %v503 = vunpack.c.l.b16 %v135
    %v504 = vunpack.c.l.b16 %v136
    %v505 = vunpack.c.l.b16 %v137
    %v506 = vunpack.c.l.b16 %v138
    %v507 = vunpack.c.l.b16 %v139
    %v508 = vunpack.c.l.b16 %v140
    %v509 = vunpack.c.l.b16 %v141
    %v510 = vunpack.c.l.b16 %v142
    %v511 = vunpack.c.l.b16 %v143
    %v512 = vunpack.c.l.b16 %v144
    %v513 = vunpack.c.l.b16 %v145
    %v514 = vunpack.c.l.b16 %v146
    %v515 = vunpack.c.l.b16 %v147
    %v516 = vunpack.c.l.b16 %v148
    %v517 = vunpack.c.l.b16 %v149
    %v518 = vunpack.c.l.b16 %v150
    %v519 = vunpack.c.l.b16 %v151
    %v520 = vunpack.c.l.b16 %v152
    %v521 = vunpack.c.l.b16 %v153
    %v522 = vunpack.c.l.b16 %v154
    %v523 = vunpack.c.l.b16 %v155
    %v524 = vunpack.c.l.b16 %v156
    %v525 = vunpack.c.l.b16 %v157
    %v526 = vunpack.c.l.b16 %v158
    %v527 = vunpack.c.l.b16 %v159
    %v528 = vunpack.c.l.b16 %v160
    %v529 = vunpack.c.l.b16 %v161
    %v530 = vunpack.c.l.b16 %v162
    %v531 = vunpack.c.l.b16 %v163
    %v532 = vunpack.c.l.b16 %v164
    %v533 = vunpack.c.l.b16 %v165
    %v534 = vunpack.c.l.b16 %v166
    %v535 = vunpack.c.l.b16 %v167
    %v536 = vunpack.c.l.b16 %v168
    %v537 = vunpack.c.l.b16 %v169
    %v538 = vunpack.c.l.b16 %v170
    %v539 = vunpack.c.l.b16 %v171
    %v540 = vunpack.c.l.b16 %v172
    %v541 = vunpack.c.l.b16 %v173
    %v542 = vunpack.c.l.b16 %v174
    %v543 = vunpack.c.l.b16 %v175
    %v544 = vunpack.c.l.b16 %v176
    %v545 = vunpack.c.l.b16 %v177
    %v546 = vunpack.c.l.b16 %v178
    %v547 = vunpack.c.l.b16 %v179
    %v548 = vunpack.c.l.b16 %v180
    %v549 = vunpack.c.l.b16 %v181
    %v550 = vunpack.c.l.b16 %v182
    %v551 = vunpack.c.l.b16 %v183
    %v552 = vunpack.c.l.b16 %v184
    %v553 = vunpack.c.l.b16 %v185
    %v554 = vunpack.c.l.b16 %v186
    %v555 = vunpack.c.l.b16 %v187
    %v556 = vunpack.c.l.b16 %v188
    %v557 = vunpack.c.l.b16 %v189
    %v558 = vunpack.c.l.b16 %v190
    %v559 = vunpack.c.l.b16 %v191
    %v560 = vunpack.c.l.b16 %v192
    %v561 = vunpack.c.l.b16 %v193
    %v562 = vunpack.c.l.b16 %v194
    %v563 = vunpack.c.l.b16 %v195
    %v564 = vunpack.c.l.b16 %v196
    %v565 = vunpack.c.l.b16 %v197
    %v566 = vunpack.c.l.b16 %v198
    %v567 = vunpack.c.l.b16 %v199
    %v568 = vunpack.c.l.b16 %v200
    %v569 = vunpack.c.l.b16 %v201
    %v570 = vunpack.c.l.b16 %v202
    %v571 = vunpack.c.l.b16 %v203
    %v572 = vunpack.c.l.b16 %v204
    %v573 = vunpack.c.l.b16 %v205
    %v574 = vunpack.c.l.b16 %v206
    %v575 = vunpack.c.l.b16 %v207
    %v576 = vpack.c.b16 %v497, %v496
    %v577 = vpack.c.b16 %v499, %v498
    %v578 = vpack.c.b16 %v501, %v500
    %v579 = vpack.c.b16 %v503, %v502
    %v580 = vpack.c.b16 %v505, %v504
    %v581 = vpack.c.b16 %v507, %v506
    %v582 = vpack.c.b16 %v509, %v508
    %v583 = vpack.c.b16 %v511, %v510
    %v584 = vpack.c.b16 %v513, %v512
    %v585 = vpack.c.b16 %v515, %v514
    %v586 = vpack.c.b16 %v517, %v516
    %v587 = vpack.c.b16 %v519, %v518
    %v588 = vpack.c.b16 %v521, %v520
    %v589 = vpack.c.b16 %v523, %v522
    %v590 = vpack.c.b16 %v525, %v524
    %v591 = vpack.c.b16 %v527, %v526
    %v592 = vpack.c.b16 %v529, %v528
    %v593 = vpack.c.b16 %v531, %v530
    %v594 = vpack.c.b16 %v533, %v532
    %v595 = vpack.c.b16 %v535, %v534
    %v596 = vpack.c.b16 %v537, %v536
    %v597 = vpack.c.b16 %v539, %v538
    %v598 = vpack.c.b16 %v541, %v540
    %v599 = vpack.c.b16 %v543, %v542
    %v600 = vpack.c.b16 %v545, %v544
    %v601 = vpack.c.b16 %v547, %v546
    %v602 = vpack.c.b16 %v549, %v548
    %v603 = vpack.c.b16 %v551, %v550
    %v604 = vpack.c.b16 %v553, %v552
    %v605 = vpack.c.b16 %v555, %v554
    %v606 = vpack.c.b16 %v557, %v556
    %v607 = vpack.c.b16 %v559, %v558
    %v608 = vpack.c.b16 %v561, %v560
    %v609 = vpack.c.b16 %v563, %v562
    %v610 = vpack.c.b16 %v565, %v564
    %v611 = vpack.c.b16 %v567, %v566
    %v612 = vpack.c.b16 %v569, %v568
    %v613 = vpack.c.b16 %v571, %v570
    %v614 = vpack.c.b16 %v573, %v572
    %v615 = vpack.c.b16 %v575, %v574
    %656 = vmatpush.bf16.msra.mxu0 %v583
    %657 = vmatpush.bf16.msra.mxu0 %v582
    %658 = vmatpush.bf16.msra.mxu0 %v581
    %659 = vmatpush.bf16.msra.mxu0 %v580
    %660 = vmatpush.bf16.msra.mxu0 %v579
    %661 = vmatpush.bf16.msra.mxu0 %v578
    %662 = vmatpush.bf16.msra.mxu0 %v577
    %663 = vmatpush.bf16.msra.mxu0 %v576
    %664 = vmatmul.bf16.gmra.mxu0 %v336
    %v665 = vpop.f32.mrf.mxu0
    %v666 = vadd.f32 0.0, %v665
    %v667 = vpop.f32.mrf.mxu0
    %v668 = vadd.f32 0.0, %v667
    %669 = vmatmul.bf16.gmra.mxu0 %v341
    %v670 = vpop.f32.mrf.mxu0
    %v671 = vadd.f32 0.0, %v670
    %v672 = vpop.f32.mrf.mxu0
    %v673 = vadd.f32 0.0, %v672
    %674 = vmatmul.bf16.gmra.mxu0 %v346
    %v675 = vpop.f32.mrf.mxu0
    %v676 = vadd.f32 0.0, %v675
    %v677 = vpop.f32.mrf.mxu0
    %v678 = vadd.f32 0.0, %v677
    %679 = vmatmul.bf16.gmra.mxu0 %v351
    %v680 = vpop.f32.mrf.mxu0
    %v681 = vadd.f32 0.0, %v680
    %v682 = vpop.f32.mrf.mxu0
    %v683 = vadd.f32 0.0, %v682
    %684 = vmatmul.bf16.gmra.mxu0 %v356
    %v685 = vpop.f32.mrf.mxu0
    %v686 = vadd.f32 0.0, %v685
    %v687 = vpop.f32.mrf.mxu0
    %v688 = vadd.f32 0.0, %v687
    %689 = vmatmul.bf16.gmra.mxu0 %v361
    %v690 = vpop.f32.mrf.mxu0
    %v691 = vadd.f32 0.0, %v690
    %v692 = vpop.f32.mrf.mxu0
    %v693 = vadd.f32 0.0, %v692
    %694 = vmatmul.bf16.gmra.mxu0 %v366
    %v695 = vpop.f32.mrf.mxu0
    %v696 = vadd.f32 0.0, %v695
    %v697 = vpop.f32.mrf.mxu0
    %v698 = vadd.f32 0.0, %v697
    %699 = vmatmul.bf16.gmra.mxu0 %v371
    %v700 = vpop.f32.mrf.mxu0
    %v701 = vadd.f32 0.0, %v700
    %v702 = vpop.f32.mrf.mxu0
    %v703 = vadd.f32 0.0, %v702
    %704 = vdwg.mxu0
    %705 = vmatpush.bf16.msra.mxu0 %v591
    %706 = vmatpush.bf16.msra.mxu0 %v590
    %707 = vmatpush.bf16.msra.mxu0 %v589
    %708 = vmatpush.bf16.msra.mxu0 %v588
    %709 = vmatpush.bf16.msra.mxu0 %v587
    %710 = vmatpush.bf16.msra.mxu0 %v586
    %711 = vmatpush.bf16.msra.mxu0 %v585
    %712 = vmatpush.bf16.msra.mxu0 %v584
    %713 = vmatmul.bf16.gmra.mxu0 %v337
    %v714 = vpop.f32.mrf.mxu0
    %v715 = vadd.f32 %v666, %v714
    %v716 = vpop.f32.mrf.mxu0
    %v717 = vadd.f32 %v668, %v716
    %718 = vmatmul.bf16.gmra.mxu0 %v342
    %v719 = vpop.f32.mrf.mxu0
    %v720 = vadd.f32 %v671, %v719
    %v721 = vpop.f32.mrf.mxu0
    %v722 = vadd.f32 %v673, %v721
    %723 = vmatmul.bf16.gmra.mxu0 %v347
    %v724 = vpop.f32.mrf.mxu0
    %v725 = vadd.f32 %v676, %v724
    %v726 = vpop.f32.mrf.mxu0
    %v727 = vadd.f32 %v678, %v726
    %728 = vmatmul.bf16.gmra.mxu0 %v352
    %v729 = vpop.f32.mrf.mxu0
    %v730 = vadd.f32 %v681, %v729
    %v731 = vpop.f32.mrf.mxu0
    %v732 = vadd.f32 %v683, %v731
    %733 = vmatmul.bf16.gmra.mxu0 %v357
    %v734 = vpop.f32.mrf.mxu0
    %v735 = vadd.f32 %v686, %v734
    %v736 = vpop.f32.mrf.mxu0
    %v737 = vadd.f32 %v688, %v736
    %738 = vmatmul.bf16.gmra.mxu0 %v362
    %v739 = vpop.f32.mrf.mxu0
    %v740 = vadd.f32 %v691, %v739
    %v741 = vpop.f32.mrf.mxu0
    %v742 = vadd.f32 %v693, %v741
    %743 = vmatmul.bf16.gmra.mxu0 %v367
    %v744 = vpop.f32.mrf.mxu0
    %v745 = vadd.f32 %v696, %v744
    %v746 = vpop.f32.mrf.mxu0
    %v747 = vadd.f32 %v698, %v746
    %748 = vmatmul.bf16.gmra.mxu0 %v372
    %v749 = vpop.f32.mrf.mxu0
    %v750 = vadd.f32 %v701, %v749
    %v751 = vpop.f32.mrf.mxu0
    %v752 = vadd.f32 %v703, %v751
    %753 = vdwg.mxu0
    %754 = vmatpush.bf16.msra.mxu0 %v599
    %755 = vmatpush.bf16.msra.mxu0 %v598
    %756 = vmatpush.bf16.msra.mxu0 %v597
    %757 = vmatpush.bf16.msra.mxu0 %v596
    %758 = vmatpush.bf16.msra.mxu0 %v595
    %759 = vmatpush.bf16.msra.mxu0 %v594
    %760 = vmatpush.bf16.msra.mxu0 %v593
    %761 = vmatpush.bf16.msra.mxu0 %v592
    %762 = vmatmul.bf16.gmra.mxu0 %v338
    %v763 = vpop.f32.mrf.mxu0
    %v764 = vadd.f32 %v715, %v763
    %v765 = vpop.f32.mrf.mxu0
    %v766 = vadd.f32 %v717, %v765
    %767 = vmatmul.bf16.gmra.mxu0 %v343
    %v768 = vpop.f32.mrf.mxu0
    %v769 = vadd.f32 %v720, %v768
    %v770 = vpop.f32.mrf.mxu0
    %v771 = vadd.f32 %v722, %v770
    %772 = vmatmul.bf16.gmra.mxu0 %v348
    %v773 = vpop.f32.mrf.mxu0
    %v774 = vadd.f32 %v725, %v773
    %v775 = vpop.f32.mrf.mxu0
    %v776 = vadd.f32 %v727, %v775
    %777 = vmatmul.bf16.gmra.mxu0 %v353
    %v778 = vpop.f32.mrf.mxu0
    %v779 = vadd.f32 %v730, %v778
    %v780 = vpop.f32.mrf.mxu0
    %v781 = vadd.f32 %v732, %v780
    %782 = vmatmul.bf16.gmra.mxu0 %v358
    %v783 = vpop.f32.mrf.mxu0
    %v784 = vadd.f32 %v735, %v783
    %v785 = vpop.f32.mrf.mxu0
    %v786 = vadd.f32 %v737, %v785
    %787 = vmatmul.bf16.gmra.mxu0 %v363
    %v788 = vpop.f32.mrf.mxu0
    %v789 = vadd.f32 %v740, %v788
    %v790 = vpop.f32.mrf.mxu0
    %v791 = vadd.f32 %v742, %v790
    %792 = vmatmul.bf16.gmra.mxu0 %v368
    %v793 = vpop.f32.mrf.mxu0
    %v794 = vadd.f32 %v745, %v793
    %v795 = vpop.f32.mrf.mxu0
    %v796 = vadd.f32 %v747, %v795
    %797 = vmatmul.bf16.gmra.mxu0 %v373
    %v798 = vpop.f32.mrf.mxu0
    %v799 = vadd.f32 %v750, %v798
    %v800 = vpop.f32.mrf.mxu0
    %v801 = vadd.f32 %v752, %v800
    %802 = vdwg.mxu0
    %803 = vmatpush.bf16.msra.mxu0 %v607
    %804 = vmatpush.bf16.msra.mxu0 %v606
    %805 = vmatpush.bf16.msra.mxu0 %v605
    %806 = vmatpush.bf16.msra.mxu0 %v604
    %807 = vmatpush.bf16.msra.mxu0 %v603
    %808 = vmatpush.bf16.msra.mxu0 %v602
    %809 = vmatpush.bf16.msra.mxu0 %v601
    %810 = vmatpush.bf16.msra.mxu0 %v600
    %811 = vmatmul.bf16.gmra.mxu0 %v339
    %v812 = vpop.f32.mrf.mxu0
    %v813 = vadd.f32 %v764, %v812
    %v814 = vpop.f32.mrf.mxu0
    %v815 = vadd.f32 %v766, %v814
    %816 = vmatmul.bf16.gmra.mxu0 %v344
    %v817 = vpop.f32.mrf.mxu0
    %v818 = vadd.f32 %v769, %v817
    %v819 = vpop.f32.mrf.mxu0
    %v820 = vadd.f32 %v771, %v819
    %821 = vmatmul.bf16.gmra.mxu0 %v349
    %v822 = vpop.f32.mrf.mxu0
    %v823 = vadd.f32 %v774, %v822
    %v824 = vpop.f32.mrf.mxu0
    %v825 = vadd.f32 %v776, %v824
    %826 = vmatmul.bf16.gmra.mxu0 %v354
    %v827 = vpop.f32.mrf.mxu0
    %v828 = vadd.f32 %v779, %v827
    %v829 = vpop.f32.mrf.mxu0
    %v830 = vadd.f32 %v781, %v829
    %831 = vmatmul.bf16.gmra.mxu0 %v359
    %v832 = vpop.f32.mrf.mxu0
    %v833 = vadd.f32 %v784, %v832
    %v834 = vpop.f32.mrf.mxu0
    %v835 = vadd.f32 %v786, %v834
    %836 = vmatmul.bf16.gmra.mxu0 %v364
    %v837 = vpop.f32.mrf.mxu0
    %v838 = vadd.f32 %v789, %v837
    %v839 = vpop.f32.mrf.mxu0
    %v840 = vadd.f32 %v791, %v839
    %841 = vmatmul.bf16.gmra.mxu0 %v369
    %v842 = vpop.f32.mrf.mxu0
    %v843 = vadd.f32 %v794, %v842
    %v844 = vpop.f32.mrf.mxu0
    %v845 = vadd.f32 %v796, %v844
    %846 = vmatmul.bf16.gmra.mxu0 %v374
    %v847 = vpop.f32.mrf.mxu0
    %v848 = vadd.f32 %v799, %v847
    %v849 = vpop.f32.mrf.mxu0
    %v850 = vadd.f32 %v801, %v849
    %851 = vdwg.mxu0
    %852 = vmatpush.bf16.msra.mxu0 %v615
    %853 = vmatpush.bf16.msra.mxu0 %v614
    %854 = vmatpush.bf16.msra.mxu0 %v613
    %855 = vmatpush.bf16.msra.mxu0 %v612
    %856 = vmatpush.bf16.msra.mxu0 %v611
    %857 = vmatpush.bf16.msra.mxu0 %v610
    %858 = vmatpush.bf16.msra.mxu0 %v609
    %859 = vmatpush.bf16.msra.mxu0 %v608
    %860 = vmatmul.bf16.gmra.mxu0 %v340
    %v861 = vpop.f32.mrf.mxu0
    %v862 = vadd.f32 %v813, %v861
    %v863 = vpop.f32.mrf.mxu0
    %v864 = vadd.f32 %v815, %v863
    %865 = vmatmul.bf16.gmra.mxu0 %v345
    %v866 = vpop.f32.mrf.mxu0
    %v867 = vadd.f32 %v818, %v866
    %v868 = vpop.f32.mrf.mxu0
    %v869 = vadd.f32 %v820, %v868
    %870 = vmatmul.bf16.gmra.mxu0 %v350
    %v871 = vpop.f32.mrf.mxu0
    %v872 = vadd.f32 %v823, %v871
    %v873 = vpop.f32.mrf.mxu0
    %v874 = vadd.f32 %v825, %v873
    %875 = vmatmul.bf16.gmra.mxu0 %v355
    %v876 = vpop.f32.mrf.mxu0
    %v877 = vadd.f32 %v828, %v876
    %v878 = vpop.f32.mrf.mxu0
    %v879 = vadd.f32 %v830, %v878
    %880 = vmatmul.bf16.gmra.mxu0 %v360
    %v881 = vpop.f32.mrf.mxu0
    %v882 = vadd.f32 %v833, %v881
    %v883 = vpop.f32.mrf.mxu0
    %v884 = vadd.f32 %v835, %v883
    %885 = vmatmul.bf16.gmra.mxu0 %v365
    %v886 = vpop.f32.mrf.mxu0
    %v887 = vadd.f32 %v838, %v886
    %v888 = vpop.f32.mrf.mxu0
    %v889 = vadd.f32 %v840, %v888
    %890 = vmatmul.bf16.gmra.mxu0 %v370
    %v891 = vpop.f32.mrf.mxu0
    %v892 = vadd.f32 %v843, %v891
    %v893 = vpop.f32.mrf.mxu0
    %v894 = vadd.f32 %v845, %v893
    %895 = vmatmul.bf16.gmra.mxu0 %v375
    %v896 = vpop.f32.mrf.mxu0
    %v897 = vadd.f32 %v848, %v896
    %v898 = vpop.f32.mrf.mxu0
    %v899 = vadd.f32 %v850, %v898
    %900 = vdwg.mxu0
    %v901 = vld [vmem:[%s4] sm:$0x7]
    %v902 = vperm.slane %v901, 0
    %v903 = vadd.f32 %v862, %v902
    %v904 = vadd.f32 %v864, %v902
    %v905 = vadd.f32 %v867, %v902
    %v906 = vadd.f32 %v869, %v902
    %v907 = vadd.f32 %v872, %v902
    %v908 = vadd.f32 %v874, %v902
    %v909 = vadd.f32 %v877, %v902
    %v910 = vadd.f32 %v879, %v902
    %v911 = vadd.f32 %v882, %v902
    %v912 = vadd.f32 %v884, %v902
    %v913 = vadd.f32 %v887, %v902
    %v914 = vadd.f32 %v889, %v902
    %v915 = vadd.f32 %v892, %v902
    %v916 = vadd.f32 %v894, %v902
    %v917 = vadd.f32 %v897, %v902
    %v918 = vadd.f32 %v899, %v902
    %v919 = vmax.f32 %v903, 0.0
    %v920 = vmax.f32 %v904, 0.0
    %v921 = vmax.f32 %v905, 0.0
    %v922 = vmax.f32 %v906, 0.0
    %v923 = vmax.f32 %v907, 0.0
    %v924 = vmax.f32 %v908, 0.0
    %v925 = vmax.f32 %v909, 0.0
    %v926 = vmax.f32 %v910, 0.0
    %v927 = vmax.f32 %v911, 0.0
    %v928 = vmax.f32 %v912, 0.0
    %v929 = vmax.f32 %v913, 0.0
    %v930 = vmax.f32 %v914, 0.0
    %v931 = vmax.f32 %v915, 0.0
    %v932 = vmax.f32 %v916, 0.0
    %v933 = vmax.f32 %v917, 0.0
    %v934 = vmax.f32 %v918, 0.0
    %v935 = vadd.f32 %v919, %v920
    %v936 = vadd.f32 %v935, %v921
    %v937 = vadd.f32 %v936, %v922
    %v938 = vadd.f32 %v937, %v923
    %v939 = vadd.f32 %v938, %v924
    %v940 = vadd.f32 %v939, %v925
    %v941 = vadd.f32 %v940, %v926
    %v942 = vrot.slane %v941, 4
    %v943 = vadd.f32 %v941, %v942
    %v944 = vrot.slane %v943, 2
    %v945 = vadd.f32 %v943, %v944
    %v946 = vrot.slane %v945, 1
    %v947 = vadd.f32 %v945, %v946
    %v948 = vadd.f32 %v927, %v928
    %v949 = vadd.f32 %v948, %v929
    %v950 = vadd.f32 %v949, %v930
    %v951 = vadd.f32 %v950, %v931
    %v952 = vadd.f32 %v951, %v932
    %v953 = vadd.f32 %v952, %v933
    %v954 = vadd.f32 %v953, %v934
    %v955 = vrot.slane %v954, 4
    %v956 = vadd.f32 %v954, %v955
    %v957 = vrot.slane %v956, 2
    %v958 = vadd.f32 %v956, %v957
    %v959 = vrot.slane %v958, 1
    %v960 = vadd.f32 %v958, %v959
    %v961 = vmul.f32 %v919, %v919
    %v962 = vmul.f32 %v920, %v920
    %v963 = vmul.f32 %v921, %v921
    %v964 = vmul.f32 %v922, %v922
    %v965 = vmul.f32 %v923, %v923
    %v966 = vmul.f32 %v924, %v924
    %v967 = vmul.f32 %v925, %v925
    %v968 = vmul.f32 %v926, %v926
    %v969 = vmul.f32 %v927, %v927
    %v970 = vmul.f32 %v928, %v928
    %v971 = vmul.f32 %v929, %v929
    %v972 = vmul.f32 %v930, %v930
    %v973 = vmul.f32 %v931, %v931
    %v974 = vmul.f32 %v932, %v932
    %v975 = vmul.f32 %v933, %v933
    %v976 = vmul.f32 %v934, %v934
    %v977 = vadd.f32 %v961, %v962
    %v978 = vadd.f32 %v977, %v963
    %v979 = vadd.f32 %v978, %v964
    %v980 = vadd.f32 %v979, %v965
    %v981 = vadd.f32 %v980, %v966
    %v982 = vadd.f32 %v981, %v967
    %v983 = vadd.f32 %v982, %v968
    %v984 = vrot.slane %v983, 4
    %v985 = vadd.f32 %v983, %v984
    %v986 = vrot.slane %v985, 2
    %v987 = vadd.f32 %v985, %v986
    %v988 = vrot.slane %v987, 1
    %v989 = vadd.f32 %v987, %v988
    %v990 = vadd.f32 %v969, %v970
    %v991 = vadd.f32 %v990, %v971
    %v992 = vadd.f32 %v991, %v972
    %v993 = vadd.f32 %v992, %v973
    %v994 = vadd.f32 %v993, %v974
    %v995 = vadd.f32 %v994, %v975
    %v996 = vadd.f32 %v995, %v976
    %v997 = vrot.slane %v996, 4
    %v998 = vadd.f32 %v996, %v997
    %v999 = vrot.slane %v998, 2
    %v1000 = vadd.f32 %v998, %v999
    %v1001 = vrot.slane %v1000, 1
    %v1002 = vadd.f32 %v1000, %v1001
    %vm1005 = vcmask 1041409
    %v1006 = vsel %vm1005, %v960, %v947
    %1008 = vmatpush.msra.mxu0 %v39
    %1009 = vmatpush.msra.mxu0 %v38
    %1010 = vmatpush.msra.mxu0 %v37
    %1011 = vmatpush.msra.mxu0 %v36
    %1012 = vmatpush.msra.mxu0 %v35
    %1013 = vmatpush.msra.mxu0 %v34
    %1014 = vmatpush.msra.mxu0 %v33
    %1015 = vmatpush.msra.mxu0 %v32
    %1016 = vmatpush.msra.mxu0 %v31
    %1017 = vmatpush.msra.mxu0 %v30
    %1018 = vmatpush.msra.mxu0 %v29
    %1019 = vmatpush.msra.mxu0 %v28
    %1020 = vmatpush.msra.mxu0 %v27
    %1021 = vmatpush.msra.mxu0 %v26
    %1022 = vmatpush.msra.mxu0 %v25
    %1023 = vmatpush.msra.mxu0 %v24
    %1024 = vmatmul.f32.gmra.mxu0 %v1006
    %v1025 = vpop.f32.mrf.mxu0
    %v1026 = vadd.f32 0.0, %v1025
    %1027 = vdwg.mxu0
    %v1030 = vsel %vm1005, %v1002, %v989
    %1032 = vmatpush.msra.mxu0 %v39
    %1033 = vmatpush.msra.mxu0 %v38
    %1034 = vmatpush.msra.mxu0 %v37
    %1035 = vmatpush.msra.mxu0 %v36
    %1036 = vmatpush.msra.mxu0 %v35
    %1037 = vmatpush.msra.mxu0 %v34
    %1038 = vmatpush.msra.mxu0 %v33
    %1039 = vmatpush.msra.mxu0 %v32
    %1040 = vmatpush.msra.mxu0 %v31
    %1041 = vmatpush.msra.mxu0 %v30
    %1042 = vmatpush.msra.mxu0 %v29
    %1043 = vmatpush.msra.mxu0 %v28
    %1044 = vmatpush.msra.mxu0 %v27
    %1045 = vmatpush.msra.mxu0 %v26
    %1046 = vmatpush.msra.mxu0 %v25
    %1047 = vmatpush.msra.mxu0 %v24
    %1048 = vmatmul.f32.gmra.mxu0 %v1030
    %v1049 = vpop.f32.mrf.mxu0
    %v1050 = vadd.f32 0.0, %v1049
    %1051 = vdwg.mxu0
    %v1052 = vmul.f32 %v1026, %v1026
    %v1053 = vsub.f32 %v1050, %v1052
    %v1054 = vmax.f32 %v1053, 0.0
    %v1055 = vadd.f32 %v1054, 1e-05
    %v1056 = vrsqrt.pop %v1055
    %v1057 = vmul.f32 %v1056, %v1055
    %v1058 = vmul.f32 %v1057, %v1056
    %v1059 = vmul.f32 0.5, %v1058
    %v1060 = vsub.f32 1.5, %v1059
    %v1061 = vmul.f32 %v1056, %v1060
    %vm1062 = vweird.f32 %v1055
    %vm1063 = vweird.f32 %v1056
    %vm1064 = vmor %vm1062, %vm1063
    %v1065 = vsel %vm1064, %v1056, %v1061
    %v1066 = vperm.slane %v901, 1
    %v1067 = vmul.f32 %v1065, %v1066
    %v1068 = vmul.f32 %v1026, %v1067
    %v1069 = vperm.slane %v901, 2
    %v1070 = vsub.f32 %v1069, %v1068
    %v1072 = vrot.slane %v1067, 1
    %v1073 = vperm.slane %v1067, 0
    %v1074 = vperm.slane %v1072, 0
    %v1077 = vmul.f32 %v919, %v1073
    %v1078 = vmul.f32 %v920, %v1073
    %v1079 = vmul.f32 %v921, %v1073
    %v1080 = vmul.f32 %v922, %v1073
    %v1081 = vmul.f32 %v923, %v1073
    %v1082 = vmul.f32 %v924, %v1073
    %v1083 = vmul.f32 %v925, %v1073
    %v1084 = vmul.f32 %v926, %v1073
    %v1085 = vmul.f32 %v927, %v1074
    %v1086 = vmul.f32 %v928, %v1074
    %v1087 = vmul.f32 %v929, %v1074
    %v1088 = vmul.f32 %v930, %v1074
    %v1089 = vmul.f32 %v931, %v1074
    %v1090 = vmul.f32 %v932, %v1074
    %v1091 = vmul.f32 %v933, %v1074
    %v1092 = vmul.f32 %v934, %v1074
    %v1094 = vrot.slane %v1070, 1
    %v1095 = vperm.slane %v1070, 0
    %v1096 = vperm.slane %v1094, 0
    %v1099 = vadd.f32 %v1077, %v1095
    %v1100 = vadd.f32 %v1078, %v1095
    %v1101 = vadd.f32 %v1079, %v1095
    %v1102 = vadd.f32 %v1080, %v1095
    %v1103 = vadd.f32 %v1081, %v1095
    %v1104 = vadd.f32 %v1082, %v1095
    %v1105 = vadd.f32 %v1083, %v1095
    %v1106 = vadd.f32 %v1084, %v1095
    %v1107 = vadd.f32 %v1085, %v1096
    %v1108 = vadd.f32 %v1086, %v1096
    %v1109 = vadd.f32 %v1087, %v1096
    %v1110 = vadd.f32 %v1088, %v1096
    %v1111 = vadd.f32 %v1089, %v1096
    %v1112 = vadd.f32 %v1090, %v1096
    %v1113 = vadd.f32 %v1091, %v1096
    %v1114 = vadd.f32 %v1092, %v1096
    %s1115 = scalar_lea.vmem [#allocation2], 16
    %1116 = vst [vmem:[%s1115 + $0x1] sm:$0xff] %v1099
    %1117 = vst [vmem:[%s1115 + $0x11] sm:$0xff] %v1100
    %1118 = vst [vmem:[%s1115 + $0x21] sm:$0xff] %v1101
    %1119 = vst [vmem:[%s1115 + $0x31] sm:$0xff] %v1102
    %1120 = vst [vmem:[%s1115 + $0x41] sm:$0xff] %v1103
    %1121 = vst [vmem:[%s1115 + $0x51] sm:$0xff] %v1104
    %1122 = vst [vmem:[%s1115 + $0x61] sm:$0xff] %v1105
    %1123 = vst [vmem:[%s1115 + $0x71] sm:$0xff] %v1106
    %1124 = vst [vmem:[%s1115 + $0xa1] sm:$0xff] %v1107
    %1125 = vst [vmem:[%s1115 + $0xb1] sm:$0xff] %v1108
    %1126 = vst [vmem:[%s1115 + $0xc1] sm:$0xff] %v1109
    %1127 = vst [vmem:[%s1115 + $0xd1] sm:$0xff] %v1110
    %1128 = vst [vmem:[%s1115 + $0xe1] sm:$0xff] %v1111
    %1129 = vst [vmem:[%s1115 + $0xf1] sm:$0xff] %v1112
    %1130 = vst [vmem:[%s1115 + $0x101] sm:$0xff] %v1113
    %1131 = vst [vmem:[%s1115 + $0x111] sm:$0xff] %v1114
    %v1132 = vld [vmem:[#allocation2] sm:$0xff]
    %v1133 = vld [vmem:[#allocation2 + $0x10] sm:$0xff]
    %v1134 = vld [vmem:[#allocation2 + $0x20] sm:$0xff]
    %v1135 = vld [vmem:[#allocation2 + $0x30] sm:$0xff]
    %v1136 = vld [vmem:[#allocation2 + $0x40] sm:$0xff]
    %v1137 = vld [vmem:[#allocation2 + $0x50] sm:$0xff]
    %v1138 = vld [vmem:[#allocation2 + $0x60] sm:$0xff]
    %v1139 = vld [vmem:[#allocation2 + $0x70] sm:$0xff]
    %v1140 = vld [vmem:[#allocation2 + $0xa0] sm:$0xff]
    %v1141 = vld [vmem:[#allocation2 + $0xb0] sm:$0xff]
    %v1142 = vld [vmem:[#allocation2 + $0xc0] sm:$0xff]
    %v1143 = vld [vmem:[#allocation2 + $0xd0] sm:$0xff]
    %v1144 = vld [vmem:[#allocation2 + $0xe0] sm:$0xff]
    %v1145 = vld [vmem:[#allocation2 + $0xf0] sm:$0xff]
    %v1146 = vld [vmem:[#allocation2 + $0x100] sm:$0xff]
    %v1147 = vld [vmem:[#allocation2 + $0x110] sm:$0xff]
    %v1148 = vpack.c.bf16 %v1132, %v1132
    %v1149 = vpack.c.bf16 %v1133, %v1133
    %v1150 = vpack.c.bf16 %v1134, %v1134
    %v1151 = vpack.c.bf16 %v1135, %v1135
    %v1152 = vpack.c.bf16 %v1136, %v1136
    %v1153 = vpack.c.bf16 %v1137, %v1137
    %v1154 = vpack.c.bf16 %v1138, %v1138
    %v1155 = vpack.c.bf16 %v1139, %v1139
    %v1156 = vpack.c.bf16 %v1140, %v1140
    %v1157 = vpack.c.bf16 %v1141, %v1141
    %v1158 = vpack.c.bf16 %v1142, %v1142
    %v1159 = vpack.c.bf16 %v1143, %v1143
    %v1160 = vpack.c.bf16 %v1144, %v1144
    %v1161 = vpack.c.bf16 %v1145, %v1145
    %v1162 = vpack.c.bf16 %v1146, %v1146
    %v1163 = vpack.c.bf16 %v1147, %v1147
    %v1164 = vld [vmem:[%s2] sm:$0xf]
    %v1165 = vld [vmem:[%s2 + $0x4] sm:$0xf]
    %v1166 = vld [vmem:[%s2 + $0x8] sm:$0xf]
    %v1167 = vld [vmem:[%s2 + $0xc] sm:$0xf]
    %v1168 = vld [vmem:[%s2 + $0x10] sm:$0xf]
    %v1169 = vld [vmem:[%s2 + $0x14] sm:$0xf]
    %v1170 = vld [vmem:[%s2 + $0x18] sm:$0xf]
    %v1171 = vld [vmem:[%s2 + $0x1c] sm:$0xf]
    %v1172 = vld [vmem:[%s2 + $0x20] sm:$0xf]
    %v1173 = vld [vmem:[%s2 + $0x24] sm:$0xf]
    %v1174 = vld [vmem:[%s2 + $0x28] sm:$0xf]
    %v1175 = vld [vmem:[%s2 + $0x2c] sm:$0xf]
    %v1176 = vld [vmem:[%s2 + $0x30] sm:$0xf]
    %v1177 = vld [vmem:[%s2 + $0x34] sm:$0xf]
    %v1178 = vld [vmem:[%s2 + $0x38] sm:$0xf]
    %v1179 = vld [vmem:[%s2 + $0x3c] sm:$0xf]
    %v1180 = vld [vmem:[#allocation2 + $0x1] sm:$0xff]
    %v1181 = vld [vmem:[#allocation2 + $0x11] sm:$0xff]
    %v1182 = vld [vmem:[#allocation2 + $0x21] sm:$0xff]
    %v1183 = vld [vmem:[#allocation2 + $0x31] sm:$0xff]
    %v1184 = vld [vmem:[#allocation2 + $0x41] sm:$0xff]
    %v1185 = vld [vmem:[#allocation2 + $0x51] sm:$0xff]
    %v1186 = vld [vmem:[#allocation2 + $0x61] sm:$0xff]
    %v1187 = vld [vmem:[#allocation2 + $0x71] sm:$0xff]
    %v1188 = vld [vmem:[#allocation2 + $0xa1] sm:$0xff]
    %v1189 = vld [vmem:[#allocation2 + $0xb1] sm:$0xff]
    %v1190 = vld [vmem:[#allocation2 + $0xc1] sm:$0xff]
    %v1191 = vld [vmem:[#allocation2 + $0xd1] sm:$0xff]
    %v1192 = vld [vmem:[#allocation2 + $0xe1] sm:$0xff]
    %v1193 = vld [vmem:[#allocation2 + $0xf1] sm:$0xff]
    %v1194 = vld [vmem:[#allocation2 + $0x101] sm:$0xff]
    %v1195 = vld [vmem:[#allocation2 + $0x111] sm:$0xff]
    %v1196 = vpack.c.bf16 %v1180, %v1180
    %v1197 = vpack.c.bf16 %v1181, %v1181
    %v1198 = vpack.c.bf16 %v1182, %v1182
    %v1199 = vpack.c.bf16 %v1183, %v1183
    %v1200 = vpack.c.bf16 %v1184, %v1184
    %v1201 = vpack.c.bf16 %v1185, %v1185
    %v1202 = vpack.c.bf16 %v1186, %v1186
    %v1203 = vpack.c.bf16 %v1187, %v1187
    %v1204 = vpack.c.bf16 %v1188, %v1188
    %v1205 = vpack.c.bf16 %v1189, %v1189
    %v1206 = vpack.c.bf16 %v1190, %v1190
    %v1207 = vpack.c.bf16 %v1191, %v1191
    %v1208 = vpack.c.bf16 %v1192, %v1192
    %v1209 = vpack.c.bf16 %v1193, %v1193
    %v1210 = vpack.c.bf16 %v1194, %v1194
    %v1211 = vpack.c.bf16 %v1195, %v1195
    %s1212 = scalar_lea.vmem %s2, 64
    %v1213 = vld [vmem:[%s1212] sm:$0xf]
    %v1214 = vld [vmem:[%s1212 + $0x4] sm:$0xf]
    %v1215 = vld [vmem:[%s1212 + $0x8] sm:$0xf]
    %v1216 = vld [vmem:[%s1212 + $0xc] sm:$0xf]
    %v1217 = vld [vmem:[%s1212 + $0x10] sm:$0xf]
    %v1218 = vld [vmem:[%s1212 + $0x14] sm:$0xf]
    %v1219 = vld [vmem:[%s1212 + $0x18] sm:$0xf]
    %v1220 = vld [vmem:[%s1212 + $0x1c] sm:$0xf]
    %v1221 = vld [vmem:[%s1212 + $0x20] sm:$0xf]
    %v1222 = vld [vmem:[%s1212 + $0x24] sm:$0xf]
    %v1223 = vld [vmem:[%s1212 + $0x28] sm:$0xf]
    %v1224 = vld [vmem:[%s1212 + $0x2c] sm:$0xf]
    %v1225 = vld [vmem:[%s1212 + $0x30] sm:$0xf]
    %v1226 = vld [vmem:[%s1212 + $0x34] sm:$0xf]
    %v1227 = vld [vmem:[%s1212 + $0x38] sm:$0xf]
    %v1228 = vld [vmem:[%s1212 + $0x3c] sm:$0xf]
    %v1245 = vunpack.c.l.b16 %v1196
    %v1246 = vunpack.c.l.b16 %v1197
    %v1247 = vunpack.c.l.b16 %v1198
    %v1248 = vunpack.c.l.b16 %v1199
    %v1249 = vunpack.c.l.b16 %v1200
    %v1250 = vunpack.c.l.b16 %v1201
    %v1251 = vunpack.c.l.b16 %v1202
    %v1252 = vunpack.c.l.b16 %v1203
    %v1253 = vunpack.c.l.b16 %v1204
    %v1254 = vunpack.c.l.b16 %v1205
    %v1255 = vunpack.c.l.b16 %v1206
    %v1256 = vunpack.c.l.b16 %v1207
    %v1257 = vunpack.c.l.b16 %v1208
    %v1258 = vunpack.c.l.b16 %v1209
    %v1259 = vunpack.c.l.b16 %v1210
    %v1260 = vunpack.c.l.b16 %v1211
    %v1261 = vpack.c.b16 %v1246, %v1245
    %v1262 = vpack.c.b16 %v1248, %v1247
    %v1263 = vpack.c.b16 %v1250, %v1249
    %v1264 = vpack.c.b16 %v1252, %v1251
    %v1265 = vpack.c.b16 %v1254, %v1253
    %v1266 = vpack.c.b16 %v1256, %v1255
    %v1267 = vpack.c.b16 %v1258, %v1257
    %v1268 = vpack.c.b16 %v1260, %v1259
    %v1293 = vunpack.c.l.b16 %v1213
    %v1294 = vunpack.c.l.b16 %v1214
    %v1295 = vunpack.c.l.b16 %v1215
    %v1296 = vunpack.c.l.b16 %v1216
    %v1297 = vunpack.c.l.b16 %v1217
    %v1298 = vunpack.c.l.b16 %v1218
    %v1299 = vunpack.c.l.b16 %v1219
    %v1300 = vunpack.c.l.b16 %v1220
    %v1301 = vunpack.c.l.b16 %v1221
    %v1302 = vunpack.c.l.b16 %v1222
    %v1303 = vunpack.c.l.b16 %v1223
    %v1304 = vunpack.c.l.b16 %v1224
    %v1305 = vunpack.c.l.b16 %v1225
    %v1306 = vunpack.c.l.b16 %v1226
    %v1307 = vunpack.c.l.b16 %v1227
    %v1308 = vunpack.c.l.b16 %v1228
    %v1309 = vpack.c.b16 %v1294, %v1293
    %v1310 = vpack.c.b16 %v1296, %v1295
    %v1311 = vpack.c.b16 %v1298, %v1297
    %v1312 = vpack.c.b16 %v1300, %v1299
    %v1313 = vpack.c.b16 %v1302, %v1301
    %v1314 = vpack.c.b16 %v1304, %v1303
    %v1315 = vpack.c.b16 %v1306, %v1305
    %v1316 = vpack.c.b16 %v1308, %v1307
    %1325 = vmatpush.bf16.msra.mxu0 %v1316
    %1326 = vmatpush.bf16.msra.mxu0 %v1315
    %1327 = vmatpush.bf16.msra.mxu0 %v1314
    %1328 = vmatpush.bf16.msra.mxu0 %v1313
    %1329 = vmatpush.bf16.msra.mxu0 %v1312
    %1330 = vmatpush.bf16.msra.mxu0 %v1311
    %1331 = vmatpush.bf16.msra.mxu0 %v1310
    %1332 = vmatpush.bf16.msra.mxu0 %v1309
    %1333 = vmatmul.bf16.gmra.mxu0 %v1261
    %v1334 = vpop.f32.mrf.mxu0
    %v1335 = vadd.f32 0.0, %v1334
    %v1336 = vpop.f32.mrf.mxu0
    %v1337 = vadd.f32 0.0, %v1336
    %1338 = vmatmul.bf16.gmra.mxu0 %v1262
    %v1339 = vpop.f32.mrf.mxu0
    %v1340 = vadd.f32 0.0, %v1339
    %v1341 = vpop.f32.mrf.mxu0
    %v1342 = vadd.f32 0.0, %v1341
    %1343 = vmatmul.bf16.gmra.mxu0 %v1263
    %v1344 = vpop.f32.mrf.mxu0
    %v1345 = vadd.f32 0.0, %v1344
    %v1346 = vpop.f32.mrf.mxu0
    %v1347 = vadd.f32 0.0, %v1346
    %1348 = vmatmul.bf16.gmra.mxu0 %v1264
    %v1349 = vpop.f32.mrf.mxu0
    %v1350 = vadd.f32 0.0, %v1349
    %v1351 = vpop.f32.mrf.mxu0
    %v1352 = vadd.f32 0.0, %v1351
    %1353 = vmatmul.bf16.gmra.mxu0 %v1265
    %v1354 = vpop.f32.mrf.mxu0
    %v1355 = vadd.f32 0.0, %v1354
    %v1356 = vpop.f32.mrf.mxu0
    %v1357 = vadd.f32 0.0, %v1356
    %1358 = vmatmul.bf16.gmra.mxu0 %v1266
    %v1359 = vpop.f32.mrf.mxu0
    %v1360 = vadd.f32 0.0, %v1359
    %v1361 = vpop.f32.mrf.mxu0
    %v1362 = vadd.f32 0.0, %v1361
    %1363 = vmatmul.bf16.gmra.mxu0 %v1267
    %v1364 = vpop.f32.mrf.mxu0
    %v1365 = vadd.f32 0.0, %v1364
    %v1366 = vpop.f32.mrf.mxu0
    %v1367 = vadd.f32 0.0, %v1366
    %1368 = vmatmul.bf16.gmra.mxu0 %v1268
    %v1369 = vpop.f32.mrf.mxu0
    %v1370 = vadd.f32 0.0, %v1369
    %v1371 = vpop.f32.mrf.mxu0
    %v1372 = vadd.f32 0.0, %v1371
    %1373 = vdwg.mxu0
    %v1390 = vunpack.c.l.b16 %v1148
    %v1391 = vunpack.c.l.b16 %v1149
    %v1392 = vunpack.c.l.b16 %v1150
    %v1393 = vunpack.c.l.b16 %v1151
    %v1394 = vunpack.c.l.b16 %v1152
    %v1395 = vunpack.c.l.b16 %v1153
    %v1396 = vunpack.c.l.b16 %v1154
    %v1397 = vunpack.c.l.b16 %v1155
    %v1398 = vunpack.c.l.b16 %v1156
    %v1399 = vunpack.c.l.b16 %v1157
    %v1400 = vunpack.c.l.b16 %v1158
    %v1401 = vunpack.c.l.b16 %v1159
    %v1402 = vunpack.c.l.b16 %v1160
    %v1403 = vunpack.c.l.b16 %v1161
    %v1404 = vunpack.c.l.b16 %v1162
    %v1405 = vunpack.c.l.b16 %v1163
    %v1406 = vpack.c.b16 %v1391, %v1390
    %v1407 = vpack.c.b16 %v1393, %v1392
    %v1408 = vpack.c.b16 %v1395, %v1394
    %v1409 = vpack.c.b16 %v1397, %v1396
    %v1410 = vpack.c.b16 %v1399, %v1398
    %v1411 = vpack.c.b16 %v1401, %v1400
    %v1412 = vpack.c.b16 %v1403, %v1402
    %v1413 = vpack.c.b16 %v1405, %v1404
    %v1438 = vunpack.c.l.b16 %v1164
    %v1439 = vunpack.c.l.b16 %v1165
    %v1440 = vunpack.c.l.b16 %v1166
    %v1441 = vunpack.c.l.b16 %v1167
    %v1442 = vunpack.c.l.b16 %v1168
    %v1443 = vunpack.c.l.b16 %v1169
    %v1444 = vunpack.c.l.b16 %v1170
    %v1445 = vunpack.c.l.b16 %v1171
    %v1446 = vunpack.c.l.b16 %v1172
    %v1447 = vunpack.c.l.b16 %v1173
    %v1448 = vunpack.c.l.b16 %v1174
    %v1449 = vunpack.c.l.b16 %v1175
    %v1450 = vunpack.c.l.b16 %v1176
    %v1451 = vunpack.c.l.b16 %v1177
    %v1452 = vunpack.c.l.b16 %v1178
    %v1453 = vunpack.c.l.b16 %v1179
    %v1454 = vpack.c.b16 %v1439, %v1438
    %v1455 = vpack.c.b16 %v1441, %v1440
    %v1456 = vpack.c.b16 %v1443, %v1442
    %v1457 = vpack.c.b16 %v1445, %v1444
    %v1458 = vpack.c.b16 %v1447, %v1446
    %v1459 = vpack.c.b16 %v1449, %v1448
    %v1460 = vpack.c.b16 %v1451, %v1450
    %v1461 = vpack.c.b16 %v1453, %v1452
    %1470 = vmatpush.bf16.msra.mxu0 %v1461
    %1471 = vmatpush.bf16.msra.mxu0 %v1460
    %1472 = vmatpush.bf16.msra.mxu0 %v1459
    %1473 = vmatpush.bf16.msra.mxu0 %v1458
    %1474 = vmatpush.bf16.msra.mxu0 %v1457
    %1475 = vmatpush.bf16.msra.mxu0 %v1456
    %1476 = vmatpush.bf16.msra.mxu0 %v1455
    %1477 = vmatpush.bf16.msra.mxu0 %v1454
    %1478 = vmatmul.bf16.gmra.mxu0 %v1406
    %v1479 = vpop.f32.mrf.mxu0
    %v1480 = vadd.f32 %v1335, %v1479
    %v1481 = vpop.f32.mrf.mxu0
    %v1482 = vadd.f32 %v1337, %v1481
    %1483 = vmatmul.bf16.gmra.mxu0 %v1407
    %v1484 = vpop.f32.mrf.mxu0
    %v1485 = vadd.f32 %v1340, %v1484
    %v1486 = vpop.f32.mrf.mxu0
    %v1487 = vadd.f32 %v1342, %v1486
    %1488 = vmatmul.bf16.gmra.mxu0 %v1408
    %v1489 = vpop.f32.mrf.mxu0
    %v1490 = vadd.f32 %v1345, %v1489
    %v1491 = vpop.f32.mrf.mxu0
    %v1492 = vadd.f32 %v1347, %v1491
    %1493 = vmatmul.bf16.gmra.mxu0 %v1409
    %v1494 = vpop.f32.mrf.mxu0
    %v1495 = vadd.f32 %v1350, %v1494
    %v1496 = vpop.f32.mrf.mxu0
    %v1497 = vadd.f32 %v1352, %v1496
    %1498 = vmatmul.bf16.gmra.mxu0 %v1410
    %v1499 = vpop.f32.mrf.mxu0
    %v1500 = vadd.f32 %v1355, %v1499
    %v1501 = vpop.f32.mrf.mxu0
    %v1502 = vadd.f32 %v1357, %v1501
    %1503 = vmatmul.bf16.gmra.mxu0 %v1411
    %v1504 = vpop.f32.mrf.mxu0
    %v1505 = vadd.f32 %v1360, %v1504
    %v1506 = vpop.f32.mrf.mxu0
    %v1507 = vadd.f32 %v1362, %v1506
    %1508 = vmatmul.bf16.gmra.mxu0 %v1412
    %v1509 = vpop.f32.mrf.mxu0
    %v1510 = vadd.f32 %v1365, %v1509
    %v1511 = vpop.f32.mrf.mxu0
    %v1512 = vadd.f32 %v1367, %v1511
    %1513 = vmatmul.bf16.gmra.mxu0 %v1413
    %v1514 = vpop.f32.mrf.mxu0
    %v1515 = vadd.f32 %v1370, %v1514
    %v1516 = vpop.f32.mrf.mxu0
    %v1517 = vadd.f32 %v1372, %v1516
    %1518 = vdwg.mxu0
    %v1519 = vld [vmem:[#allocation2 + $0x2] sm:$0xff]
    %v1520 = vld [vmem:[#allocation2 + $0x12] sm:$0xff]
    %v1521 = vld [vmem:[#allocation2 + $0x22] sm:$0xff]
    %v1522 = vld [vmem:[#allocation2 + $0x32] sm:$0xff]
    %v1523 = vld [vmem:[#allocation2 + $0x42] sm:$0xff]
    %v1524 = vld [vmem:[#allocation2 + $0x52] sm:$0xff]
    %v1525 = vld [vmem:[#allocation2 + $0x62] sm:$0xff]
    %v1526 = vld [vmem:[#allocation2 + $0x72] sm:$0xff]
    %v1527 = vld [vmem:[#allocation2 + $0xa2] sm:$0xff]
    %v1528 = vld [vmem:[#allocation2 + $0xb2] sm:$0xff]
    %v1529 = vld [vmem:[#allocation2 + $0xc2] sm:$0xff]
    %v1530 = vld [vmem:[#allocation2 + $0xd2] sm:$0xff]
    %v1531 = vld [vmem:[#allocation2 + $0xe2] sm:$0xff]
    %v1532 = vld [vmem:[#allocation2 + $0xf2] sm:$0xff]
    %v1533 = vld [vmem:[#allocation2 + $0x102] sm:$0xff]
    %v1534 = vld [vmem:[#allocation2 + $0x112] sm:$0xff]
    %v1535 = vpack.c.bf16 %v1519, %v1519
    %v1536 = vpack.c.bf16 %v1520, %v1520
    %v1537 = vpack.c.bf16 %v1521, %v1521
    %v1538 = vpack.c.bf16 %v1522, %v1522
    %v1539 = vpack.c.bf16 %v1523, %v1523
    %v1540 = vpack.c.bf16 %v1524, %v1524
    %v1541 = vpack.c.bf16 %v1525, %v1525
    %v1542 = vpack.c.bf16 %v1526, %v1526
    %v1543 = vpack.c.bf16 %v1527, %v1527
    %v1544 = vpack.c.bf16 %v1528, %v1528
    %v1545 = vpack.c.bf16 %v1529, %v1529
    %v1546 = vpack.c.bf16 %v1530, %v1530
    %v1547 = vpack.c.bf16 %v1531, %v1531
    %v1548 = vpack.c.bf16 %v1532, %v1532
    %v1549 = vpack.c.bf16 %v1533, %v1533
    %v1550 = vpack.c.bf16 %v1534, %v1534
    %s1551 = scalar_lea.vmem %s2, 128
    %v1552 = vld [vmem:[%s1551] sm:$0xf]
    %v1553 = vld [vmem:[%s1551 + $0x4] sm:$0xf]
    %v1554 = vld [vmem:[%s1551 + $0x8] sm:$0xf]
    %v1555 = vld [vmem:[%s1551 + $0xc] sm:$0xf]
    %v1556 = vld [vmem:[%s1551 + $0x10] sm:$0xf]
    %v1557 = vld [vmem:[%s1551 + $0x14] sm:$0xf]
    %v1558 = vld [vmem:[%s1551 + $0x18] sm:$0xf]
    %v1559 = vld [vmem:[%s1551 + $0x1c] sm:$0xf]
    %v1560 = vld [vmem:[%s1551 + $0x20] sm:$0xf]
    %v1561 = vld [vmem:[%s1551 + $0x24] sm:$0xf]
    %v1562 = vld [vmem:[%s1551 + $0x28] sm:$0xf]
    %v1563 = vld [vmem:[%s1551 + $0x2c] sm:$0xf]
    %v1564 = vld [vmem:[%s1551 + $0x30] sm:$0xf]
    %v1565 = vld [vmem:[%s1551 + $0x34] sm:$0xf]
    %v1566 = vld [vmem:[%s1551 + $0x38] sm:$0xf]
    %v1567 = vld [vmem:[%s1551 + $0x3c] sm:$0xf]
    %v1584 = vunpack.c.l.b16 %v1535
    %v1585 = vunpack.c.l.b16 %v1536
    %v1586 = vunpack.c.l.b16 %v1537
    %v1587 = vunpack.c.l.b16 %v1538
    %v1588 = vunpack.c.l.b16 %v1539
    %v1589 = vunpack.c.l.b16 %v1540
    %v1590 = vunpack.c.l.b16 %v1541
    %v1591 = vunpack.c.l.b16 %v1542
    %v1592 = vunpack.c.l.b16 %v1543
    %v1593 = vunpack.c.l.b16 %v1544
    %v1594 = vunpack.c.l.b16 %v1545
    %v1595 = vunpack.c.l.b16 %v1546
    %v1596 = vunpack.c.l.b16 %v1547
    %v1597 = vunpack.c.l.b16 %v1548
    %v1598 = vunpack.c.l.b16 %v1549
    %v1599 = vunpack.c.l.b16 %v1550
    %v1600 = vpack.c.b16 %v1585, %v1584
    %v1601 = vpack.c.b16 %v1587, %v1586
    %v1602 = vpack.c.b16 %v1589, %v1588
    %v1603 = vpack.c.b16 %v1591, %v1590
    %v1604 = vpack.c.b16 %v1593, %v1592
    %v1605 = vpack.c.b16 %v1595, %v1594
    %v1606 = vpack.c.b16 %v1597, %v1596
    %v1607 = vpack.c.b16 %v1599, %v1598
    %v1632 = vunpack.c.l.b16 %v1552
    %v1633 = vunpack.c.l.b16 %v1553
    %v1634 = vunpack.c.l.b16 %v1554
    %v1635 = vunpack.c.l.b16 %v1555
    %v1636 = vunpack.c.l.b16 %v1556
    %v1637 = vunpack.c.l.b16 %v1557
    %v1638 = vunpack.c.l.b16 %v1558
    %v1639 = vunpack.c.l.b16 %v1559
    %v1640 = vunpack.c.l.b16 %v1560
    %v1641 = vunpack.c.l.b16 %v1561
    %v1642 = vunpack.c.l.b16 %v1562
    %v1643 = vunpack.c.l.b16 %v1563
    %v1644 = vunpack.c.l.b16 %v1564
    %v1645 = vunpack.c.l.b16 %v1565
    %v1646 = vunpack.c.l.b16 %v1566
    %v1647 = vunpack.c.l.b16 %v1567
    %v1648 = vpack.c.b16 %v1633, %v1632
    %v1649 = vpack.c.b16 %v1635, %v1634
    %v1650 = vpack.c.b16 %v1637, %v1636
    %v1651 = vpack.c.b16 %v1639, %v1638
    %v1652 = vpack.c.b16 %v1641, %v1640
    %v1653 = vpack.c.b16 %v1643, %v1642
    %v1654 = vpack.c.b16 %v1645, %v1644
    %v1655 = vpack.c.b16 %v1647, %v1646
    %1664 = vmatpush.bf16.msra.mxu0 %v1655
    %1665 = vmatpush.bf16.msra.mxu0 %v1654
    %1666 = vmatpush.bf16.msra.mxu0 %v1653
    %1667 = vmatpush.bf16.msra.mxu0 %v1652
    %1668 = vmatpush.bf16.msra.mxu0 %v1651
    %1669 = vmatpush.bf16.msra.mxu0 %v1650
    %1670 = vmatpush.bf16.msra.mxu0 %v1649
    %1671 = vmatpush.bf16.msra.mxu0 %v1648
    %1672 = vmatmul.bf16.gmra.mxu0 %v1600
    %v1673 = vpop.f32.mrf.mxu0
    %v1674 = vadd.f32 0.0, %v1673
    %v1675 = vpop.f32.mrf.mxu0
    %v1676 = vadd.f32 0.0, %v1675
    %1677 = vmatmul.bf16.gmra.mxu0 %v1601
    %v1678 = vpop.f32.mrf.mxu0
    %v1679 = vadd.f32 0.0, %v1678
    %v1680 = vpop.f32.mrf.mxu0
    %v1681 = vadd.f32 0.0, %v1680
    %1682 = vmatmul.bf16.gmra.mxu0 %v1602
    %v1683 = vpop.f32.mrf.mxu0
    %v1684 = vadd.f32 0.0, %v1683
    %v1685 = vpop.f32.mrf.mxu0
    %v1686 = vadd.f32 0.0, %v1685
    %1687 = vmatmul.bf16.gmra.mxu0 %v1603
    %v1688 = vpop.f32.mrf.mxu0
    %v1689 = vadd.f32 0.0, %v1688
    %v1690 = vpop.f32.mrf.mxu0
    %v1691 = vadd.f32 0.0, %v1690
    %1692 = vmatmul.bf16.gmra.mxu0 %v1604
    %v1693 = vpop.f32.mrf.mxu0
    %v1694 = vadd.f32 0.0, %v1693
    %v1695 = vpop.f32.mrf.mxu0
    %v1696 = vadd.f32 0.0, %v1695
    %1697 = vmatmul.bf16.gmra.mxu0 %v1605
    %v1698 = vpop.f32.mrf.mxu0
    %v1699 = vadd.f32 0.0, %v1698
    %v1700 = vpop.f32.mrf.mxu0
    %v1701 = vadd.f32 0.0, %v1700
    %1702 = vmatmul.bf16.gmra.mxu0 %v1606
    %v1703 = vpop.f32.mrf.mxu0
    %v1704 = vadd.f32 0.0, %v1703
    %v1705 = vpop.f32.mrf.mxu0
    %v1706 = vadd.f32 0.0, %v1705
    %1707 = vmatmul.bf16.gmra.mxu0 %v1607
    %v1708 = vpop.f32.mrf.mxu0
    %v1709 = vadd.f32 0.0, %v1708
    %v1710 = vpop.f32.mrf.mxu0
    %v1711 = vadd.f32 0.0, %v1710
    %1712 = vdwg.mxu0
    %v1713 = vadd.f32 %v1480, %v1674
    %v1714 = vadd.f32 %v1482, %v1676
    %v1715 = vadd.f32 %v1485, %v1679
    %v1716 = vadd.f32 %v1487, %v1681
    %v1717 = vadd.f32 %v1490, %v1684
    %v1718 = vadd.f32 %v1492, %v1686
    %v1719 = vadd.f32 %v1495, %v1689
    %v1720 = vadd.f32 %v1497, %v1691
    %v1721 = vadd.f32 %v1500, %v1694
    %v1722 = vadd.f32 %v1502, %v1696
    %v1723 = vadd.f32 %v1505, %v1699
    %v1724 = vadd.f32 %v1507, %v1701
    %v1725 = vadd.f32 %v1510, %v1704
    %v1726 = vadd.f32 %v1512, %v1706
    %v1727 = vadd.f32 %v1515, %v1709
    %v1728 = vadd.f32 %v1517, %v1711
    %v1729 = vld [vmem:[%s1115] sm:$0xff]
    %v1730 = vld [vmem:[%s1115 + $0x10] sm:$0xff]
    %v1731 = vld [vmem:[%s1115 + $0x20] sm:$0xff]
    %v1732 = vld [vmem:[%s1115 + $0x30] sm:$0xff]
    %v1733 = vld [vmem:[%s1115 + $0x40] sm:$0xff]
    %v1734 = vld [vmem:[%s1115 + $0x50] sm:$0xff]
    %v1735 = vld [vmem:[%s1115 + $0x60] sm:$0xff]
    %v1736 = vld [vmem:[%s1115 + $0x70] sm:$0xff]
    %v1737 = vld [vmem:[%s1115 + $0xa0] sm:$0xff]
    %v1738 = vld [vmem:[%s1115 + $0xb0] sm:$0xff]
    %v1739 = vld [vmem:[%s1115 + $0xc0] sm:$0xff]
    %v1740 = vld [vmem:[%s1115 + $0xd0] sm:$0xff]
    %v1741 = vld [vmem:[%s1115 + $0xe0] sm:$0xff]
    %v1742 = vld [vmem:[%s1115 + $0xf0] sm:$0xff]
    %v1743 = vld [vmem:[%s1115 + $0x100] sm:$0xff]
    %v1744 = vld [vmem:[%s1115 + $0x110] sm:$0xff]
    %v1745 = vpack.c.bf16 %v1729, %v1729
    %v1746 = vpack.c.bf16 %v1730, %v1730
    %v1747 = vpack.c.bf16 %v1731, %v1731
    %v1748 = vpack.c.bf16 %v1732, %v1732
    %v1749 = vpack.c.bf16 %v1733, %v1733
    %v1750 = vpack.c.bf16 %v1734, %v1734
    %v1751 = vpack.c.bf16 %v1735, %v1735
    %v1752 = vpack.c.bf16 %v1736, %v1736
    %v1753 = vpack.c.bf16 %v1737, %v1737
    %v1754 = vpack.c.bf16 %v1738, %v1738
    %v1755 = vpack.c.bf16 %v1739, %v1739
    %v1756 = vpack.c.bf16 %v1740, %v1740
    %v1757 = vpack.c.bf16 %v1741, %v1741
    %v1758 = vpack.c.bf16 %v1742, %v1742
    %v1759 = vpack.c.bf16 %v1743, %v1743
    %v1760 = vpack.c.bf16 %v1744, %v1744
    %s1761 = scalar_lea.vmem %s2, 192
    %v1762 = vld [vmem:[%s1761] sm:$0xf]
    %v1763 = vld [vmem:[%s1761 + $0x4] sm:$0xf]
    %v1764 = vld [vmem:[%s1761 + $0x8] sm:$0xf]
    %v1765 = vld [vmem:[%s1761 + $0xc] sm:$0xf]
    %v1766 = vld [vmem:[%s1761 + $0x10] sm:$0xf]
    %v1767 = vld [vmem:[%s1761 + $0x14] sm:$0xf]
    %v1768 = vld [vmem:[%s1761 + $0x18] sm:$0xf]
    %v1769 = vld [vmem:[%s1761 + $0x1c] sm:$0xf]
    %v1770 = vld [vmem:[%s1761 + $0x20] sm:$0xf]
    %v1771 = vld [vmem:[%s1761 + $0x24] sm:$0xf]
    %v1772 = vld [vmem:[%s1761 + $0x28] sm:$0xf]
    %v1773 = vld [vmem:[%s1761 + $0x2c] sm:$0xf]
    %v1774 = vld [vmem:[%s1761 + $0x30] sm:$0xf]
    %v1775 = vld [vmem:[%s1761 + $0x34] sm:$0xf]
    %v1776 = vld [vmem:[%s1761 + $0x38] sm:$0xf]
    %v1777 = vld [vmem:[%s1761 + $0x3c] sm:$0xf]
    %v1794 = vunpack.c.l.b16 %v1745
    %v1795 = vunpack.c.l.b16 %v1746
    %v1796 = vunpack.c.l.b16 %v1747
    %v1797 = vunpack.c.l.b16 %v1748
    %v1798 = vunpack.c.l.b16 %v1749
    %v1799 = vunpack.c.l.b16 %v1750
    %v1800 = vunpack.c.l.b16 %v1751
    %v1801 = vunpack.c.l.b16 %v1752
    %v1802 = vunpack.c.l.b16 %v1753
    %v1803 = vunpack.c.l.b16 %v1754
    %v1804 = vunpack.c.l.b16 %v1755
    %v1805 = vunpack.c.l.b16 %v1756
    %v1806 = vunpack.c.l.b16 %v1757
    %v1807 = vunpack.c.l.b16 %v1758
    %v1808 = vunpack.c.l.b16 %v1759
    %v1809 = vunpack.c.l.b16 %v1760
    %v1810 = vpack.c.b16 %v1795, %v1794
    %v1811 = vpack.c.b16 %v1797, %v1796
    %v1812 = vpack.c.b16 %v1799, %v1798
    %v1813 = vpack.c.b16 %v1801, %v1800
    %v1814 = vpack.c.b16 %v1803, %v1802
    %v1815 = vpack.c.b16 %v1805, %v1804
    %v1816 = vpack.c.b16 %v1807, %v1806
    %v1817 = vpack.c.b16 %v1809, %v1808
    %v1842 = vunpack.c.l.b16 %v1762
    %v1843 = vunpack.c.l.b16 %v1763
    %v1844 = vunpack.c.l.b16 %v1764
    %v1845 = vunpack.c.l.b16 %v1765
    %v1846 = vunpack.c.l.b16 %v1766
    %v1847 = vunpack.c.l.b16 %v1767
    %v1848 = vunpack.c.l.b16 %v1768
    %v1849 = vunpack.c.l.b16 %v1769
    %v1850 = vunpack.c.l.b16 %v1770
    %v1851 = vunpack.c.l.b16 %v1771
    %v1852 = vunpack.c.l.b16 %v1772
    %v1853 = vunpack.c.l.b16 %v1773
    %v1854 = vunpack.c.l.b16 %v1774
    %v1855 = vunpack.c.l.b16 %v1775
    %v1856 = vunpack.c.l.b16 %v1776
    %v1857 = vunpack.c.l.b16 %v1777
    %v1858 = vpack.c.b16 %v1843, %v1842
    %v1859 = vpack.c.b16 %v1845, %v1844
    %v1860 = vpack.c.b16 %v1847, %v1846
    %v1861 = vpack.c.b16 %v1849, %v1848
    %v1862 = vpack.c.b16 %v1851, %v1850
    %v1863 = vpack.c.b16 %v1853, %v1852
    %v1864 = vpack.c.b16 %v1855, %v1854
    %v1865 = vpack.c.b16 %v1857, %v1856
    %1874 = vmatpush.bf16.msra.mxu0 %v1865
    %1875 = vmatpush.bf16.msra.mxu0 %v1864
    %1876 = vmatpush.bf16.msra.mxu0 %v1863
    %1877 = vmatpush.bf16.msra.mxu0 %v1862
    %1878 = vmatpush.bf16.msra.mxu0 %v1861
    %1879 = vmatpush.bf16.msra.mxu0 %v1860
    %1880 = vmatpush.bf16.msra.mxu0 %v1859
    %1881 = vmatpush.bf16.msra.mxu0 %v1858
    %1882 = vmatmul.bf16.gmra.mxu0 %v1810
    %v1883 = vpop.f32.mrf.mxu0
    %v1884 = vadd.f32 0.0, %v1883
    %v1885 = vpop.f32.mrf.mxu0
    %v1886 = vadd.f32 0.0, %v1885
    %1887 = vmatmul.bf16.gmra.mxu0 %v1811
    %v1888 = vpop.f32.mrf.mxu0
    %v1889 = vadd.f32 0.0, %v1888
    %v1890 = vpop.f32.mrf.mxu0
    %v1891 = vadd.f32 0.0, %v1890
    %1892 = vmatmul.bf16.gmra.mxu0 %v1812
    %v1893 = vpop.f32.mrf.mxu0
    %v1894 = vadd.f32 0.0, %v1893
    %v1895 = vpop.f32.mrf.mxu0
    %v1896 = vadd.f32 0.0, %v1895
    %1897 = vmatmul.bf16.gmra.mxu0 %v1813
    %v1898 = vpop.f32.mrf.mxu0
    %v1899 = vadd.f32 0.0, %v1898
    %v1900 = vpop.f32.mrf.mxu0
    %v1901 = vadd.f32 0.0, %v1900
    %1902 = vmatmul.bf16.gmra.mxu0 %v1814
    %v1903 = vpop.f32.mrf.mxu0
    %v1904 = vadd.f32 0.0, %v1903
    %v1905 = vpop.f32.mrf.mxu0
    %v1906 = vadd.f32 0.0, %v1905
    %1907 = vmatmul.bf16.gmra.mxu0 %v1815
    %v1908 = vpop.f32.mrf.mxu0
    %v1909 = vadd.f32 0.0, %v1908
    %v1910 = vpop.f32.mrf.mxu0
    %v1911 = vadd.f32 0.0, %v1910
    %1912 = vmatmul.bf16.gmra.mxu0 %v1816
    %v1913 = vpop.f32.mrf.mxu0
    %v1914 = vadd.f32 0.0, %v1913
    %v1915 = vpop.f32.mrf.mxu0
    %v1916 = vadd.f32 0.0, %v1915
    %1917 = vmatmul.bf16.gmra.mxu0 %v1817
    %v1918 = vpop.f32.mrf.mxu0
    %v1919 = vadd.f32 0.0, %v1918
    %v1920 = vpop.f32.mrf.mxu0
    %v1921 = vadd.f32 0.0, %v1920
    %1922 = vdwg.mxu0
    %v1923 = vadd.f32 %v1713, %v1884
    %v1924 = vadd.f32 %v1714, %v1886
    %v1925 = vadd.f32 %v1715, %v1889
    %v1926 = vadd.f32 %v1716, %v1891
    %v1927 = vadd.f32 %v1717, %v1894
    %v1928 = vadd.f32 %v1718, %v1896
    %v1929 = vadd.f32 %v1719, %v1899
    %v1930 = vadd.f32 %v1720, %v1901
    %v1931 = vadd.f32 %v1721, %v1904
    %v1932 = vadd.f32 %v1722, %v1906
    %v1933 = vadd.f32 %v1723, %v1909
    %v1934 = vadd.f32 %v1724, %v1911
    %v1935 = vadd.f32 %v1725, %v1914
    %v1936 = vadd.f32 %v1726, %v1916
    %v1937 = vadd.f32 %v1727, %v1919
    %v1938 = vadd.f32 %v1728, %v1921
    %v1939 = vld [vmem:[%s1115 + $0x1] sm:$0xff]
    %v1940 = vld [vmem:[%s1115 + $0x11] sm:$0xff]
    %v1941 = vld [vmem:[%s1115 + $0x21] sm:$0xff]
    %v1942 = vld [vmem:[%s1115 + $0x31] sm:$0xff]
    %v1943 = vld [vmem:[%s1115 + $0x41] sm:$0xff]
    %v1944 = vld [vmem:[%s1115 + $0x51] sm:$0xff]
    %v1945 = vld [vmem:[%s1115 + $0x61] sm:$0xff]
    %v1946 = vld [vmem:[%s1115 + $0x71] sm:$0xff]
    %v1947 = vld [vmem:[%s1115 + $0xa1] sm:$0xff]
    %v1948 = vld [vmem:[%s1115 + $0xb1] sm:$0xff]
    %v1949 = vld [vmem:[%s1115 + $0xc1] sm:$0xff]
    %v1950 = vld [vmem:[%s1115 + $0xd1] sm:$0xff]
    %v1951 = vld [vmem:[%s1115 + $0xe1] sm:$0xff]
    %v1952 = vld [vmem:[%s1115 + $0xf1] sm:$0xff]
    %v1953 = vld [vmem:[%s1115 + $0x101] sm:$0xff]
    %v1954 = vld [vmem:[%s1115 + $0x111] sm:$0xff]
    %v1955 = vpack.c.bf16 %v1939, %v1939
    %v1956 = vpack.c.bf16 %v1940, %v1940
    %v1957 = vpack.c.bf16 %v1941, %v1941
    %v1958 = vpack.c.bf16 %v1942, %v1942
    %v1959 = vpack.c.bf16 %v1943, %v1943
    %v1960 = vpack.c.bf16 %v1944, %v1944
    %v1961 = vpack.c.bf16 %v1945, %v1945
    %v1962 = vpack.c.bf16 %v1946, %v1946
    %v1963 = vpack.c.bf16 %v1947, %v1947
    %v1964 = vpack.c.bf16 %v1948, %v1948
    %v1965 = vpack.c.bf16 %v1949, %v1949
    %v1966 = vpack.c.bf16 %v1950, %v1950
    %v1967 = vpack.c.bf16 %v1951, %v1951
    %v1968 = vpack.c.bf16 %v1952, %v1952
    %v1969 = vpack.c.bf16 %v1953, %v1953
    %v1970 = vpack.c.bf16 %v1954, %v1954
    %s1971 = scalar_lea.vmem %s2, 256
    %v1972 = vld [vmem:[%s1971] sm:$0xf]
    %v1973 = vld [vmem:[%s1971 + $0x4] sm:$0xf]
    %v1974 = vld [vmem:[%s1971 + $0x8] sm:$0xf]
    %v1975 = vld [vmem:[%s1971 + $0xc] sm:$0xf]
    %v1976 = vld [vmem:[%s1971 + $0x10] sm:$0xf]
    %v1977 = vld [vmem:[%s1971 + $0x14] sm:$0xf]
    %v1978 = vld [vmem:[%s1971 + $0x18] sm:$0xf]
    %v1979 = vld [vmem:[%s1971 + $0x1c] sm:$0xf]
    %v1980 = vld [vmem:[%s1971 + $0x20] sm:$0xf]
    %v1981 = vld [vmem:[%s1971 + $0x24] sm:$0xf]
    %v1982 = vld [vmem:[%s1971 + $0x28] sm:$0xf]
    %v1983 = vld [vmem:[%s1971 + $0x2c] sm:$0xf]
    %v1984 = vld [vmem:[%s1971 + $0x30] sm:$0xf]
    %v1985 = vld [vmem:[%s1971 + $0x34] sm:$0xf]
    %v1986 = vld [vmem:[%s1971 + $0x38] sm:$0xf]
    %v1987 = vld [vmem:[%s1971 + $0x3c] sm:$0xf]
    %v2004 = vunpack.c.l.b16 %v1955
    %v2005 = vunpack.c.l.b16 %v1956
    %v2006 = vunpack.c.l.b16 %v1957
    %v2007 = vunpack.c.l.b16 %v1958
    %v2008 = vunpack.c.l.b16 %v1959
    %v2009 = vunpack.c.l.b16 %v1960
    %v2010 = vunpack.c.l.b16 %v1961
    %v2011 = vunpack.c.l.b16 %v1962
    %v2012 = vunpack.c.l.b16 %v1963
    %v2013 = vunpack.c.l.b16 %v1964
    %v2014 = vunpack.c.l.b16 %v1965
    %v2015 = vunpack.c.l.b16 %v1966
    %v2016 = vunpack.c.l.b16 %v1967
    %v2017 = vunpack.c.l.b16 %v1968
    %v2018 = vunpack.c.l.b16 %v1969
    %v2019 = vunpack.c.l.b16 %v1970
    %v2020 = vpack.c.b16 %v2005, %v2004
    %v2021 = vpack.c.b16 %v2007, %v2006
    %v2022 = vpack.c.b16 %v2009, %v2008
    %v2023 = vpack.c.b16 %v2011, %v2010
    %v2024 = vpack.c.b16 %v2013, %v2012
    %v2025 = vpack.c.b16 %v2015, %v2014
    %v2026 = vpack.c.b16 %v2017, %v2016
    %v2027 = vpack.c.b16 %v2019, %v2018
    %v2052 = vunpack.c.l.b16 %v1972
    %v2053 = vunpack.c.l.b16 %v1973
    %v2054 = vunpack.c.l.b16 %v1974
    %v2055 = vunpack.c.l.b16 %v1975
    %v2056 = vunpack.c.l.b16 %v1976
    %v2057 = vunpack.c.l.b16 %v1977
    %v2058 = vunpack.c.l.b16 %v1978
    %v2059 = vunpack.c.l.b16 %v1979
    %v2060 = vunpack.c.l.b16 %v1980
    %v2061 = vunpack.c.l.b16 %v1981
    %v2062 = vunpack.c.l.b16 %v1982
    %v2063 = vunpack.c.l.b16 %v1983
    %v2064 = vunpack.c.l.b16 %v1984
    %v2065 = vunpack.c.l.b16 %v1985
    %v2066 = vunpack.c.l.b16 %v1986
    %v2067 = vunpack.c.l.b16 %v1987
    %v2068 = vpack.c.b16 %v2053, %v2052
    %v2069 = vpack.c.b16 %v2055, %v2054
    %v2070 = vpack.c.b16 %v2057, %v2056
    %v2071 = vpack.c.b16 %v2059, %v2058
    %v2072 = vpack.c.b16 %v2061, %v2060
    %v2073 = vpack.c.b16 %v2063, %v2062
    %v2074 = vpack.c.b16 %v2065, %v2064
    %v2075 = vpack.c.b16 %v2067, %v2066
    %2084 = vmatpush.bf16.msra.mxu0 %v2075
    %2085 = vmatpush.bf16.msra.mxu0 %v2074
    %2086 = vmatpush.bf16.msra.mxu0 %v2073
    %2087 = vmatpush.bf16.msra.mxu0 %v2072
    %2088 = vmatpush.bf16.msra.mxu0 %v2071
    %2089 = vmatpush.bf16.msra.mxu0 %v2070
    %2090 = vmatpush.bf16.msra.mxu0 %v2069
    %2091 = vmatpush.bf16.msra.mxu0 %v2068
    %2092 = vmatmul.bf16.gmra.mxu0 %v2020
    %v2093 = vpop.f32.mrf.mxu0
    %v2094 = vadd.f32 0.0, %v2093
    %v2095 = vpop.f32.mrf.mxu0
    %v2096 = vadd.f32 0.0, %v2095
    %2097 = vmatmul.bf16.gmra.mxu0 %v2021
    %v2098 = vpop.f32.mrf.mxu0
    %v2099 = vadd.f32 0.0, %v2098
    %v2100 = vpop.f32.mrf.mxu0
    %v2101 = vadd.f32 0.0, %v2100
    %2102 = vmatmul.bf16.gmra.mxu0 %v2022
    %v2103 = vpop.f32.mrf.mxu0
    %v2104 = vadd.f32 0.0, %v2103
    %v2105 = vpop.f32.mrf.mxu0
    %v2106 = vadd.f32 0.0, %v2105
    %2107 = vmatmul.bf16.gmra.mxu0 %v2023
    %v2108 = vpop.f32.mrf.mxu0
    %v2109 = vadd.f32 0.0, %v2108
    %v2110 = vpop.f32.mrf.mxu0
    %v2111 = vadd.f32 0.0, %v2110
    %2112 = vmatmul.bf16.gmra.mxu0 %v2024
    %v2113 = vpop.f32.mrf.mxu0
    %v2114 = vadd.f32 0.0, %v2113
    %v2115 = vpop.f32.mrf.mxu0
    %v2116 = vadd.f32 0.0, %v2115
    %2117 = vmatmul.bf16.gmra.mxu0 %v2025
    %v2118 = vpop.f32.mrf.mxu0
    %v2119 = vadd.f32 0.0, %v2118
    %v2120 = vpop.f32.mrf.mxu0
    %v2121 = vadd.f32 0.0, %v2120
    %2122 = vmatmul.bf16.gmra.mxu0 %v2026
    %v2123 = vpop.f32.mrf.mxu0
    %v2124 = vadd.f32 0.0, %v2123
    %v2125 = vpop.f32.mrf.mxu0
    %v2126 = vadd.f32 0.0, %v2125
    %2127 = vmatmul.bf16.gmra.mxu0 %v2027
    %v2128 = vpop.f32.mrf.mxu0
    %v2129 = vadd.f32 0.0, %v2128
    %v2130 = vpop.f32.mrf.mxu0
    %v2131 = vadd.f32 0.0, %v2130
    %2132 = vdwg.mxu0
    %v2133 = vadd.f32 %v1923, %v2094
    %v2134 = vadd.f32 %v1924, %v2096
    %v2135 = vadd.f32 %v1925, %v2099
    %v2136 = vadd.f32 %v1926, %v2101
    %v2137 = vadd.f32 %v1927, %v2104
    %v2138 = vadd.f32 %v1928, %v2106
    %v2139 = vadd.f32 %v1929, %v2109
    %v2140 = vadd.f32 %v1930, %v2111
    %v2141 = vadd.f32 %v1931, %v2114
    %v2142 = vadd.f32 %v1932, %v2116
    %v2143 = vadd.f32 %v1933, %v2119
    %v2144 = vadd.f32 %v1934, %v2121
    %v2145 = vadd.f32 %v1935, %v2124
    %v2146 = vadd.f32 %v1936, %v2126
    %v2147 = vadd.f32 %v1937, %v2129
    %v2148 = vadd.f32 %v1938, %v2131
    %v2149 = vld [vmem:[%s1115 + $0x2] sm:$0xff]
    %v2150 = vld [vmem:[%s1115 + $0x12] sm:$0xff]
    %v2151 = vld [vmem:[%s1115 + $0x22] sm:$0xff]
    %v2152 = vld [vmem:[%s1115 + $0x32] sm:$0xff]
    %v2153 = vld [vmem:[%s1115 + $0x42] sm:$0xff]
    %v2154 = vld [vmem:[%s1115 + $0x52] sm:$0xff]
    %v2155 = vld [vmem:[%s1115 + $0x62] sm:$0xff]
    %v2156 = vld [vmem:[%s1115 + $0x72] sm:$0xff]
    %v2157 = vld [vmem:[%s1115 + $0xa2] sm:$0xff]
    %v2158 = vld [vmem:[%s1115 + $0xb2] sm:$0xff]
    %v2159 = vld [vmem:[%s1115 + $0xc2] sm:$0xff]
    %v2160 = vld [vmem:[%s1115 + $0xd2] sm:$0xff]
    %v2161 = vld [vmem:[%s1115 + $0xe2] sm:$0xff]
    %v2162 = vld [vmem:[%s1115 + $0xf2] sm:$0xff]
    %v2163 = vld [vmem:[%s1115 + $0x102] sm:$0xff]
    %v2164 = vld [vmem:[%s1115 + $0x112] sm:$0xff]
    %v2165 = vpack.c.bf16 %v2149, %v2149
    %v2166 = vpack.c.bf16 %v2150, %v2150
    %v2167 = vpack.c.bf16 %v2151, %v2151
    %v2168 = vpack.c.bf16 %v2152, %v2152
    %v2169 = vpack.c.bf16 %v2153, %v2153
    %v2170 = vpack.c.bf16 %v2154, %v2154
    %v2171 = vpack.c.bf16 %v2155, %v2155
    %v2172 = vpack.c.bf16 %v2156, %v2156
    %v2173 = vpack.c.bf16 %v2157, %v2157
    %v2174 = vpack.c.bf16 %v2158, %v2158
    %v2175 = vpack.c.bf16 %v2159, %v2159
    %v2176 = vpack.c.bf16 %v2160, %v2160
    %v2177 = vpack.c.bf16 %v2161, %v2161
    %v2178 = vpack.c.bf16 %v2162, %v2162
    %v2179 = vpack.c.bf16 %v2163, %v2163
    %v2180 = vpack.c.bf16 %v2164, %v2164
    %s2181 = scalar_lea.vmem %s2, 320
    %v2182 = vld [vmem:[%s2181] sm:$0xf]
    %v2183 = vld [vmem:[%s2181 + $0x4] sm:$0xf]
    %v2184 = vld [vmem:[%s2181 + $0x8] sm:$0xf]
    %v2185 = vld [vmem:[%s2181 + $0xc] sm:$0xf]
    %v2186 = vld [vmem:[%s2181 + $0x10] sm:$0xf]
    %v2187 = vld [vmem:[%s2181 + $0x14] sm:$0xf]
    %v2188 = vld [vmem:[%s2181 + $0x18] sm:$0xf]
    %v2189 = vld [vmem:[%s2181 + $0x1c] sm:$0xf]
    %v2190 = vld [vmem:[%s2181 + $0x20] sm:$0xf]
    %v2191 = vld [vmem:[%s2181 + $0x24] sm:$0xf]
    %v2192 = vld [vmem:[%s2181 + $0x28] sm:$0xf]
    %v2193 = vld [vmem:[%s2181 + $0x2c] sm:$0xf]
    %v2194 = vld [vmem:[%s2181 + $0x30] sm:$0xf]
    %v2195 = vld [vmem:[%s2181 + $0x34] sm:$0xf]
    %v2196 = vld [vmem:[%s2181 + $0x38] sm:$0xf]
    %v2197 = vld [vmem:[%s2181 + $0x3c] sm:$0xf]
    %v2214 = vunpack.c.l.b16 %v2165
    %v2215 = vunpack.c.l.b16 %v2166
    %v2216 = vunpack.c.l.b16 %v2167
    %v2217 = vunpack.c.l.b16 %v2168
    %v2218 = vunpack.c.l.b16 %v2169
    %v2219 = vunpack.c.l.b16 %v2170
    %v2220 = vunpack.c.l.b16 %v2171
    %v2221 = vunpack.c.l.b16 %v2172
    %v2222 = vunpack.c.l.b16 %v2173
    %v2223 = vunpack.c.l.b16 %v2174
    %v2224 = vunpack.c.l.b16 %v2175
    %v2225 = vunpack.c.l.b16 %v2176
    %v2226 = vunpack.c.l.b16 %v2177
    %v2227 = vunpack.c.l.b16 %v2178
    %v2228 = vunpack.c.l.b16 %v2179
    %v2229 = vunpack.c.l.b16 %v2180
    %v2230 = vpack.c.b16 %v2215, %v2214
    %v2231 = vpack.c.b16 %v2217, %v2216
    %v2232 = vpack.c.b16 %v2219, %v2218
    %v2233 = vpack.c.b16 %v2221, %v2220
    %v2234 = vpack.c.b16 %v2223, %v2222
    %v2235 = vpack.c.b16 %v2225, %v2224
    %v2236 = vpack.c.b16 %v2227, %v2226
    %v2237 = vpack.c.b16 %v2229, %v2228
    %v2262 = vunpack.c.l.b16 %v2182
    %v2263 = vunpack.c.l.b16 %v2183
    %v2264 = vunpack.c.l.b16 %v2184
    %v2265 = vunpack.c.l.b16 %v2185
    %v2266 = vunpack.c.l.b16 %v2186
    %v2267 = vunpack.c.l.b16 %v2187
    %v2268 = vunpack.c.l.b16 %v2188
    %v2269 = vunpack.c.l.b16 %v2189
    %v2270 = vunpack.c.l.b16 %v2190
    %v2271 = vunpack.c.l.b16 %v2191
    %v2272 = vunpack.c.l.b16 %v2192
    %v2273 = vunpack.c.l.b16 %v2193
    %v2274 = vunpack.c.l.b16 %v2194
    %v2275 = vunpack.c.l.b16 %v2195
    %v2276 = vunpack.c.l.b16 %v2196
    %v2277 = vunpack.c.l.b16 %v2197
    %v2278 = vpack.c.b16 %v2263, %v2262
    %v2279 = vpack.c.b16 %v2265, %v2264
    %v2280 = vpack.c.b16 %v2267, %v2266
    %v2281 = vpack.c.b16 %v2269, %v2268
    %v2282 = vpack.c.b16 %v2271, %v2270
    %v2283 = vpack.c.b16 %v2273, %v2272
    %v2284 = vpack.c.b16 %v2275, %v2274
    %v2285 = vpack.c.b16 %v2277, %v2276
    %2294 = vmatpush.bf16.msra.mxu0 %v2285
    %2295 = vmatpush.bf16.msra.mxu0 %v2284
    %2296 = vmatpush.bf16.msra.mxu0 %v2283
    %2297 = vmatpush.bf16.msra.mxu0 %v2282
    %2298 = vmatpush.bf16.msra.mxu0 %v2281
    %2299 = vmatpush.bf16.msra.mxu0 %v2280
    %2300 = vmatpush.bf16.msra.mxu0 %v2279
    %2301 = vmatpush.bf16.msra.mxu0 %v2278
    %2302 = vmatmul.bf16.gmra.mxu0 %v2230
    %v2303 = vpop.f32.mrf.mxu0
    %v2304 = vadd.f32 0.0, %v2303
    %v2305 = vpop.f32.mrf.mxu0
    %v2306 = vadd.f32 0.0, %v2305
    %2307 = vmatmul.bf16.gmra.mxu0 %v2231
    %v2308 = vpop.f32.mrf.mxu0
    %v2309 = vadd.f32 0.0, %v2308
    %v2310 = vpop.f32.mrf.mxu0
    %v2311 = vadd.f32 0.0, %v2310
    %2312 = vmatmul.bf16.gmra.mxu0 %v2232
    %v2313 = vpop.f32.mrf.mxu0
    %v2314 = vadd.f32 0.0, %v2313
    %v2315 = vpop.f32.mrf.mxu0
    %v2316 = vadd.f32 0.0, %v2315
    %2317 = vmatmul.bf16.gmra.mxu0 %v2233
    %v2318 = vpop.f32.mrf.mxu0
    %v2319 = vadd.f32 0.0, %v2318
    %v2320 = vpop.f32.mrf.mxu0
    %v2321 = vadd.f32 0.0, %v2320
    %2322 = vmatmul.bf16.gmra.mxu0 %v2234
    %v2323 = vpop.f32.mrf.mxu0
    %v2324 = vadd.f32 0.0, %v2323
    %v2325 = vpop.f32.mrf.mxu0
    %v2326 = vadd.f32 0.0, %v2325
    %2327 = vmatmul.bf16.gmra.mxu0 %v2235
    %v2328 = vpop.f32.mrf.mxu0
    %v2329 = vadd.f32 0.0, %v2328
    %v2330 = vpop.f32.mrf.mxu0
    %v2331 = vadd.f32 0.0, %v2330
    %2332 = vmatmul.bf16.gmra.mxu0 %v2236
    %v2333 = vpop.f32.mrf.mxu0
    %v2334 = vadd.f32 0.0, %v2333
    %v2335 = vpop.f32.mrf.mxu0
    %v2336 = vadd.f32 0.0, %v2335
    %2337 = vmatmul.bf16.gmra.mxu0 %v2237
    %v2338 = vpop.f32.mrf.mxu0
    %v2339 = vadd.f32 0.0, %v2338
    %v2340 = vpop.f32.mrf.mxu0
    %v2341 = vadd.f32 0.0, %v2340
    %2342 = vdwg.mxu0
    %v2343 = vadd.f32 %v2133, %v2304
    %v2344 = vadd.f32 %v2134, %v2306
    %v2345 = vadd.f32 %v2135, %v2309
    %v2346 = vadd.f32 %v2136, %v2311
    %v2347 = vadd.f32 %v2137, %v2314
    %v2348 = vadd.f32 %v2138, %v2316
    %v2349 = vadd.f32 %v2139, %v2319
    %v2350 = vadd.f32 %v2140, %v2321
    %v2351 = vadd.f32 %v2141, %v2324
    %v2352 = vadd.f32 %v2142, %v2326
    %v2353 = vadd.f32 %v2143, %v2329
    %v2354 = vadd.f32 %v2144, %v2331
    %v2355 = vadd.f32 %v2145, %v2334
    %v2356 = vadd.f32 %v2146, %v2336
    %v2357 = vadd.f32 %v2147, %v2339
    %v2358 = vadd.f32 %v2148, %v2341
    %s2359 = scalar_lea.vmem [#allocation2], 32
    %v2360 = vld [vmem:[%s2359] sm:$0xff]
    %v2361 = vld [vmem:[%s2359 + $0x10] sm:$0xff]
    %v2362 = vld [vmem:[%s2359 + $0x20] sm:$0xff]
    %v2363 = vld [vmem:[%s2359 + $0x30] sm:$0xff]
    %v2364 = vld [vmem:[%s2359 + $0x40] sm:$0xff]
    %v2365 = vld [vmem:[%s2359 + $0x50] sm:$0xff]
    %v2366 = vld [vmem:[%s2359 + $0x60] sm:$0xff]
    %v2367 = vld [vmem:[%s2359 + $0x70] sm:$0xff]
    %v2368 = vld [vmem:[%s2359 + $0xa0] sm:$0xff]
    %v2369 = vld [vmem:[%s2359 + $0xb0] sm:$0xff]
    %v2370 = vld [vmem:[%s2359 + $0xc0] sm:$0xff]
    %v2371 = vld [vmem:[%s2359 + $0xd0] sm:$0xff]
    %v2372 = vld [vmem:[%s2359 + $0xe0] sm:$0xff]
    %v2373 = vld [vmem:[%s2359 + $0xf0] sm:$0xff]
    %v2374 = vld [vmem:[%s2359 + $0x100] sm:$0xff]
    %v2375 = vld [vmem:[%s2359 + $0x110] sm:$0xff]
    %v2376 = vpack.c.bf16 %v2360, %v2360
    %v2377 = vpack.c.bf16 %v2361, %v2361
    %v2378 = vpack.c.bf16 %v2362, %v2362
    %v2379 = vpack.c.bf16 %v2363, %v2363
    %v2380 = vpack.c.bf16 %v2364, %v2364
    %v2381 = vpack.c.bf16 %v2365, %v2365
    %v2382 = vpack.c.bf16 %v2366, %v2366
    %v2383 = vpack.c.bf16 %v2367, %v2367
    %v2384 = vpack.c.bf16 %v2368, %v2368
    %v2385 = vpack.c.bf16 %v2369, %v2369
    %v2386 = vpack.c.bf16 %v2370, %v2370
    %v2387 = vpack.c.bf16 %v2371, %v2371
    %v2388 = vpack.c.bf16 %v2372, %v2372
    %v2389 = vpack.c.bf16 %v2373, %v2373
    %v2390 = vpack.c.bf16 %v2374, %v2374
    %v2391 = vpack.c.bf16 %v2375, %v2375
    %s2392 = scalar_lea.vmem %s2, 384
    %v2393 = vld [vmem:[%s2392] sm:$0xf]
    %v2394 = vld [vmem:[%s2392 + $0x4] sm:$0xf]
    %v2395 = vld [vmem:[%s2392 + $0x8] sm:$0xf]
    %v2396 = vld [vmem:[%s2392 + $0xc] sm:$0xf]
    %v2397 = vld [vmem:[%s2392 + $0x10] sm:$0xf]
    %v2398 = vld [vmem:[%s2392 + $0x14] sm:$0xf]
    %v2399 = vld [vmem:[%s2392 + $0x18] sm:$0xf]
    %v2400 = vld [vmem:[%s2392 + $0x1c] sm:$0xf]
    %v2401 = vld [vmem:[%s2392 + $0x20] sm:$0xf]
    %v2402 = vld [vmem:[%s2392 + $0x24] sm:$0xf]
    %v2403 = vld [vmem:[%s2392 + $0x28] sm:$0xf]
    %v2404 = vld [vmem:[%s2392 + $0x2c] sm:$0xf]
    %v2405 = vld [vmem:[%s2392 + $0x30] sm:$0xf]
    %v2406 = vld [vmem:[%s2392 + $0x34] sm:$0xf]
    %v2407 = vld [vmem:[%s2392 + $0x38] sm:$0xf]
    %v2408 = vld [vmem:[%s2392 + $0x3c] sm:$0xf]
    %v2425 = vunpack.c.l.b16 %v2376
    %v2426 = vunpack.c.l.b16 %v2377
    %v2427 = vunpack.c.l.b16 %v2378
    %v2428 = vunpack.c.l.b16 %v2379
    %v2429 = vunpack.c.l.b16 %v2380
    %v2430 = vunpack.c.l.b16 %v2381
    %v2431 = vunpack.c.l.b16 %v2382
    %v2432 = vunpack.c.l.b16 %v2383
    %v2433 = vunpack.c.l.b16 %v2384
    %v2434 = vunpack.c.l.b16 %v2385
    %v2435 = vunpack.c.l.b16 %v2386
    %v2436 = vunpack.c.l.b16 %v2387
    %v2437 = vunpack.c.l.b16 %v2388
    %v2438 = vunpack.c.l.b16 %v2389
    %v2439 = vunpack.c.l.b16 %v2390
    %v2440 = vunpack.c.l.b16 %v2391
    %v2441 = vpack.c.b16 %v2426, %v2425
    %v2442 = vpack.c.b16 %v2428, %v2427
    %v2443 = vpack.c.b16 %v2430, %v2429
    %v2444 = vpack.c.b16 %v2432, %v2431
    %v2445 = vpack.c.b16 %v2434, %v2433
    %v2446 = vpack.c.b16 %v2436, %v2435
    %v2447 = vpack.c.b16 %v2438, %v2437
    %v2448 = vpack.c.b16 %v2440, %v2439
    %v2473 = vunpack.c.l.b16 %v2393
    %v2474 = vunpack.c.l.b16 %v2394
    %v2475 = vunpack.c.l.b16 %v2395
    %v2476 = vunpack.c.l.b16 %v2396
    %v2477 = vunpack.c.l.b16 %v2397
    %v2478 = vunpack.c.l.b16 %v2398
    %v2479 = vunpack.c.l.b16 %v2399
    %v2480 = vunpack.c.l.b16 %v2400
    %v2481 = vunpack.c.l.b16 %v2401
    %v2482 = vunpack.c.l.b16 %v2402
    %v2483 = vunpack.c.l.b16 %v2403
    %v2484 = vunpack.c.l.b16 %v2404
    %v2485 = vunpack.c.l.b16 %v2405
    %v2486 = vunpack.c.l.b16 %v2406
    %v2487 = vunpack.c.l.b16 %v2407
    %v2488 = vunpack.c.l.b16 %v2408
    %v2489 = vpack.c.b16 %v2474, %v2473
    %v2490 = vpack.c.b16 %v2476, %v2475
    %v2491 = vpack.c.b16 %v2478, %v2477
    %v2492 = vpack.c.b16 %v2480, %v2479
    %v2493 = vpack.c.b16 %v2482, %v2481
    %v2494 = vpack.c.b16 %v2484, %v2483
    %v2495 = vpack.c.b16 %v2486, %v2485
    %v2496 = vpack.c.b16 %v2488, %v2487
    %2505 = vmatpush.bf16.msra.mxu0 %v2496
    %2506 = vmatpush.bf16.msra.mxu0 %v2495
    %2507 = vmatpush.bf16.msra.mxu0 %v2494
    %2508 = vmatpush.bf16.msra.mxu0 %v2493
    %2509 = vmatpush.bf16.msra.mxu0 %v2492
    %2510 = vmatpush.bf16.msra.mxu0 %v2491
    %2511 = vmatpush.bf16.msra.mxu0 %v2490
    %2512 = vmatpush.bf16.msra.mxu0 %v2489
    %2513 = vmatmul.bf16.gmra.mxu0 %v2441
    %v2514 = vpop.f32.mrf.mxu0
    %v2515 = vadd.f32 0.0, %v2514
    %v2516 = vpop.f32.mrf.mxu0
    %v2517 = vadd.f32 0.0, %v2516
    %2518 = vmatmul.bf16.gmra.mxu0 %v2442
    %v2519 = vpop.f32.mrf.mxu0
    %v2520 = vadd.f32 0.0, %v2519
    %v2521 = vpop.f32.mrf.mxu0
    %v2522 = vadd.f32 0.0, %v2521
    %2523 = vmatmul.bf16.gmra.mxu0 %v2443
    %v2524 = vpop.f32.mrf.mxu0
    %v2525 = vadd.f32 0.0, %v2524
    %v2526 = vpop.f32.mrf.mxu0
    %v2527 = vadd.f32 0.0, %v2526
    %2528 = vmatmul.bf16.gmra.mxu0 %v2444
    %v2529 = vpop.f32.mrf.mxu0
    %v2530 = vadd.f32 0.0, %v2529
    %v2531 = vpop.f32.mrf.mxu0
    %v2532 = vadd.f32 0.0, %v2531
    %2533 = vmatmul.bf16.gmra.mxu0 %v2445
    %v2534 = vpop.f32.mrf.mxu0
    %v2535 = vadd.f32 0.0, %v2534
    %v2536 = vpop.f32.mrf.mxu0
    %v2537 = vadd.f32 0.0, %v2536
    %2538 = vmatmul.bf16.gmra.mxu0 %v2446
    %v2539 = vpop.f32.mrf.mxu0
    %v2540 = vadd.f32 0.0, %v2539
    %v2541 = vpop.f32.mrf.mxu0
    %v2542 = vadd.f32 0.0, %v2541
    %2543 = vmatmul.bf16.gmra.mxu0 %v2447
    %v2544 = vpop.f32.mrf.mxu0
    %v2545 = vadd.f32 0.0, %v2544
    %v2546 = vpop.f32.mrf.mxu0
    %v2547 = vadd.f32 0.0, %v2546
    %2548 = vmatmul.bf16.gmra.mxu0 %v2448
    %v2549 = vpop.f32.mrf.mxu0
    %v2550 = vadd.f32 0.0, %v2549
    %v2551 = vpop.f32.mrf.mxu0
    %v2552 = vadd.f32 0.0, %v2551
    %2553 = vdwg.mxu0
    %v2554 = vadd.f32 %v2343, %v2515
    %v2555 = vadd.f32 %v2344, %v2517
    %v2556 = vadd.f32 %v2345, %v2520
    %v2557 = vadd.f32 %v2346, %v2522
    %v2558 = vadd.f32 %v2347, %v2525
    %v2559 = vadd.f32 %v2348, %v2527
    %v2560 = vadd.f32 %v2349, %v2530
    %v2561 = vadd.f32 %v2350, %v2532
    %v2562 = vadd.f32 %v2351, %v2535
    %v2563 = vadd.f32 %v2352, %v2537
    %v2564 = vadd.f32 %v2353, %v2540
    %v2565 = vadd.f32 %v2354, %v2542
    %v2566 = vadd.f32 %v2355, %v2545
    %v2567 = vadd.f32 %v2356, %v2547
    %v2568 = vadd.f32 %v2357, %v2550
    %v2569 = vadd.f32 %v2358, %v2552
    %v2570 = vld [vmem:[%s2359 + $0x1] sm:$0xff]
    %v2571 = vld [vmem:[%s2359 + $0x11] sm:$0xff]
    %v2572 = vld [vmem:[%s2359 + $0x21] sm:$0xff]
    %v2573 = vld [vmem:[%s2359 + $0x31] sm:$0xff]
    %v2574 = vld [vmem:[%s2359 + $0x41] sm:$0xff]
    %v2575 = vld [vmem:[%s2359 + $0x51] sm:$0xff]
    %v2576 = vld [vmem:[%s2359 + $0x61] sm:$0xff]
    %v2577 = vld [vmem:[%s2359 + $0x71] sm:$0xff]
    %v2578 = vld [vmem:[%s2359 + $0xa1] sm:$0xff]
    %v2579 = vld [vmem:[%s2359 + $0xb1] sm:$0xff]
    %v2580 = vld [vmem:[%s2359 + $0xc1] sm:$0xff]
    %v2581 = vld [vmem:[%s2359 + $0xd1] sm:$0xff]
    %v2582 = vld [vmem:[%s2359 + $0xe1] sm:$0xff]
    %v2583 = vld [vmem:[%s2359 + $0xf1] sm:$0xff]
    %v2584 = vld [vmem:[%s2359 + $0x101] sm:$0xff]
    %v2585 = vld [vmem:[%s2359 + $0x111] sm:$0xff]
    %v2586 = vpack.c.bf16 %v2570, %v2570
    %v2587 = vpack.c.bf16 %v2571, %v2571
    %v2588 = vpack.c.bf16 %v2572, %v2572
    %v2589 = vpack.c.bf16 %v2573, %v2573
    %v2590 = vpack.c.bf16 %v2574, %v2574
    %v2591 = vpack.c.bf16 %v2575, %v2575
    %v2592 = vpack.c.bf16 %v2576, %v2576
    %v2593 = vpack.c.bf16 %v2577, %v2577
    %v2594 = vpack.c.bf16 %v2578, %v2578
    %v2595 = vpack.c.bf16 %v2579, %v2579
    %v2596 = vpack.c.bf16 %v2580, %v2580
    %v2597 = vpack.c.bf16 %v2581, %v2581
    %v2598 = vpack.c.bf16 %v2582, %v2582
    %v2599 = vpack.c.bf16 %v2583, %v2583
    %v2600 = vpack.c.bf16 %v2584, %v2584
    %v2601 = vpack.c.bf16 %v2585, %v2585
    %s2602 = scalar_lea.vmem %s2, 448
    %v2603 = vld [vmem:[%s2602] sm:$0xf]
    %v2604 = vld [vmem:[%s2602 + $0x4] sm:$0xf]
    %v2605 = vld [vmem:[%s2602 + $0x8] sm:$0xf]
    %v2606 = vld [vmem:[%s2602 + $0xc] sm:$0xf]
    %v2607 = vld [vmem:[%s2602 + $0x10] sm:$0xf]
    %v2608 = vld [vmem:[%s2602 + $0x14] sm:$0xf]
    %v2609 = vld [vmem:[%s2602 + $0x18] sm:$0xf]
    %v2610 = vld [vmem:[%s2602 + $0x1c] sm:$0xf]
    %v2611 = vld [vmem:[%s2602 + $0x20] sm:$0xf]
    %v2612 = vld [vmem:[%s2602 + $0x24] sm:$0xf]
    %v2613 = vld [vmem:[%s2602 + $0x28] sm:$0xf]
    %v2614 = vld [vmem:[%s2602 + $0x2c] sm:$0xf]
    %v2615 = vld [vmem:[%s2602 + $0x30] sm:$0xf]
    %v2616 = vld [vmem:[%s2602 + $0x34] sm:$0xf]
    %v2617 = vld [vmem:[%s2602 + $0x38] sm:$0xf]
    %v2618 = vld [vmem:[%s2602 + $0x3c] sm:$0xf]
    %v2635 = vunpack.c.l.b16 %v2586
    %v2636 = vunpack.c.l.b16 %v2587
    %v2637 = vunpack.c.l.b16 %v2588
    %v2638 = vunpack.c.l.b16 %v2589
    %v2639 = vunpack.c.l.b16 %v2590
    %v2640 = vunpack.c.l.b16 %v2591
    %v2641 = vunpack.c.l.b16 %v2592
    %v2642 = vunpack.c.l.b16 %v2593
    %v2643 = vunpack.c.l.b16 %v2594
    %v2644 = vunpack.c.l.b16 %v2595
    %v2645 = vunpack.c.l.b16 %v2596
    %v2646 = vunpack.c.l.b16 %v2597
    %v2647 = vunpack.c.l.b16 %v2598
    %v2648 = vunpack.c.l.b16 %v2599
    %v2649 = vunpack.c.l.b16 %v2600
    %v2650 = vunpack.c.l.b16 %v2601
    %v2651 = vpack.c.b16 %v2636, %v2635
    %v2652 = vpack.c.b16 %v2638, %v2637
    %v2653 = vpack.c.b16 %v2640, %v2639
    %v2654 = vpack.c.b16 %v2642, %v2641
    %v2655 = vpack.c.b16 %v2644, %v2643
    %v2656 = vpack.c.b16 %v2646, %v2645
    %v2657 = vpack.c.b16 %v2648, %v2647
    %v2658 = vpack.c.b16 %v2650, %v2649
    %v2683 = vunpack.c.l.b16 %v2603
    %v2684 = vunpack.c.l.b16 %v2604
    %v2685 = vunpack.c.l.b16 %v2605
    %v2686 = vunpack.c.l.b16 %v2606
    %v2687 = vunpack.c.l.b16 %v2607
    %v2688 = vunpack.c.l.b16 %v2608
    %v2689 = vunpack.c.l.b16 %v2609
    %v2690 = vunpack.c.l.b16 %v2610
    %v2691 = vunpack.c.l.b16 %v2611
    %v2692 = vunpack.c.l.b16 %v2612
    %v2693 = vunpack.c.l.b16 %v2613
    %v2694 = vunpack.c.l.b16 %v2614
    %v2695 = vunpack.c.l.b16 %v2615
    %v2696 = vunpack.c.l.b16 %v2616
    %v2697 = vunpack.c.l.b16 %v2617
    %v2698 = vunpack.c.l.b16 %v2618
    %v2699 = vpack.c.b16 %v2684, %v2683
    %v2700 = vpack.c.b16 %v2686, %v2685
    %v2701 = vpack.c.b16 %v2688, %v2687
    %v2702 = vpack.c.b16 %v2690, %v2689
    %v2703 = vpack.c.b16 %v2692, %v2691
    %v2704 = vpack.c.b16 %v2694, %v2693
    %v2705 = vpack.c.b16 %v2696, %v2695
    %v2706 = vpack.c.b16 %v2698, %v2697
    %2715 = vmatpush.bf16.msra.mxu0 %v2706
    %2716 = vmatpush.bf16.msra.mxu0 %v2705
    %2717 = vmatpush.bf16.msra.mxu0 %v2704
    %2718 = vmatpush.bf16.msra.mxu0 %v2703
    %2719 = vmatpush.bf16.msra.mxu0 %v2702
    %2720 = vmatpush.bf16.msra.mxu0 %v2701
    %2721 = vmatpush.bf16.msra.mxu0 %v2700
    %2722 = vmatpush.bf16.msra.mxu0 %v2699
    %2723 = vmatmul.bf16.gmra.mxu0 %v2651
    %v2724 = vpop.f32.mrf.mxu0
    %v2725 = vadd.f32 0.0, %v2724
    %v2726 = vpop.f32.mrf.mxu0
    %v2727 = vadd.f32 0.0, %v2726
    %2728 = vmatmul.bf16.gmra.mxu0 %v2652
    %v2729 = vpop.f32.mrf.mxu0
    %v2730 = vadd.f32 0.0, %v2729
    %v2731 = vpop.f32.mrf.mxu0
    %v2732 = vadd.f32 0.0, %v2731
    %2733 = vmatmul.bf16.gmra.mxu0 %v2653
    %v2734 = vpop.f32.mrf.mxu0
    %v2735 = vadd.f32 0.0, %v2734
    %v2736 = vpop.f32.mrf.mxu0
    %v2737 = vadd.f32 0.0, %v2736
    %2738 = vmatmul.bf16.gmra.mxu0 %v2654
    %v2739 = vpop.f32.mrf.mxu0
    %v2740 = vadd.f32 0.0, %v2739
    %v2741 = vpop.f32.mrf.mxu0
    %v2742 = vadd.f32 0.0, %v2741
    %2743 = vmatmul.bf16.gmra.mxu0 %v2655
    %v2744 = vpop.f32.mrf.mxu0
    %v2745 = vadd.f32 0.0, %v2744
    %v2746 = vpop.f32.mrf.mxu0
    %v2747 = vadd.f32 0.0, %v2746
    %2748 = vmatmul.bf16.gmra.mxu0 %v2656
    %v2749 = vpop.f32.mrf.mxu0
    %v2750 = vadd.f32 0.0, %v2749
    %v2751 = vpop.f32.mrf.mxu0
    %v2752 = vadd.f32 0.0, %v2751
    %2753 = vmatmul.bf16.gmra.mxu0 %v2657
    %v2754 = vpop.f32.mrf.mxu0
    %v2755 = vadd.f32 0.0, %v2754
    %v2756 = vpop.f32.mrf.mxu0
    %v2757 = vadd.f32 0.0, %v2756
    %2758 = vmatmul.bf16.gmra.mxu0 %v2658
    %v2759 = vpop.f32.mrf.mxu0
    %v2760 = vadd.f32 0.0, %v2759
    %v2761 = vpop.f32.mrf.mxu0
    %v2762 = vadd.f32 0.0, %v2761
    %2763 = vdwg.mxu0
    %v2764 = vadd.f32 %v2554, %v2725
    %v2765 = vadd.f32 %v2555, %v2727
    %v2766 = vadd.f32 %v2556, %v2730
    %v2767 = vadd.f32 %v2557, %v2732
    %v2768 = vadd.f32 %v2558, %v2735
    %v2769 = vadd.f32 %v2559, %v2737
    %v2770 = vadd.f32 %v2560, %v2740
    %v2771 = vadd.f32 %v2561, %v2742
    %v2772 = vadd.f32 %v2562, %v2745
    %v2773 = vadd.f32 %v2563, %v2747
    %v2774 = vadd.f32 %v2564, %v2750
    %v2775 = vadd.f32 %v2565, %v2752
    %v2776 = vadd.f32 %v2566, %v2755
    %v2777 = vadd.f32 %v2567, %v2757
    %v2778 = vadd.f32 %v2568, %v2760
    %v2779 = vadd.f32 %v2569, %v2762
    %v2780 = vld [vmem:[%s2359 + $0x2] sm:$0xff]
    %v2781 = vld [vmem:[%s2359 + $0x12] sm:$0xff]
    %v2782 = vld [vmem:[%s2359 + $0x22] sm:$0xff]
    %v2783 = vld [vmem:[%s2359 + $0x32] sm:$0xff]
    %v2784 = vld [vmem:[%s2359 + $0x42] sm:$0xff]
    %v2785 = vld [vmem:[%s2359 + $0x52] sm:$0xff]
    %v2786 = vld [vmem:[%s2359 + $0x62] sm:$0xff]
    %v2787 = vld [vmem:[%s2359 + $0x72] sm:$0xff]
    %v2788 = vld [vmem:[%s2359 + $0xa2] sm:$0xff]
    %v2789 = vld [vmem:[%s2359 + $0xb2] sm:$0xff]
    %v2790 = vld [vmem:[%s2359 + $0xc2] sm:$0xff]
    %v2791 = vld [vmem:[%s2359 + $0xd2] sm:$0xff]
    %v2792 = vld [vmem:[%s2359 + $0xe2] sm:$0xff]
    %v2793 = vld [vmem:[%s2359 + $0xf2] sm:$0xff]
    %v2794 = vld [vmem:[%s2359 + $0x102] sm:$0xff]
    %v2795 = vld [vmem:[%s2359 + $0x112] sm:$0xff]
    %v2796 = vpack.c.bf16 %v2780, %v2780
    %v2797 = vpack.c.bf16 %v2781, %v2781
    %v2798 = vpack.c.bf16 %v2782, %v2782
    %v2799 = vpack.c.bf16 %v2783, %v2783
    %v2800 = vpack.c.bf16 %v2784, %v2784
    %v2801 = vpack.c.bf16 %v2785, %v2785
    %v2802 = vpack.c.bf16 %v2786, %v2786
    %v2803 = vpack.c.bf16 %v2787, %v2787
    %v2804 = vpack.c.bf16 %v2788, %v2788
    %v2805 = vpack.c.bf16 %v2789, %v2789
    %v2806 = vpack.c.bf16 %v2790, %v2790
    %v2807 = vpack.c.bf16 %v2791, %v2791
    %v2808 = vpack.c.bf16 %v2792, %v2792
    %v2809 = vpack.c.bf16 %v2793, %v2793
    %v2810 = vpack.c.bf16 %v2794, %v2794
    %v2811 = vpack.c.bf16 %v2795, %v2795
    %s2812 = scalar_lea.vmem %s2, 512
    %v2813 = vld [vmem:[%s2812] sm:$0xf]
    %v2814 = vld [vmem:[%s2812 + $0x4] sm:$0xf]
    %v2815 = vld [vmem:[%s2812 + $0x8] sm:$0xf]
    %v2816 = vld [vmem:[%s2812 + $0xc] sm:$0xf]
    %v2817 = vld [vmem:[%s2812 + $0x10] sm:$0xf]
    %v2818 = vld [vmem:[%s2812 + $0x14] sm:$0xf]
    %v2819 = vld [vmem:[%s2812 + $0x18] sm:$0xf]
    %v2820 = vld [vmem:[%s2812 + $0x1c] sm:$0xf]
    %v2821 = vld [vmem:[%s2812 + $0x20] sm:$0xf]
    %v2822 = vld [vmem:[%s2812 + $0x24] sm:$0xf]
    %v2823 = vld [vmem:[%s2812 + $0x28] sm:$0xf]
    %v2824 = vld [vmem:[%s2812 + $0x2c] sm:$0xf]
    %v2825 = vld [vmem:[%s2812 + $0x30] sm:$0xf]
    %v2826 = vld [vmem:[%s2812 + $0x34] sm:$0xf]
    %v2827 = vld [vmem:[%s2812 + $0x38] sm:$0xf]
    %v2828 = vld [vmem:[%s2812 + $0x3c] sm:$0xf]
    %v2845 = vunpack.c.l.b16 %v2796
    %v2846 = vunpack.c.l.b16 %v2797
    %v2847 = vunpack.c.l.b16 %v2798
    %v2848 = vunpack.c.l.b16 %v2799
    %v2849 = vunpack.c.l.b16 %v2800
    %v2850 = vunpack.c.l.b16 %v2801
    %v2851 = vunpack.c.l.b16 %v2802
    %v2852 = vunpack.c.l.b16 %v2803
    %v2853 = vunpack.c.l.b16 %v2804
    %v2854 = vunpack.c.l.b16 %v2805
    %v2855 = vunpack.c.l.b16 %v2806
    %v2856 = vunpack.c.l.b16 %v2807
    %v2857 = vunpack.c.l.b16 %v2808
    %v2858 = vunpack.c.l.b16 %v2809
    %v2859 = vunpack.c.l.b16 %v2810
    %v2860 = vunpack.c.l.b16 %v2811
    %v2861 = vpack.c.b16 %v2846, %v2845
    %v2862 = vpack.c.b16 %v2848, %v2847
    %v2863 = vpack.c.b16 %v2850, %v2849
    %v2864 = vpack.c.b16 %v2852, %v2851
    %v2865 = vpack.c.b16 %v2854, %v2853
    %v2866 = vpack.c.b16 %v2856, %v2855
    %v2867 = vpack.c.b16 %v2858, %v2857
    %v2868 = vpack.c.b16 %v2860, %v2859
    %v2893 = vunpack.c.l.b16 %v2813
    %v2894 = vunpack.c.l.b16 %v2814
    %v2895 = vunpack.c.l.b16 %v2815
    %v2896 = vunpack.c.l.b16 %v2816
    %v2897 = vunpack.c.l.b16 %v2817
    %v2898 = vunpack.c.l.b16 %v2818
    %v2899 = vunpack.c.l.b16 %v2819
    %v2900 = vunpack.c.l.b16 %v2820
    %v2901 = vunpack.c.l.b16 %v2821
    %v2902 = vunpack.c.l.b16 %v2822
    %v2903 = vunpack.c.l.b16 %v2823
    %v2904 = vunpack.c.l.b16 %v2824
    %v2905 = vunpack.c.l.b16 %v2825
    %v2906 = vunpack.c.l.b16 %v2826
    %v2907 = vunpack.c.l.b16 %v2827
    %v2908 = vunpack.c.l.b16 %v2828
    %v2909 = vpack.c.b16 %v2894, %v2893
    %v2910 = vpack.c.b16 %v2896, %v2895
    %v2911 = vpack.c.b16 %v2898, %v2897
    %v2912 = vpack.c.b16 %v2900, %v2899
    %v2913 = vpack.c.b16 %v2902, %v2901
    %v2914 = vpack.c.b16 %v2904, %v2903
    %v2915 = vpack.c.b16 %v2906, %v2905
    %v2916 = vpack.c.b16 %v2908, %v2907
    %2925 = vmatpush.bf16.msra.mxu0 %v2916
    %2926 = vmatpush.bf16.msra.mxu0 %v2915
    %2927 = vmatpush.bf16.msra.mxu0 %v2914
    %2928 = vmatpush.bf16.msra.mxu0 %v2913
    %2929 = vmatpush.bf16.msra.mxu0 %v2912
    %2930 = vmatpush.bf16.msra.mxu0 %v2911
    %2931 = vmatpush.bf16.msra.mxu0 %v2910
    %2932 = vmatpush.bf16.msra.mxu0 %v2909
    %2933 = vmatmul.bf16.gmra.mxu0 %v2861
    %v2934 = vpop.f32.mrf.mxu0
    %v2935 = vadd.f32 0.0, %v2934
    %v2936 = vpop.f32.mrf.mxu0
    %v2937 = vadd.f32 0.0, %v2936
    %2938 = vmatmul.bf16.gmra.mxu0 %v2862
    %v2939 = vpop.f32.mrf.mxu0
    %v2940 = vadd.f32 0.0, %v2939
    %v2941 = vpop.f32.mrf.mxu0
    %v2942 = vadd.f32 0.0, %v2941
    %2943 = vmatmul.bf16.gmra.mxu0 %v2863
    %v2944 = vpop.f32.mrf.mxu0
    %v2945 = vadd.f32 0.0, %v2944
    %v2946 = vpop.f32.mrf.mxu0
    %v2947 = vadd.f32 0.0, %v2946
    %2948 = vmatmul.bf16.gmra.mxu0 %v2864
    %v2949 = vpop.f32.mrf.mxu0
    %v2950 = vadd.f32 0.0, %v2949
    %v2951 = vpop.f32.mrf.mxu0
    %v2952 = vadd.f32 0.0, %v2951
    %2953 = vmatmul.bf16.gmra.mxu0 %v2865
    %v2954 = vpop.f32.mrf.mxu0
    %v2955 = vadd.f32 0.0, %v2954
    %v2956 = vpop.f32.mrf.mxu0
    %v2957 = vadd.f32 0.0, %v2956
    %2958 = vmatmul.bf16.gmra.mxu0 %v2866
    %v2959 = vpop.f32.mrf.mxu0
    %v2960 = vadd.f32 0.0, %v2959
    %v2961 = vpop.f32.mrf.mxu0
    %v2962 = vadd.f32 0.0, %v2961
    %2963 = vmatmul.bf16.gmra.mxu0 %v2867
    %v2964 = vpop.f32.mrf.mxu0
    %v2965 = vadd.f32 0.0, %v2964
    %v2966 = vpop.f32.mrf.mxu0
    %v2967 = vadd.f32 0.0, %v2966
    %2968 = vmatmul.bf16.gmra.mxu0 %v2868
    %v2969 = vpop.f32.mrf.mxu0
    %v2970 = vadd.f32 0.0, %v2969
    %v2971 = vpop.f32.mrf.mxu0
    %v2972 = vadd.f32 0.0, %v2971
    %2973 = vdwg.mxu0
    %v2974 = vadd.f32 %v2764, %v2935
    %v2975 = vadd.f32 %v2765, %v2937
    %v2976 = vadd.f32 %v2766, %v2940
    %v2977 = vadd.f32 %v2767, %v2942
    %v2978 = vadd.f32 %v2768, %v2945
    %v2979 = vadd.f32 %v2769, %v2947
    %v2980 = vadd.f32 %v2770, %v2950
    %v2981 = vadd.f32 %v2771, %v2952
    %v2982 = vadd.f32 %v2772, %v2955
    %v2983 = vadd.f32 %v2773, %v2957
    %v2984 = vadd.f32 %v2774, %v2960
    %v2985 = vadd.f32 %v2775, %v2962
    %v2986 = vadd.f32 %v2776, %v2965
    %v2987 = vadd.f32 %v2777, %v2967
    %v2988 = vadd.f32 %v2778, %v2970
    %v2989 = vadd.f32 %v2779, %v2972
    %s2990 = scalar_lea.vmem %s4, 4
    %v2991 = vld [vmem:[%s2990] sm:$0x7]
    %v2992 = vperm.slane %v2991, 0
    %v2993 = vadd.f32 %v2974, %v2992
    %v2994 = vadd.f32 %v2975, %v2992
    %v2995 = vadd.f32 %v2976, %v2992
    %v2996 = vadd.f32 %v2977, %v2992
    %v2997 = vadd.f32 %v2978, %v2992
    %v2998 = vadd.f32 %v2979, %v2992
    %v2999 = vadd.f32 %v2980, %v2992
    %v3000 = vadd.f32 %v2981, %v2992
    %v3001 = vadd.f32 %v2982, %v2992
    %v3002 = vadd.f32 %v2983, %v2992
    %v3003 = vadd.f32 %v2984, %v2992
    %v3004 = vadd.f32 %v2985, %v2992
    %v3005 = vadd.f32 %v2986, %v2992
    %v3006 = vadd.f32 %v2987, %v2992
    %v3007 = vadd.f32 %v2988, %v2992
    %v3008 = vadd.f32 %v2989, %v2992
    %v3009 = vmax.f32 %v2993, 0.0
    %v3010 = vmax.f32 %v2994, 0.0
    %v3011 = vmax.f32 %v2995, 0.0
    %v3012 = vmax.f32 %v2996, 0.0
    %v3013 = vmax.f32 %v2997, 0.0
    %v3014 = vmax.f32 %v2998, 0.0
    %v3015 = vmax.f32 %v2999, 0.0
    %v3016 = vmax.f32 %v3000, 0.0
    %v3017 = vmax.f32 %v3001, 0.0
    %v3018 = vmax.f32 %v3002, 0.0
    %v3019 = vmax.f32 %v3003, 0.0
    %v3020 = vmax.f32 %v3004, 0.0
    %v3021 = vmax.f32 %v3005, 0.0
    %v3022 = vmax.f32 %v3006, 0.0
    %v3023 = vmax.f32 %v3007, 0.0
    %v3024 = vmax.f32 %v3008, 0.0
    %v3025 = vadd.f32 %v3009, %v3010
    %v3026 = vadd.f32 %v3025, %v3011
    %v3027 = vadd.f32 %v3026, %v3012
    %v3028 = vadd.f32 %v3027, %v3013
    %v3029 = vadd.f32 %v3028, %v3014
    %v3030 = vadd.f32 %v3029, %v3015
    %v3031 = vadd.f32 %v3030, %v3016
    %v3032 = vrot.slane %v3031, 4
    %v3033 = vadd.f32 %v3031, %v3032
    %v3034 = vrot.slane %v3033, 2
    %v3035 = vadd.f32 %v3033, %v3034
    %v3036 = vrot.slane %v3035, 1
    %v3037 = vadd.f32 %v3035, %v3036
    %v3038 = vadd.f32 %v3017, %v3018
    %v3039 = vadd.f32 %v3038, %v3019
    %v3040 = vadd.f32 %v3039, %v3020
    %v3041 = vadd.f32 %v3040, %v3021
    %v3042 = vadd.f32 %v3041, %v3022
    %v3043 = vadd.f32 %v3042, %v3023
    %v3044 = vadd.f32 %v3043, %v3024
    %v3045 = vrot.slane %v3044, 4
    %v3046 = vadd.f32 %v3044, %v3045
    %v3047 = vrot.slane %v3046, 2
    %v3048 = vadd.f32 %v3046, %v3047
    %v3049 = vrot.slane %v3048, 1
    %v3050 = vadd.f32 %v3048, %v3049
    %v3051 = vmul.f32 %v3009, %v3009
    %v3052 = vmul.f32 %v3010, %v3010
    %v3053 = vmul.f32 %v3011, %v3011
    %v3054 = vmul.f32 %v3012, %v3012
    %v3055 = vmul.f32 %v3013, %v3013
    %v3056 = vmul.f32 %v3014, %v3014
    %v3057 = vmul.f32 %v3015, %v3015
    %v3058 = vmul.f32 %v3016, %v3016
    %v3059 = vmul.f32 %v3017, %v3017
    %v3060 = vmul.f32 %v3018, %v3018
    %v3061 = vmul.f32 %v3019, %v3019
    %v3062 = vmul.f32 %v3020, %v3020
    %v3063 = vmul.f32 %v3021, %v3021
    %v3064 = vmul.f32 %v3022, %v3022
    %v3065 = vmul.f32 %v3023, %v3023
    %v3066 = vmul.f32 %v3024, %v3024
    %v3067 = vadd.f32 %v3051, %v3052
    %v3068 = vadd.f32 %v3067, %v3053
    %v3069 = vadd.f32 %v3068, %v3054
    %v3070 = vadd.f32 %v3069, %v3055
    %v3071 = vadd.f32 %v3070, %v3056
    %v3072 = vadd.f32 %v3071, %v3057
    %v3073 = vadd.f32 %v3072, %v3058
    %v3074 = vrot.slane %v3073, 4
    %v3075 = vadd.f32 %v3073, %v3074
    %v3076 = vrot.slane %v3075, 2
    %v3077 = vadd.f32 %v3075, %v3076
    %v3078 = vrot.slane %v3077, 1
    %v3079 = vadd.f32 %v3077, %v3078
    %v3080 = vadd.f32 %v3059, %v3060
    %v3081 = vadd.f32 %v3080, %v3061
    %v3082 = vadd.f32 %v3081, %v3062
    %v3083 = vadd.f32 %v3082, %v3063
    %v3084 = vadd.f32 %v3083, %v3064
    %v3085 = vadd.f32 %v3084, %v3065
    %v3086 = vadd.f32 %v3085, %v3066
    %v3087 = vrot.slane %v3086, 4
    %v3088 = vadd.f32 %v3086, %v3087
    %v3089 = vrot.slane %v3088, 2
    %v3090 = vadd.f32 %v3088, %v3089
    %v3091 = vrot.slane %v3090, 1
    %v3092 = vadd.f32 %v3090, %v3091
    %v3095 = vsel %vm1005, %v3050, %v3037
    %3097 = vmatpush.msra.mxu0 %v39
    %3098 = vmatpush.msra.mxu0 %v38
    %3099 = vmatpush.msra.mxu0 %v37
    %3100 = vmatpush.msra.mxu0 %v36
    %3101 = vmatpush.msra.mxu0 %v35
    %3102 = vmatpush.msra.mxu0 %v34
    %3103 = vmatpush.msra.mxu0 %v33
    %3104 = vmatpush.msra.mxu0 %v32
    %3105 = vmatpush.msra.mxu0 %v31
    %3106 = vmatpush.msra.mxu0 %v30
    %3107 = vmatpush.msra.mxu0 %v29
    %3108 = vmatpush.msra.mxu0 %v28
    %3109 = vmatpush.msra.mxu0 %v27
    %3110 = vmatpush.msra.mxu0 %v26
    %3111 = vmatpush.msra.mxu0 %v25
    %3112 = vmatpush.msra.mxu0 %v24
    %3113 = vmatmul.f32.gmra.mxu0 %v3095
    %v3114 = vpop.f32.mrf.mxu0
    %v3115 = vadd.f32 0.0, %v3114
    %3116 = vdwg.mxu0
    %v3119 = vsel %vm1005, %v3092, %v3079
    %3121 = vmatpush.msra.mxu0 %v39
    %3122 = vmatpush.msra.mxu0 %v38
    %3123 = vmatpush.msra.mxu0 %v37
    %3124 = vmatpush.msra.mxu0 %v36
    %3125 = vmatpush.msra.mxu0 %v35
    %3126 = vmatpush.msra.mxu0 %v34
    %3127 = vmatpush.msra.mxu0 %v33
    %3128 = vmatpush.msra.mxu0 %v32
    %3129 = vmatpush.msra.mxu0 %v31
    %3130 = vmatpush.msra.mxu0 %v30
    %3131 = vmatpush.msra.mxu0 %v29
    %3132 = vmatpush.msra.mxu0 %v28
    %3133 = vmatpush.msra.mxu0 %v27
    %3134 = vmatpush.msra.mxu0 %v26
    %3135 = vmatpush.msra.mxu0 %v25
    %3136 = vmatpush.msra.mxu0 %v24
    %3137 = vmatmul.f32.gmra.mxu0 %v3119
    %v3138 = vpop.f32.mrf.mxu0
    %v3139 = vadd.f32 0.0, %v3138
    %3140 = vdwg.mxu0
    %v3141 = vmul.f32 %v3115, %v3115
    %v3142 = vsub.f32 %v3139, %v3141
    %v3143 = vmax.f32 %v3142, 0.0
    %v3144 = vadd.f32 %v3143, 1e-05
    %v3145 = vrsqrt.pop %v3144
    %v3146 = vmul.f32 %v3145, %v3144
    %v3147 = vmul.f32 %v3146, %v3145
    %v3148 = vmul.f32 0.5, %v3147
    %v3149 = vsub.f32 1.5, %v3148
    %v3150 = vmul.f32 %v3145, %v3149
    %vm3151 = vweird.f32 %v3144
    %vm3152 = vweird.f32 %v3145
    %vm3153 = vmor %vm3151, %vm3152
    %v3154 = vsel %vm3153, %v3145, %v3150
    %v3155 = vperm.slane %v2991, 1
    %v3156 = vmul.f32 %v3154, %v3155
    %v3157 = vmul.f32 %v3115, %v3156
    %v3158 = vperm.slane %v2991, 2
    %v3159 = vsub.f32 %v3158, %v3157
    %v3161 = vrot.slane %v3156, 1
    %v3162 = vperm.slane %v3156, 0
    %v3163 = vperm.slane %v3161, 0
    %v3166 = vmul.f32 %v3009, %v3162
    %v3167 = vmul.f32 %v3010, %v3162
    %v3168 = vmul.f32 %v3011, %v3162
    %v3169 = vmul.f32 %v3012, %v3162
    %v3170 = vmul.f32 %v3013, %v3162
    %v3171 = vmul.f32 %v3014, %v3162
    %v3172 = vmul.f32 %v3015, %v3162
    %v3173 = vmul.f32 %v3016, %v3162
    %v3174 = vmul.f32 %v3017, %v3163
    %v3175 = vmul.f32 %v3018, %v3163
    %v3176 = vmul.f32 %v3019, %v3163
    %v3177 = vmul.f32 %v3020, %v3163
    %v3178 = vmul.f32 %v3021, %v3163
    %v3179 = vmul.f32 %v3022, %v3163
    %v3180 = vmul.f32 %v3023, %v3163
    %v3181 = vmul.f32 %v3024, %v3163
    %v3183 = vrot.slane %v3159, 1
    %v3184 = vperm.slane %v3159, 0
    %v3185 = vperm.slane %v3183, 0
    %v3188 = vadd.f32 %v3166, %v3184
    %v3189 = vadd.f32 %v3167, %v3184
    %v3190 = vadd.f32 %v3168, %v3184
    %v3191 = vadd.f32 %v3169, %v3184
    %v3192 = vadd.f32 %v3170, %v3184
    %v3193 = vadd.f32 %v3171, %v3184
    %v3194 = vadd.f32 %v3172, %v3184
    %v3195 = vadd.f32 %v3173, %v3184
    %v3196 = vadd.f32 %v3174, %v3185
    %v3197 = vadd.f32 %v3175, %v3185
    %v3198 = vadd.f32 %v3176, %v3185
    %v3199 = vadd.f32 %v3177, %v3185
    %v3200 = vadd.f32 %v3178, %v3185
    %v3201 = vadd.f32 %v3179, %v3185
    %v3202 = vadd.f32 %v3180, %v3185
    %v3203 = vadd.f32 %v3181, %v3185
    %3204 = vst [vmem:[%s1115 + $0x1] sm:$0xff] %v3188
    %3205 = vst [vmem:[%s1115 + $0x11] sm:$0xff] %v3189
    %3206 = vst [vmem:[%s1115 + $0x21] sm:$0xff] %v3190
    %3207 = vst [vmem:[%s1115 + $0x31] sm:$0xff] %v3191
    %3208 = vst [vmem:[%s1115 + $0x41] sm:$0xff] %v3192
    %3209 = vst [vmem:[%s1115 + $0x51] sm:$0xff] %v3193
    %3210 = vst [vmem:[%s1115 + $0x61] sm:$0xff] %v3194
    %3211 = vst [vmem:[%s1115 + $0x71] sm:$0xff] %v3195
    %3212 = vst [vmem:[%s1115 + $0xa1] sm:$0xff] %v3196
    %3213 = vst [vmem:[%s1115 + $0xb1] sm:$0xff] %v3197
    %3214 = vst [vmem:[%s1115 + $0xc1] sm:$0xff] %v3198
    %3215 = vst [vmem:[%s1115 + $0xd1] sm:$0xff] %v3199
    %3216 = vst [vmem:[%s1115 + $0xe1] sm:$0xff] %v3200
    %3217 = vst [vmem:[%s1115 + $0xf1] sm:$0xff] %v3201
    %3218 = vst [vmem:[%s1115 + $0x101] sm:$0xff] %v3202
    %3219 = vst [vmem:[%s1115 + $0x111] sm:$0xff] %v3203
    %v3220 = vld [vmem:[#allocation2] sm:$0xff]
    %v3221 = vld [vmem:[#allocation2 + $0x10] sm:$0xff]
    %v3222 = vld [vmem:[#allocation2 + $0x20] sm:$0xff]
    %v3223 = vld [vmem:[#allocation2 + $0x30] sm:$0xff]
    %v3224 = vld [vmem:[#allocation2 + $0x40] sm:$0xff]
    %v3225 = vld [vmem:[#allocation2 + $0x50] sm:$0xff]
    %v3226 = vld [vmem:[#allocation2 + $0x60] sm:$0xff]
    %v3227 = vld [vmem:[#allocation2 + $0x70] sm:$0xff]
    %v3228 = vld [vmem:[#allocation2 + $0xa0] sm:$0xff]
    %v3229 = vld [vmem:[#allocation2 + $0xb0] sm:$0xff]
    %v3230 = vld [vmem:[#allocation2 + $0xc0] sm:$0xff]
    %v3231 = vld [vmem:[#allocation2 + $0xd0] sm:$0xff]
    %v3232 = vld [vmem:[#allocation2 + $0xe0] sm:$0xff]
    %v3233 = vld [vmem:[#allocation2 + $0xf0] sm:$0xff]
    %v3234 = vld [vmem:[#allocation2 + $0x100] sm:$0xff]
    %v3235 = vld [vmem:[#allocation2 + $0x110] sm:$0xff]
    %v3236 = vpack.c.bf16 %v3220, %v3220
    %v3237 = vpack.c.bf16 %v3221, %v3221
    %v3238 = vpack.c.bf16 %v3222, %v3222
    %v3239 = vpack.c.bf16 %v3223, %v3223
    %v3240 = vpack.c.bf16 %v3224, %v3224
    %v3241 = vpack.c.bf16 %v3225, %v3225
    %v3242 = vpack.c.bf16 %v3226, %v3226
    %v3243 = vpack.c.bf16 %v3227, %v3227
    %v3244 = vpack.c.bf16 %v3228, %v3228
    %v3245 = vpack.c.bf16 %v3229, %v3229
    %v3246 = vpack.c.bf16 %v3230, %v3230
    %v3247 = vpack.c.bf16 %v3231, %v3231
    %v3248 = vpack.c.bf16 %v3232, %v3232
    %v3249 = vpack.c.bf16 %v3233, %v3233
    %v3250 = vpack.c.bf16 %v3234, %v3234
    %v3251 = vpack.c.bf16 %v3235, %v3235
    %v3252 = vld [vmem:[%s3] sm:$0xf]
    %v3253 = vld [vmem:[%s3 + $0x4] sm:$0xf]
    %v3254 = vld [vmem:[%s3 + $0x8] sm:$0xf]
    %v3255 = vld [vmem:[%s3 + $0xc] sm:$0xf]
    %v3256 = vld [vmem:[%s3 + $0x10] sm:$0xf]
    %v3257 = vld [vmem:[%s3 + $0x14] sm:$0xf]
    %v3258 = vld [vmem:[%s3 + $0x18] sm:$0xf]
    %v3259 = vld [vmem:[%s3 + $0x1c] sm:$0xf]
    %v3260 = vld [vmem:[%s3 + $0x20] sm:$0xf]
    %v3261 = vld [vmem:[%s3 + $0x24] sm:$0xf]
    %v3262 = vld [vmem:[%s3 + $0x28] sm:$0xf]
    %v3263 = vld [vmem:[%s3 + $0x2c] sm:$0xf]
    %v3264 = vld [vmem:[%s3 + $0x30] sm:$0xf]
    %v3265 = vld [vmem:[%s3 + $0x34] sm:$0xf]
    %v3266 = vld [vmem:[%s3 + $0x38] sm:$0xf]
    %v3267 = vld [vmem:[%s3 + $0x3c] sm:$0xf]
    %v3268 = vld [vmem:[#allocation2 + $0x1] sm:$0xff]
    %v3269 = vld [vmem:[#allocation2 + $0x11] sm:$0xff]
    %v3270 = vld [vmem:[#allocation2 + $0x21] sm:$0xff]
    %v3271 = vld [vmem:[#allocation2 + $0x31] sm:$0xff]
    %v3272 = vld [vmem:[#allocation2 + $0x41] sm:$0xff]
    %v3273 = vld [vmem:[#allocation2 + $0x51] sm:$0xff]
    %v3274 = vld [vmem:[#allocation2 + $0x61] sm:$0xff]
    %v3275 = vld [vmem:[#allocation2 + $0x71] sm:$0xff]
    %v3276 = vld [vmem:[#allocation2 + $0xa1] sm:$0xff]
    %v3277 = vld [vmem:[#allocation2 + $0xb1] sm:$0xff]
    %v3278 = vld [vmem:[#allocation2 + $0xc1] sm:$0xff]
    %v3279 = vld [vmem:[#allocation2 + $0xd1] sm:$0xff]
    %v3280 = vld [vmem:[#allocation2 + $0xe1] sm:$0xff]
    %v3281 = vld [vmem:[#allocation2 + $0xf1] sm:$0xff]
    %v3282 = vld [vmem:[#allocation2 + $0x101] sm:$0xff]
    %v3283 = vld [vmem:[#allocation2 + $0x111] sm:$0xff]
    %v3284 = vpack.c.bf16 %v3268, %v3268
    %v3285 = vpack.c.bf16 %v3269, %v3269
    %v3286 = vpack.c.bf16 %v3270, %v3270
    %v3287 = vpack.c.bf16 %v3271, %v3271
    %v3288 = vpack.c.bf16 %v3272, %v3272
    %v3289 = vpack.c.bf16 %v3273, %v3273
    %v3290 = vpack.c.bf16 %v3274, %v3274
    %v3291 = vpack.c.bf16 %v3275, %v3275
    %v3292 = vpack.c.bf16 %v3276, %v3276
    %v3293 = vpack.c.bf16 %v3277, %v3277
    %v3294 = vpack.c.bf16 %v3278, %v3278
    %v3295 = vpack.c.bf16 %v3279, %v3279
    %v3296 = vpack.c.bf16 %v3280, %v3280
    %v3297 = vpack.c.bf16 %v3281, %v3281
    %v3298 = vpack.c.bf16 %v3282, %v3282
    %v3299 = vpack.c.bf16 %v3283, %v3283
    %s3300 = scalar_lea.vmem %s3, 64
    %v3301 = vld [vmem:[%s3300] sm:$0xf]
    %v3302 = vld [vmem:[%s3300 + $0x4] sm:$0xf]
    %v3303 = vld [vmem:[%s3300 + $0x8] sm:$0xf]
    %v3304 = vld [vmem:[%s3300 + $0xc] sm:$0xf]
    %v3305 = vld [vmem:[%s3300 + $0x10] sm:$0xf]
    %v3306 = vld [vmem:[%s3300 + $0x14] sm:$0xf]
    %v3307 = vld [vmem:[%s3300 + $0x18] sm:$0xf]
    %v3308 = vld [vmem:[%s3300 + $0x1c] sm:$0xf]
    %v3309 = vld [vmem:[%s3300 + $0x20] sm:$0xf]
    %v3310 = vld [vmem:[%s3300 + $0x24] sm:$0xf]
    %v3311 = vld [vmem:[%s3300 + $0x28] sm:$0xf]
    %v3312 = vld [vmem:[%s3300 + $0x2c] sm:$0xf]
    %v3313 = vld [vmem:[%s3300 + $0x30] sm:$0xf]
    %v3314 = vld [vmem:[%s3300 + $0x34] sm:$0xf]
    %v3315 = vld [vmem:[%s3300 + $0x38] sm:$0xf]
    %v3316 = vld [vmem:[%s3300 + $0x3c] sm:$0xf]
    %v3333 = vunpack.c.l.b16 %v3284
    %v3334 = vunpack.c.l.b16 %v3285
    %v3335 = vunpack.c.l.b16 %v3286
    %v3336 = vunpack.c.l.b16 %v3287
    %v3337 = vunpack.c.l.b16 %v3288
    %v3338 = vunpack.c.l.b16 %v3289
    %v3339 = vunpack.c.l.b16 %v3290
    %v3340 = vunpack.c.l.b16 %v3291
    %v3341 = vunpack.c.l.b16 %v3292
    %v3342 = vunpack.c.l.b16 %v3293
    %v3343 = vunpack.c.l.b16 %v3294
    %v3344 = vunpack.c.l.b16 %v3295
    %v3345 = vunpack.c.l.b16 %v3296
    %v3346 = vunpack.c.l.b16 %v3297
    %v3347 = vunpack.c.l.b16 %v3298
    %v3348 = vunpack.c.l.b16 %v3299
    %v3349 = vpack.c.b16 %v3334, %v3333
    %v3350 = vpack.c.b16 %v3336, %v3335
    %v3351 = vpack.c.b16 %v3338, %v3337
    %v3352 = vpack.c.b16 %v3340, %v3339
    %v3353 = vpack.c.b16 %v3342, %v3341
    %v3354 = vpack.c.b16 %v3344, %v3343
    %v3355 = vpack.c.b16 %v3346, %v3345
    %v3356 = vpack.c.b16 %v3348, %v3347
    %v3381 = vunpack.c.l.b16 %v3301
    %v3382 = vunpack.c.l.b16 %v3302
    %v3383 = vunpack.c.l.b16 %v3303
    %v3384 = vunpack.c.l.b16 %v3304
    %v3385 = vunpack.c.l.b16 %v3305
    %v3386 = vunpack.c.l.b16 %v3306
    %v3387 = vunpack.c.l.b16 %v3307
    %v3388 = vunpack.c.l.b16 %v3308
    %v3389 = vunpack.c.l.b16 %v3309
    %v3390 = vunpack.c.l.b16 %v3310
    %v3391 = vunpack.c.l.b16 %v3311
    %v3392 = vunpack.c.l.b16 %v3312
    %v3393 = vunpack.c.l.b16 %v3313
    %v3394 = vunpack.c.l.b16 %v3314
    %v3395 = vunpack.c.l.b16 %v3315
    %v3396 = vunpack.c.l.b16 %v3316
    %v3397 = vpack.c.b16 %v3382, %v3381
    %v3398 = vpack.c.b16 %v3384, %v3383
    %v3399 = vpack.c.b16 %v3386, %v3385
    %v3400 = vpack.c.b16 %v3388, %v3387
    %v3401 = vpack.c.b16 %v3390, %v3389
    %v3402 = vpack.c.b16 %v3392, %v3391
    %v3403 = vpack.c.b16 %v3394, %v3393
    %v3404 = vpack.c.b16 %v3396, %v3395
    %3413 = vmatpush.bf16.msra.mxu0 %v3404
    %3414 = vmatpush.bf16.msra.mxu0 %v3403
    %3415 = vmatpush.bf16.msra.mxu0 %v3402
    %3416 = vmatpush.bf16.msra.mxu0 %v3401
    %3417 = vmatpush.bf16.msra.mxu0 %v3400
    %3418 = vmatpush.bf16.msra.mxu0 %v3399
    %3419 = vmatpush.bf16.msra.mxu0 %v3398
    %3420 = vmatpush.bf16.msra.mxu0 %v3397
    %3421 = vmatmul.bf16.gmra.mxu0 %v3349
    %v3422 = vpop.f32.mrf.mxu0
    %v3423 = vadd.f32 0.0, %v3422
    %v3424 = vpop.f32.mrf.mxu0
    %v3425 = vadd.f32 0.0, %v3424
    %3426 = vmatmul.bf16.gmra.mxu0 %v3350
    %v3427 = vpop.f32.mrf.mxu0
    %v3428 = vadd.f32 0.0, %v3427
    %v3429 = vpop.f32.mrf.mxu0
    %v3430 = vadd.f32 0.0, %v3429
    %3431 = vmatmul.bf16.gmra.mxu0 %v3351
    %v3432 = vpop.f32.mrf.mxu0
    %v3433 = vadd.f32 0.0, %v3432
    %v3434 = vpop.f32.mrf.mxu0
    %v3435 = vadd.f32 0.0, %v3434
    %3436 = vmatmul.bf16.gmra.mxu0 %v3352
    %v3437 = vpop.f32.mrf.mxu0
    %v3438 = vadd.f32 0.0, %v3437
    %v3439 = vpop.f32.mrf.mxu0
    %v3440 = vadd.f32 0.0, %v3439
    %3441 = vmatmul.bf16.gmra.mxu0 %v3353
    %v3442 = vpop.f32.mrf.mxu0
    %v3443 = vadd.f32 0.0, %v3442
    %v3444 = vpop.f32.mrf.mxu0
    %v3445 = vadd.f32 0.0, %v3444
    %3446 = vmatmul.bf16.gmra.mxu0 %v3354
    %v3447 = vpop.f32.mrf.mxu0
    %v3448 = vadd.f32 0.0, %v3447
    %v3449 = vpop.f32.mrf.mxu0
    %v3450 = vadd.f32 0.0, %v3449
    %3451 = vmatmul.bf16.gmra.mxu0 %v3355
    %v3452 = vpop.f32.mrf.mxu0
    %v3453 = vadd.f32 0.0, %v3452
    %v3454 = vpop.f32.mrf.mxu0
    %v3455 = vadd.f32 0.0, %v3454
    %3456 = vmatmul.bf16.gmra.mxu0 %v3356
    %v3457 = vpop.f32.mrf.mxu0
    %v3458 = vadd.f32 0.0, %v3457
    %v3459 = vpop.f32.mrf.mxu0
    %v3460 = vadd.f32 0.0, %v3459
    %3461 = vdwg.mxu0
    %v3478 = vunpack.c.l.b16 %v3236
    %v3479 = vunpack.c.l.b16 %v3237
    %v3480 = vunpack.c.l.b16 %v3238
    %v3481 = vunpack.c.l.b16 %v3239
    %v3482 = vunpack.c.l.b16 %v3240
    %v3483 = vunpack.c.l.b16 %v3241
    %v3484 = vunpack.c.l.b16 %v3242
    %v3485 = vunpack.c.l.b16 %v3243
    %v3486 = vunpack.c.l.b16 %v3244
    %v3487 = vunpack.c.l.b16 %v3245
    %v3488 = vunpack.c.l.b16 %v3246
    %v3489 = vunpack.c.l.b16 %v3247
    %v3490 = vunpack.c.l.b16 %v3248
    %v3491 = vunpack.c.l.b16 %v3249
    %v3492 = vunpack.c.l.b16 %v3250
    %v3493 = vunpack.c.l.b16 %v3251
    %v3494 = vpack.c.b16 %v3479, %v3478
    %v3495 = vpack.c.b16 %v3481, %v3480
    %v3496 = vpack.c.b16 %v3483, %v3482
    %v3497 = vpack.c.b16 %v3485, %v3484
    %v3498 = vpack.c.b16 %v3487, %v3486
    %v3499 = vpack.c.b16 %v3489, %v3488
    %v3500 = vpack.c.b16 %v3491, %v3490
    %v3501 = vpack.c.b16 %v3493, %v3492
    %v3526 = vunpack.c.l.b16 %v3252
    %v3527 = vunpack.c.l.b16 %v3253
    %v3528 = vunpack.c.l.b16 %v3254
    %v3529 = vunpack.c.l.b16 %v3255
    %v3530 = vunpack.c.l.b16 %v3256
    %v3531 = vunpack.c.l.b16 %v3257
    %v3532 = vunpack.c.l.b16 %v3258
    %v3533 = vunpack.c.l.b16 %v3259
    %v3534 = vunpack.c.l.b16 %v3260
    %v3535 = vunpack.c.l.b16 %v3261
    %v3536 = vunpack.c.l.b16 %v3262
    %v3537 = vunpack.c.l.b16 %v3263
    %v3538 = vunpack.c.l.b16 %v3264
    %v3539 = vunpack.c.l.b16 %v3265
    %v3540 = vunpack.c.l.b16 %v3266
    %v3541 = vunpack.c.l.b16 %v3267
    %v3542 = vpack.c.b16 %v3527, %v3526
    %v3543 = vpack.c.b16 %v3529, %v3528
    %v3544 = vpack.c.b16 %v3531, %v3530
    %v3545 = vpack.c.b16 %v3533, %v3532
    %v3546 = vpack.c.b16 %v3535, %v3534
    %v3547 = vpack.c.b16 %v3537, %v3536
    %v3548 = vpack.c.b16 %v3539, %v3538
    %v3549 = vpack.c.b16 %v3541, %v3540
    %3558 = vmatpush.bf16.msra.mxu0 %v3549
    %3559 = vmatpush.bf16.msra.mxu0 %v3548
    %3560 = vmatpush.bf16.msra.mxu0 %v3547
    %3561 = vmatpush.bf16.msra.mxu0 %v3546
    %3562 = vmatpush.bf16.msra.mxu0 %v3545
    %3563 = vmatpush.bf16.msra.mxu0 %v3544
    %3564 = vmatpush.bf16.msra.mxu0 %v3543
    %3565 = vmatpush.bf16.msra.mxu0 %v3542
    %3566 = vmatmul.bf16.gmra.mxu0 %v3494
    %v3567 = vpop.f32.mrf.mxu0
    %v3568 = vadd.f32 %v3423, %v3567
    %v3569 = vpop.f32.mrf.mxu0
    %v3570 = vadd.f32 %v3425, %v3569
    %3571 = vmatmul.bf16.gmra.mxu0 %v3495
    %v3572 = vpop.f32.mrf.mxu0
    %v3573 = vadd.f32 %v3428, %v3572
    %v3574 = vpop.f32.mrf.mxu0
    %v3575 = vadd.f32 %v3430, %v3574
    %3576 = vmatmul.bf16.gmra.mxu0 %v3496
    %v3577 = vpop.f32.mrf.mxu0
    %v3578 = vadd.f32 %v3433, %v3577
    %v3579 = vpop.f32.mrf.mxu0
    %v3580 = vadd.f32 %v3435, %v3579
    %3581 = vmatmul.bf16.gmra.mxu0 %v3497
    %v3582 = vpop.f32.mrf.mxu0
    %v3583 = vadd.f32 %v3438, %v3582
    %v3584 = vpop.f32.mrf.mxu0
    %v3585 = vadd.f32 %v3440, %v3584
    %3586 = vmatmul.bf16.gmra.mxu0 %v3498
    %v3587 = vpop.f32.mrf.mxu0
    %v3588 = vadd.f32 %v3443, %v3587
    %v3589 = vpop.f32.mrf.mxu0
    %v3590 = vadd.f32 %v3445, %v3589
    %3591 = vmatmul.bf16.gmra.mxu0 %v3499
    %v3592 = vpop.f32.mrf.mxu0
    %v3593 = vadd.f32 %v3448, %v3592
    %v3594 = vpop.f32.mrf.mxu0
    %v3595 = vadd.f32 %v3450, %v3594
    %3596 = vmatmul.bf16.gmra.mxu0 %v3500
    %v3597 = vpop.f32.mrf.mxu0
    %v3598 = vadd.f32 %v3453, %v3597
    %v3599 = vpop.f32.mrf.mxu0
    %v3600 = vadd.f32 %v3455, %v3599
    %3601 = vmatmul.bf16.gmra.mxu0 %v3501
    %v3602 = vpop.f32.mrf.mxu0
    %v3603 = vadd.f32 %v3458, %v3602
    %v3604 = vpop.f32.mrf.mxu0
    %v3605 = vadd.f32 %v3460, %v3604
    %3606 = vdwg.mxu0
    %v3607 = vld [vmem:[#allocation2 + $0x2] sm:$0xff]
    %v3608 = vld [vmem:[#allocation2 + $0x12] sm:$0xff]
    %v3609 = vld [vmem:[#allocation2 + $0x22] sm:$0xff]
    %v3610 = vld [vmem:[#allocation2 + $0x32] sm:$0xff]
    %v3611 = vld [vmem:[#allocation2 + $0x42] sm:$0xff]
    %v3612 = vld [vmem:[#allocation2 + $0x52] sm:$0xff]
    %v3613 = vld [vmem:[#allocation2 + $0x62] sm:$0xff]
    %v3614 = vld [vmem:[#allocation2 + $0x72] sm:$0xff]
    %v3615 = vld [vmem:[#allocation2 + $0xa2] sm:$0xff]
    %v3616 = vld [vmem:[#allocation2 + $0xb2] sm:$0xff]
    %v3617 = vld [vmem:[#allocation2 + $0xc2] sm:$0xff]
    %v3618 = vld [vmem:[#allocation2 + $0xd2] sm:$0xff]
    %v3619 = vld [vmem:[#allocation2 + $0xe2] sm:$0xff]
    %v3620 = vld [vmem:[#allocation2 + $0xf2] sm:$0xff]
    %v3621 = vld [vmem:[#allocation2 + $0x102] sm:$0xff]
    %v3622 = vld [vmem:[#allocation2 + $0x112] sm:$0xff]
    %v3623 = vpack.c.bf16 %v3607, %v3607
    %v3624 = vpack.c.bf16 %v3608, %v3608
    %v3625 = vpack.c.bf16 %v3609, %v3609
    %v3626 = vpack.c.bf16 %v3610, %v3610
    %v3627 = vpack.c.bf16 %v3611, %v3611
    %v3628 = vpack.c.bf16 %v3612, %v3612
    %v3629 = vpack.c.bf16 %v3613, %v3613
    %v3630 = vpack.c.bf16 %v3614, %v3614
    %v3631 = vpack.c.bf16 %v3615, %v3615
    %v3632 = vpack.c.bf16 %v3616, %v3616
    %v3633 = vpack.c.bf16 %v3617, %v3617
    %v3634 = vpack.c.bf16 %v3618, %v3618
    %v3635 = vpack.c.bf16 %v3619, %v3619
    %v3636 = vpack.c.bf16 %v3620, %v3620
    %v3637 = vpack.c.bf16 %v3621, %v3621
    %v3638 = vpack.c.bf16 %v3622, %v3622
    %s3639 = scalar_lea.vmem %s3, 128
    %v3640 = vld [vmem:[%s3639] sm:$0xf]
    %v3641 = vld [vmem:[%s3639 + $0x4] sm:$0xf]
    %v3642 = vld [vmem:[%s3639 + $0x8] sm:$0xf]
    %v3643 = vld [vmem:[%s3639 + $0xc] sm:$0xf]
    %v3644 = vld [vmem:[%s3639 + $0x10] sm:$0xf]
    %v3645 = vld [vmem:[%s3639 + $0x14] sm:$0xf]
    %v3646 = vld [vmem:[%s3639 + $0x18] sm:$0xf]
    %v3647 = vld [vmem:[%s3639 + $0x1c] sm:$0xf]
    %v3648 = vld [vmem:[%s3639 + $0x20] sm:$0xf]
    %v3649 = vld [vmem:[%s3639 + $0x24] sm:$0xf]
    %v3650 = vld [vmem:[%s3639 + $0x28] sm:$0xf]
    %v3651 = vld [vmem:[%s3639 + $0x2c] sm:$0xf]
    %v3652 = vld [vmem:[%s3639 + $0x30] sm:$0xf]
    %v3653 = vld [vmem:[%s3639 + $0x34] sm:$0xf]
    %v3654 = vld [vmem:[%s3639 + $0x38] sm:$0xf]
    %v3655 = vld [vmem:[%s3639 + $0x3c] sm:$0xf]
    %v3672 = vunpack.c.l.b16 %v3623
    %v3673 = vunpack.c.l.b16 %v3624
    %v3674 = vunpack.c.l.b16 %v3625
    %v3675 = vunpack.c.l.b16 %v3626
    %v3676 = vunpack.c.l.b16 %v3627
    %v3677 = vunpack.c.l.b16 %v3628
    %v3678 = vunpack.c.l.b16 %v3629
    %v3679 = vunpack.c.l.b16 %v3630
    %v3680 = vunpack.c.l.b16 %v3631
    %v3681 = vunpack.c.l.b16 %v3632
    %v3682 = vunpack.c.l.b16 %v3633
    %v3683 = vunpack.c.l.b16 %v3634
    %v3684 = vunpack.c.l.b16 %v3635
    %v3685 = vunpack.c.l.b16 %v3636
    %v3686 = vunpack.c.l.b16 %v3637
    %v3687 = vunpack.c.l.b16 %v3638
    %v3688 = vpack.c.b16 %v3673, %v3672
    %v3689 = vpack.c.b16 %v3675, %v3674
    %v3690 = vpack.c.b16 %v3677, %v3676
    %v3691 = vpack.c.b16 %v3679, %v3678
    %v3692 = vpack.c.b16 %v3681, %v3680
    %v3693 = vpack.c.b16 %v3683, %v3682
    %v3694 = vpack.c.b16 %v3685, %v3684
    %v3695 = vpack.c.b16 %v3687, %v3686
    %v3720 = vunpack.c.l.b16 %v3640
    %v3721 = vunpack.c.l.b16 %v3641
    %v3722 = vunpack.c.l.b16 %v3642
    %v3723 = vunpack.c.l.b16 %v3643
    %v3724 = vunpack.c.l.b16 %v3644
    %v3725 = vunpack.c.l.b16 %v3645
    %v3726 = vunpack.c.l.b16 %v3646
    %v3727 = vunpack.c.l.b16 %v3647
    %v3728 = vunpack.c.l.b16 %v3648
    %v3729 = vunpack.c.l.b16 %v3649
    %v3730 = vunpack.c.l.b16 %v3650
    %v3731 = vunpack.c.l.b16 %v3651
    %v3732 = vunpack.c.l.b16 %v3652
    %v3733 = vunpack.c.l.b16 %v3653
    %v3734 = vunpack.c.l.b16 %v3654
    %v3735 = vunpack.c.l.b16 %v3655
    %v3736 = vpack.c.b16 %v3721, %v3720
    %v3737 = vpack.c.b16 %v3723, %v3722
    %v3738 = vpack.c.b16 %v3725, %v3724
    %v3739 = vpack.c.b16 %v3727, %v3726
    %v3740 = vpack.c.b16 %v3729, %v3728
    %v3741 = vpack.c.b16 %v3731, %v3730
    %v3742 = vpack.c.b16 %v3733, %v3732
    %v3743 = vpack.c.b16 %v3735, %v3734
    %3752 = vmatpush.bf16.msra.mxu0 %v3743
    %3753 = vmatpush.bf16.msra.mxu0 %v3742
    %3754 = vmatpush.bf16.msra.mxu0 %v3741
    %3755 = vmatpush.bf16.msra.mxu0 %v3740
    %3756 = vmatpush.bf16.msra.mxu0 %v3739
    %3757 = vmatpush.bf16.msra.mxu0 %v3738
    %3758 = vmatpush.bf16.msra.mxu0 %v3737
    %3759 = vmatpush.bf16.msra.mxu0 %v3736
    %3760 = vmatmul.bf16.gmra.mxu0 %v3688
    %v3761 = vpop.f32.mrf.mxu0
    %v3762 = vadd.f32 0.0, %v3761
    %v3763 = vpop.f32.mrf.mxu0
    %v3764 = vadd.f32 0.0, %v3763
    %3765 = vmatmul.bf16.gmra.mxu0 %v3689
    %v3766 = vpop.f32.mrf.mxu0
    %v3767 = vadd.f32 0.0, %v3766
    %v3768 = vpop.f32.mrf.mxu0
    %v3769 = vadd.f32 0.0, %v3768
    %3770 = vmatmul.bf16.gmra.mxu0 %v3690
    %v3771 = vpop.f32.mrf.mxu0
    %v3772 = vadd.f32 0.0, %v3771
    %v3773 = vpop.f32.mrf.mxu0
    %v3774 = vadd.f32 0.0, %v3773
    %3775 = vmatmul.bf16.gmra.mxu0 %v3691
    %v3776 = vpop.f32.mrf.mxu0
    %v3777 = vadd.f32 0.0, %v3776
    %v3778 = vpop.f32.mrf.mxu0
    %v3779 = vadd.f32 0.0, %v3778
    %3780 = vmatmul.bf16.gmra.mxu0 %v3692
    %v3781 = vpop.f32.mrf.mxu0
    %v3782 = vadd.f32 0.0, %v3781
    %v3783 = vpop.f32.mrf.mxu0
    %v3784 = vadd.f32 0.0, %v3783
    %3785 = vmatmul.bf16.gmra.mxu0 %v3693
    %v3786 = vpop.f32.mrf.mxu0
    %v3787 = vadd.f32 0.0, %v3786
    %v3788 = vpop.f32.mrf.mxu0
    %v3789 = vadd.f32 0.0, %v3788
    %3790 = vmatmul.bf16.gmra.mxu0 %v3694
    %v3791 = vpop.f32.mrf.mxu0
    %v3792 = vadd.f32 0.0, %v3791
    %v3793 = vpop.f32.mrf.mxu0
    %v3794 = vadd.f32 0.0, %v3793
    %3795 = vmatmul.bf16.gmra.mxu0 %v3695
    %v3796 = vpop.f32.mrf.mxu0
    %v3797 = vadd.f32 0.0, %v3796
    %v3798 = vpop.f32.mrf.mxu0
    %v3799 = vadd.f32 0.0, %v3798
    %3800 = vdwg.mxu0
    %v3801 = vadd.f32 %v3568, %v3762
    %v3802 = vadd.f32 %v3570, %v3764
    %v3803 = vadd.f32 %v3573, %v3767
    %v3804 = vadd.f32 %v3575, %v3769
    %v3805 = vadd.f32 %v3578, %v3772
    %v3806 = vadd.f32 %v3580, %v3774
    %v3807 = vadd.f32 %v3583, %v3777
    %v3808 = vadd.f32 %v3585, %v3779
    %v3809 = vadd.f32 %v3588, %v3782
    %v3810 = vadd.f32 %v3590, %v3784
    %v3811 = vadd.f32 %v3593, %v3787
    %v3812 = vadd.f32 %v3595, %v3789
    %v3813 = vadd.f32 %v3598, %v3792
    %v3814 = vadd.f32 %v3600, %v3794
    %v3815 = vadd.f32 %v3603, %v3797
    %v3816 = vadd.f32 %v3605, %v3799
    %v3817 = vld [vmem:[%s1115] sm:$0xff]
    %v3818 = vld [vmem:[%s1115 + $0x10] sm:$0xff]
    %v3819 = vld [vmem:[%s1115 + $0x20] sm:$0xff]
    %v3820 = vld [vmem:[%s1115 + $0x30] sm:$0xff]
    %v3821 = vld [vmem:[%s1115 + $0x40] sm:$0xff]
    %v3822 = vld [vmem:[%s1115 + $0x50] sm:$0xff]
    %v3823 = vld [vmem:[%s1115 + $0x60] sm:$0xff]
    %v3824 = vld [vmem:[%s1115 + $0x70] sm:$0xff]
    %v3825 = vld [vmem:[%s1115 + $0xa0] sm:$0xff]
    %v3826 = vld [vmem:[%s1115 + $0xb0] sm:$0xff]
    %v3827 = vld [vmem:[%s1115 + $0xc0] sm:$0xff]
    %v3828 = vld [vmem:[%s1115 + $0xd0] sm:$0xff]
    %v3829 = vld [vmem:[%s1115 + $0xe0] sm:$0xff]
    %v3830 = vld [vmem:[%s1115 + $0xf0] sm:$0xff]
    %v3831 = vld [vmem:[%s1115 + $0x100] sm:$0xff]
    %v3832 = vld [vmem:[%s1115 + $0x110] sm:$0xff]
    %v3833 = vpack.c.bf16 %v3817, %v3817
    %v3834 = vpack.c.bf16 %v3818, %v3818
    %v3835 = vpack.c.bf16 %v3819, %v3819
    %v3836 = vpack.c.bf16 %v3820, %v3820
    %v3837 = vpack.c.bf16 %v3821, %v3821
    %v3838 = vpack.c.bf16 %v3822, %v3822
    %v3839 = vpack.c.bf16 %v3823, %v3823
    %v3840 = vpack.c.bf16 %v3824, %v3824
    %v3841 = vpack.c.bf16 %v3825, %v3825
    %v3842 = vpack.c.bf16 %v3826, %v3826
    %v3843 = vpack.c.bf16 %v3827, %v3827
    %v3844 = vpack.c.bf16 %v3828, %v3828
    %v3845 = vpack.c.bf16 %v3829, %v3829
    %v3846 = vpack.c.bf16 %v3830, %v3830
    %v3847 = vpack.c.bf16 %v3831, %v3831
    %v3848 = vpack.c.bf16 %v3832, %v3832
    %s3849 = scalar_lea.vmem %s3, 192
    %v3850 = vld [vmem:[%s3849] sm:$0xf]
    %v3851 = vld [vmem:[%s3849 + $0x4] sm:$0xf]
    %v3852 = vld [vmem:[%s3849 + $0x8] sm:$0xf]
    %v3853 = vld [vmem:[%s3849 + $0xc] sm:$0xf]
    %v3854 = vld [vmem:[%s3849 + $0x10] sm:$0xf]
    %v3855 = vld [vmem:[%s3849 + $0x14] sm:$0xf]
    %v3856 = vld [vmem:[%s3849 + $0x18] sm:$0xf]
    %v3857 = vld [vmem:[%s3849 + $0x1c] sm:$0xf]
    %v3858 = vld [vmem:[%s3849 + $0x20] sm:$0xf]
    %v3859 = vld [vmem:[%s3849 + $0x24] sm:$0xf]
    %v3860 = vld [vmem:[%s3849 + $0x28] sm:$0xf]
    %v3861 = vld [vmem:[%s3849 + $0x2c] sm:$0xf]
    %v3862 = vld [vmem:[%s3849 + $0x30] sm:$0xf]
    %v3863 = vld [vmem:[%s3849 + $0x34] sm:$0xf]
    %v3864 = vld [vmem:[%s3849 + $0x38] sm:$0xf]
    %v3865 = vld [vmem:[%s3849 + $0x3c] sm:$0xf]
    %v3882 = vunpack.c.l.b16 %v3833
    %v3883 = vunpack.c.l.b16 %v3834
    %v3884 = vunpack.c.l.b16 %v3835
    %v3885 = vunpack.c.l.b16 %v3836
    %v3886 = vunpack.c.l.b16 %v3837
    %v3887 = vunpack.c.l.b16 %v3838
    %v3888 = vunpack.c.l.b16 %v3839
    %v3889 = vunpack.c.l.b16 %v3840
    %v3890 = vunpack.c.l.b16 %v3841
    %v3891 = vunpack.c.l.b16 %v3842
    %v3892 = vunpack.c.l.b16 %v3843
    %v3893 = vunpack.c.l.b16 %v3844
    %v3894 = vunpack.c.l.b16 %v3845
    %v3895 = vunpack.c.l.b16 %v3846
    %v3896 = vunpack.c.l.b16 %v3847
    %v3897 = vunpack.c.l.b16 %v3848
    %v3898 = vpack.c.b16 %v3883, %v3882
    %v3899 = vpack.c.b16 %v3885, %v3884
    %v3900 = vpack.c.b16 %v3887, %v3886
    %v3901 = vpack.c.b16 %v3889, %v3888
    %v3902 = vpack.c.b16 %v3891, %v3890
    %v3903 = vpack.c.b16 %v3893, %v3892
    %v3904 = vpack.c.b16 %v3895, %v3894
    %v3905 = vpack.c.b16 %v3897, %v3896
    %v3930 = vunpack.c.l.b16 %v3850
    %v3931 = vunpack.c.l.b16 %v3851
    %v3932 = vunpack.c.l.b16 %v3852
    %v3933 = vunpack.c.l.b16 %v3853
    %v3934 = vunpack.c.l.b16 %v3854
    %v3935 = vunpack.c.l.b16 %v3855
    %v3936 = vunpack.c.l.b16 %v3856
    %v3937 = vunpack.c.l.b16 %v3857
    %v3938 = vunpack.c.l.b16 %v3858
    %v3939 = vunpack.c.l.b16 %v3859
    %v3940 = vunpack.c.l.b16 %v3860
    %v3941 = vunpack.c.l.b16 %v3861
    %v3942 = vunpack.c.l.b16 %v3862
    %v3943 = vunpack.c.l.b16 %v3863
    %v3944 = vunpack.c.l.b16 %v3864
    %v3945 = vunpack.c.l.b16 %v3865
    %v3946 = vpack.c.b16 %v3931, %v3930
    %v3947 = vpack.c.b16 %v3933, %v3932
    %v3948 = vpack.c.b16 %v3935, %v3934
    %v3949 = vpack.c.b16 %v3937, %v3936
    %v3950 = vpack.c.b16 %v3939, %v3938
    %v3951 = vpack.c.b16 %v3941, %v3940
    %v3952 = vpack.c.b16 %v3943, %v3942
    %v3953 = vpack.c.b16 %v3945, %v3944
    %3962 = vmatpush.bf16.msra.mxu0 %v3953
    %3963 = vmatpush.bf16.msra.mxu0 %v3952
    %3964 = vmatpush.bf16.msra.mxu0 %v3951
    %3965 = vmatpush.bf16.msra.mxu0 %v3950
    %3966 = vmatpush.bf16.msra.mxu0 %v3949
    %3967 = vmatpush.bf16.msra.mxu0 %v3948
    %3968 = vmatpush.bf16.msra.mxu0 %v3947
    %3969 = vmatpush.bf16.msra.mxu0 %v3946
    %3970 = vmatmul.bf16.gmra.mxu0 %v3898
    %v3971 = vpop.f32.mrf.mxu0
    %v3972 = vadd.f32 0.0, %v3971
    %v3973 = vpop.f32.mrf.mxu0
    %v3974 = vadd.f32 0.0, %v3973
    %3975 = vmatmul.bf16.gmra.mxu0 %v3899
    %v3976 = vpop.f32.mrf.mxu0
    %v3977 = vadd.f32 0.0, %v3976
    %v3978 = vpop.f32.mrf.mxu0
    %v3979 = vadd.f32 0.0, %v3978
    %3980 = vmatmul.bf16.gmra.mxu0 %v3900
    %v3981 = vpop.f32.mrf.mxu0
    %v3982 = vadd.f32 0.0, %v3981
    %v3983 = vpop.f32.mrf.mxu0
    %v3984 = vadd.f32 0.0, %v3983
    %3985 = vmatmul.bf16.gmra.mxu0 %v3901
    %v3986 = vpop.f32.mrf.mxu0
    %v3987 = vadd.f32 0.0, %v3986
    %v3988 = vpop.f32.mrf.mxu0
    %v3989 = vadd.f32 0.0, %v3988
    %3990 = vmatmul.bf16.gmra.mxu0 %v3902
    %v3991 = vpop.f32.mrf.mxu0
    %v3992 = vadd.f32 0.0, %v3991
    %v3993 = vpop.f32.mrf.mxu0
    %v3994 = vadd.f32 0.0, %v3993
    %3995 = vmatmul.bf16.gmra.mxu0 %v3903
    %v3996 = vpop.f32.mrf.mxu0
    %v3997 = vadd.f32 0.0, %v3996
    %v3998 = vpop.f32.mrf.mxu0
    %v3999 = vadd.f32 0.0, %v3998
    %4000 = vmatmul.bf16.gmra.mxu0 %v3904
    %v4001 = vpop.f32.mrf.mxu0
    %v4002 = vadd.f32 0.0, %v4001
    %v4003 = vpop.f32.mrf.mxu0
    %v4004 = vadd.f32 0.0, %v4003
    %4005 = vmatmul.bf16.gmra.mxu0 %v3905
    %v4006 = vpop.f32.mrf.mxu0
    %v4007 = vadd.f32 0.0, %v4006
    %v4008 = vpop.f32.mrf.mxu0
    %v4009 = vadd.f32 0.0, %v4008
    %4010 = vdwg.mxu0
    %v4011 = vadd.f32 %v3801, %v3972
    %v4012 = vadd.f32 %v3802, %v3974
    %v4013 = vadd.f32 %v3803, %v3977
    %v4014 = vadd.f32 %v3804, %v3979
    %v4015 = vadd.f32 %v3805, %v3982
    %v4016 = vadd.f32 %v3806, %v3984
    %v4017 = vadd.f32 %v3807, %v3987
    %v4018 = vadd.f32 %v3808, %v3989
    %v4019 = vadd.f32 %v3809, %v3992
    %v4020 = vadd.f32 %v3810, %v3994
    %v4021 = vadd.f32 %v3811, %v3997
    %v4022 = vadd.f32 %v3812, %v3999
    %v4023 = vadd.f32 %v3813, %v4002
    %v4024 = vadd.f32 %v3814, %v4004
    %v4025 = vadd.f32 %v3815, %v4007
    %v4026 = vadd.f32 %v3816, %v4009
    %v4027 = vld [vmem:[%s1115 + $0x1] sm:$0xff]
    %v4028 = vld [vmem:[%s1115 + $0x11] sm:$0xff]
    %v4029 = vld [vmem:[%s1115 + $0x21] sm:$0xff]
    %v4030 = vld [vmem:[%s1115 + $0x31] sm:$0xff]
    %v4031 = vld [vmem:[%s1115 + $0x41] sm:$0xff]
    %v4032 = vld [vmem:[%s1115 + $0x51] sm:$0xff]
    %v4033 = vld [vmem:[%s1115 + $0x61] sm:$0xff]
    %v4034 = vld [vmem:[%s1115 + $0x71] sm:$0xff]
    %v4035 = vld [vmem:[%s1115 + $0xa1] sm:$0xff]
    %v4036 = vld [vmem:[%s1115 + $0xb1] sm:$0xff]
    %v4037 = vld [vmem:[%s1115 + $0xc1] sm:$0xff]
    %v4038 = vld [vmem:[%s1115 + $0xd1] sm:$0xff]
    %v4039 = vld [vmem:[%s1115 + $0xe1] sm:$0xff]
    %v4040 = vld [vmem:[%s1115 + $0xf1] sm:$0xff]
    %v4041 = vld [vmem:[%s1115 + $0x101] sm:$0xff]
    %v4042 = vld [vmem:[%s1115 + $0x111] sm:$0xff]
    %v4043 = vpack.c.bf16 %v4027, %v4027
    %v4044 = vpack.c.bf16 %v4028, %v4028
    %v4045 = vpack.c.bf16 %v4029, %v4029
    %v4046 = vpack.c.bf16 %v4030, %v4030
    %v4047 = vpack.c.bf16 %v4031, %v4031
    %v4048 = vpack.c.bf16 %v4032, %v4032
    %v4049 = vpack.c.bf16 %v4033, %v4033
    %v4050 = vpack.c.bf16 %v4034, %v4034
    %v4051 = vpack.c.bf16 %v4035, %v4035
    %v4052 = vpack.c.bf16 %v4036, %v4036
    %v4053 = vpack.c.bf16 %v4037, %v4037
    %v4054 = vpack.c.bf16 %v4038, %v4038
    %v4055 = vpack.c.bf16 %v4039, %v4039
    %v4056 = vpack.c.bf16 %v4040, %v4040
    %v4057 = vpack.c.bf16 %v4041, %v4041
    %v4058 = vpack.c.bf16 %v4042, %v4042
    %s4059 = scalar_lea.vmem %s3, 256
    %v4060 = vld [vmem:[%s4059] sm:$0xf]
    %v4061 = vld [vmem:[%s4059 + $0x4] sm:$0xf]
    %v4062 = vld [vmem:[%s4059 + $0x8] sm:$0xf]
    %v4063 = vld [vmem:[%s4059 + $0xc] sm:$0xf]
    %v4064 = vld [vmem:[%s4059 + $0x10] sm:$0xf]
    %v4065 = vld [vmem:[%s4059 + $0x14] sm:$0xf]
    %v4066 = vld [vmem:[%s4059 + $0x18] sm:$0xf]
    %v4067 = vld [vmem:[%s4059 + $0x1c] sm:$0xf]
    %v4068 = vld [vmem:[%s4059 + $0x20] sm:$0xf]
    %v4069 = vld [vmem:[%s4059 + $0x24] sm:$0xf]
    %v4070 = vld [vmem:[%s4059 + $0x28] sm:$0xf]
    %v4071 = vld [vmem:[%s4059 + $0x2c] sm:$0xf]
    %v4072 = vld [vmem:[%s4059 + $0x30] sm:$0xf]
    %v4073 = vld [vmem:[%s4059 + $0x34] sm:$0xf]
    %v4074 = vld [vmem:[%s4059 + $0x38] sm:$0xf]
    %v4075 = vld [vmem:[%s4059 + $0x3c] sm:$0xf]
    %v4092 = vunpack.c.l.b16 %v4043
    %v4093 = vunpack.c.l.b16 %v4044
    %v4094 = vunpack.c.l.b16 %v4045
    %v4095 = vunpack.c.l.b16 %v4046
    %v4096 = vunpack.c.l.b16 %v4047
    %v4097 = vunpack.c.l.b16 %v4048
    %v4098 = vunpack.c.l.b16 %v4049
    %v4099 = vunpack.c.l.b16 %v4050
    %v4100 = vunpack.c.l.b16 %v4051
    %v4101 = vunpack.c.l.b16 %v4052
    %v4102 = vunpack.c.l.b16 %v4053
    %v4103 = vunpack.c.l.b16 %v4054
    %v4104 = vunpack.c.l.b16 %v4055
    %v4105 = vunpack.c.l.b16 %v4056
    %v4106 = vunpack.c.l.b16 %v4057
    %v4107 = vunpack.c.l.b16 %v4058
    %v4108 = vpack.c.b16 %v4093, %v4092
    %v4109 = vpack.c.b16 %v4095, %v4094
    %v4110 = vpack.c.b16 %v4097, %v4096
    %v4111 = vpack.c.b16 %v4099, %v4098
    %v4112 = vpack.c.b16 %v4101, %v4100
    %v4113 = vpack.c.b16 %v4103, %v4102
    %v4114 = vpack.c.b16 %v4105, %v4104
    %v4115 = vpack.c.b16 %v4107, %v4106
    %v4140 = vunpack.c.l.b16 %v4060
    %v4141 = vunpack.c.l.b16 %v4061
    %v4142 = vunpack.c.l.b16 %v4062
    %v4143 = vunpack.c.l.b16 %v4063
    %v4144 = vunpack.c.l.b16 %v4064
    %v4145 = vunpack.c.l.b16 %v4065
    %v4146 = vunpack.c.l.b16 %v4066
    %v4147 = vunpack.c.l.b16 %v4067
    %v4148 = vunpack.c.l.b16 %v4068
    %v4149 = vunpack.c.l.b16 %v4069
    %v4150 = vunpack.c.l.b16 %v4070
    %v4151 = vunpack.c.l.b16 %v4071
    %v4152 = vunpack.c.l.b16 %v4072
    %v4153 = vunpack.c.l.b16 %v4073
    %v4154 = vunpack.c.l.b16 %v4074
    %v4155 = vunpack.c.l.b16 %v4075
    %v4156 = vpack.c.b16 %v4141, %v4140
    %v4157 = vpack.c.b16 %v4143, %v4142
    %v4158 = vpack.c.b16 %v4145, %v4144
    %v4159 = vpack.c.b16 %v4147, %v4146
    %v4160 = vpack.c.b16 %v4149, %v4148
    %v4161 = vpack.c.b16 %v4151, %v4150
    %v4162 = vpack.c.b16 %v4153, %v4152
    %v4163 = vpack.c.b16 %v4155, %v4154
    %4172 = vmatpush.bf16.msra.mxu0 %v4163
    %4173 = vmatpush.bf16.msra.mxu0 %v4162
    %4174 = vmatpush.bf16.msra.mxu0 %v4161
    %4175 = vmatpush.bf16.msra.mxu0 %v4160
    %4176 = vmatpush.bf16.msra.mxu0 %v4159
    %4177 = vmatpush.bf16.msra.mxu0 %v4158
    %4178 = vmatpush.bf16.msra.mxu0 %v4157
    %4179 = vmatpush.bf16.msra.mxu0 %v4156
    %4180 = vmatmul.bf16.gmra.mxu0 %v4108
    %v4181 = vpop.f32.mrf.mxu0
    %v4182 = vadd.f32 0.0, %v4181
    %v4183 = vpop.f32.mrf.mxu0
    %v4184 = vadd.f32 0.0, %v4183
    %4185 = vmatmul.bf16.gmra.mxu0 %v4109
    %v4186 = vpop.f32.mrf.mxu0
    %v4187 = vadd.f32 0.0, %v4186
    %v4188 = vpop.f32.mrf.mxu0
    %v4189 = vadd.f32 0.0, %v4188
    %4190 = vmatmul.bf16.gmra.mxu0 %v4110
    %v4191 = vpop.f32.mrf.mxu0
    %v4192 = vadd.f32 0.0, %v4191
    %v4193 = vpop.f32.mrf.mxu0
    %v4194 = vadd.f32 0.0, %v4193
    %4195 = vmatmul.bf16.gmra.mxu0 %v4111
    %v4196 = vpop.f32.mrf.mxu0
    %v4197 = vadd.f32 0.0, %v4196
    %v4198 = vpop.f32.mrf.mxu0
    %v4199 = vadd.f32 0.0, %v4198
    %4200 = vmatmul.bf16.gmra.mxu0 %v4112
    %v4201 = vpop.f32.mrf.mxu0
    %v4202 = vadd.f32 0.0, %v4201
    %v4203 = vpop.f32.mrf.mxu0
    %v4204 = vadd.f32 0.0, %v4203
    %4205 = vmatmul.bf16.gmra.mxu0 %v4113
    %v4206 = vpop.f32.mrf.mxu0
    %v4207 = vadd.f32 0.0, %v4206
    %v4208 = vpop.f32.mrf.mxu0
    %v4209 = vadd.f32 0.0, %v4208
    %4210 = vmatmul.bf16.gmra.mxu0 %v4114
    %v4211 = vpop.f32.mrf.mxu0
    %v4212 = vadd.f32 0.0, %v4211
    %v4213 = vpop.f32.mrf.mxu0
    %v4214 = vadd.f32 0.0, %v4213
    %4215 = vmatmul.bf16.gmra.mxu0 %v4115
    %v4216 = vpop.f32.mrf.mxu0
    %v4217 = vadd.f32 0.0, %v4216
    %v4218 = vpop.f32.mrf.mxu0
    %v4219 = vadd.f32 0.0, %v4218
    %4220 = vdwg.mxu0
    %v4221 = vadd.f32 %v4011, %v4182
    %v4222 = vadd.f32 %v4012, %v4184
    %v4223 = vadd.f32 %v4013, %v4187
    %v4224 = vadd.f32 %v4014, %v4189
    %v4225 = vadd.f32 %v4015, %v4192
    %v4226 = vadd.f32 %v4016, %v4194
    %v4227 = vadd.f32 %v4017, %v4197
    %v4228 = vadd.f32 %v4018, %v4199
    %v4229 = vadd.f32 %v4019, %v4202
    %v4230 = vadd.f32 %v4020, %v4204
    %v4231 = vadd.f32 %v4021, %v4207
    %v4232 = vadd.f32 %v4022, %v4209
    %v4233 = vadd.f32 %v4023, %v4212
    %v4234 = vadd.f32 %v4024, %v4214
    %v4235 = vadd.f32 %v4025, %v4217
    %v4236 = vadd.f32 %v4026, %v4219
    %v4237 = vld [vmem:[%s1115 + $0x2] sm:$0xff]
    %v4238 = vld [vmem:[%s1115 + $0x12] sm:$0xff]
    %v4239 = vld [vmem:[%s1115 + $0x22] sm:$0xff]
    %v4240 = vld [vmem:[%s1115 + $0x32] sm:$0xff]
    %v4241 = vld [vmem:[%s1115 + $0x42] sm:$0xff]
    %v4242 = vld [vmem:[%s1115 + $0x52] sm:$0xff]
    %v4243 = vld [vmem:[%s1115 + $0x62] sm:$0xff]
    %v4244 = vld [vmem:[%s1115 + $0x72] sm:$0xff]
    %v4245 = vld [vmem:[%s1115 + $0xa2] sm:$0xff]
    %v4246 = vld [vmem:[%s1115 + $0xb2] sm:$0xff]
    %v4247 = vld [vmem:[%s1115 + $0xc2] sm:$0xff]
    %v4248 = vld [vmem:[%s1115 + $0xd2] sm:$0xff]
    %v4249 = vld [vmem:[%s1115 + $0xe2] sm:$0xff]
    %v4250 = vld [vmem:[%s1115 + $0xf2] sm:$0xff]
    %v4251 = vld [vmem:[%s1115 + $0x102] sm:$0xff]
    %v4252 = vld [vmem:[%s1115 + $0x112] sm:$0xff]
    %v4253 = vpack.c.bf16 %v4237, %v4237
    %v4254 = vpack.c.bf16 %v4238, %v4238
    %v4255 = vpack.c.bf16 %v4239, %v4239
    %v4256 = vpack.c.bf16 %v4240, %v4240
    %v4257 = vpack.c.bf16 %v4241, %v4241
    %v4258 = vpack.c.bf16 %v4242, %v4242
    %v4259 = vpack.c.bf16 %v4243, %v4243
    %v4260 = vpack.c.bf16 %v4244, %v4244
    %v4261 = vpack.c.bf16 %v4245, %v4245
    %v4262 = vpack.c.bf16 %v4246, %v4246
    %v4263 = vpack.c.bf16 %v4247, %v4247
    %v4264 = vpack.c.bf16 %v4248, %v4248
    %v4265 = vpack.c.bf16 %v4249, %v4249
    %v4266 = vpack.c.bf16 %v4250, %v4250
    %v4267 = vpack.c.bf16 %v4251, %v4251
    %v4268 = vpack.c.bf16 %v4252, %v4252
    %s4269 = scalar_lea.vmem %s3, 320
    %v4270 = vld [vmem:[%s4269] sm:$0xf]
    %v4271 = vld [vmem:[%s4269 + $0x4] sm:$0xf]
    %v4272 = vld [vmem:[%s4269 + $0x8] sm:$0xf]
    %v4273 = vld [vmem:[%s4269 + $0xc] sm:$0xf]
    %v4274 = vld [vmem:[%s4269 + $0x10] sm:$0xf]
    %v4275 = vld [vmem:[%s4269 + $0x14] sm:$0xf]
    %v4276 = vld [vmem:[%s4269 + $0x18] sm:$0xf]
    %v4277 = vld [vmem:[%s4269 + $0x1c] sm:$0xf]
    %v4278 = vld [vmem:[%s4269 + $0x20] sm:$0xf]
    %v4279 = vld [vmem:[%s4269 + $0x24] sm:$0xf]
    %v4280 = vld [vmem:[%s4269 + $0x28] sm:$0xf]
    %v4281 = vld [vmem:[%s4269 + $0x2c] sm:$0xf]
    %v4282 = vld [vmem:[%s4269 + $0x30] sm:$0xf]
    %v4283 = vld [vmem:[%s4269 + $0x34] sm:$0xf]
    %v4284 = vld [vmem:[%s4269 + $0x38] sm:$0xf]
    %v4285 = vld [vmem:[%s4269 + $0x3c] sm:$0xf]
    %v4302 = vunpack.c.l.b16 %v4253
    %v4303 = vunpack.c.l.b16 %v4254
    %v4304 = vunpack.c.l.b16 %v4255
    %v4305 = vunpack.c.l.b16 %v4256
    %v4306 = vunpack.c.l.b16 %v4257
    %v4307 = vunpack.c.l.b16 %v4258
    %v4308 = vunpack.c.l.b16 %v4259
    %v4309 = vunpack.c.l.b16 %v4260
    %v4310 = vunpack.c.l.b16 %v4261
    %v4311 = vunpack.c.l.b16 %v4262
    %v4312 = vunpack.c.l.b16 %v4263
    %v4313 = vunpack.c.l.b16 %v4264
    %v4314 = vunpack.c.l.b16 %v4265
    %v4315 = vunpack.c.l.b16 %v4266
    %v4316 = vunpack.c.l.b16 %v4267
    %v4317 = vunpack.c.l.b16 %v4268
    %v4318 = vpack.c.b16 %v4303, %v4302
    %v4319 = vpack.c.b16 %v4305, %v4304
    %v4320 = vpack.c.b16 %v4307, %v4306
    %v4321 = vpack.c.b16 %v4309, %v4308
    %v4322 = vpack.c.b16 %v4311, %v4310
    %v4323 = vpack.c.b16 %v4313, %v4312
    %v4324 = vpack.c.b16 %v4315, %v4314
    %v4325 = vpack.c.b16 %v4317, %v4316
    %v4350 = vunpack.c.l.b16 %v4270
    %v4351 = vunpack.c.l.b16 %v4271
    %v4352 = vunpack.c.l.b16 %v4272
    %v4353 = vunpack.c.l.b16 %v4273
    %v4354 = vunpack.c.l.b16 %v4274
    %v4355 = vunpack.c.l.b16 %v4275
    %v4356 = vunpack.c.l.b16 %v4276
    %v4357 = vunpack.c.l.b16 %v4277
    %v4358 = vunpack.c.l.b16 %v4278
    %v4359 = vunpack.c.l.b16 %v4279
    %v4360 = vunpack.c.l.b16 %v4280
    %v4361 = vunpack.c.l.b16 %v4281
    %v4362 = vunpack.c.l.b16 %v4282
    %v4363 = vunpack.c.l.b16 %v4283
    %v4364 = vunpack.c.l.b16 %v4284
    %v4365 = vunpack.c.l.b16 %v4285
    %v4366 = vpack.c.b16 %v4351, %v4350
    %v4367 = vpack.c.b16 %v4353, %v4352
    %v4368 = vpack.c.b16 %v4355, %v4354
    %v4369 = vpack.c.b16 %v4357, %v4356
    %v4370 = vpack.c.b16 %v4359, %v4358
    %v4371 = vpack.c.b16 %v4361, %v4360
    %v4372 = vpack.c.b16 %v4363, %v4362
    %v4373 = vpack.c.b16 %v4365, %v4364
    %4382 = vmatpush.bf16.msra.mxu0 %v4373
    %4383 = vmatpush.bf16.msra.mxu0 %v4372
    %4384 = vmatpush.bf16.msra.mxu0 %v4371
    %4385 = vmatpush.bf16.msra.mxu0 %v4370
    %4386 = vmatpush.bf16.msra.mxu0 %v4369
    %4387 = vmatpush.bf16.msra.mxu0 %v4368
    %4388 = vmatpush.bf16.msra.mxu0 %v4367
    %4389 = vmatpush.bf16.msra.mxu0 %v4366
    %4390 = vmatmul.bf16.gmra.mxu0 %v4318
    %v4391 = vpop.f32.mrf.mxu0
    %v4392 = vadd.f32 0.0, %v4391
    %v4393 = vpop.f32.mrf.mxu0
    %v4394 = vadd.f32 0.0, %v4393
    %4395 = vmatmul.bf16.gmra.mxu0 %v4319
    %v4396 = vpop.f32.mrf.mxu0
    %v4397 = vadd.f32 0.0, %v4396
    %v4398 = vpop.f32.mrf.mxu0
    %v4399 = vadd.f32 0.0, %v4398
    %4400 = vmatmul.bf16.gmra.mxu0 %v4320
    %v4401 = vpop.f32.mrf.mxu0
    %v4402 = vadd.f32 0.0, %v4401
    %v4403 = vpop.f32.mrf.mxu0
    %v4404 = vadd.f32 0.0, %v4403
    %4405 = vmatmul.bf16.gmra.mxu0 %v4321
    %v4406 = vpop.f32.mrf.mxu0
    %v4407 = vadd.f32 0.0, %v4406
    %v4408 = vpop.f32.mrf.mxu0
    %v4409 = vadd.f32 0.0, %v4408
    %4410 = vmatmul.bf16.gmra.mxu0 %v4322
    %v4411 = vpop.f32.mrf.mxu0
    %v4412 = vadd.f32 0.0, %v4411
    %v4413 = vpop.f32.mrf.mxu0
    %v4414 = vadd.f32 0.0, %v4413
    %4415 = vmatmul.bf16.gmra.mxu0 %v4323
    %v4416 = vpop.f32.mrf.mxu0
    %v4417 = vadd.f32 0.0, %v4416
    %v4418 = vpop.f32.mrf.mxu0
    %v4419 = vadd.f32 0.0, %v4418
    %4420 = vmatmul.bf16.gmra.mxu0 %v4324
    %v4421 = vpop.f32.mrf.mxu0
    %v4422 = vadd.f32 0.0, %v4421
    %v4423 = vpop.f32.mrf.mxu0
    %v4424 = vadd.f32 0.0, %v4423
    %4425 = vmatmul.bf16.gmra.mxu0 %v4325
    %v4426 = vpop.f32.mrf.mxu0
    %v4427 = vadd.f32 0.0, %v4426
    %v4428 = vpop.f32.mrf.mxu0
    %v4429 = vadd.f32 0.0, %v4428
    %4430 = vdwg.mxu0
    %v4431 = vadd.f32 %v4221, %v4392
    %v4432 = vadd.f32 %v4222, %v4394
    %v4433 = vadd.f32 %v4223, %v4397
    %v4434 = vadd.f32 %v4224, %v4399
    %v4435 = vadd.f32 %v4225, %v4402
    %v4436 = vadd.f32 %v4226, %v4404
    %v4437 = vadd.f32 %v4227, %v4407
    %v4438 = vadd.f32 %v4228, %v4409
    %v4439 = vadd.f32 %v4229, %v4412
    %v4440 = vadd.f32 %v4230, %v4414
    %v4441 = vadd.f32 %v4231, %v4417
    %v4442 = vadd.f32 %v4232, %v4419
    %v4443 = vadd.f32 %v4233, %v4422
    %v4444 = vadd.f32 %v4234, %v4424
    %v4445 = vadd.f32 %v4235, %v4427
    %v4446 = vadd.f32 %v4236, %v4429
    %v4447 = vld [vmem:[%s2359] sm:$0xff]
    %v4448 = vld [vmem:[%s2359 + $0x10] sm:$0xff]
    %v4449 = vld [vmem:[%s2359 + $0x20] sm:$0xff]
    %v4450 = vld [vmem:[%s2359 + $0x30] sm:$0xff]
    %v4451 = vld [vmem:[%s2359 + $0x40] sm:$0xff]
    %v4452 = vld [vmem:[%s2359 + $0x50] sm:$0xff]
    %v4453 = vld [vmem:[%s2359 + $0x60] sm:$0xff]
    %v4454 = vld [vmem:[%s2359 + $0x70] sm:$0xff]
    %v4455 = vld [vmem:[%s2359 + $0xa0] sm:$0xff]
    %v4456 = vld [vmem:[%s2359 + $0xb0] sm:$0xff]
    %v4457 = vld [vmem:[%s2359 + $0xc0] sm:$0xff]
    %v4458 = vld [vmem:[%s2359 + $0xd0] sm:$0xff]
    %v4459 = vld [vmem:[%s2359 + $0xe0] sm:$0xff]
    %v4460 = vld [vmem:[%s2359 + $0xf0] sm:$0xff]
    %v4461 = vld [vmem:[%s2359 + $0x100] sm:$0xff]
    %v4462 = vld [vmem:[%s2359 + $0x110] sm:$0xff]
    %v4463 = vpack.c.bf16 %v4447, %v4447
    %v4464 = vpack.c.bf16 %v4448, %v4448
    %v4465 = vpack.c.bf16 %v4449, %v4449
    %v4466 = vpack.c.bf16 %v4450, %v4450
    %v4467 = vpack.c.bf16 %v4451, %v4451
    %v4468 = vpack.c.bf16 %v4452, %v4452
    %v4469 = vpack.c.bf16 %v4453, %v4453
    %v4470 = vpack.c.bf16 %v4454, %v4454
    %v4471 = vpack.c.bf16 %v4455, %v4455
    %v4472 = vpack.c.bf16 %v4456, %v4456
    %v4473 = vpack.c.bf16 %v4457, %v4457
    %v4474 = vpack.c.bf16 %v4458, %v4458
    %v4475 = vpack.c.bf16 %v4459, %v4459
    %v4476 = vpack.c.bf16 %v4460, %v4460
    %v4477 = vpack.c.bf16 %v4461, %v4461
    %v4478 = vpack.c.bf16 %v4462, %v4462
    %s4479 = scalar_lea.vmem %s3, 384
    %v4480 = vld [vmem:[%s4479] sm:$0xf]
    %v4481 = vld [vmem:[%s4479 + $0x4] sm:$0xf]
    %v4482 = vld [vmem:[%s4479 + $0x8] sm:$0xf]
    %v4483 = vld [vmem:[%s4479 + $0xc] sm:$0xf]
    %v4484 = vld [vmem:[%s4479 + $0x10] sm:$0xf]
    %v4485 = vld [vmem:[%s4479 + $0x14] sm:$0xf]
    %v4486 = vld [vmem:[%s4479 + $0x18] sm:$0xf]
    %v4487 = vld [vmem:[%s4479 + $0x1c] sm:$0xf]
    %v4488 = vld [vmem:[%s4479 + $0x20] sm:$0xf]
    %v4489 = vld [vmem:[%s4479 + $0x24] sm:$0xf]
    %v4490 = vld [vmem:[%s4479 + $0x28] sm:$0xf]
    %v4491 = vld [vmem:[%s4479 + $0x2c] sm:$0xf]
    %v4492 = vld [vmem:[%s4479 + $0x30] sm:$0xf]
    %v4493 = vld [vmem:[%s4479 + $0x34] sm:$0xf]
    %v4494 = vld [vmem:[%s4479 + $0x38] sm:$0xf]
    %v4495 = vld [vmem:[%s4479 + $0x3c] sm:$0xf]
    %v4512 = vunpack.c.l.b16 %v4463
    %v4513 = vunpack.c.l.b16 %v4464
    %v4514 = vunpack.c.l.b16 %v4465
    %v4515 = vunpack.c.l.b16 %v4466
    %v4516 = vunpack.c.l.b16 %v4467
    %v4517 = vunpack.c.l.b16 %v4468
    %v4518 = vunpack.c.l.b16 %v4469
    %v4519 = vunpack.c.l.b16 %v4470
    %v4520 = vunpack.c.l.b16 %v4471
    %v4521 = vunpack.c.l.b16 %v4472
    %v4522 = vunpack.c.l.b16 %v4473
    %v4523 = vunpack.c.l.b16 %v4474
    %v4524 = vunpack.c.l.b16 %v4475
    %v4525 = vunpack.c.l.b16 %v4476
    %v4526 = vunpack.c.l.b16 %v4477
    %v4527 = vunpack.c.l.b16 %v4478
    %v4528 = vpack.c.b16 %v4513, %v4512
    %v4529 = vpack.c.b16 %v4515, %v4514
    %v4530 = vpack.c.b16 %v4517, %v4516
    %v4531 = vpack.c.b16 %v4519, %v4518
    %v4532 = vpack.c.b16 %v4521, %v4520
    %v4533 = vpack.c.b16 %v4523, %v4522
    %v4534 = vpack.c.b16 %v4525, %v4524
    %v4535 = vpack.c.b16 %v4527, %v4526
    %v4560 = vunpack.c.l.b16 %v4480
    %v4561 = vunpack.c.l.b16 %v4481
    %v4562 = vunpack.c.l.b16 %v4482
    %v4563 = vunpack.c.l.b16 %v4483
    %v4564 = vunpack.c.l.b16 %v4484
    %v4565 = vunpack.c.l.b16 %v4485
    %v4566 = vunpack.c.l.b16 %v4486
    %v4567 = vunpack.c.l.b16 %v4487
    %v4568 = vunpack.c.l.b16 %v4488
    %v4569 = vunpack.c.l.b16 %v4489
    %v4570 = vunpack.c.l.b16 %v4490
    %v4571 = vunpack.c.l.b16 %v4491
    %v4572 = vunpack.c.l.b16 %v4492
    %v4573 = vunpack.c.l.b16 %v4493
    %v4574 = vunpack.c.l.b16 %v4494
    %v4575 = vunpack.c.l.b16 %v4495
    %v4576 = vpack.c.b16 %v4561, %v4560
    %v4577 = vpack.c.b16 %v4563, %v4562
    %v4578 = vpack.c.b16 %v4565, %v4564
    %v4579 = vpack.c.b16 %v4567, %v4566
    %v4580 = vpack.c.b16 %v4569, %v4568
    %v4581 = vpack.c.b16 %v4571, %v4570
    %v4582 = vpack.c.b16 %v4573, %v4572
    %v4583 = vpack.c.b16 %v4575, %v4574
    %4592 = vmatpush.bf16.msra.mxu0 %v4583
    %4593 = vmatpush.bf16.msra.mxu0 %v4582
    %4594 = vmatpush.bf16.msra.mxu0 %v4581
    %4595 = vmatpush.bf16.msra.mxu0 %v4580
    %4596 = vmatpush.bf16.msra.mxu0 %v4579
    %4597 = vmatpush.bf16.msra.mxu0 %v4578
    %4598 = vmatpush.bf16.msra.mxu0 %v4577
    %4599 = vmatpush.bf16.msra.mxu0 %v4576
    %4600 = vmatmul.bf16.gmra.mxu0 %v4528
    %v4601 = vpop.f32.mrf.mxu0
    %v4602 = vadd.f32 0.0, %v4601
    %v4603 = vpop.f32.mrf.mxu0
    %v4604 = vadd.f32 0.0, %v4603
    %4605 = vmatmul.bf16.gmra.mxu0 %v4529
    %v4606 = vpop.f32.mrf.mxu0
    %v4607 = vadd.f32 0.0, %v4606
    %v4608 = vpop.f32.mrf.mxu0
    %v4609 = vadd.f32 0.0, %v4608
    %4610 = vmatmul.bf16.gmra.mxu0 %v4530
    %v4611 = vpop.f32.mrf.mxu0
    %v4612 = vadd.f32 0.0, %v4611
    %v4613 = vpop.f32.mrf.mxu0
    %v4614 = vadd.f32 0.0, %v4613
    %4615 = vmatmul.bf16.gmra.mxu0 %v4531
    %v4616 = vpop.f32.mrf.mxu0
    %v4617 = vadd.f32 0.0, %v4616
    %v4618 = vpop.f32.mrf.mxu0
    %v4619 = vadd.f32 0.0, %v4618
    %4620 = vmatmul.bf16.gmra.mxu0 %v4532
    %v4621 = vpop.f32.mrf.mxu0
    %v4622 = vadd.f32 0.0, %v4621
    %v4623 = vpop.f32.mrf.mxu0
    %v4624 = vadd.f32 0.0, %v4623
    %4625 = vmatmul.bf16.gmra.mxu0 %v4533
    %v4626 = vpop.f32.mrf.mxu0
    %v4627 = vadd.f32 0.0, %v4626
    %v4628 = vpop.f32.mrf.mxu0
    %v4629 = vadd.f32 0.0, %v4628
    %4630 = vmatmul.bf16.gmra.mxu0 %v4534
    %v4631 = vpop.f32.mrf.mxu0
    %v4632 = vadd.f32 0.0, %v4631
    %v4633 = vpop.f32.mrf.mxu0
    %v4634 = vadd.f32 0.0, %v4633
    %4635 = vmatmul.bf16.gmra.mxu0 %v4535
    %v4636 = vpop.f32.mrf.mxu0
    %v4637 = vadd.f32 0.0, %v4636
    %v4638 = vpop.f32.mrf.mxu0
    %v4639 = vadd.f32 0.0, %v4638
    %4640 = vdwg.mxu0
    %v4641 = vadd.f32 %v4431, %v4602
    %v4642 = vadd.f32 %v4432, %v4604
    %v4643 = vadd.f32 %v4433, %v4607
    %v4644 = vadd.f32 %v4434, %v4609
    %v4645 = vadd.f32 %v4435, %v4612
    %v4646 = vadd.f32 %v4436, %v4614
    %v4647 = vadd.f32 %v4437, %v4617
    %v4648 = vadd.f32 %v4438, %v4619
    %v4649 = vadd.f32 %v4439, %v4622
    %v4650 = vadd.f32 %v4440, %v4624
    %v4651 = vadd.f32 %v4441, %v4627
    %v4652 = vadd.f32 %v4442, %v4629
    %v4653 = vadd.f32 %v4443, %v4632
    %v4654 = vadd.f32 %v4444, %v4634
    %v4655 = vadd.f32 %v4445, %v4637
    %v4656 = vadd.f32 %v4446, %v4639
    %v4657 = vld [vmem:[%s2359 + $0x1] sm:$0xff]
    %v4658 = vld [vmem:[%s2359 + $0x11] sm:$0xff]
    %v4659 = vld [vmem:[%s2359 + $0x21] sm:$0xff]
    %v4660 = vld [vmem:[%s2359 + $0x31] sm:$0xff]
    %v4661 = vld [vmem:[%s2359 + $0x41] sm:$0xff]
    %v4662 = vld [vmem:[%s2359 + $0x51] sm:$0xff]
    %v4663 = vld [vmem:[%s2359 + $0x61] sm:$0xff]
    %v4664 = vld [vmem:[%s2359 + $0x71] sm:$0xff]
    %v4665 = vld [vmem:[%s2359 + $0xa1] sm:$0xff]
    %v4666 = vld [vmem:[%s2359 + $0xb1] sm:$0xff]
    %v4667 = vld [vmem:[%s2359 + $0xc1] sm:$0xff]
    %v4668 = vld [vmem:[%s2359 + $0xd1] sm:$0xff]
    %v4669 = vld [vmem:[%s2359 + $0xe1] sm:$0xff]
    %v4670 = vld [vmem:[%s2359 + $0xf1] sm:$0xff]
    %v4671 = vld [vmem:[%s2359 + $0x101] sm:$0xff]
    %v4672 = vld [vmem:[%s2359 + $0x111] sm:$0xff]
    %v4673 = vpack.c.bf16 %v4657, %v4657
    %v4674 = vpack.c.bf16 %v4658, %v4658
    %v4675 = vpack.c.bf16 %v4659, %v4659
    %v4676 = vpack.c.bf16 %v4660, %v4660
    %v4677 = vpack.c.bf16 %v4661, %v4661
    %v4678 = vpack.c.bf16 %v4662, %v4662
    %v4679 = vpack.c.bf16 %v4663, %v4663
    %v4680 = vpack.c.bf16 %v4664, %v4664
    %v4681 = vpack.c.bf16 %v4665, %v4665
    %v4682 = vpack.c.bf16 %v4666, %v4666
    %v4683 = vpack.c.bf16 %v4667, %v4667
    %v4684 = vpack.c.bf16 %v4668, %v4668
    %v4685 = vpack.c.bf16 %v4669, %v4669
    %v4686 = vpack.c.bf16 %v4670, %v4670
    %v4687 = vpack.c.bf16 %v4671, %v4671
    %v4688 = vpack.c.bf16 %v4672, %v4672
    %s4689 = scalar_lea.vmem %s3, 448
    %v4690 = vld [vmem:[%s4689] sm:$0xf]
    %v4691 = vld [vmem:[%s4689 + $0x4] sm:$0xf]
    %v4692 = vld [vmem:[%s4689 + $0x8] sm:$0xf]
    %v4693 = vld [vmem:[%s4689 + $0xc] sm:$0xf]
    %v4694 = vld [vmem:[%s4689 + $0x10] sm:$0xf]
    %v4695 = vld [vmem:[%s4689 + $0x14] sm:$0xf]
    %v4696 = vld [vmem:[%s4689 + $0x18] sm:$0xf]
    %v4697 = vld [vmem:[%s4689 + $0x1c] sm:$0xf]
    %v4698 = vld [vmem:[%s4689 + $0x20] sm:$0xf]
    %v4699 = vld [vmem:[%s4689 + $0x24] sm:$0xf]
    %v4700 = vld [vmem:[%s4689 + $0x28] sm:$0xf]
    %v4701 = vld [vmem:[%s4689 + $0x2c] sm:$0xf]
    %v4702 = vld [vmem:[%s4689 + $0x30] sm:$0xf]
    %v4703 = vld [vmem:[%s4689 + $0x34] sm:$0xf]
    %v4704 = vld [vmem:[%s4689 + $0x38] sm:$0xf]
    %v4705 = vld [vmem:[%s4689 + $0x3c] sm:$0xf]
    %v4722 = vunpack.c.l.b16 %v4673
    %v4723 = vunpack.c.l.b16 %v4674
    %v4724 = vunpack.c.l.b16 %v4675
    %v4725 = vunpack.c.l.b16 %v4676
    %v4726 = vunpack.c.l.b16 %v4677
    %v4727 = vunpack.c.l.b16 %v4678
    %v4728 = vunpack.c.l.b16 %v4679
    %v4729 = vunpack.c.l.b16 %v4680
    %v4730 = vunpack.c.l.b16 %v4681
    %v4731 = vunpack.c.l.b16 %v4682
    %v4732 = vunpack.c.l.b16 %v4683
    %v4733 = vunpack.c.l.b16 %v4684
    %v4734 = vunpack.c.l.b16 %v4685
    %v4735 = vunpack.c.l.b16 %v4686
    %v4736 = vunpack.c.l.b16 %v4687
    %v4737 = vunpack.c.l.b16 %v4688
    %v4738 = vpack.c.b16 %v4723, %v4722
    %v4739 = vpack.c.b16 %v4725, %v4724
    %v4740 = vpack.c.b16 %v4727, %v4726
    %v4741 = vpack.c.b16 %v4729, %v4728
    %v4742 = vpack.c.b16 %v4731, %v4730
    %v4743 = vpack.c.b16 %v4733, %v4732
    %v4744 = vpack.c.b16 %v4735, %v4734
    %v4745 = vpack.c.b16 %v4737, %v4736
    %v4770 = vunpack.c.l.b16 %v4690
    %v4771 = vunpack.c.l.b16 %v4691
    %v4772 = vunpack.c.l.b16 %v4692
    %v4773 = vunpack.c.l.b16 %v4693
    %v4774 = vunpack.c.l.b16 %v4694
    %v4775 = vunpack.c.l.b16 %v4695
    %v4776 = vunpack.c.l.b16 %v4696
    %v4777 = vunpack.c.l.b16 %v4697
    %v4778 = vunpack.c.l.b16 %v4698
    %v4779 = vunpack.c.l.b16 %v4699
    %v4780 = vunpack.c.l.b16 %v4700
    %v4781 = vunpack.c.l.b16 %v4701
    %v4782 = vunpack.c.l.b16 %v4702
    %v4783 = vunpack.c.l.b16 %v4703
    %v4784 = vunpack.c.l.b16 %v4704
    %v4785 = vunpack.c.l.b16 %v4705
    %v4786 = vpack.c.b16 %v4771, %v4770
    %v4787 = vpack.c.b16 %v4773, %v4772
    %v4788 = vpack.c.b16 %v4775, %v4774
    %v4789 = vpack.c.b16 %v4777, %v4776
    %v4790 = vpack.c.b16 %v4779, %v4778
    %v4791 = vpack.c.b16 %v4781, %v4780
    %v4792 = vpack.c.b16 %v4783, %v4782
    %v4793 = vpack.c.b16 %v4785, %v4784
    %4802 = vmatpush.bf16.msra.mxu0 %v4793
    %4803 = vmatpush.bf16.msra.mxu0 %v4792
    %4804 = vmatpush.bf16.msra.mxu0 %v4791
    %4805 = vmatpush.bf16.msra.mxu0 %v4790
    %4806 = vmatpush.bf16.msra.mxu0 %v4789
    %4807 = vmatpush.bf16.msra.mxu0 %v4788
    %4808 = vmatpush.bf16.msra.mxu0 %v4787
    %4809 = vmatpush.bf16.msra.mxu0 %v4786
    %4810 = vmatmul.bf16.gmra.mxu0 %v4738
    %v4811 = vpop.f32.mrf.mxu0
    %v4812 = vadd.f32 0.0, %v4811
    %v4813 = vpop.f32.mrf.mxu0
    %v4814 = vadd.f32 0.0, %v4813
    %4815 = vmatmul.bf16.gmra.mxu0 %v4739
    %v4816 = vpop.f32.mrf.mxu0
    %v4817 = vadd.f32 0.0, %v4816
    %v4818 = vpop.f32.mrf.mxu0
    %v4819 = vadd.f32 0.0, %v4818
    %4820 = vmatmul.bf16.gmra.mxu0 %v4740
    %v4821 = vpop.f32.mrf.mxu0
    %v4822 = vadd.f32 0.0, %v4821
    %v4823 = vpop.f32.mrf.mxu0
    %v4824 = vadd.f32 0.0, %v4823
    %4825 = vmatmul.bf16.gmra.mxu0 %v4741
    %v4826 = vpop.f32.mrf.mxu0
    %v4827 = vadd.f32 0.0, %v4826
    %v4828 = vpop.f32.mrf.mxu0
    %v4829 = vadd.f32 0.0, %v4828
    %4830 = vmatmul.bf16.gmra.mxu0 %v4742
    %v4831 = vpop.f32.mrf.mxu0
    %v4832 = vadd.f32 0.0, %v4831
    %v4833 = vpop.f32.mrf.mxu0
    %v4834 = vadd.f32 0.0, %v4833
    %4835 = vmatmul.bf16.gmra.mxu0 %v4743
    %v4836 = vpop.f32.mrf.mxu0
    %v4837 = vadd.f32 0.0, %v4836
    %v4838 = vpop.f32.mrf.mxu0
    %v4839 = vadd.f32 0.0, %v4838
    %4840 = vmatmul.bf16.gmra.mxu0 %v4744
    %v4841 = vpop.f32.mrf.mxu0
    %v4842 = vadd.f32 0.0, %v4841
    %v4843 = vpop.f32.mrf.mxu0
    %v4844 = vadd.f32 0.0, %v4843
    %4845 = vmatmul.bf16.gmra.mxu0 %v4745
    %v4846 = vpop.f32.mrf.mxu0
    %v4847 = vadd.f32 0.0, %v4846
    %v4848 = vpop.f32.mrf.mxu0
    %v4849 = vadd.f32 0.0, %v4848
    %4850 = vdwg.mxu0
    %v4851 = vadd.f32 %v4641, %v4812
    %v4852 = vadd.f32 %v4642, %v4814
    %v4853 = vadd.f32 %v4643, %v4817
    %v4854 = vadd.f32 %v4644, %v4819
    %v4855 = vadd.f32 %v4645, %v4822
    %v4856 = vadd.f32 %v4646, %v4824
    %v4857 = vadd.f32 %v4647, %v4827
    %v4858 = vadd.f32 %v4648, %v4829
    %v4859 = vadd.f32 %v4649, %v4832
    %v4860 = vadd.f32 %v4650, %v4834
    %v4861 = vadd.f32 %v4651, %v4837
    %v4862 = vadd.f32 %v4652, %v4839
    %v4863 = vadd.f32 %v4653, %v4842
    %v4864 = vadd.f32 %v4654, %v4844
    %v4865 = vadd.f32 %v4655, %v4847
    %v4866 = vadd.f32 %v4656, %v4849
    %v4867 = vld [vmem:[%s2359 + $0x2] sm:$0xff]
    %v4868 = vld [vmem:[%s2359 + $0x12] sm:$0xff]
    %v4869 = vld [vmem:[%s2359 + $0x22] sm:$0xff]
    %v4870 = vld [vmem:[%s2359 + $0x32] sm:$0xff]
    %v4871 = vld [vmem:[%s2359 + $0x42] sm:$0xff]
    %v4872 = vld [vmem:[%s2359 + $0x52] sm:$0xff]
    %v4873 = vld [vmem:[%s2359 + $0x62] sm:$0xff]
    %v4874 = vld [vmem:[%s2359 + $0x72] sm:$0xff]
    %v4875 = vld [vmem:[%s2359 + $0xa2] sm:$0xff]
    %v4876 = vld [vmem:[%s2359 + $0xb2] sm:$0xff]
    %v4877 = vld [vmem:[%s2359 + $0xc2] sm:$0xff]
    %v4878 = vld [vmem:[%s2359 + $0xd2] sm:$0xff]
    %v4879 = vld [vmem:[%s2359 + $0xe2] sm:$0xff]
    %v4880 = vld [vmem:[%s2359 + $0xf2] sm:$0xff]
    %v4881 = vld [vmem:[%s2359 + $0x102] sm:$0xff]
    %v4882 = vld [vmem:[%s2359 + $0x112] sm:$0xff]
    %v4883 = vpack.c.bf16 %v4867, %v4867
    %v4884 = vpack.c.bf16 %v4868, %v4868
    %v4885 = vpack.c.bf16 %v4869, %v4869
    %v4886 = vpack.c.bf16 %v4870, %v4870
    %v4887 = vpack.c.bf16 %v4871, %v4871
    %v4888 = vpack.c.bf16 %v4872, %v4872
    %v4889 = vpack.c.bf16 %v4873, %v4873
    %v4890 = vpack.c.bf16 %v4874, %v4874
    %v4891 = vpack.c.bf16 %v4875, %v4875
    %v4892 = vpack.c.bf16 %v4876, %v4876
    %v4893 = vpack.c.bf16 %v4877, %v4877
    %v4894 = vpack.c.bf16 %v4878, %v4878
    %v4895 = vpack.c.bf16 %v4879, %v4879
    %v4896 = vpack.c.bf16 %v4880, %v4880
    %v4897 = vpack.c.bf16 %v4881, %v4881
    %v4898 = vpack.c.bf16 %v4882, %v4882
    %s4899 = scalar_lea.vmem %s3, 512
    %v4900 = vld [vmem:[%s4899] sm:$0xf]
    %v4901 = vld [vmem:[%s4899 + $0x4] sm:$0xf]
    %v4902 = vld [vmem:[%s4899 + $0x8] sm:$0xf]
    %v4903 = vld [vmem:[%s4899 + $0xc] sm:$0xf]
    %v4904 = vld [vmem:[%s4899 + $0x10] sm:$0xf]
    %v4905 = vld [vmem:[%s4899 + $0x14] sm:$0xf]
    %v4906 = vld [vmem:[%s4899 + $0x18] sm:$0xf]
    %v4907 = vld [vmem:[%s4899 + $0x1c] sm:$0xf]
    %v4908 = vld [vmem:[%s4899 + $0x20] sm:$0xf]
    %v4909 = vld [vmem:[%s4899 + $0x24] sm:$0xf]
    %v4910 = vld [vmem:[%s4899 + $0x28] sm:$0xf]
    %v4911 = vld [vmem:[%s4899 + $0x2c] sm:$0xf]
    %v4912 = vld [vmem:[%s4899 + $0x30] sm:$0xf]
    %v4913 = vld [vmem:[%s4899 + $0x34] sm:$0xf]
    %v4914 = vld [vmem:[%s4899 + $0x38] sm:$0xf]
    %v4915 = vld [vmem:[%s4899 + $0x3c] sm:$0xf]
    %v4932 = vunpack.c.l.b16 %v4883
    %v4933 = vunpack.c.l.b16 %v4884
    %v4934 = vunpack.c.l.b16 %v4885
    %v4935 = vunpack.c.l.b16 %v4886
    %v4936 = vunpack.c.l.b16 %v4887
    %v4937 = vunpack.c.l.b16 %v4888
    %v4938 = vunpack.c.l.b16 %v4889
    %v4939 = vunpack.c.l.b16 %v4890
    %v4940 = vunpack.c.l.b16 %v4891
    %v4941 = vunpack.c.l.b16 %v4892
    %v4942 = vunpack.c.l.b16 %v4893
    %v4943 = vunpack.c.l.b16 %v4894
    %v4944 = vunpack.c.l.b16 %v4895
    %v4945 = vunpack.c.l.b16 %v4896
    %v4946 = vunpack.c.l.b16 %v4897
    %v4947 = vunpack.c.l.b16 %v4898
    %v4948 = vpack.c.b16 %v4933, %v4932
    %v4949 = vpack.c.b16 %v4935, %v4934
    %v4950 = vpack.c.b16 %v4937, %v4936
    %v4951 = vpack.c.b16 %v4939, %v4938
    %v4952 = vpack.c.b16 %v4941, %v4940
    %v4953 = vpack.c.b16 %v4943, %v4942
    %v4954 = vpack.c.b16 %v4945, %v4944
    %v4955 = vpack.c.b16 %v4947, %v4946
    %v4980 = vunpack.c.l.b16 %v4900
    %v4981 = vunpack.c.l.b16 %v4901
    %v4982 = vunpack.c.l.b16 %v4902
    %v4983 = vunpack.c.l.b16 %v4903
    %v4984 = vunpack.c.l.b16 %v4904
    %v4985 = vunpack.c.l.b16 %v4905
    %v4986 = vunpack.c.l.b16 %v4906
    %v4987 = vunpack.c.l.b16 %v4907
    %v4988 = vunpack.c.l.b16 %v4908
    %v4989 = vunpack.c.l.b16 %v4909
    %v4990 = vunpack.c.l.b16 %v4910
    %v4991 = vunpack.c.l.b16 %v4911
    %v4992 = vunpack.c.l.b16 %v4912
    %v4993 = vunpack.c.l.b16 %v4913
    %v4994 = vunpack.c.l.b16 %v4914
    %v4995 = vunpack.c.l.b16 %v4915
    %v4996 = vpack.c.b16 %v4981, %v4980
    %v4997 = vpack.c.b16 %v4983, %v4982
    %v4998 = vpack.c.b16 %v4985, %v4984
    %v4999 = vpack.c.b16 %v4987, %v4986
    %v5000 = vpack.c.b16 %v4989, %v4988
    %v5001 = vpack.c.b16 %v4991, %v4990
    %v5002 = vpack.c.b16 %v4993, %v4992
    %v5003 = vpack.c.b16 %v4995, %v4994
    %5012 = vmatpush.bf16.msra.mxu0 %v5003
    %5013 = vmatpush.bf16.msra.mxu0 %v5002
    %5014 = vmatpush.bf16.msra.mxu0 %v5001
    %5015 = vmatpush.bf16.msra.mxu0 %v5000
    %5016 = vmatpush.bf16.msra.mxu0 %v4999
    %5017 = vmatpush.bf16.msra.mxu0 %v4998
    %5018 = vmatpush.bf16.msra.mxu0 %v4997
    %5019 = vmatpush.bf16.msra.mxu0 %v4996
    %5020 = vmatmul.bf16.gmra.mxu0 %v4948
    %v5021 = vpop.f32.mrf.mxu0
    %v5022 = vadd.f32 0.0, %v5021
    %v5023 = vpop.f32.mrf.mxu0
    %v5024 = vadd.f32 0.0, %v5023
    %5025 = vmatmul.bf16.gmra.mxu0 %v4949
    %v5026 = vpop.f32.mrf.mxu0
    %v5027 = vadd.f32 0.0, %v5026
    %v5028 = vpop.f32.mrf.mxu0
    %v5029 = vadd.f32 0.0, %v5028
    %5030 = vmatmul.bf16.gmra.mxu0 %v4950
    %v5031 = vpop.f32.mrf.mxu0
    %v5032 = vadd.f32 0.0, %v5031
    %v5033 = vpop.f32.mrf.mxu0
    %v5034 = vadd.f32 0.0, %v5033
    %5035 = vmatmul.bf16.gmra.mxu0 %v4951
    %v5036 = vpop.f32.mrf.mxu0
    %v5037 = vadd.f32 0.0, %v5036
    %v5038 = vpop.f32.mrf.mxu0
    %v5039 = vadd.f32 0.0, %v5038
    %5040 = vmatmul.bf16.gmra.mxu0 %v4952
    %v5041 = vpop.f32.mrf.mxu0
    %v5042 = vadd.f32 0.0, %v5041
    %v5043 = vpop.f32.mrf.mxu0
    %v5044 = vadd.f32 0.0, %v5043
    %5045 = vmatmul.bf16.gmra.mxu0 %v4953
    %v5046 = vpop.f32.mrf.mxu0
    %v5047 = vadd.f32 0.0, %v5046
    %v5048 = vpop.f32.mrf.mxu0
    %v5049 = vadd.f32 0.0, %v5048
    %5050 = vmatmul.bf16.gmra.mxu0 %v4954
    %v5051 = vpop.f32.mrf.mxu0
    %v5052 = vadd.f32 0.0, %v5051
    %v5053 = vpop.f32.mrf.mxu0
    %v5054 = vadd.f32 0.0, %v5053
    %5055 = vmatmul.bf16.gmra.mxu0 %v4955
    %v5056 = vpop.f32.mrf.mxu0
    %v5057 = vadd.f32 0.0, %v5056
    %v5058 = vpop.f32.mrf.mxu0
    %v5059 = vadd.f32 0.0, %v5058
    %5060 = vdwg.mxu0
    %v5061 = vadd.f32 %v4851, %v5022
    %v5062 = vadd.f32 %v4852, %v5024
    %v5063 = vadd.f32 %v4853, %v5027
    %v5064 = vadd.f32 %v4854, %v5029
    %v5065 = vadd.f32 %v4855, %v5032
    %v5066 = vadd.f32 %v4856, %v5034
    %v5067 = vadd.f32 %v4857, %v5037
    %v5068 = vadd.f32 %v4858, %v5039
    %v5069 = vadd.f32 %v4859, %v5042
    %v5070 = vadd.f32 %v4860, %v5044
    %v5071 = vadd.f32 %v4861, %v5047
    %v5072 = vadd.f32 %v4862, %v5049
    %v5073 = vadd.f32 %v4863, %v5052
    %v5074 = vadd.f32 %v4864, %v5054
    %v5075 = vadd.f32 %v4865, %v5057
    %v5076 = vadd.f32 %v4866, %v5059
    %s5077 = scalar_lea.vmem %s4, 8
    %v5078 = vld [vmem:[%s5077] sm:$0x7]
    %v5079 = vperm.slane %v5078, 0
    %v5080 = vadd.f32 %v5061, %v5079
    %v5081 = vadd.f32 %v5062, %v5079
    %v5082 = vadd.f32 %v5063, %v5079
    %v5083 = vadd.f32 %v5064, %v5079
    %v5084 = vadd.f32 %v5065, %v5079
    %v5085 = vadd.f32 %v5066, %v5079
    %v5086 = vadd.f32 %v5067, %v5079
    %v5087 = vadd.f32 %v5068, %v5079
    %v5088 = vadd.f32 %v5069, %v5079
    %v5089 = vadd.f32 %v5070, %v5079
    %v5090 = vadd.f32 %v5071, %v5079
    %v5091 = vadd.f32 %v5072, %v5079
    %v5092 = vadd.f32 %v5073, %v5079
    %v5093 = vadd.f32 %v5074, %v5079
    %v5094 = vadd.f32 %v5075, %v5079
    %v5095 = vadd.f32 %v5076, %v5079
    %v5096 = vmax.f32 %v5080, 0.0
    %v5097 = vmax.f32 %v5081, 0.0
    %v5098 = vmax.f32 %v5082, 0.0
    %v5099 = vmax.f32 %v5083, 0.0
    %v5100 = vmax.f32 %v5084, 0.0
    %v5101 = vmax.f32 %v5085, 0.0
    %v5102 = vmax.f32 %v5086, 0.0
    %v5103 = vmax.f32 %v5087, 0.0
    %v5104 = vmax.f32 %v5088, 0.0
    %v5105 = vmax.f32 %v5089, 0.0
    %v5106 = vmax.f32 %v5090, 0.0
    %v5107 = vmax.f32 %v5091, 0.0
    %v5108 = vmax.f32 %v5092, 0.0
    %v5109 = vmax.f32 %v5093, 0.0
    %v5110 = vmax.f32 %v5094, 0.0
    %v5111 = vmax.f32 %v5095, 0.0
    %v5112 = vadd.f32 %v5096, %v5097
    %v5113 = vadd.f32 %v5112, %v5098
    %v5114 = vadd.f32 %v5113, %v5099
    %v5115 = vadd.f32 %v5114, %v5100
    %v5116 = vadd.f32 %v5115, %v5101
    %v5117 = vadd.f32 %v5116, %v5102
    %v5118 = vadd.f32 %v5117, %v5103
    %v5119 = vrot.slane %v5118, 4
    %v5120 = vadd.f32 %v5118, %v5119
    %v5121 = vrot.slane %v5120, 2
    %v5122 = vadd.f32 %v5120, %v5121
    %v5123 = vrot.slane %v5122, 1
    %v5124 = vadd.f32 %v5122, %v5123
    %v5125 = vadd.f32 %v5104, %v5105
    %v5126 = vadd.f32 %v5125, %v5106
    %v5127 = vadd.f32 %v5126, %v5107
    %v5128 = vadd.f32 %v5127, %v5108
    %v5129 = vadd.f32 %v5128, %v5109
    %v5130 = vadd.f32 %v5129, %v5110
    %v5131 = vadd.f32 %v5130, %v5111
    %v5132 = vrot.slane %v5131, 4
    %v5133 = vadd.f32 %v5131, %v5132
    %v5134 = vrot.slane %v5133, 2
    %v5135 = vadd.f32 %v5133, %v5134
    %v5136 = vrot.slane %v5135, 1
    %v5137 = vadd.f32 %v5135, %v5136
    %v5138 = vmul.f32 %v5096, %v5096
    %v5139 = vmul.f32 %v5097, %v5097
    %v5140 = vmul.f32 %v5098, %v5098
    %v5141 = vmul.f32 %v5099, %v5099
    %v5142 = vmul.f32 %v5100, %v5100
    %v5143 = vmul.f32 %v5101, %v5101
    %v5144 = vmul.f32 %v5102, %v5102
    %v5145 = vmul.f32 %v5103, %v5103
    %v5146 = vmul.f32 %v5104, %v5104
    %v5147 = vmul.f32 %v5105, %v5105
    %v5148 = vmul.f32 %v5106, %v5106
    %v5149 = vmul.f32 %v5107, %v5107
    %v5150 = vmul.f32 %v5108, %v5108
    %v5151 = vmul.f32 %v5109, %v5109
    %v5152 = vmul.f32 %v5110, %v5110
    %v5153 = vmul.f32 %v5111, %v5111
    %v5154 = vadd.f32 %v5138, %v5139
    %v5155 = vadd.f32 %v5154, %v5140
    %v5156 = vadd.f32 %v5155, %v5141
    %v5157 = vadd.f32 %v5156, %v5142
    %v5158 = vadd.f32 %v5157, %v5143
    %v5159 = vadd.f32 %v5158, %v5144
    %v5160 = vadd.f32 %v5159, %v5145
    %v5161 = vrot.slane %v5160, 4
    %v5162 = vadd.f32 %v5160, %v5161
    %v5163 = vrot.slane %v5162, 2
    %v5164 = vadd.f32 %v5162, %v5163
    %v5165 = vrot.slane %v5164, 1
    %v5166 = vadd.f32 %v5164, %v5165
    %v5167 = vadd.f32 %v5146, %v5147
    %v5168 = vadd.f32 %v5167, %v5148
    %v5169 = vadd.f32 %v5168, %v5149
    %v5170 = vadd.f32 %v5169, %v5150
    %v5171 = vadd.f32 %v5170, %v5151
    %v5172 = vadd.f32 %v5171, %v5152
    %v5173 = vadd.f32 %v5172, %v5153
    %v5174 = vrot.slane %v5173, 4
    %v5175 = vadd.f32 %v5173, %v5174
    %v5176 = vrot.slane %v5175, 2
    %v5177 = vadd.f32 %v5175, %v5176
    %v5178 = vrot.slane %v5177, 1
    %v5179 = vadd.f32 %v5177, %v5178
    %v5182 = vsel %vm1005, %v5137, %v5124
    %5184 = vmatpush.msra.mxu0 %v39
    %5185 = vmatpush.msra.mxu0 %v38
    %5186 = vmatpush.msra.mxu0 %v37
    %5187 = vmatpush.msra.mxu0 %v36
    %5188 = vmatpush.msra.mxu0 %v35
    %5189 = vmatpush.msra.mxu0 %v34
    %5190 = vmatpush.msra.mxu0 %v33
    %5191 = vmatpush.msra.mxu0 %v32
    %5192 = vmatpush.msra.mxu0 %v31
    %5193 = vmatpush.msra.mxu0 %v30
    %5194 = vmatpush.msra.mxu0 %v29
    %5195 = vmatpush.msra.mxu0 %v28
    %5196 = vmatpush.msra.mxu0 %v27
    %5197 = vmatpush.msra.mxu0 %v26
    %5198 = vmatpush.msra.mxu0 %v25
    %5199 = vmatpush.msra.mxu0 %v24
    %5200 = vmatmul.f32.gmra.mxu0 %v5182
    %v5201 = vpop.f32.mrf.mxu0
    %v5202 = vadd.f32 0.0, %v5201
    %5203 = vdwg.mxu0
    %v5206 = vsel %vm1005, %v5179, %v5166
    %5208 = vmatpush.msra.mxu0 %v39
    %5209 = vmatpush.msra.mxu0 %v38
    %5210 = vmatpush.msra.mxu0 %v37
    %5211 = vmatpush.msra.mxu0 %v36
    %5212 = vmatpush.msra.mxu0 %v35
    %5213 = vmatpush.msra.mxu0 %v34
    %5214 = vmatpush.msra.mxu0 %v33
    %5215 = vmatpush.msra.mxu0 %v32
    %5216 = vmatpush.msra.mxu0 %v31
    %5217 = vmatpush.msra.mxu0 %v30
    %5218 = vmatpush.msra.mxu0 %v29
    %5219 = vmatpush.msra.mxu0 %v28
    %5220 = vmatpush.msra.mxu0 %v27
    %5221 = vmatpush.msra.mxu0 %v26
    %5222 = vmatpush.msra.mxu0 %v25
    %5223 = vmatpush.msra.mxu0 %v24
    %5224 = vmatmul.f32.gmra.mxu0 %v5206
    %v5225 = vpop.f32.mrf.mxu0
    %v5226 = vadd.f32 0.0, %v5225
    %5227 = vdwg.mxu0
    %v5228 = vmul.f32 %v5202, %v5202
    %v5229 = vsub.f32 %v5226, %v5228
    %v5230 = vmax.f32 %v5229, 0.0
    %v5231 = vadd.f32 %v5230, 1e-05
    %v5232 = vrsqrt.pop %v5231
    %v5233 = vmul.f32 %v5232, %v5231
    %v5234 = vmul.f32 %v5233, %v5232
    %v5235 = vmul.f32 0.5, %v5234
    %v5236 = vsub.f32 1.5, %v5235
    %v5237 = vmul.f32 %v5232, %v5236
    %vm5238 = vweird.f32 %v5231
    %vm5239 = vweird.f32 %v5232
    %vm5240 = vmor %vm5238, %vm5239
    %v5241 = vsel %vm5240, %v5232, %v5237
    %v5242 = vperm.slane %v5078, 1
    %v5243 = vmul.f32 %v5241, %v5242
    %v5244 = vmul.f32 %v5202, %v5243
    %v5245 = vperm.slane %v5078, 2
    %v5246 = vsub.f32 %v5245, %v5244
    %v5247 = vmul.f32 %v5243, 0.015625
    %v5249 = vrot.slane %v5247, 1
    %v5252 = vmul.f32 %v5124, %v5247
    %v5253 = vmul.f32 %v5137, %v5249
    %v5255 = vrot.slane %v5246, 1
    %v5258 = vadd.f32 %v5252, %v5246
    %v5259 = vadd.f32 %v5253, %v5255
    %v5262 = vrot.slane %v5259, 7
    %v5263 = vsel %vm1005, %v5262, %v5258
    %5265 = vst [vmem:[#allocation3] sm:$0x3] %v5263
    // Predicated region
    $region26: #{_lambda_.3} parent=1 // pred_check
      _
    $region27: #{_lambda_.3} parent=1 // pred_check_branch
      %5267 = sbr.rel (0) target = $region29
    $region28: #{_lambda_.3} parent=1 // pred_region
      %5269 = vsyncadd [#allocation4], 0
      %s5271 = sshll.u32 [#allocation3], 4
      %s5272 = int_to_ptr.vmem [resolvable:$true] %s5271
      %s5273 = sshll.u32 %s6, 4
      %s5274 = int_to_ptr.hbm [resolvable:$true] %s5273
      %5276 = dma.vmem_to_hbm [thread:$0]  %s5272, 32, %s5274, [#allocation4]
    $region29: #{_lambda_.3} parent=1 // pred_fallthru
      _
    // Predicated region
    $region30: #{_lambda_.3} parent=1 // pred_check
      _
    $region31: #{_lambda_.3} parent=1 // pred_check_branch
      %5278 = sbr.rel (0) target = $region33
    $region32: #{_lambda_.3} parent=1 // pred_region
      %5280 = dma.done [#allocation4], 32
    $region33: #{_lambda_.3} parent=1 // pred_fallthru
      _
    %5281 = vsyncpa [#allocation4], 1

</llo_original>
